<compile_context>
chip_gen: v6e
topology: v6e:2x2x1
jax: 0.10.0
libtpu: 0.0.40
codegen_flags: <defaults>
</compile_context>

<pallas_src>
import jax
import jax.numpy as jnp
from jax.experimental import pallas as pl
from jax.experimental.pallas import tpu as pltpu

# ----------------------------- configuration --------------------------------
DIM = 32
NUM_HEADS = 4
HEAD_DIM = DIM // NUM_HEADS
WINDOW = (8, 8)
SHIFT = (0, 0)                        # -> no roll, mask_matrix unused (None)
MLP_RATIO = 4.0
MLP_HIDDEN = int(DIM * MLP_RATIO)     # 128
N_TOK = WINDOW[0] * WINDOW[1]         # 64 tokens / window
EPS = 1e-5
SQRT1_2 = 0.7071067811865476


# ------------------------------- fused kernel --------------------------------
def _make_swin_block_kernel(n_win_h, n_win_w):
    """Fused Swin block kernel for an (H, W) = (8*n_win_h, 8*n_win_w) image."""
    wh, ww = WINDOW
    n_win = n_win_h * n_win_w
    m_tok = n_win * N_TOK                                      # tokens per image

    def kernel(x_ref, vec_ref, qkvw_ref, bias_ref, projw_ref, w1_ref, w2_ref, o_ref):
        # ---- packed small parameter vectors (one (8,128) operand) -----------
        vec = vec_ref[...]
        n1g, n1b = vec[0, :DIM], vec[1, :DIM]
        qkvb = vec[2, :3 * DIM]                                # Q part pre-scaled host-side
        projb = vec[3, :DIM]
        n2g, n2b = vec[4, :DIM], vec[5, :DIM]
        b1 = vec[6, :]                                         # (128,)
        b2 = vec[7, :DIM]

        # ---- window partition (shift=(0,0): axis-aligned 8x8 tiles) ----------
        # (8,8,C)->(64,C) is a layout-free reshape; tokens end up in windowed,
        # row-major-within-window order.  All per-token ops are order-invariant.
        x3 = x_ref[0].astype(jnp.float32)                      # (H, W, C)
        wins = []
        for wi in range(n_win_h):
            for wj in range(n_win_w):
                win = x3[wi * wh:(wi + 1) * wh, wj * ww:(wj + 1) * ww, :]
                wins.append(win.reshape(N_TOK, DIM))
        xt = jnp.concatenate(wins, axis=0)                     # (m_tok, C)

        # ---- LayerNorm 1 -----------------------------------------------------
        mu = jnp.mean(xt, axis=-1, keepdims=True)
        xc = xt - mu
        var = jnp.mean(xc * xc, axis=-1, keepdims=True)
        xn = xc * jax.lax.rsqrt(var + EPS) * n1g + n1b

        # ---- QKV: one (m_tok, C) @ (C, 3C) matmul ----------------------------
        qkv = jnp.dot(xn, qkvw_ref[...],
                      preferred_element_type=jnp.float32) + qkvb          # (m_tok, 3C)

        # ---- merged-head attention (single batched einsums, single softmax) --
        def heads(off):
            # (m_tok, 3C) -> (nH*nW, N, hd); batch index = h * n_win + w
            return jnp.concatenate(
                [qkv[:, off + h * HEAD_DIM: off + (h + 1) * HEAD_DIM]
                 .reshape(n_win, N_TOK, HEAD_DIM) for h in range(NUM_HEADS)],
                axis=0)

        q, k, v = heads(0), heads(DIM), heads(2 * DIM)

        s = jnp.einsum('bnd,bmd->bnm', q, k,
                       preferred_element_type=jnp.float32)                # (nH*nW, N, N)
        # relative-position bias: same (nH, N, N) table for every window
        s = (s.reshape(NUM_HEADS, n_win, N_TOK, N_TOK)
             + bias_ref[...][:, None]).reshape(NUM_HEADS * n_win, N_TOK, N_TOK)
        s = s - jnp.max(s, axis=-1, keepdims=True)
        p = jnp.exp(s)
        denom = jnp.sum(p, axis=-1, keepdims=True)                         # (nH*nW, N, 1)
        ctx = jnp.einsum('bnm,bmd->bnd', p, v,
                         preferred_element_type=jnp.float32)               # (nH*nW, N, hd)
        ctx = ctx / denom                         # deferred, exact softmax normalization

        # heads back to lanes (head-major channel order), then ONE projection matmul
        ctx = jnp.concatenate(
            [ctx[h * n_win:(h + 1) * n_win].reshape(m_tok, HEAD_DIM)
             for h in range(NUM_HEADS)], axis=1)                           # (m_tok, C)
        attn = jnp.dot(ctx, projw_ref[...],
                       preferred_element_type=jnp.float32) + projb

        x1 = xt + attn                                        # residual 1 (drop_path = Id)

        # ---- LayerNorm 2 + MLP + residual 2 (hidden stays lane-dense: 128) ---
        mu2 = jnp.mean(x1, axis=-1, keepdims=True)
        xc2 = x1 - mu2
        var2 = jnp.mean(xc2 * xc2, axis=-1, keepdims=True)
        y = xc2 * jax.lax.rsqrt(var2 + EPS) * n2g + n2b
        hmid = jnp.dot(y, w1_ref[...],
                       preferred_element_type=jnp.float32) + b1            # (m_tok, 128)
        hmid = 0.5 * hmid * (1.0 + jax.lax.erf(hmid * SQRT1_2))            # exact GELU
        out = x1 + jnp.dot(hmid, w2_ref[...],
                           preferred_element_type=jnp.float32) + b2
        out = out.astype(o_ref.dtype)

        # ---- window reverse -> lane-dense (8, ww*C) slab stores ---------------
        # token row t = b*(wh*ww) + r*ww + c  ->  t // ww = b*wh + r,  t % ww = c.
        o3 = out.reshape(n_win * wh, ww, DIM)                   # [(b, r), c, ch]
        slab = jnp.concatenate([o3[:, c, :] for c in range(ww)], axis=1)  # [(b, r), c*C+ch]
        for wi in range(n_win_h):
            for wj in range(n_win_w):
                b = wi * n_win_w + wj
                o_ref[0, wi * wh:(wi + 1) * wh,
                      wj * ww * DIM:(wj + 1) * ww * DIM] = slab[b * wh:(b + 1) * wh, :]

    return kernel


# ------------------------------ wrapper ---------------------------------------
def swin_transformer_block(x, params, mask_matrix=None):
    """Forward of SwinTransformerBlock (4-D NHWC branch, shift_size=(0,0))."""
    assert SHIFT == (0, 0) and mask_matrix is None, (
        "shifted-window path (roll + attention mask) is not implemented")
    B, H, W, C = x.shape
    assert C == DIM and H % WINDOW[0] == 0 and W % WINDOW[1] == 0
    n_win_h, n_win_w = H // WINDOW[0], W // WINDOW[1]

    # Fold 1/sqrt(head_dim) into the Q columns of the qkv projection (exact rescale).
    scale = HEAD_DIM ** -0.5
    qkv_w_t = jnp.concatenate(
        [params["qkv_w_t"][:, :DIM] * scale, params["qkv_w_t"][:, DIM:]], axis=1)
    qkv_b = jnp.concatenate([params["qkv_b"][:DIM] * scale, params["qkv_b"][DIM:]])

    # Pack every small vector parameter into one padded (8,128) operand.
    def row(v):
        return jnp.pad(v.astype(jnp.float32), (0, 128 - v.shape[0]))
    vecs = jnp.stack([
        row(params["norm1_g"]), row(params["norm1_b"]), row(qkv_b),
        row(params["proj_b"]), row(params["norm2_g"]), row(params["norm2_b"]),
        row(params["b1"]), row(params["b2"])])                              # (8, 128)

    out = pl.pallas_call(
        _make_swin_block_kernel(n_win_h, n_win_w),
        out_shape=jax.ShapeDtypeStruct((B, H, W * C), x.dtype),            # lane-dense output
        grid=(B,),
        in_specs=[
            pl.BlockSpec((1, H, W, C), lambda b: (b, 0, 0, 0)),             # x (one image)
            pl.BlockSpec((8, 128), lambda b: (0, 0)),                       # packed vectors
            pl.BlockSpec((DIM, 3 * DIM), lambda b: (0, 0)),                 # qkv W^T (scaled)
            pl.BlockSpec((NUM_HEADS, N_TOK, N_TOK), lambda b: (0, 0, 0)),   # rel. pos. bias
            pl.BlockSpec((DIM, DIM), lambda b: (0, 0)),                     # proj W^T
            pl.BlockSpec((DIM, MLP_HIDDEN), lambda b: (0, 0)),              # fc1 W^T
            pl.BlockSpec((MLP_HIDDEN, DIM), lambda b: (0, 0)),              # fc2 W^T
        ],
        out_specs=pl.BlockSpec((1, H, W * C), lambda b: (b, 0, 0)),
        compiler_params=pltpu.CompilerParams(dimension_semantics=("parallel",)),
    )(x, vecs, qkv_w_t, params["rel_bias"], params["proj_w_t"],
      params["w1_t"], params["w2_t"])
    # free view change back to the module's NHWC output contract
    return out.reshape(B, H, W, C)


# --------------------------- pure-JAX reference -------------------------------
def window_partition_2d(x, ws):
    b, h, w, c = x.shape
    x = x.reshape(b, h // ws[0], ws[0], w // ws[1], ws[1], c)
    return x.transpose(0, 1, 3, 2, 4, 5).reshape(-1, ws[0] * ws[1], c)


def window_reverse_2d(windows, ws, dims):
    b, h, w = dims
    x = windows.reshape(b, h // ws[0], w // ws[1], ws[0], ws[1], -1)
    return x.transpose(0, 1, 3, 2, 4, 5).reshape(b, h, w, -1)


def make_relative_position_index(ws):
    wh, ww = ws
    coords = jnp.stack(jnp.meshgrid(jnp.arange(wh), jnp.arange(ww), indexing="ij"))
    cf = coords.reshape(2, -1)
    rel = (cf[:, :, None] - cf[:, None, :]).transpose(1, 2, 0)
    rel = rel.at[:, :, 0].add(wh - 1)
    rel = rel.at[:, :, 1].add(ww - 1)
    rel = rel.at[:, :, 0].multiply(2 * ww - 1)
    return rel.sum(-1)                                            # (N, N) int


def reference_block(x, p):
    B, H, W, C = x.shape

    def ln(v, g, b):
        mu = v.mean(-1, keepdims=True)
        var = ((v - mu) ** 2).mean(-1, keepdims=True)
        return (v - mu) / jnp.sqrt(var + EPS) * g + b

    shortcut = x
    xn = ln(x, p["norm1_g"], p["norm1_b"])
    xw = window_partition_2d(xn, WINDOW)
    BW, N, _ = xw.shape
    qkv = xw @ p["qkv_w_t"] + p["qkv_b"]
    qkv = qkv.reshape(BW, N, 3, NUM_HEADS, HEAD_DIM).transpose(2, 0, 3, 1, 4)
    q, k, v = qkv[0], qkv[1], qkv[2]
    att = (q * HEAD_DIM ** -0.5) @ k.transpose(0, 1, 3, 2) + p["rel_bias"][None]
    att = jax.nn.softmax(att, -1)
    ctx = (att @ v).transpose(0, 2, 1, 3).reshape(BW, N, C)
    ctx = ctx @ p["proj_w_t"] + p["proj_b"]
    x1 = shortcut + window_reverse_2d(ctx, WINDOW, (B, H, W))
    y = ln(x1, p["norm2_g"], p["norm2_b"])
    h = y @ p["w1_t"] + p["b1"]
    h = 0.5 * h * (1.0 + jax.lax.erf(h * SQRT1_2))
    return x1 + (h @ p["w2_t"] + p["b2"])


# --------------------------------- main ---------------------------------------
if __name__ == "__main__":
    key = jax.random.PRNGKey(0)
    ks = jax.random.split(key, 16)

    B, H, W = 2, 16, 16
    x = jax.random.normal(ks[0], (B, H, W, DIM), jnp.float32)

    # Deterministic synthetic parameters (PyTorch weight layouts, pre-transposed
    # for row-major matmuls: y = x @ W^T + b  ->  we store W^T directly).
    n_rel = (2 * WINDOW[0] - 1) * (2 * WINDOW[1] - 1)
    rel_table = 0.02 * jax.random.normal(ks[1], (n_rel, NUM_HEADS), jnp.float32)
    rel_index = make_relative_position_index(WINDOW)
    rel_bias = rel_table[rel_index.reshape(-1)].reshape(N_TOK, N_TOK, NUM_HEADS)
    rel_bias = rel_bias.transpose(2, 0, 1)                        # (nH, N, N)

    params = dict(
        norm1_g=1.0 + 0.1 * jax.random.normal(ks[2], (DIM,), jnp.float32),
        norm1_b=0.1 * jax.random.normal(ks[3], (DIM,), jnp.float32),
        qkv_w_t=0.05 * jax.random.normal(ks[4], (DIM, 3 * DIM), jnp.float32),
        qkv_b=0.05 * jax.random.normal(ks[5], (3 * DIM,), jnp.float32),
        rel_bias=rel_bias,
        proj_w_t=0.05 * jax.random.normal(ks[6], (DIM, DIM), jnp.float32),
        proj_b=0.05 * jax.random.normal(ks[7], (DIM,), jnp.float32),
        norm2_g=1.0 + 0.1 * jax.random.normal(ks[8], (DIM,), jnp.float32),
        norm2_b=0.1 * jax.random.normal(ks[9], (DIM,), jnp.float32),
        w1_t=0.05 * jax.random.normal(ks[10], (DIM, MLP_HIDDEN), jnp.float32),
        b1=0.05 * jax.random.normal(ks[11], (MLP_HIDDEN,), jnp.float32),
        w2_t=0.05 * jax.random.normal(ks[12], (MLP_HIDDEN, DIM), jnp.float32),
        b2=0.05 * jax.random.normal(ks[13], (DIM,), jnp.float32),
    )

    out = jax.block_until_ready(swin_transformer_block(x, params, mask_matrix=None))
    ref = jax.block_until_ready(reference_block(x, params))
    assert out.shape == x.shape and out.dtype == x.dtype
    assert jnp.allclose(out, ref, rtol=1e-4, atol=1e-4), float(jnp.abs(out - ref).max())
    print("KERNEL_OK")
</pallas_src>

<mosaic_0001>
module attributes {stable_mosaic.version = 11 : i64} {
  func.func @kernel(%arg0: i32, %arg1: memref<1x16x16x32xf32, #tpu.memory_space<vmem>>, %arg2: memref<8x128xf32, #tpu.memory_space<vmem>>, %arg3: memref<32x96xf32, #tpu.memory_space<vmem>>, %arg4: memref<4x64x64xf32, #tpu.memory_space<vmem>>, %arg5: memref<32x32xf32, #tpu.memory_space<vmem>>, %arg6: memref<32x128xf32, #tpu.memory_space<vmem>>, %arg7: memref<128x32xf32, #tpu.memory_space<vmem>>, %arg8: memref<1x16x512xf32, #tpu.memory_space<vmem>>) attributes {dimension_semantics = [#tpu.dimension_semantics<parallel>], iteration_bounds = array<i64: 2>, scalar_prefetch = 0 : i64, scratch_operands = 0 : i64, tpu.core_type = #tpu.core_type<tc>, window_params = [{transform_indices = @transform_0, window_bounds = array<i64: 1, 16, 16, 32>}, {pipeline_mode = #tpu.pipeline_mode<synchronous>, transform_indices = @transform_1, window_bounds = array<i64: 8, 128>}, {pipeline_mode = #tpu.pipeline_mode<synchronous>, transform_indices = @transform_2, window_bounds = array<i64: 32, 96>}, {pipeline_mode = #tpu.pipeline_mode<synchronous>, transform_indices = @transform_3, window_bounds = array<i64: 4, 64, 64>}, {pipeline_mode = #tpu.pipeline_mode<synchronous>, transform_indices = @transform_4, window_bounds = array<i64: 32, 32>}, {pipeline_mode = #tpu.pipeline_mode<synchronous>, transform_indices = @transform_5, window_bounds = array<i64: 32, 128>}, {pipeline_mode = #tpu.pipeline_mode<synchronous>, transform_indices = @transform_6, window_bounds = array<i64: 128, 32>}, {transform_indices = @transform_7, window_bounds = array<i64: 1, 16, 512>}]} {
    %c0 = arith.constant 0 : index
    %c0_0 = arith.constant 0 : index
    %0 = vector.load %arg2[%c0, %c0_0] : memref<8x128xf32, #tpu.memory_space<vmem>>, vector<8x128xf32>
    %1 = vector.extract_strided_slice %0 {offsets = [0, 0], sizes = [1, 32], strides = [1, 1]} : vector<8x128xf32> to vector<1x32xf32>
    %2 = vector.shape_cast %1 : vector<1x32xf32> to vector<32xf32>
    %3 = vector.extract_strided_slice %0 {offsets = [1, 0], sizes = [1, 32], strides = [1, 1]} : vector<8x128xf32> to vector<1x32xf32>
    %4 = vector.shape_cast %3 : vector<1x32xf32> to vector<32xf32>
    %5 = vector.extract_strided_slice %0 {offsets = [2, 0], sizes = [1, 96], strides = [1, 1]} : vector<8x128xf32> to vector<1x96xf32>
    %6 = vector.shape_cast %5 : vector<1x96xf32> to vector<96xf32>
    %7 = vector.extract_strided_slice %0 {offsets = [3, 0], sizes = [1, 32], strides = [1, 1]} : vector<8x128xf32> to vector<1x32xf32>
    %8 = vector.shape_cast %7 : vector<1x32xf32> to vector<32xf32>
    %9 = vector.extract_strided_slice %0 {offsets = [4, 0], sizes = [1, 32], strides = [1, 1]} : vector<8x128xf32> to vector<1x32xf32>
    %10 = vector.shape_cast %9 : vector<1x32xf32> to vector<32xf32>
    %11 = vector.extract_strided_slice %0 {offsets = [5, 0], sizes = [1, 32], strides = [1, 1]} : vector<8x128xf32> to vector<1x32xf32>
    %12 = vector.shape_cast %11 : vector<1x32xf32> to vector<32xf32>
    %13 = vector.extract_strided_slice %0 {offsets = [6, 0], sizes = [1, 128], strides = [1, 1]} : vector<8x128xf32> to vector<1x128xf32>
    %14 = vector.shape_cast %13 : vector<1x128xf32> to vector<128xf32>
    %15 = vector.extract_strided_slice %0 {offsets = [7, 0], sizes = [1, 32], strides = [1, 1]} : vector<8x128xf32> to vector<1x32xf32>
    %16 = vector.shape_cast %15 : vector<1x32xf32> to vector<32xf32>
    %c0_1 = arith.constant 0 : index
    %c0_2 = arith.constant 0 : index
    %c0_3 = arith.constant 0 : index
    %c0_4 = arith.constant 0 : index
    %17 = vector.load %arg1[%c0_1, %c0_2, %c0_3, %c0_4] : memref<1x16x16x32xf32, #tpu.memory_space<vmem>>, vector<1x16x16x32xf32>
    %18 = vector.shape_cast %17 : vector<1x16x16x32xf32> to vector<16x16x32xf32>
    %19 = vector.extract_strided_slice %18 {offsets = [0, 0, 0], sizes = [8, 8, 32], strides = [1, 1, 1]} : vector<16x16x32xf32> to vector<8x8x32xf32>
    %20 = vector.shape_cast %19 : vector<8x8x32xf32> to vector<64x32xf32>
    %21 = vector.extract_strided_slice %18 {offsets = [0, 8, 0], sizes = [8, 8, 32], strides = [1, 1, 1]} : vector<16x16x32xf32> to vector<8x8x32xf32>
    %22 = vector.shape_cast %21 : vector<8x8x32xf32> to vector<64x32xf32>
    %23 = vector.extract_strided_slice %18 {offsets = [8, 0, 0], sizes = [8, 8, 32], strides = [1, 1, 1]} : vector<16x16x32xf32> to vector<8x8x32xf32>
    %24 = vector.shape_cast %23 : vector<8x8x32xf32> to vector<64x32xf32>
    %25 = vector.extract_strided_slice %18 {offsets = [8, 8, 0], sizes = [8, 8, 32], strides = [1, 1, 1]} : vector<16x16x32xf32> to vector<8x8x32xf32>
    %26 = vector.shape_cast %25 : vector<8x8x32xf32> to vector<64x32xf32>
    %27 = tpu.concatenate %20, %22, %24, %26 in 0 : vector<64x32xf32>, vector<64x32xf32>, vector<64x32xf32>, vector<64x32xf32> -> vector<256x32xf32>
    %cst = arith.constant dense<0.000000e+00> : vector<256xf32>
    %28 = vector.multi_reduction <add>, %27, %cst [1] : vector<256x32xf32> to vector<256xf32>
    %29 = vector.shape_cast %28 : vector<256xf32> to vector<256x1xf32>
    %cst_5 = arith.constant 3.200000e+01 : f32
    %30 = vector.broadcast %cst_5 : f32 to vector<256x1xf32>
    %31 = arith.divf %29, %30 : vector<256x1xf32>
    %32 = vector.broadcast %31 : vector<256x1xf32> to vector<256x32xf32>
    %33 = arith.subf %27, %32 : vector<256x32xf32>
    %34 = arith.mulf %33, %33 : vector<256x32xf32>
    %cst_6 = arith.constant dense<0.000000e+00> : vector<256xf32>
    %35 = vector.multi_reduction <add>, %34, %cst_6 [1] : vector<256x32xf32> to vector<256xf32>
    %36 = vector.shape_cast %35 : vector<256xf32> to vector<256x1xf32>
    %cst_7 = arith.constant 3.200000e+01 : f32
    %37 = vector.broadcast %cst_7 : f32 to vector<256x1xf32>
    %38 = arith.divf %36, %37 : vector<256x1xf32>
    %cst_8 = arith.constant 9.99999974E-6 : f32
    %39 = vector.broadcast %cst_8 : f32 to vector<256x1xf32>
    %40 = arith.addf %38, %39 : vector<256x1xf32>
    %41 = math.rsqrt %40 : vector<256x1xf32>
    %42 = vector.broadcast %41 : vector<256x1xf32> to vector<256x32xf32>
    %43 = arith.mulf %33, %42 : vector<256x32xf32>
    %44 = vector.shape_cast %2 : vector<32xf32> to vector<1x32xf32>
    %45 = vector.broadcast %44 : vector<1x32xf32> to vector<256x32xf32>
    %46 = arith.mulf %43, %45 : vector<256x32xf32>
    %47 = vector.shape_cast %4 : vector<32xf32> to vector<1x32xf32>
    %48 = vector.broadcast %47 : vector<1x32xf32> to vector<256x32xf32>
    %49 = arith.addf %46, %48 : vector<256x32xf32>
    %c0_9 = arith.constant 0 : index
    %c0_10 = arith.constant 0 : index
    %50 = vector.load %arg3[%c0_9, %c0_10] : memref<32x96xf32, #tpu.memory_space<vmem>>, vector<32x96xf32>
    %cst_11 = arith.constant dense<0.000000e+00> : vector<256x96xf32>
    %51 = tpu.matmul %49, %50, %cst_11 {dimension_numbers = #tpu.dot_dimension_numbers<[1], [0], [0], [1], [0, 0, 1, 1], [], []>} : vector<256x32xf32>, vector<32x96xf32>, vector<256x96xf32> -> vector<256x96xf32>
    %52 = vector.shape_cast %6 : vector<96xf32> to vector<1x96xf32>
    %53 = vector.broadcast %52 : vector<1x96xf32> to vector<256x96xf32>
    %54 = arith.addf %51, %53 : vector<256x96xf32>
    %55 = vector.extract_strided_slice %54 {offsets = [0, 0], sizes = [256, 8], strides = [1, 1]} : vector<256x96xf32> to vector<256x8xf32>
    %56 = vector.shape_cast %55 : vector<256x8xf32> to vector<4x64x8xf32>
    %57 = vector.extract_strided_slice %54 {offsets = [0, 8], sizes = [256, 8], strides = [1, 1]} : vector<256x96xf32> to vector<256x8xf32>
    %58 = vector.shape_cast %57 : vector<256x8xf32> to vector<4x64x8xf32>
    %59 = vector.extract_strided_slice %54 {offsets = [0, 16], sizes = [256, 8], strides = [1, 1]} : vector<256x96xf32> to vector<256x8xf32>
    %60 = vector.shape_cast %59 : vector<256x8xf32> to vector<4x64x8xf32>
    %61 = vector.extract_strided_slice %54 {offsets = [0, 24], sizes = [256, 8], strides = [1, 1]} : vector<256x96xf32> to vector<256x8xf32>
    %62 = vector.shape_cast %61 : vector<256x8xf32> to vector<4x64x8xf32>
    %63 = tpu.concatenate %56, %58, %60, %62 in 0 : vector<4x64x8xf32>, vector<4x64x8xf32>, vector<4x64x8xf32>, vector<4x64x8xf32> -> vector<16x64x8xf32>
    %64 = vector.extract_strided_slice %54 {offsets = [0, 32], sizes = [256, 8], strides = [1, 1]} : vector<256x96xf32> to vector<256x8xf32>
    %65 = vector.shape_cast %64 : vector<256x8xf32> to vector<4x64x8xf32>
    %66 = vector.extract_strided_slice %54 {offsets = [0, 40], sizes = [256, 8], strides = [1, 1]} : vector<256x96xf32> to vector<256x8xf32>
    %67 = vector.shape_cast %66 : vector<256x8xf32> to vector<4x64x8xf32>
    %68 = vector.extract_strided_slice %54 {offsets = [0, 48], sizes = [256, 8], strides = [1, 1]} : vector<256x96xf32> to vector<256x8xf32>
    %69 = vector.shape_cast %68 : vector<256x8xf32> to vector<4x64x8xf32>
    %70 = vector.extract_strided_slice %54 {offsets = [0, 56], sizes = [256, 8], strides = [1, 1]} : vector<256x96xf32> to vector<256x8xf32>
    %71 = vector.shape_cast %70 : vector<256x8xf32> to vector<4x64x8xf32>
    %72 = tpu.concatenate %65, %67, %69, %71 in 0 : vector<4x64x8xf32>, vector<4x64x8xf32>, vector<4x64x8xf32>, vector<4x64x8xf32> -> vector<16x64x8xf32>
    %73 = vector.extract_strided_slice %54 {offsets = [0, 64], sizes = [256, 8], strides = [1, 1]} : vector<256x96xf32> to vector<256x8xf32>
    %74 = vector.shape_cast %73 : vector<256x8xf32> to vector<4x64x8xf32>
    %75 = vector.extract_strided_slice %54 {offsets = [0, 72], sizes = [256, 8], strides = [1, 1]} : vector<256x96xf32> to vector<256x8xf32>
    %76 = vector.shape_cast %75 : vector<256x8xf32> to vector<4x64x8xf32>
    %77 = vector.extract_strided_slice %54 {offsets = [0, 80], sizes = [256, 8], strides = [1, 1]} : vector<256x96xf32> to vector<256x8xf32>
    %78 = vector.shape_cast %77 : vector<256x8xf32> to vector<4x64x8xf32>
    %79 = vector.extract_strided_slice %54 {offsets = [0, 88], sizes = [256, 8], strides = [1, 1]} : vector<256x96xf32> to vector<256x8xf32>
    %80 = vector.shape_cast %79 : vector<256x8xf32> to vector<4x64x8xf32>
    %81 = tpu.concatenate %74, %76, %78, %80 in 0 : vector<4x64x8xf32>, vector<4x64x8xf32>, vector<4x64x8xf32>, vector<4x64x8xf32> -> vector<16x64x8xf32>
    "tpu.trace_start"() <{level = 10 : i32, message = "bnd,bmd->bnm"}> : () -> ()
    %cst_12 = arith.constant dense<0.000000e+00> : vector<16x64x64xf32>
    %82 = tpu.matmul %63, %72, %cst_12 {dimension_numbers = #tpu.dot_dimension_numbers<[2], [2], [1], [1], [0, 0, 0, 1, 1, 1], [0], [0]>} : vector<16x64x8xf32>, vector<16x64x8xf32>, vector<16x64x64xf32> -> vector<16x64x64xf32>
    "tpu.trace_stop"() : () -> ()
    %83 = vector.shape_cast %82 : vector<16x64x64xf32> to vector<4x4x64x64xf32>
    %c0_13 = arith.constant 0 : index
    %c0_14 = arith.constant 0 : index
    %c0_15 = arith.constant 0 : index
    %84 = vector.load %arg4[%c0_13, %c0_14, %c0_15] : memref<4x64x64xf32, #tpu.memory_space<vmem>>, vector<4x64x64xf32>
    %85 = vector.shape_cast %84 : vector<4x64x64xf32> to vector<4x1x64x64xf32>
    %86 = vector.broadcast %85 : vector<4x1x64x64xf32> to vector<4x4x64x64xf32>
    %87 = arith.addf %83, %86 : vector<4x4x64x64xf32>
    %88 = vector.shape_cast %87 : vector<4x4x64x64xf32> to vector<16x64x64xf32>
    %cst_16 = arith.constant dense<0xFF800000> : vector<16x64xf32>
    %89 = vector.multi_reduction <maximumf>, %88, %cst_16 [2] : vector<16x64x64xf32> to vector<16x64xf32>
    %90 = vector.shape_cast %89 : vector<16x64xf32> to vector<16x64x1xf32>
    %91 = vector.broadcast %90 : vector<16x64x1xf32> to vector<16x64x64xf32>
    %92 = arith.subf %88, %91 : vector<16x64x64xf32>
    %93 = math.exp %92 : vector<16x64x64xf32>
    %cst_17 = arith.constant dense<0.000000e+00> : vector<16x64xf32>
    %94 = vector.multi_reduction <add>, %93, %cst_17 [2] : vector<16x64x64xf32> to vector<16x64xf32>
    %95 = vector.shape_cast %94 : vector<16x64xf32> to vector<16x64x1xf32>
    "tpu.trace_start"() <{level = 10 : i32, message = "bnm,bmd->bnd"}> : () -> ()
    %cst_18 = arith.constant dense<0.000000e+00> : vector<16x64x8xf32>
    %96 = tpu.matmul %93, %81, %cst_18 {dimension_numbers = #tpu.dot_dimension_numbers<[2], [1], [1], [2], [0, 0, 0, 1, 1, 2], [0], [0]>} : vector<16x64x64xf32>, vector<16x64x8xf32>, vector<16x64x8xf32> -> vector<16x64x8xf32>
    "tpu.trace_stop"() : () -> ()
    %97 = vector.broadcast %95 : vector<16x64x1xf32> to vector<16x64x8xf32>
    %98 = arith.divf %96, %97 : vector<16x64x8xf32>
    %99 = vector.extract_strided_slice %98 {offsets = [0, 0, 0], sizes = [4, 64, 8], strides = [1, 1, 1]} : vector<16x64x8xf32> to vector<4x64x8xf32>
    %100 = vector.shape_cast %99 : vector<4x64x8xf32> to vector<256x8xf32>
    %101 = vector.extract_strided_slice %98 {offsets = [4, 0, 0], sizes = [4, 64, 8], strides = [1, 1, 1]} : vector<16x64x8xf32> to vector<4x64x8xf32>
    %102 = vector.shape_cast %101 : vector<4x64x8xf32> to vector<256x8xf32>
    %103 = vector.extract_strided_slice %98 {offsets = [8, 0, 0], sizes = [4, 64, 8], strides = [1, 1, 1]} : vector<16x64x8xf32> to vector<4x64x8xf32>
    %104 = vector.shape_cast %103 : vector<4x64x8xf32> to vector<256x8xf32>
    %105 = vector.extract_strided_slice %98 {offsets = [12, 0, 0], sizes = [4, 64, 8], strides = [1, 1, 1]} : vector<16x64x8xf32> to vector<4x64x8xf32>
    %106 = vector.shape_cast %105 : vector<4x64x8xf32> to vector<256x8xf32>
    %107 = tpu.concatenate %100, %102, %104, %106 in 1 : vector<256x8xf32>, vector<256x8xf32>, vector<256x8xf32>, vector<256x8xf32> -> vector<256x32xf32>
    %c0_19 = arith.constant 0 : index
    %c0_20 = arith.constant 0 : index
    %108 = vector.load %arg5[%c0_19, %c0_20] : memref<32x32xf32, #tpu.memory_space<vmem>>, vector<32x32xf32>
    %cst_21 = arith.constant dense<0.000000e+00> : vector<256x32xf32>
    %109 = tpu.matmul %107, %108, %cst_21 {dimension_numbers = #tpu.dot_dimension_numbers<[1], [0], [0], [1], [0, 0, 1, 1], [], []>} : vector<256x32xf32>, vector<32x32xf32>, vector<256x32xf32> -> vector<256x32xf32>
    %110 = vector.shape_cast %8 : vector<32xf32> to vector<1x32xf32>
    %111 = vector.broadcast %110 : vector<1x32xf32> to vector<256x32xf32>
    %112 = arith.addf %109, %111 : vector<256x32xf32>
    %113 = arith.addf %27, %112 : vector<256x32xf32>
    %cst_22 = arith.constant dense<0.000000e+00> : vector<256xf32>
    %114 = vector.multi_reduction <add>, %113, %cst_22 [1] : vector<256x32xf32> to vector<256xf32>
    %115 = vector.shape_cast %114 : vector<256xf32> to vector<256x1xf32>
    %cst_23 = arith.constant 3.200000e+01 : f32
    %116 = vector.broadcast %cst_23 : f32 to vector<256x1xf32>
    %117 = arith.divf %115, %116 : vector<256x1xf32>
    %118 = vector.broadcast %117 : vector<256x1xf32> to vector<256x32xf32>
    %119 = arith.subf %113, %118 : vector<256x32xf32>
    %120 = arith.mulf %119, %119 : vector<256x32xf32>
    %cst_24 = arith.constant dense<0.000000e+00> : vector<256xf32>
    %121 = vector.multi_reduction <add>, %120, %cst_24 [1] : vector<256x32xf32> to vector<256xf32>
    %122 = vector.shape_cast %121 : vector<256xf32> to vector<256x1xf32>
    %cst_25 = arith.constant 3.200000e+01 : f32
    %123 = vector.broadcast %cst_25 : f32 to vector<256x1xf32>
    %124 = arith.divf %122, %123 : vector<256x1xf32>
    %cst_26 = arith.constant 9.99999974E-6 : f32
    %125 = vector.broadcast %cst_26 : f32 to vector<256x1xf32>
    %126 = arith.addf %124, %125 : vector<256x1xf32>
    %127 = math.rsqrt %126 : vector<256x1xf32>
    %128 = vector.broadcast %127 : vector<256x1xf32> to vector<256x32xf32>
    %129 = arith.mulf %119, %128 : vector<256x32xf32>
    %130 = vector.shape_cast %10 : vector<32xf32> to vector<1x32xf32>
    %131 = vector.broadcast %130 : vector<1x32xf32> to vector<256x32xf32>
    %132 = arith.mulf %129, %131 : vector<256x32xf32>
    %133 = vector.shape_cast %12 : vector<32xf32> to vector<1x32xf32>
    %134 = vector.broadcast %133 : vector<1x32xf32> to vector<256x32xf32>
    %135 = arith.addf %132, %134 : vector<256x32xf32>
    %c0_27 = arith.constant 0 : index
    %c0_28 = arith.constant 0 : index
    %136 = vector.load %arg6[%c0_27, %c0_28] : memref<32x128xf32, #tpu.memory_space<vmem>>, vector<32x128xf32>
    %cst_29 = arith.constant dense<0.000000e+00> : vector<256x128xf32>
    %137 = tpu.matmul %135, %136, %cst_29 {dimension_numbers = #tpu.dot_dimension_numbers<[1], [0], [0], [1], [0, 0, 1, 1], [], []>} : vector<256x32xf32>, vector<32x128xf32>, vector<256x128xf32> -> vector<256x128xf32>
    %138 = vector.shape_cast %14 : vector<128xf32> to vector<1x128xf32>
    %139 = vector.broadcast %138 : vector<1x128xf32> to vector<256x128xf32>
    %140 = arith.addf %137, %139 : vector<256x128xf32>
    %cst_30 = arith.constant 5.000000e-01 : f32
    %141 = vector.broadcast %cst_30 : f32 to vector<256x128xf32>
    %142 = arith.mulf %141, %140 : vector<256x128xf32>
    %cst_31 = arith.constant 0.707106769 : f32
    %143 = vector.broadcast %cst_31 : f32 to vector<256x128xf32>
    %144 = arith.mulf %140, %143 : vector<256x128xf32>
    %145 = math.erf %144 : vector<256x128xf32>
    %cst_32 = arith.constant 1.000000e+00 : f32
    %146 = vector.broadcast %cst_32 : f32 to vector<256x128xf32>
    %147 = arith.addf %146, %145 : vector<256x128xf32>
    %148 = arith.mulf %142, %147 : vector<256x128xf32>
    %c0_33 = arith.constant 0 : index
    %c0_34 = arith.constant 0 : index
    %149 = vector.load %arg7[%c0_33, %c0_34] : memref<128x32xf32, #tpu.memory_space<vmem>>, vector<128x32xf32>
    %cst_35 = arith.constant dense<0.000000e+00> : vector<256x32xf32>
    %150 = tpu.matmul %148, %149, %cst_35 {dimension_numbers = #tpu.dot_dimension_numbers<[1], [0], [0], [1], [0, 0, 1, 1], [], []>} : vector<256x128xf32>, vector<128x32xf32>, vector<256x32xf32> -> vector<256x32xf32>
    %151 = arith.addf %113, %150 : vector<256x32xf32>
    %152 = vector.shape_cast %16 : vector<32xf32> to vector<1x32xf32>
    %153 = vector.broadcast %152 : vector<1x32xf32> to vector<256x32xf32>
    %154 = arith.addf %151, %153 : vector<256x32xf32>
    %155 = vector.shape_cast %154 : vector<256x32xf32> to vector<32x8x32xf32>
    %156 = vector.extract_strided_slice %155 {offsets = [0, 0, 0], sizes = [32, 1, 32], strides = [1, 1, 1]} : vector<32x8x32xf32> to vector<32x1x32xf32>
    %157 = vector.shape_cast %156 : vector<32x1x32xf32> to vector<32x32xf32>
    %158 = vector.extract_strided_slice %155 {offsets = [0, 1, 0], sizes = [32, 1, 32], strides = [1, 1, 1]} : vector<32x8x32xf32> to vector<32x1x32xf32>
    %159 = vector.shape_cast %158 : vector<32x1x32xf32> to vector<32x32xf32>
    %160 = vector.extract_strided_slice %155 {offsets = [0, 2, 0], sizes = [32, 1, 32], strides = [1, 1, 1]} : vector<32x8x32xf32> to vector<32x1x32xf32>
    %161 = vector.shape_cast %160 : vector<32x1x32xf32> to vector<32x32xf32>
    %162 = vector.extract_strided_slice %155 {offsets = [0, 3, 0], sizes = [32, 1, 32], strides = [1, 1, 1]} : vector<32x8x32xf32> to vector<32x1x32xf32>
    %163 = vector.shape_cast %162 : vector<32x1x32xf32> to vector<32x32xf32>
    %164 = vector.extract_strided_slice %155 {offsets = [0, 4, 0], sizes = [32, 1, 32], strides = [1, 1, 1]} : vector<32x8x32xf32> to vector<32x1x32xf32>
    %165 = vector.shape_cast %164 : vector<32x1x32xf32> to vector<32x32xf32>
    %166 = vector.extract_strided_slice %155 {offsets = [0, 5, 0], sizes = [32, 1, 32], strides = [1, 1, 1]} : vector<32x8x32xf32> to vector<32x1x32xf32>
    %167 = vector.shape_cast %166 : vector<32x1x32xf32> to vector<32x32xf32>
    %168 = vector.extract_strided_slice %155 {offsets = [0, 6, 0], sizes = [32, 1, 32], strides = [1, 1, 1]} : vector<32x8x32xf32> to vector<32x1x32xf32>
    %169 = vector.shape_cast %168 : vector<32x1x32xf32> to vector<32x32xf32>
    %170 = vector.extract_strided_slice %155 {offsets = [0, 7, 0], sizes = [32, 1, 32], strides = [1, 1, 1]} : vector<32x8x32xf32> to vector<32x1x32xf32>
    %171 = vector.shape_cast %170 : vector<32x1x32xf32> to vector<32x32xf32>
    %172 = tpu.concatenate %157, %159, %161, %163, %165, %167, %169, %171 in 1 : vector<32x32xf32>, vector<32x32xf32>, vector<32x32xf32>, vector<32x32xf32>, vector<32x32xf32>, vector<32x32xf32>, vector<32x32xf32>, vector<32x32xf32> -> vector<32x256xf32>
    %173 = vector.extract_strided_slice %172 {offsets = [0, 0], sizes = [8, 256], strides = [1, 1]} : vector<32x256xf32> to vector<8x256xf32>
    %c0_36 = arith.constant 0 : index
    %c0_37 = arith.constant 0 : index
    %c0_38 = arith.constant 0 : index
    %174 = vector.load %arg8[%c0_36, %c0_37, %c0_38] : memref<1x16x512xf32, #tpu.memory_space<vmem>>, vector<1x8x256xf32>
    %175 = vector.shape_cast %174 : vector<1x8x256xf32> to vector<8x256xf32>
    %176 = vector.shape_cast %173 : vector<8x256xf32> to vector<1x8x256xf32>
    tpu.vector_store %arg8[%c0_36, %c0_37, %c0_38], %176 {strides = array<i32>} : memref<1x16x512xf32, #tpu.memory_space<vmem>>, vector<1x8x256xf32>,
    %177 = vector.extract_strided_slice %172 {offsets = [8, 0], sizes = [8, 256], strides = [1, 1]} : vector<32x256xf32> to vector<8x256xf32>
    %c0_39 = arith.constant 0 : index
    %c0_40 = arith.constant 0 : index
    %c256 = arith.constant 256 : index
    %178 = vector.load %arg8[%c0_39, %c0_40, %c256] : memref<1x16x512xf32, #tpu.memory_space<vmem>>, vector<1x8x256xf32>
    %179 = vector.shape_cast %178 : vector<1x8x256xf32> to vector<8x256xf32>
    %180 = vector.shape_cast %177 : vector<8x256xf32> to vector<1x8x256xf32>
    tpu.vector_store %arg8[%c0_39, %c0_40, %c256], %180 {strides = array<i32>} : memref<1x16x512xf32, #tpu.memory_space<vmem>>, vector<1x8x256xf32>,
    %181 = vector.extract_strided_slice %172 {offsets = [16, 0], sizes = [8, 256], strides = [1, 1]} : vector<32x256xf32> to vector<8x256xf32>
    %c0_41 = arith.constant 0 : index
    %c8 = arith.constant 8 : index
    %c0_42 = arith.constant 0 : index
    %182 = vector.load %arg8[%c0_41, %c8, %c0_42] : memref<1x16x512xf32, #tpu.memory_space<vmem>>, vector<1x8x256xf32>
    %183 = vector.shape_cast %182 : vector<1x8x256xf32> to vector<8x256xf32>
    %184 = vector.shape_cast %181 : vector<8x256xf32> to vector<1x8x256xf32>
    tpu.vector_store %arg8[%c0_41, %c8, %c0_42], %184 {strides = array<i32>} : memref<1x16x512xf32, #tpu.memory_space<vmem>>, vector<1x8x256xf32>,
    %185 = vector.extract_strided_slice %172 {offsets = [24, 0], sizes = [8, 256], strides = [1, 1]} : vector<32x256xf32> to vector<8x256xf32>
    %c0_43 = arith.constant 0 : index
    %c8_44 = arith.constant 8 : index
    %c256_45 = arith.constant 256 : index
    %186 = vector.load %arg8[%c0_43, %c8_44, %c256_45] : memref<1x16x512xf32, #tpu.memory_space<vmem>>, vector<1x8x256xf32>
    %187 = vector.shape_cast %186 : vector<1x8x256xf32> to vector<8x256xf32>
    %188 = vector.shape_cast %185 : vector<8x256xf32> to vector<1x8x256xf32>
    tpu.vector_store %arg8[%c0_43, %c8_44, %c256_45], %188 {strides = array<i32>} : memref<1x16x512xf32, #tpu.memory_space<vmem>>, vector<1x8x256xf32>,
    return
  }
  func.func @transform_0(%arg0: i32) -> (i32, i32, i32, i32) {
    %c0_i32 = arith.constant 0 : i32
    %c0_i32_0 = arith.constant 0 : i32
    %c0_i32_1 = arith.constant 0 : i32
    %c0_i32_2 = arith.constant 0 : i32
    return %arg0, %c0_i32, %c0_i32_0, %c0_i32_1 : i32, i32, i32, i32
  }
  func.func @transform_1(%arg0: i32) -> (i32, i32) {
    %c0_i32 = arith.constant 0 : i32
    %c0_i32_0 = arith.constant 0 : i32
    %c0_i32_1 = arith.constant 0 : i32
    return %c0_i32, %c0_i32_0 : i32, i32
  }
  func.func @transform_2(%arg0: i32) -> (i32, i32) {
    %c0_i32 = arith.constant 0 : i32
    %c0_i32_0 = arith.constant 0 : i32
    %c0_i32_1 = arith.constant 0 : i32
    return %c0_i32, %c0_i32_0 : i32, i32
  }
  func.func @transform_3(%arg0: i32) -> (i32, i32, i32) {
    %c0_i32 = arith.constant 0 : i32
    %c0_i32_0 = arith.constant 0 : i32
    %c0_i32_1 = arith.constant 0 : i32
    %c0_i32_2 = arith.constant 0 : i32
    return %c0_i32, %c0_i32_0, %c0_i32_1 : i32, i32, i32
  }
  func.func @transform_4(%arg0: i32) -> (i32, i32) {
    %c0_i32 = arith.constant 0 : i32
    %c0_i32_0 = arith.constant 0 : i32
    %c0_i32_1 = arith.constant 0 : i32
    return %c0_i32, %c0_i32_0 : i32, i32
  }
  func.func @transform_5(%arg0: i32) -> (i32, i32) {
    %c0_i32 = arith.constant 0 : i32
    %c0_i32_0 = arith.constant 0 : i32
    %c0_i32_1 = arith.constant 0 : i32
    return %c0_i32, %c0_i32_0 : i32, i32
  }
  func.func @transform_6(%arg0: i32) -> (i32, i32) {
    %c0_i32 = arith.constant 0 : i32
    %c0_i32_0 = arith.constant 0 : i32
    %c0_i32_1 = arith.constant 0 : i32
    return %c0_i32, %c0_i32_0 : i32, i32
  }
  func.func @transform_7(%arg0: i32) -> (i32, i32, i32) {
    %c0_i32 = arith.constant 0 : i32
    %c0_i32_0 = arith.constant 0 : i32
    %c0_i32_1 = arith.constant 0 : i32
    return %arg0, %c0_i32, %c0_i32_0 : i32, i32, i32
  }
}

</mosaic_0001>

<llo_original>
// kernel: tpu_custom_call.1
$region0: #{tpu_custom_call.1}
  #allocation0 [shape = 'u32[]', space=smem, size = 0x4, offset = 0x4, fixed_abs, tag = 'smem constant byte address 0x4 - core index']
  #allocation1 [shape = 'u32[144,128]{1,0:T(1,128)}', space=vmem, size = 0x12000, scoped, tag = 'internal scratch']
  %s0 = inlined_call_operand.hbm [shape: f32[2,16,16,32], index: 0, kind: input, shape index: {}]
  %s1 = inlined_call_operand.vmem [shape: f32[8,128], index: 1, kind: input, shape index: {}]
  %s2 = inlined_call_operand.vmem [shape: f32[32,96], index: 2, kind: input, shape index: {}]
  %s3 = inlined_call_operand.hbm [shape: f32[4,64,64], index: 3, kind: input, shape index: {}]
  %s4 = inlined_call_operand.vmem [shape: f32[32,32], index: 4, kind: input, shape index: {}]
  %s5 = inlined_call_operand.vmem [shape: f32[32,128], index: 5, kind: input, shape index: {}]
  %s6 = inlined_call_operand.vmem [shape: f32[128,32], index: 6, kind: input, shape index: {}]
  %s7 = inlined_call_operand.hbm [shape: f32[2,16,512], index: 7, kind: output, shape index: {}]
  %s8 = sld [smem:[#allocation0]]
  $region69: #{tpu_custom_call.1} parent=0
    _
  %s10 = ssub.s32 1, %s8
  %s11 = scalar_select 0, %s10, %s8
  $region1: #{tpu_custom_call.1} parent=0
    #allocation2 [shape = 'u8[262144]{0}', space=vmem, size = 0x40000, scoped, tag = 'input window, operand 0']
    #allocation3 [shape = 's32[2]{0}', space=sflag, size = 0x8, scoped, tag = 'scoped memory for tpu_custom_call.1']
    #allocation4 [shape = 's32[2]{0}', space=sflag, size = 0x8, scoped, tag = 'scoped memory for tpu_custom_call.1']
    #allocation5 [shape = 'u8[131072]{0}', space=vmem, size = 0x20000, scoped, tag = 'input window, operand 3, single buffered']
    #allocation6 [shape = 's32[1]{0}', space=sflag, size = 0x4, scoped, tag = 'scoped memory for tpu_custom_call.1']
    #allocation7 [shape = 'u8[65536]{0}', space=vmem, size = 0x10000, scoped, tag = 'output window, operand 0']
    %12 = vsyncpa [#allocation3], 0
    %s13 = scalar_lea.sflag [#allocation3], 1
    %14 = vsyncpa %s13, 0
    %15 = vsyncpa [#allocation6], 0
    %16 = vsyncpa [#allocation4], 0
    %s17 = scalar_lea.sflag [#allocation4], 1
    %18 = vsyncpa %s17, 0
    loop: start=0, step=1, limit=4
    $region2: #{tpu_custom_call.1} parent=1 // loop_pre_header
      _
    $region3: #{tpu_custom_call.1} parent=1 // loop_header
      %s20 = sphi 0, %s24
      %p21 = scmp.ge.s32.totalorder %s20, 4
      %s30 = sphi 0, %s32
      %s33 = sphi 0, %s30
      %s34 = sphi 0, %s33
      %s50 = sphi 0, %s34
      %s54 = sphi 0, %s54
      %s56 = sphi 0, %s54
      %s57 = sphi 0, %s56
      %s71 = sphi 0, %s57
      %s75 = sphi 0, %s75
      %s77 = sphi 0, %s75
      %s78 = sphi 0, %s77
      %s92 = sphi 0, %s78
      %s96 = sphi 0, %s96
      %s98 = sphi 0, %s96
      %s99 = sphi 0, %s98
      %s113 = sphi 0, %s99
      %s117 = sphi 0, %s117
      %s119 = sphi 0, %s117
      %s120 = sphi 0, %s119
      %s134 = sphi 0, %s120
      %s138 = sphi 0, %s138
      %s140 = sphi 0, %s138
      %s141 = sphi 0, %s140
      %s155 = sphi 0, %s141
      %s159 = sphi 0, %s159
      %s161 = sphi 0, %s159
      %s162 = sphi 0, %s161
      %s176 = sphi 0, %s162
      %s182 = sphi 0, %s184
      %s185 = sphi 0, %s182
      %s186 = sphi 0, %s185
      %s202 = sphi 0, %s186
    $region4: #{tpu_custom_call.1} parent=1 // loop_header_branch
      %23 = sbr.rel (%p21) target = $region8
    $region5: #{tpu_custom_call.1} parent=1 // loop_body
      %s25 = ssub.s32 %s20, 1
      %s26 = ssub.s32 %s20, 2
      %s27 = sadd.s32 %s20, 1
      %s28 = ssub.s32 %s20, %s27
      %p29 = scmp.eq.s32.totalorder %s28, 0
      %s31 = sadd.s32 %s30, 1
      %s32 = scalar_select %p29, %s30, %s31
      %p35 = pneg %p29
      %p36 = scmp.eq.s32.totalorder %s20, 1
      %p37 = por %p35, %p36
      %p38 = scmp.ne.s32.totalorder %s30, %s33
      %p39 = scmp.eq.s32.totalorder %s20, 0
      %p40 = por %p38, %p39
      %p41 = scmp.ne.s32.totalorder %s30, %s33
      %p42 = scmp.eq.s32.totalorder %s25, 1
      %p43 = por %p41, %p42
      %p44 = scmp.ne.s32.totalorder %s33, %s34
      %p45 = scmp.eq.s32.totalorder %s25, 0
      %p46 = por %p44, %p45
      %p47 = scmp.ne.s32.totalorder %s33, %s34
      %p48 = scmp.eq.s32.totalorder %s26, 1
      %p49 = por %p47, %p48
      %p51 = scmp.ne.s32.totalorder %s34, %s50
      %p52 = scmp.eq.s32.totalorder %s26, 0
      %p53 = por %p51, %p52
      %s55 = sadd.s32 %s54, 1
      %p58 = scmp.eq.s32.totalorder %s20, 1
      %p59 = scmp.ne.s32.totalorder %s54, %s56
      %p60 = scmp.eq.s32.totalorder %s20, 0
      %p61 = por %p59, %p60
      %p62 = scmp.ne.s32.totalorder %s54, %s56
      %p63 = scmp.eq.s32.totalorder %s25, 1
      %p64 = por %p62, %p63
      %p65 = scmp.ne.s32.totalorder %s56, %s57
      %p66 = scmp.eq.s32.totalorder %s25, 0
      %p67 = por %p65, %p66
      %p68 = scmp.ne.s32.totalorder %s56, %s57
      %p69 = scmp.eq.s32.totalorder %s26, 1
      %p70 = por %p68, %p69
      %p72 = scmp.ne.s32.totalorder %s57, %s71
      %p73 = scmp.eq.s32.totalorder %s26, 0
      %p74 = por %p72, %p73
      %s76 = sadd.s32 %s75, 1
      %p79 = scmp.eq.s32.totalorder %s20, 1
      %p80 = scmp.ne.s32.totalorder %s75, %s77
      %p81 = scmp.eq.s32.totalorder %s20, 0
      %p82 = por %p80, %p81
      %p83 = scmp.ne.s32.totalorder %s75, %s77
      %p84 = scmp.eq.s32.totalorder %s25, 1
      %p85 = por %p83, %p84
      %p86 = scmp.ne.s32.totalorder %s77, %s78
      %p87 = scmp.eq.s32.totalorder %s25, 0
      %p88 = por %p86, %p87
      %p89 = scmp.ne.s32.totalorder %s77, %s78
      %p90 = scmp.eq.s32.totalorder %s26, 1
      %p91 = por %p89, %p90
      %p93 = scmp.ne.s32.totalorder %s78, %s92
      %p94 = scmp.eq.s32.totalorder %s26, 0
      %p95 = por %p93, %p94
      %s97 = sadd.s32 %s96, 1
      %p100 = scmp.eq.s32.totalorder %s20, 1
      %p101 = scmp.ne.s32.totalorder %s96, %s98
      %p102 = scmp.eq.s32.totalorder %s20, 0
      %p103 = por %p101, %p102
      %p104 = scmp.ne.s32.totalorder %s96, %s98
      %p105 = scmp.eq.s32.totalorder %s25, 1
      %p106 = por %p104, %p105
      %p107 = scmp.ne.s32.totalorder %s98, %s99
      %p108 = scmp.eq.s32.totalorder %s25, 0
      %p109 = por %p107, %p108
      %p110 = scmp.ne.s32.totalorder %s98, %s99
      %p111 = scmp.eq.s32.totalorder %s26, 1
      %p112 = por %p110, %p111
      %p114 = scmp.ne.s32.totalorder %s99, %s113
      %p115 = scmp.eq.s32.totalorder %s26, 0
      %p116 = por %p114, %p115
      %s118 = sadd.s32 %s117, 1
      %p121 = scmp.eq.s32.totalorder %s20, 1
      %p122 = scmp.ne.s32.totalorder %s117, %s119
      %p123 = scmp.eq.s32.totalorder %s20, 0
      %p124 = por %p122, %p123
      %p125 = scmp.ne.s32.totalorder %s117, %s119
      %p126 = scmp.eq.s32.totalorder %s25, 1
      %p127 = por %p125, %p126
      %p128 = scmp.ne.s32.totalorder %s119, %s120
      %p129 = scmp.eq.s32.totalorder %s25, 0
      %p130 = por %p128, %p129
      %p131 = scmp.ne.s32.totalorder %s119, %s120
      %p132 = scmp.eq.s32.totalorder %s26, 1
      %p133 = por %p131, %p132
      %p135 = scmp.ne.s32.totalorder %s120, %s134
      %p136 = scmp.eq.s32.totalorder %s26, 0
      %p137 = por %p135, %p136
      %s139 = sadd.s32 %s138, 1
      %p142 = scmp.eq.s32.totalorder %s20, 1
      %p143 = scmp.ne.s32.totalorder %s138, %s140
      %p144 = scmp.eq.s32.totalorder %s20, 0
      %p145 = por %p143, %p144
      %p146 = scmp.ne.s32.totalorder %s138, %s140
      %p147 = scmp.eq.s32.totalorder %s25, 1
      %p148 = por %p146, %p147
      %p149 = scmp.ne.s32.totalorder %s140, %s141
      %p150 = scmp.eq.s32.totalorder %s25, 0
      %p151 = por %p149, %p150
      %p152 = scmp.ne.s32.totalorder %s140, %s141
      %p153 = scmp.eq.s32.totalorder %s26, 1
      %p154 = por %p152, %p153
      %p156 = scmp.ne.s32.totalorder %s141, %s155
      %p157 = scmp.eq.s32.totalorder %s26, 0
      %p158 = por %p156, %p157
      %s160 = sadd.s32 %s159, 1
      %p163 = scmp.eq.s32.totalorder %s20, 1
      %p164 = scmp.ne.s32.totalorder %s159, %s161
      %p165 = scmp.eq.s32.totalorder %s20, 0
      %p166 = por %p164, %p165
      %p167 = scmp.ne.s32.totalorder %s159, %s161
      %p168 = scmp.eq.s32.totalorder %s25, 1
      %p169 = por %p167, %p168
      %p170 = scmp.ne.s32.totalorder %s161, %s162
      %p171 = scmp.eq.s32.totalorder %s25, 0
      %p172 = por %p170, %p171
      %p173 = scmp.ne.s32.totalorder %s161, %s162
      %p174 = scmp.eq.s32.totalorder %s26, 1
      %p175 = por %p173, %p174
      %p177 = scmp.ne.s32.totalorder %s162, %s176
      %p178 = scmp.eq.s32.totalorder %s26, 0
      %p179 = por %p177, %p178
      %s180 = ssub.s32 %s20, %s27
      %p181 = scmp.eq.s32.totalorder %s180, 0
      %s183 = sadd.s32 %s182, 1
      %s184 = scalar_select %p181, %s182, %s183
      %p187 = pneg %p181
      %p188 = scmp.eq.s32.totalorder %s20, 1
      %p189 = por %p187, %p188
      %p190 = scmp.ne.s32.totalorder %s182, %s185
      %p191 = scmp.eq.s32.totalorder %s20, 0
      %p192 = por %p190, %p191
      %p193 = scmp.ne.s32.totalorder %s182, %s185
      %p194 = scmp.eq.s32.totalorder %s25, 1
      %p195 = por %p193, %p194
      %p196 = scmp.ne.s32.totalorder %s185, %s186
      %p197 = scmp.eq.s32.totalorder %s25, 0
      %p198 = por %p196, %p197
      %p199 = scmp.ne.s32.totalorder %s185, %s186
      %p200 = scmp.eq.s32.totalorder %s26, 1
      %p201 = por %p199, %p200
      %p203 = scmp.ne.s32.totalorder %s186, %s202
      %p204 = scmp.eq.s32.totalorder %s26, 0
      %p205 = por %p203, %p204
      %p206 = scmp.le.s32.totalorder 1, %s20
      %p207 = scmp.lt.s32.totalorder %s20, 3
      %p208 = pnand %p206, %p207
      %p209 = pneg %p208
      // Predicated region
      $region9: #{tpu_custom_call.1} parent=5 // pred_check
        _
      $region10: #{tpu_custom_call.1} parent=5 // pred_check_branch
        %211 = sbr.rel (%p208) target = $region12
      $region11: #{tpu_custom_call.1} parent=5 // pred_region
        %s212 = ssub.s32 %s20, 1
        // Predicated region
        $region13: #{tpu_custom_call.1} parent=11 // pred_check
          %p213 = pneg %p67
        $region14: #{tpu_custom_call.1} parent=11 // pred_check_branch
          %215 = sbr.rel (%p213) target = $region16
        $region15: #{tpu_custom_call.1} parent=11 // pred_region
          _
        $region16: #{tpu_custom_call.1} parent=11 // pred_fallthru
          _
        // Predicated region
        $region17: #{tpu_custom_call.1} parent=11 // pred_check
          %p216 = pneg %p88
        $region18: #{tpu_custom_call.1} parent=11 // pred_check_branch
          %218 = sbr.rel (%p216) target = $region20
        $region19: #{tpu_custom_call.1} parent=11 // pred_region
          _
        $region20: #{tpu_custom_call.1} parent=11 // pred_fallthru
          _
        // Predicated region
        $region21: #{tpu_custom_call.1} parent=11 // pred_check
          %p219 = pneg %p109
        $region22: #{tpu_custom_call.1} parent=11 // pred_check_branch
          %221 = sbr.rel (%p219) target = $region24
        $region23: #{tpu_custom_call.1} parent=11 // pred_region
          %s223 = ssub.s32 4096, 4096
          %224 = vsyncadd [#allocation6], %s223
          %s225 = sshll.u32 [#allocation5], 4
          %s226 = int_to_ptr.vmem [resolvable:$true] %s225
          %231 = dma.hbm_to_vmem [thread:$0]  %s3, 4096, %s226, [#allocation6], 128, 128, 8
        $region24: #{tpu_custom_call.1} parent=11 // pred_fallthru
          _
        // Predicated region
        $region25: #{tpu_custom_call.1} parent=11 // pred_check
          %p232 = pneg %p130
        $region26: #{tpu_custom_call.1} parent=11 // pred_check_branch
          %234 = sbr.rel (%p232) target = $region28
        $region27: #{tpu_custom_call.1} parent=11 // pred_region
          _
        $region28: #{tpu_custom_call.1} parent=11 // pred_fallthru
          _
        // Predicated region
        $region29: #{tpu_custom_call.1} parent=11 // pred_check
          %p235 = pneg %p151
        $region30: #{tpu_custom_call.1} parent=11 // pred_check_branch
          %237 = sbr.rel (%p235) target = $region32
        $region31: #{tpu_custom_call.1} parent=11 // pred_region
          _
        $region32: #{tpu_custom_call.1} parent=11 // pred_fallthru
          _
        // Predicated region
        $region33: #{tpu_custom_call.1} parent=11 // pred_check
          %p238 = pneg %p172
        $region34: #{tpu_custom_call.1} parent=11 // pred_check_branch
          %240 = sbr.rel (%p238) target = $region36
        $region35: #{tpu_custom_call.1} parent=11 // pred_region
          _
        $region36: #{tpu_custom_call.1} parent=11 // pred_fallthru
          _
      $region12: #{tpu_custom_call.1} parent=5 // pred_fallthru
        _
      %p241 = scmp.lt.s32.totalorder %s20, 2
      // Predicated region
      $region37: #{tpu_custom_call.1} parent=5 // pred_check
        %p242 = pneg %p241
      $region38: #{tpu_custom_call.1} parent=5 // pred_check_branch
        %244 = sbr.rel (%p242) target = $region40
      $region39: #{tpu_custom_call.1} parent=5 // pred_region
        // Predicated region
        $region41: #{tpu_custom_call.1} parent=39 // pred_check
          %p245 = pneg %p40
        $region42: #{tpu_custom_call.1} parent=39 // pred_check_branch
          %247 = sbr.rel (%p245) target = $region44
        $region43: #{tpu_custom_call.1} parent=39 // pred_region
          %s248 = sand.u32 %s30, 1
          %s249 = scalar_lea.sflag [#allocation3], %s248
          %s250 = sand.u32 %s30, 1
          %s251 = smul.addr %s250, 256
          %s252 = scalar_lea.vmem [#allocation2], %s251
          %s254 = ssub.s32 4096, 4096
          %255 = vsyncadd %s249, %s254
          %s256 = smul.addr %s20, 32
          %s257 = smul.addr %s256, 128
          %s258 = scalar_lea.hbm %s0, %s257
          %s259 = sshll.u32 %s252, 4
          %s260 = int_to_ptr.vmem [resolvable:$true] %s259
          %265 = dma.hbm_to_vmem [thread:$0]  %s258, 4096, %s260, %s249, 128, 128, 8
        $region44: #{tpu_custom_call.1} parent=39 // pred_fallthru
          _
      $region40: #{tpu_custom_call.1} parent=5 // pred_fallthru
        _
      %p266 = scmp.le.s32.totalorder 1, %s20
      %p267 = scmp.lt.s32.totalorder %s20, 3
      %p268 = pnand %p266, %p267
      %p269 = pneg %p268
      // Predicated region
      $region45: #{tpu_custom_call.1} parent=5 // pred_check
        _
      $region46: #{tpu_custom_call.1} parent=5 // pred_check_branch
        %271 = sbr.rel (%p268) target = $region48
      $region47: #{tpu_custom_call.1} parent=5 // pred_region
        %s272 = ssub.s32 %s20, 1
        %s273 = sand.u32 %s33, 1
        %s274 = scalar_lea.sflag [#allocation3], %s273
        %s275 = sand.u32 %s33, 1
        %s276 = smul.addr %s275, 256
        %s277 = scalar_lea.vmem [#allocation2], %s276
        // Predicated region
        $region49: #{tpu_custom_call.1} parent=47 // pred_check
          %p278 = pneg %p46
        $region50: #{tpu_custom_call.1} parent=47 // pred_check_branch
          %280 = sbr.rel (%p278) target = $region52
        $region51: #{tpu_custom_call.1} parent=47 // pred_region
          %281 = dma.done %s274, 4096
        $region52: #{tpu_custom_call.1} parent=47 // pred_fallthru
          _
        // Predicated region
        $region53: #{tpu_custom_call.1} parent=47 // pred_check
          %p282 = pneg %p109
        $region54: #{tpu_custom_call.1} parent=47 // pred_check_branch
          %284 = sbr.rel (%p282) target = $region56
        $region55: #{tpu_custom_call.1} parent=47 // pred_region
          %285 = dma.done [#allocation6], 4096
        $region56: #{tpu_custom_call.1} parent=47 // pred_fallthru
          _
        %s286 = sand.u32 %s33, 1
        %s287 = scalar_lea.sflag [#allocation3], %s286
        %s288 = sand.u32 %s33, 1
        %s289 = smul.addr %s288, 256
        %s290 = scalar_lea.vmem [#allocation2], %s289
        %p291 = pneg %p46
        %p292 = pneg %p43
        %p293 = pneg %p67
        %p294 = pneg %p64
        %p295 = pneg %p88
        %p296 = pneg %p85
        %p297 = pneg %p109
        %p298 = pneg %p106
        %p299 = pneg %p130
        %p300 = pneg %p127
        %p301 = pneg %p151
        %p302 = pneg %p148
        %p303 = pneg %p172
        %p304 = pneg %p169
        %p305 = pneg %p198
        %p306 = pneg %p195
        %s307 = sand.u32 %s185, 1
        %s308 = scalar_lea.sflag [#allocation4], %s307
        %s309 = sand.u32 %s185, 1
        %s310 = smul.addr %s309, 64
        %s311 = scalar_lea.vmem [#allocation7], %s310
        %v312 = vld [vmem:[%s1] sm:$0xff]
        %v313 = vld [vmem:[%s277] sm:$0xff]
        %v314 = vld [vmem:[%s277 + $0x8] sm:$0xff]
        %v315 = vld [vmem:[%s277 + $0x10] sm:$0xff]
        %v316 = vld [vmem:[%s277 + $0x18] sm:$0xff]
        %v317 = vld [vmem:[%s277 + $0x20] sm:$0xff]
        %v318 = vld [vmem:[%s277 + $0x28] sm:$0xff]
        %v319 = vld [vmem:[%s277 + $0x30] sm:$0xff]
        %v320 = vld [vmem:[%s277 + $0x38] sm:$0xff]
        %v321 = vld [vmem:[%s277 + $0x40] sm:$0xff]
        %v322 = vld [vmem:[%s277 + $0x48] sm:$0xff]
        %v323 = vld [vmem:[%s277 + $0x50] sm:$0xff]
        %v324 = vld [vmem:[%s277 + $0x58] sm:$0xff]
        %v325 = vld [vmem:[%s277 + $0x60] sm:$0xff]
        %v326 = vld [vmem:[%s277 + $0x68] sm:$0xff]
        %v327 = vld [vmem:[%s277 + $0x70] sm:$0xff]
        %v328 = vld [vmem:[%s277 + $0x78] sm:$0xff]
        %v329 = vld [vmem:[%s277 + $0x80] sm:$0xff]
        %v330 = vld [vmem:[%s277 + $0x88] sm:$0xff]
        %v331 = vld [vmem:[%s277 + $0x90] sm:$0xff]
        %v332 = vld [vmem:[%s277 + $0x98] sm:$0xff]
        %v333 = vld [vmem:[%s277 + $0xa0] sm:$0xff]
        %v334 = vld [vmem:[%s277 + $0xa8] sm:$0xff]
        %v335 = vld [vmem:[%s277 + $0xb0] sm:$0xff]
        %v336 = vld [vmem:[%s277 + $0xb8] sm:$0xff]
        %v337 = vld [vmem:[%s277 + $0xc0] sm:$0xff]
        %v338 = vld [vmem:[%s277 + $0xc8] sm:$0xff]
        %v339 = vld [vmem:[%s277 + $0xd0] sm:$0xff]
        %v340 = vld [vmem:[%s277 + $0xd8] sm:$0xff]
        %v341 = vld [vmem:[%s277 + $0xe0] sm:$0xff]
        %v342 = vld [vmem:[%s277 + $0xe8] sm:$0xff]
        %v343 = vld [vmem:[%s277 + $0xf0] sm:$0xff]
        %v344 = vld [vmem:[%s277 + $0xf8] sm:$0xff]
        %vm345 = vcmask 261120
        %v346 = vsel %vm345, %v313, 0.0
        %347 = vadd.xlane.f32.xlu0 %v346
        %v348 = vpop.xlane.xlu0 %347
        %v349 = vsel %vm345, %v315, 0.0
        %350 = vadd.xlane.f32.xlu0 %v349
        %v351 = vpop.xlane.xlu0 %350
        %v352 = vsel %vm345, %v317, 0.0
        %353 = vadd.xlane.f32.xlu0 %v352
        %v354 = vpop.xlane.xlu0 %353
        %v355 = vsel %vm345, %v319, 0.0
        %356 = vadd.xlane.f32.xlu0 %v355
        %v357 = vpop.xlane.xlu0 %356
        %v358 = vsel %vm345, %v321, 0.0
        %359 = vadd.xlane.f32.xlu0 %v358
        %v360 = vpop.xlane.xlu0 %359
        %v361 = vsel %vm345, %v323, 0.0
        %362 = vadd.xlane.f32.xlu0 %v361
        %v363 = vpop.xlane.xlu0 %362
        %v364 = vsel %vm345, %v325, 0.0
        %365 = vadd.xlane.f32.xlu0 %v364
        %v366 = vpop.xlane.xlu0 %365
        %v367 = vsel %vm345, %v327, 0.0
        %368 = vadd.xlane.f32.xlu0 %v367
        %v369 = vpop.xlane.xlu0 %368
        %v370 = vsel %vm345, %v314, 0.0
        %371 = vadd.xlane.f32.xlu0 %v370
        %v372 = vpop.xlane.xlu0 %371
        %v373 = vsel %vm345, %v316, 0.0
        %374 = vadd.xlane.f32.xlu0 %v373
        %v375 = vpop.xlane.xlu0 %374
        %v376 = vsel %vm345, %v318, 0.0
        %377 = vadd.xlane.f32.xlu0 %v376
        %v378 = vpop.xlane.xlu0 %377
        %v379 = vsel %vm345, %v320, 0.0
        %380 = vadd.xlane.f32.xlu0 %v379
        %v381 = vpop.xlane.xlu0 %380
        %v382 = vsel %vm345, %v322, 0.0
        %383 = vadd.xlane.f32.xlu0 %v382
        %v384 = vpop.xlane.xlu0 %383
        %v385 = vsel %vm345, %v324, 0.0
        %386 = vadd.xlane.f32.xlu0 %v385
        %v387 = vpop.xlane.xlu0 %386
        %v388 = vsel %vm345, %v326, 0.0
        %389 = vadd.xlane.f32.xlu0 %v388
        %v390 = vpop.xlane.xlu0 %389
        %v391 = vsel %vm345, %v328, 0.0
        %392 = vadd.xlane.f32.xlu0 %v391
        %v393 = vpop.xlane.xlu0 %392
        %v394 = vsel %vm345, %v329, 0.0
        %395 = vadd.xlane.f32.xlu0 %v394
        %v396 = vpop.xlane.xlu0 %395
        %v397 = vsel %vm345, %v331, 0.0
        %398 = vadd.xlane.f32.xlu0 %v397
        %v399 = vpop.xlane.xlu0 %398
        %v400 = vsel %vm345, %v333, 0.0
        %401 = vadd.xlane.f32.xlu0 %v400
        %v402 = vpop.xlane.xlu0 %401
        %v403 = vsel %vm345, %v335, 0.0
        %404 = vadd.xlane.f32.xlu0 %v403
        %v405 = vpop.xlane.xlu0 %404
        %v406 = vsel %vm345, %v337, 0.0
        %407 = vadd.xlane.f32.xlu0 %v406
        %v408 = vpop.xlane.xlu0 %407
        %v409 = vsel %vm345, %v339, 0.0
        %410 = vadd.xlane.f32.xlu0 %v409
        %v411 = vpop.xlane.xlu0 %410
        %v412 = vsel %vm345, %v341, 0.0
        %413 = vadd.xlane.f32.xlu0 %v412
        %v414 = vpop.xlane.xlu0 %413
        %v415 = vsel %vm345, %v343, 0.0
        %416 = vadd.xlane.f32.xlu0 %v415
        %v417 = vpop.xlane.xlu0 %416
        %v418 = vsel %vm345, %v330, 0.0
        %419 = vadd.xlane.f32.xlu0 %v418
        %v420 = vpop.xlane.xlu0 %419
        %v421 = vsel %vm345, %v332, 0.0
        %422 = vadd.xlane.f32.xlu0 %v421
        %v423 = vpop.xlane.xlu0 %422
        %v424 = vsel %vm345, %v334, 0.0
        %425 = vadd.xlane.f32.xlu0 %v424
        %v426 = vpop.xlane.xlu0 %425
        %v427 = vsel %vm345, %v336, 0.0
        %428 = vadd.xlane.f32.xlu0 %v427
        %v429 = vpop.xlane.xlu0 %428
        %v430 = vsel %vm345, %v338, 0.0
        %431 = vadd.xlane.f32.xlu0 %v430
        %v432 = vpop.xlane.xlu0 %431
        %v433 = vsel %vm345, %v340, 0.0
        %434 = vadd.xlane.f32.xlu0 %v433
        %v435 = vpop.xlane.xlu0 %434
        %v436 = vsel %vm345, %v342, 0.0
        %437 = vadd.xlane.f32.xlu0 %v436
        %v438 = vpop.xlane.xlu0 %437
        %v439 = vsel %vm345, %v344, 0.0
        %440 = vadd.xlane.f32.xlu0 %v439
        %v441 = vpop.xlane.xlu0 %440
        %v442 = vrcp.pop 32.0
        %v443 = vmul.f32 %v348, %v442
        %v444 = vmul.f32 %v351, %v442
        %v445 = vmul.f32 %v354, %v442
        %v446 = vmul.f32 %v357, %v442
        %v447 = vmul.f32 %v360, %v442
        %v448 = vmul.f32 %v363, %v442
        %v449 = vmul.f32 %v366, %v442
        %v450 = vmul.f32 %v369, %v442
        %v451 = vmul.f32 %v372, %v442
        %v452 = vmul.f32 %v375, %v442
        %v453 = vmul.f32 %v378, %v442
        %v454 = vmul.f32 %v381, %v442
        %v455 = vmul.f32 %v384, %v442
        %v456 = vmul.f32 %v387, %v442
        %v457 = vmul.f32 %v390, %v442
        %v458 = vmul.f32 %v393, %v442
        %v459 = vmul.f32 %v396, %v442
        %v460 = vmul.f32 %v399, %v442
        %v461 = vmul.f32 %v402, %v442
        %v462 = vmul.f32 %v405, %v442
        %v463 = vmul.f32 %v408, %v442
        %v464 = vmul.f32 %v411, %v442
        %v465 = vmul.f32 %v414, %v442
        %v466 = vmul.f32 %v417, %v442
        %v467 = vmul.f32 %v420, %v442
        %v468 = vmul.f32 %v423, %v442
        %v469 = vmul.f32 %v426, %v442
        %v470 = vmul.f32 %v429, %v442
        %v471 = vmul.f32 %v432, %v442
        %v472 = vmul.f32 %v435, %v442
        %v473 = vmul.f32 %v438, %v442
        %v474 = vmul.f32 %v441, %v442
        %v475 = vsub.f32 %v313, %v443
        %v476 = vsub.f32 %v315, %v444
        %v477 = vsub.f32 %v317, %v445
        %v478 = vsub.f32 %v319, %v446
        %v479 = vsub.f32 %v321, %v447
        %v480 = vsub.f32 %v323, %v448
        %v481 = vsub.f32 %v325, %v449
        %v482 = vsub.f32 %v327, %v450
        %v483 = vsub.f32 %v314, %v451
        %v484 = vsub.f32 %v316, %v452
        %v485 = vsub.f32 %v318, %v453
        %v486 = vsub.f32 %v320, %v454
        %v487 = vsub.f32 %v322, %v455
        %v488 = vsub.f32 %v324, %v456
        %v489 = vsub.f32 %v326, %v457
        %v490 = vsub.f32 %v328, %v458
        %v491 = vsub.f32 %v329, %v459
        %v492 = vsub.f32 %v331, %v460
        %v493 = vsub.f32 %v333, %v461
        %v494 = vsub.f32 %v335, %v462
        %v495 = vsub.f32 %v337, %v463
        %v496 = vsub.f32 %v339, %v464
        %v497 = vsub.f32 %v341, %v465
        %v498 = vsub.f32 %v343, %v466
        %v499 = vsub.f32 %v330, %v467
        %v500 = vsub.f32 %v332, %v468
        %v501 = vsub.f32 %v334, %v469
        %v502 = vsub.f32 %v336, %v470
        %v503 = vsub.f32 %v338, %v471
        %v504 = vsub.f32 %v340, %v472
        %v505 = vsub.f32 %v342, %v473
        %v506 = vsub.f32 %v344, %v474
        %v507 = vmul.f32 %v475, %v475
        %v508 = vmul.f32 %v476, %v476
        %v509 = vmul.f32 %v477, %v477
        %v510 = vmul.f32 %v478, %v478
        %v511 = vmul.f32 %v479, %v479
        %v512 = vmul.f32 %v480, %v480
        %v513 = vmul.f32 %v481, %v481
        %v514 = vmul.f32 %v482, %v482
        %v515 = vmul.f32 %v483, %v483
        %v516 = vmul.f32 %v484, %v484
        %v517 = vmul.f32 %v485, %v485
        %v518 = vmul.f32 %v486, %v486
        %v519 = vmul.f32 %v487, %v487
        %v520 = vmul.f32 %v488, %v488
        %v521 = vmul.f32 %v489, %v489
        %v522 = vmul.f32 %v490, %v490
        %v523 = vmul.f32 %v491, %v491
        %v524 = vmul.f32 %v492, %v492
        %v525 = vmul.f32 %v493, %v493
        %v526 = vmul.f32 %v494, %v494
        %v527 = vmul.f32 %v495, %v495
        %v528 = vmul.f32 %v496, %v496
        %v529 = vmul.f32 %v497, %v497
        %v530 = vmul.f32 %v498, %v498
        %v531 = vmul.f32 %v499, %v499
        %v532 = vmul.f32 %v500, %v500
        %v533 = vmul.f32 %v501, %v501
        %v534 = vmul.f32 %v502, %v502
        %v535 = vmul.f32 %v503, %v503
        %v536 = vmul.f32 %v504, %v504
        %v537 = vmul.f32 %v505, %v505
        %v538 = vmul.f32 %v506, %v506
        %v539 = vsel %vm345, %v507, 0.0
        %540 = vadd.xlane.f32.xlu0 %v539
        %v541 = vpop.xlane.xlu0 %540
        %v542 = vsel %vm345, %v508, 0.0
        %543 = vadd.xlane.f32.xlu0 %v542
        %v544 = vpop.xlane.xlu0 %543
        %v545 = vsel %vm345, %v509, 0.0
        %546 = vadd.xlane.f32.xlu0 %v545
        %v547 = vpop.xlane.xlu0 %546
        %v548 = vsel %vm345, %v510, 0.0
        %549 = vadd.xlane.f32.xlu0 %v548
        %v550 = vpop.xlane.xlu0 %549
        %v551 = vsel %vm345, %v511, 0.0
        %552 = vadd.xlane.f32.xlu0 %v551
        %v553 = vpop.xlane.xlu0 %552
        %v554 = vsel %vm345, %v512, 0.0
        %555 = vadd.xlane.f32.xlu0 %v554
        %v556 = vpop.xlane.xlu0 %555
        %v557 = vsel %vm345, %v513, 0.0
        %558 = vadd.xlane.f32.xlu0 %v557
        %v559 = vpop.xlane.xlu0 %558
        %v560 = vsel %vm345, %v514, 0.0
        %561 = vadd.xlane.f32.xlu0 %v560
        %v562 = vpop.xlane.xlu0 %561
        %v563 = vsel %vm345, %v515, 0.0
        %564 = vadd.xlane.f32.xlu0 %v563
        %v565 = vpop.xlane.xlu0 %564
        %v566 = vsel %vm345, %v516, 0.0
        %567 = vadd.xlane.f32.xlu0 %v566
        %v568 = vpop.xlane.xlu0 %567
        %v569 = vsel %vm345, %v517, 0.0
        %570 = vadd.xlane.f32.xlu0 %v569
        %v571 = vpop.xlane.xlu0 %570
        %v572 = vsel %vm345, %v518, 0.0
        %573 = vadd.xlane.f32.xlu0 %v572
        %v574 = vpop.xlane.xlu0 %573
        %v575 = vsel %vm345, %v519, 0.0
        %576 = vadd.xlane.f32.xlu0 %v575
        %v577 = vpop.xlane.xlu0 %576
        %v578 = vsel %vm345, %v520, 0.0
        %579 = vadd.xlane.f32.xlu0 %v578
        %v580 = vpop.xlane.xlu0 %579
        %v581 = vsel %vm345, %v521, 0.0
        %582 = vadd.xlane.f32.xlu0 %v581
        %v583 = vpop.xlane.xlu0 %582
        %v584 = vsel %vm345, %v522, 0.0
        %585 = vadd.xlane.f32.xlu0 %v584
        %v586 = vpop.xlane.xlu0 %585
        %v587 = vsel %vm345, %v523, 0.0
        %588 = vadd.xlane.f32.xlu0 %v587
        %v589 = vpop.xlane.xlu0 %588
        %v590 = vsel %vm345, %v524, 0.0
        %591 = vadd.xlane.f32.xlu0 %v590
        %v592 = vpop.xlane.xlu0 %591
        %v593 = vsel %vm345, %v525, 0.0
        %594 = vadd.xlane.f32.xlu0 %v593
        %v595 = vpop.xlane.xlu0 %594
        %v596 = vsel %vm345, %v526, 0.0
        %597 = vadd.xlane.f32.xlu0 %v596
        %v598 = vpop.xlane.xlu0 %597
        %v599 = vsel %vm345, %v527, 0.0
        %600 = vadd.xlane.f32.xlu0 %v599
        %v601 = vpop.xlane.xlu0 %600
        %v602 = vsel %vm345, %v528, 0.0
        %603 = vadd.xlane.f32.xlu0 %v602
        %v604 = vpop.xlane.xlu0 %603
        %v605 = vsel %vm345, %v529, 0.0
        %606 = vadd.xlane.f32.xlu0 %v605
        %v607 = vpop.xlane.xlu0 %606
        %v608 = vsel %vm345, %v530, 0.0
        %609 = vadd.xlane.f32.xlu0 %v608
        %v610 = vpop.xlane.xlu0 %609
        %v611 = vsel %vm345, %v531, 0.0
        %612 = vadd.xlane.f32.xlu0 %v611
        %v613 = vpop.xlane.xlu0 %612
        %v614 = vsel %vm345, %v532, 0.0
        %615 = vadd.xlane.f32.xlu0 %v614
        %v616 = vpop.xlane.xlu0 %615
        %v617 = vsel %vm345, %v533, 0.0
        %618 = vadd.xlane.f32.xlu0 %v617
        %v619 = vpop.xlane.xlu0 %618
        %v620 = vsel %vm345, %v534, 0.0
        %621 = vadd.xlane.f32.xlu0 %v620
        %v622 = vpop.xlane.xlu0 %621
        %v623 = vsel %vm345, %v535, 0.0
        %624 = vadd.xlane.f32.xlu0 %v623
        %v625 = vpop.xlane.xlu0 %624
        %v626 = vsel %vm345, %v536, 0.0
        %627 = vadd.xlane.f32.xlu0 %v626
        %v628 = vpop.xlane.xlu0 %627
        %v629 = vsel %vm345, %v537, 0.0
        %630 = vadd.xlane.f32.xlu0 %v629
        %v631 = vpop.xlane.xlu0 %630
        %v632 = vsel %vm345, %v538, 0.0
        %633 = vadd.xlane.f32.xlu0 %v632
        %v634 = vpop.xlane.xlu0 %633
        %v635 = vmul.f32 %v541, %v442
        %v636 = vmul.f32 %v544, %v442
        %v637 = vmul.f32 %v547, %v442
        %v638 = vmul.f32 %v550, %v442
        %v639 = vmul.f32 %v553, %v442
        %v640 = vmul.f32 %v556, %v442
        %v641 = vmul.f32 %v559, %v442
        %v642 = vmul.f32 %v562, %v442
        %v643 = vmul.f32 %v565, %v442
        %v644 = vmul.f32 %v568, %v442
        %v645 = vmul.f32 %v571, %v442
        %v646 = vmul.f32 %v574, %v442
        %v647 = vmul.f32 %v577, %v442
        %v648 = vmul.f32 %v580, %v442
        %v649 = vmul.f32 %v583, %v442
        %v650 = vmul.f32 %v586, %v442
        %v651 = vmul.f32 %v589, %v442
        %v652 = vmul.f32 %v592, %v442
        %v653 = vmul.f32 %v595, %v442
        %v654 = vmul.f32 %v598, %v442
        %v655 = vmul.f32 %v601, %v442
        %v656 = vmul.f32 %v604, %v442
        %v657 = vmul.f32 %v607, %v442
        %v658 = vmul.f32 %v610, %v442
        %v659 = vmul.f32 %v613, %v442
        %v660 = vmul.f32 %v616, %v442
        %v661 = vmul.f32 %v619, %v442
        %v662 = vmul.f32 %v622, %v442
        %v663 = vmul.f32 %v625, %v442
        %v664 = vmul.f32 %v628, %v442
        %v665 = vmul.f32 %v631, %v442
        %v666 = vmul.f32 %v634, %v442
        %v667 = vadd.f32 %v635, 1e-05
        %v668 = vadd.f32 %v636, 1e-05
        %v669 = vadd.f32 %v637, 1e-05
        %v670 = vadd.f32 %v638, 1e-05
        %v671 = vadd.f32 %v639, 1e-05
        %v672 = vadd.f32 %v640, 1e-05
        %v673 = vadd.f32 %v641, 1e-05
        %v674 = vadd.f32 %v642, 1e-05
        %v675 = vadd.f32 %v643, 1e-05
        %v676 = vadd.f32 %v644, 1e-05
        %v677 = vadd.f32 %v645, 1e-05
        %v678 = vadd.f32 %v646, 1e-05
        %v679 = vadd.f32 %v647, 1e-05
        %v680 = vadd.f32 %v648, 1e-05
        %v681 = vadd.f32 %v649, 1e-05
        %v682 = vadd.f32 %v650, 1e-05
        %v683 = vadd.f32 %v651, 1e-05
        %v684 = vadd.f32 %v652, 1e-05
        %v685 = vadd.f32 %v653, 1e-05
        %v686 = vadd.f32 %v654, 1e-05
        %v687 = vadd.f32 %v655, 1e-05
        %v688 = vadd.f32 %v656, 1e-05
        %v689 = vadd.f32 %v657, 1e-05
        %v690 = vadd.f32 %v658, 1e-05
        %v691 = vadd.f32 %v659, 1e-05
        %v692 = vadd.f32 %v660, 1e-05
        %v693 = vadd.f32 %v661, 1e-05
        %v694 = vadd.f32 %v662, 1e-05
        %v695 = vadd.f32 %v663, 1e-05
        %v696 = vadd.f32 %v664, 1e-05
        %v697 = vadd.f32 %v665, 1e-05
        %v698 = vadd.f32 %v666, 1e-05
        %v699 = vrsqrt.pop %v667
        %v700 = vrsqrt.pop %v668
        %v701 = vrsqrt.pop %v669
        %v702 = vrsqrt.pop %v670
        %v703 = vrsqrt.pop %v671
        %v704 = vrsqrt.pop %v672
        %v705 = vrsqrt.pop %v673
        %v706 = vrsqrt.pop %v674
        %v707 = vrsqrt.pop %v675
        %v708 = vrsqrt.pop %v676
        %v709 = vrsqrt.pop %v677
        %v710 = vrsqrt.pop %v678
        %v711 = vrsqrt.pop %v679
        %v712 = vrsqrt.pop %v680
        %v713 = vrsqrt.pop %v681
        %v714 = vrsqrt.pop %v682
        %v715 = vrsqrt.pop %v683
        %v716 = vrsqrt.pop %v684
        %v717 = vrsqrt.pop %v685
        %v718 = vrsqrt.pop %v686
        %v719 = vrsqrt.pop %v687
        %v720 = vrsqrt.pop %v688
        %v721 = vrsqrt.pop %v689
        %v722 = vrsqrt.pop %v690
        %v723 = vrsqrt.pop %v691
        %v724 = vrsqrt.pop %v692
        %v725 = vrsqrt.pop %v693
        %v726 = vrsqrt.pop %v694
        %v727 = vrsqrt.pop %v695
        %v728 = vrsqrt.pop %v696
        %v729 = vrsqrt.pop %v697
        %v730 = vrsqrt.pop %v698
        %v731 = vmul.f32 %v475, %v699
        %v732 = vmul.f32 %v476, %v700
        %v733 = vmul.f32 %v477, %v701
        %v734 = vmul.f32 %v478, %v702
        %v735 = vmul.f32 %v479, %v703
        %v736 = vmul.f32 %v480, %v704
        %v737 = vmul.f32 %v481, %v705
        %v738 = vmul.f32 %v482, %v706
        %v739 = vmul.f32 %v483, %v707
        %v740 = vmul.f32 %v484, %v708
        %v741 = vmul.f32 %v485, %v709
        %v742 = vmul.f32 %v486, %v710
        %v743 = vmul.f32 %v487, %v711
        %v744 = vmul.f32 %v488, %v712
        %v745 = vmul.f32 %v489, %v713
        %v746 = vmul.f32 %v490, %v714
        %v747 = vmul.f32 %v491, %v715
        %v748 = vmul.f32 %v492, %v716
        %v749 = vmul.f32 %v493, %v717
        %v750 = vmul.f32 %v494, %v718
        %v751 = vmul.f32 %v495, %v719
        %v752 = vmul.f32 %v496, %v720
        %v753 = vmul.f32 %v497, %v721
        %v754 = vmul.f32 %v498, %v722
        %v755 = vmul.f32 %v499, %v723
        %v756 = vmul.f32 %v500, %v724
        %v757 = vmul.f32 %v501, %v725
        %v758 = vmul.f32 %v502, %v726
        %v759 = vmul.f32 %v503, %v727
        %v760 = vmul.f32 %v504, %v728
        %v761 = vmul.f32 %v505, %v729
        %v762 = vmul.f32 %v506, %v730
        %v763 = vlaneseq
        %v764 = vshrl.u32 %v763, 7
        %v765 = vsub.s32 0, %v764
        %v766 = vrot.slane %v312, %v765
        %v767 = vmul.f32 %v731, %v766
        %v768 = vmul.f32 %v732, %v766
        %v769 = vmul.f32 %v733, %v766
        %v770 = vmul.f32 %v734, %v766
        %v771 = vmul.f32 %v735, %v766
        %v772 = vmul.f32 %v736, %v766
        %v773 = vmul.f32 %v737, %v766
        %v774 = vmul.f32 %v738, %v766
        %v775 = vmul.f32 %v739, %v766
        %v776 = vmul.f32 %v740, %v766
        %v777 = vmul.f32 %v741, %v766
        %v778 = vmul.f32 %v742, %v766
        %v779 = vmul.f32 %v743, %v766
        %v780 = vmul.f32 %v744, %v766
        %v781 = vmul.f32 %v745, %v766
        %v782 = vmul.f32 %v746, %v766
        %v783 = vmul.f32 %v747, %v766
        %v784 = vmul.f32 %v748, %v766
        %v785 = vmul.f32 %v749, %v766
        %v786 = vmul.f32 %v750, %v766
        %v787 = vmul.f32 %v751, %v766
        %v788 = vmul.f32 %v752, %v766
        %v789 = vmul.f32 %v753, %v766
        %v790 = vmul.f32 %v754, %v766
        %v791 = vmul.f32 %v755, %v766
        %v792 = vmul.f32 %v756, %v766
        %v793 = vmul.f32 %v757, %v766
        %v794 = vmul.f32 %v758, %v766
        %v795 = vmul.f32 %v759, %v766
        %v796 = vmul.f32 %v760, %v766
        %v797 = vmul.f32 %v761, %v766
        %v798 = vmul.f32 %v762, %v766
        %v799 = vlaneseq
        %v800 = vshrl.u32 %v799, 7
        %v801 = vsub.s32 1, %v800
        %v802 = vrot.slane %v312, %v801
        %v803 = vadd.f32 %v767, %v802
        %v804 = vadd.f32 %v768, %v802
        %v805 = vadd.f32 %v769, %v802
        %v806 = vadd.f32 %v770, %v802
        %v807 = vadd.f32 %v771, %v802
        %v808 = vadd.f32 %v772, %v802
        %v809 = vadd.f32 %v773, %v802
        %v810 = vadd.f32 %v774, %v802
        %v811 = vadd.f32 %v775, %v802
        %v812 = vadd.f32 %v776, %v802
        %v813 = vadd.f32 %v777, %v802
        %v814 = vadd.f32 %v778, %v802
        %v815 = vadd.f32 %v779, %v802
        %v816 = vadd.f32 %v780, %v802
        %v817 = vadd.f32 %v781, %v802
        %v818 = vadd.f32 %v782, %v802
        %v819 = vadd.f32 %v783, %v802
        %v820 = vadd.f32 %v784, %v802
        %v821 = vadd.f32 %v785, %v802
        %v822 = vadd.f32 %v786, %v802
        %v823 = vadd.f32 %v787, %v802
        %v824 = vadd.f32 %v788, %v802
        %v825 = vadd.f32 %v789, %v802
        %v826 = vadd.f32 %v790, %v802
        %v827 = vadd.f32 %v791, %v802
        %v828 = vadd.f32 %v792, %v802
        %v829 = vadd.f32 %v793, %v802
        %v830 = vadd.f32 %v794, %v802
        %v831 = vadd.f32 %v795, %v802
        %v832 = vadd.f32 %v796, %v802
        %v833 = vadd.f32 %v797, %v802
        %v834 = vadd.f32 %v798, %v802
        %v835 = vld [vmem:[%s2] sm:$0xff]
        %v836 = vld [vmem:[%s2 + $0x8] sm:$0xff]
        %v837 = vld [vmem:[%s2 + $0x10] sm:$0xff]
        %v838 = vld [vmem:[%s2 + $0x18] sm:$0xff]
        %v839 = vlaneseq
        %v840 = vshrl.u32 %v839, 7
        %v841 = vsub.s32 2, %v840
        %v842 = vrot.slane %v312, %v841
        %v844 = vsel %vm345, %v803, 0
        %v847 = vsel %vm345, %v804, 0
        %v850 = vsel %vm345, %v805, 0
        %v853 = vsel %vm345, %v806, 0
        %v856 = vsel %vm345, %v807, 0
        %v859 = vsel %vm345, %v808, 0
        %v862 = vsel %vm345, %v809, 0
        %v865 = vsel %vm345, %v810, 0
        %v868 = vsel %vm345, %v811, 0
        %v871 = vsel %vm345, %v812, 0
        %v874 = vsel %vm345, %v813, 0
        %v877 = vsel %vm345, %v814, 0
        %v880 = vsel %vm345, %v815, 0
        %v883 = vsel %vm345, %v816, 0
        %v886 = vsel %vm345, %v817, 0
        %v889 = vsel %vm345, %v818, 0
        %v892 = vsel %vm345, %v819, 0
        %v895 = vsel %vm345, %v820, 0
        %v898 = vsel %vm345, %v821, 0
        %v901 = vsel %vm345, %v822, 0
        %v904 = vsel %vm345, %v823, 0
        %v907 = vsel %vm345, %v824, 0
        %v910 = vsel %vm345, %v825, 0
        %v913 = vsel %vm345, %v826, 0
        %v916 = vsel %vm345, %v827, 0
        %v919 = vsel %vm345, %v828, 0
        %v922 = vsel %vm345, %v829, 0
        %v925 = vsel %vm345, %v830, 0
        %v928 = vsel %vm345, %v831, 0
        %v931 = vsel %vm345, %v832, 0
        %v934 = vsel %vm345, %v833, 0
        %v937 = vsel %vm345, %v834, 0
        %939 = vmatprep.subr.mxu0 0.0
        %940 = vmatpush1.msra.mxu0 0.0
        %941 = vmatprep.subr.mxu0 0.0
        %942 = vmatpush1.msra.mxu0 0.0
        %943 = vmatprep.subr.mxu0 0.0
        %944 = vmatpush1.msra.mxu0 0.0
        %945 = vmatprep.subr.mxu0 0.0
        %946 = vmatpush1.msra.mxu0 0.0
        %947 = vmatprep.subr.mxu0 0.0
        %948 = vmatpush1.msra.mxu0 0.0
        %949 = vmatprep.subr.mxu0 0.0
        %950 = vmatpush1.msra.mxu0 0.0
        %951 = vmatprep.subr.mxu0 0.0
        %952 = vmatpush1.msra.mxu0 0.0
        %953 = vmatprep.subr.mxu0 0.0
        %954 = vmatpush1.msra.mxu0 0.0
        %955 = vmatprep.subr.mxu0 0.0
        %956 = vmatpush1.msra.mxu0 0.0
        %957 = vmatprep.subr.mxu0 0.0
        %958 = vmatpush1.msra.mxu0 0.0
        %959 = vmatprep.subr.mxu0 0.0
        %960 = vmatpush1.msra.mxu0 0.0
        %961 = vmatprep.subr.mxu0 0.0
        %962 = vmatpush1.msra.mxu0 0.0
        %963 = vmatprep.subr.mxu0 0.0
        %964 = vmatpush1.msra.mxu0 %v838
        %965 = vmatprep.subr.mxu0 0.0
        %966 = vmatpush1.msra.mxu0 %v837
        %967 = vmatprep.subr.mxu0 0.0
        %968 = vmatpush1.msra.mxu0 %v836
        %969 = vmatprep.subr.mxu0 0.0
        %970 = vmatpush1.msra.mxu0 %v835
        %971 = vmatprep.subr.mxu0 0.0
        %972 = vmatpush2.msra.mxu0 0.0
        %973 = vmatprep.subr.mxu0 0.0
        %974 = vmatpush2.msra.mxu0 0.0
        %975 = vmatprep.subr.mxu0 0.0
        %976 = vmatpush2.msra.mxu0 0.0
        %977 = vmatprep.subr.mxu0 0.0
        %978 = vmatpush2.msra.mxu0 0.0
        %979 = vmatprep.subr.mxu0 0.0
        %980 = vmatpush2.msra.mxu0 0.0
        %981 = vmatprep.subr.mxu0 0.0
        %982 = vmatpush2.msra.mxu0 0.0
        %983 = vmatprep.subr.mxu0 0.0
        %984 = vmatpush2.msra.mxu0 0.0
        %985 = vmatprep.subr.mxu0 0.0
        %986 = vmatpush2.msra.mxu0 0.0
        %987 = vmatprep.subr.mxu0 0.0
        %988 = vmatpush2.msra.mxu0 0.0
        %989 = vmatprep.subr.mxu0 0.0
        %990 = vmatpush2.msra.mxu0 0.0
        %991 = vmatprep.subr.mxu0 0.0
        %992 = vmatpush2.msra.mxu0 0.0
        %993 = vmatprep.subr.mxu0 0.0
        %994 = vmatpush2.msra.mxu0 0.0
        %995 = vmatprep.subr.mxu0 0.0
        %996 = vmatpush2.msra.mxu0 0.0
        %997 = vmatprep.subr.mxu0 0.0
        %998 = vmatpush2.msra.mxu0 0.0
        %999 = vmatprep.subr.mxu0 0.0
        %1000 = vmatpush2.msra.mxu0 0.0
        %1001 = vmatprep.subr.mxu0 0.0
        %1002 = vmatpush2.msra.mxu0 0.0
        %1003 = vmatprep.mubr.f32.mxu0 0.0
        %1004 = vmatmul.mubr.f32.gmra.mxu0 %v844
        %v1005 = vpop.f32.mrf.mxu0
        %v1006 = vadd.f32 %v842, %v1005
        %v1007 = vpop.f32.mrf.mxu0
        %1008 = vmatprep.mubr.f32.mxu0 0.0
        %1009 = vmatmul.mubr.f32.gmra.mxu0 %v847
        %v1010 = vpop.f32.mrf.mxu0
        %v1011 = vadd.f32 %v842, %v1010
        %v1012 = vpop.f32.mrf.mxu0
        %1013 = vmatprep.mubr.f32.mxu0 0.0
        %1014 = vmatmul.mubr.f32.gmra.mxu0 %v850
        %v1015 = vpop.f32.mrf.mxu0
        %v1016 = vadd.f32 %v842, %v1015
        %v1017 = vpop.f32.mrf.mxu0
        %1018 = vmatprep.mubr.f32.mxu0 0.0
        %1019 = vmatmul.mubr.f32.gmra.mxu0 %v853
        %v1020 = vpop.f32.mrf.mxu0
        %v1021 = vadd.f32 %v842, %v1020
        %v1022 = vpop.f32.mrf.mxu0
        %1023 = vmatprep.mubr.f32.mxu0 0.0
        %1024 = vmatmul.mubr.f32.gmra.mxu0 %v856
        %v1025 = vpop.f32.mrf.mxu0
        %v1026 = vadd.f32 %v842, %v1025
        %v1027 = vpop.f32.mrf.mxu0
        %1028 = vmatprep.mubr.f32.mxu0 0.0
        %1029 = vmatmul.mubr.f32.gmra.mxu0 %v859
        %v1030 = vpop.f32.mrf.mxu0
        %v1031 = vadd.f32 %v842, %v1030
        %v1032 = vpop.f32.mrf.mxu0
        %1033 = vmatprep.mubr.f32.mxu0 0.0
        %1034 = vmatmul.mubr.f32.gmra.mxu0 %v862
        %v1035 = vpop.f32.mrf.mxu0
        %v1036 = vadd.f32 %v842, %v1035
        %v1037 = vpop.f32.mrf.mxu0
        %1038 = vmatprep.mubr.f32.mxu0 0.0
        %1039 = vmatmul.mubr.f32.gmra.mxu0 %v865
        %v1040 = vpop.f32.mrf.mxu0
        %v1041 = vadd.f32 %v842, %v1040
        %v1042 = vpop.f32.mrf.mxu0
        %1043 = vmatprep.mubr.f32.mxu0 0.0
        %1044 = vmatmul.mubr.f32.gmra.mxu0 %v868
        %v1045 = vpop.f32.mrf.mxu0
        %v1046 = vadd.f32 %v842, %v1045
        %v1047 = vpop.f32.mrf.mxu0
        %1048 = vmatprep.mubr.f32.mxu0 0.0
        %1049 = vmatmul.mubr.f32.gmra.mxu0 %v871
        %v1050 = vpop.f32.mrf.mxu0
        %v1051 = vadd.f32 %v842, %v1050
        %v1052 = vpop.f32.mrf.mxu0
        %1053 = vmatprep.mubr.f32.mxu0 0.0
        %1054 = vmatmul.mubr.f32.gmra.mxu0 %v874
        %v1055 = vpop.f32.mrf.mxu0
        %v1056 = vadd.f32 %v842, %v1055
        %v1057 = vpop.f32.mrf.mxu0
        %1058 = vmatprep.mubr.f32.mxu0 0.0
        %1059 = vmatmul.mubr.f32.gmra.mxu0 %v877
        %v1060 = vpop.f32.mrf.mxu0
        %v1061 = vadd.f32 %v842, %v1060
        %v1062 = vpop.f32.mrf.mxu0
        %1063 = vmatprep.mubr.f32.mxu0 0.0
        %1064 = vmatmul.mubr.f32.gmra.mxu0 %v880
        %v1065 = vpop.f32.mrf.mxu0
        %v1066 = vadd.f32 %v842, %v1065
        %v1067 = vpop.f32.mrf.mxu0
        %1068 = vmatprep.mubr.f32.mxu0 0.0
        %1069 = vmatmul.mubr.f32.gmra.mxu0 %v883
        %v1070 = vpop.f32.mrf.mxu0
        %v1071 = vadd.f32 %v842, %v1070
        %v1072 = vpop.f32.mrf.mxu0
        %1073 = vmatprep.mubr.f32.mxu0 0.0
        %1074 = vmatmul.mubr.f32.gmra.mxu0 %v886
        %v1075 = vpop.f32.mrf.mxu0
        %v1076 = vadd.f32 %v842, %v1075
        %v1077 = vpop.f32.mrf.mxu0
        %1078 = vmatprep.mubr.f32.mxu0 0.0
        %1079 = vmatmul.mubr.f32.gmra.mxu0 %v889
        %v1080 = vpop.f32.mrf.mxu0
        %v1081 = vadd.f32 %v842, %v1080
        %v1082 = vpop.f32.mrf.mxu0
        %1083 = vmatprep.mubr.f32.mxu0 0.0
        %1084 = vmatmul.mubr.f32.gmra.mxu0 %v892
        %v1085 = vpop.f32.mrf.mxu0
        %v1086 = vadd.f32 %v842, %v1085
        %v1087 = vpop.f32.mrf.mxu0
        %1088 = vmatprep.mubr.f32.mxu0 0.0
        %1089 = vmatmul.mubr.f32.gmra.mxu0 %v895
        %v1090 = vpop.f32.mrf.mxu0
        %v1091 = vadd.f32 %v842, %v1090
        %v1092 = vpop.f32.mrf.mxu0
        %1093 = vmatprep.mubr.f32.mxu0 0.0
        %1094 = vmatmul.mubr.f32.gmra.mxu0 %v898
        %v1095 = vpop.f32.mrf.mxu0
        %v1096 = vadd.f32 %v842, %v1095
        %v1097 = vpop.f32.mrf.mxu0
        %1098 = vmatprep.mubr.f32.mxu0 0.0
        %1099 = vmatmul.mubr.f32.gmra.mxu0 %v901
        %v1100 = vpop.f32.mrf.mxu0
        %v1101 = vadd.f32 %v842, %v1100
        %v1102 = vpop.f32.mrf.mxu0
        %1103 = vmatprep.mubr.f32.mxu0 0.0
        %1104 = vmatmul.mubr.f32.gmra.mxu0 %v904
        %v1105 = vpop.f32.mrf.mxu0
        %v1106 = vadd.f32 %v842, %v1105
        %v1107 = vpop.f32.mrf.mxu0
        %1108 = vmatprep.mubr.f32.mxu0 0.0
        %1109 = vmatmul.mubr.f32.gmra.mxu0 %v907
        %v1110 = vpop.f32.mrf.mxu0
        %v1111 = vadd.f32 %v842, %v1110
        %v1112 = vpop.f32.mrf.mxu0
        %1113 = vmatprep.mubr.f32.mxu0 0.0
        %1114 = vmatmul.mubr.f32.gmra.mxu0 %v910
        %v1115 = vpop.f32.mrf.mxu0
        %v1116 = vadd.f32 %v842, %v1115
        %v1117 = vpop.f32.mrf.mxu0
        %1118 = vmatprep.mubr.f32.mxu0 0.0
        %1119 = vmatmul.mubr.f32.gmra.mxu0 %v913
        %v1120 = vpop.f32.mrf.mxu0
        %v1121 = vadd.f32 %v842, %v1120
        %v1122 = vpop.f32.mrf.mxu0
        %1123 = vmatprep.mubr.f32.mxu0 0.0
        %1124 = vmatmul.mubr.f32.gmra.mxu0 %v916
        %v1125 = vpop.f32.mrf.mxu0
        %v1126 = vadd.f32 %v842, %v1125
        %v1127 = vpop.f32.mrf.mxu0
        %1128 = vmatprep.mubr.f32.mxu0 0.0
        %1129 = vmatmul.mubr.f32.gmra.mxu0 %v919
        %v1130 = vpop.f32.mrf.mxu0
        %v1131 = vadd.f32 %v842, %v1130
        %v1132 = vpop.f32.mrf.mxu0
        %1133 = vmatprep.mubr.f32.mxu0 0.0
        %1134 = vmatmul.mubr.f32.gmra.mxu0 %v922
        %v1135 = vpop.f32.mrf.mxu0
        %v1136 = vadd.f32 %v842, %v1135
        %v1137 = vpop.f32.mrf.mxu0
        %1138 = vmatprep.mubr.f32.mxu0 0.0
        %1139 = vmatmul.mubr.f32.gmra.mxu0 %v925
        %v1140 = vpop.f32.mrf.mxu0
        %v1141 = vadd.f32 %v842, %v1140
        %v1142 = vpop.f32.mrf.mxu0
        %1143 = vmatprep.mubr.f32.mxu0 0.0
        %1144 = vmatmul.mubr.f32.gmra.mxu0 %v928
        %v1145 = vpop.f32.mrf.mxu0
        %v1146 = vadd.f32 %v842, %v1145
        %v1147 = vpop.f32.mrf.mxu0
        %1148 = vmatprep.mubr.f32.mxu0 0.0
        %1149 = vmatmul.mubr.f32.gmra.mxu0 %v931
        %v1150 = vpop.f32.mrf.mxu0
        %v1151 = vadd.f32 %v842, %v1150
        %v1152 = vpop.f32.mrf.mxu0
        %1153 = vmatprep.mubr.f32.mxu0 0.0
        %1154 = vmatmul.mubr.f32.gmra.mxu0 %v934
        %v1155 = vpop.f32.mrf.mxu0
        %v1156 = vadd.f32 %v842, %v1155
        %v1157 = vpop.f32.mrf.mxu0
        %1158 = vmatprep.mubr.f32.mxu0 0.0
        %1159 = vmatmul.mubr.f32.gmra.mxu0 %v937
        %v1160 = vpop.f32.mrf.mxu0
        %v1161 = vadd.f32 %v842, %v1160
        %v1162 = vpop.f32.mrf.mxu0
        %1163 = vdwg.mxu0
        %1196 = vrot.lane.b32.xlu0 %v1006, 120
        %v1197 = vpop.permute.xlu0 %1196
        %1198 = vrot.lane.b32.xlu0 %v1011, 120
        %v1199 = vpop.permute.xlu0 %1198
        %1200 = vrot.lane.b32.xlu0 %v1016, 120
        %v1201 = vpop.permute.xlu0 %1200
        %1202 = vrot.lane.b32.xlu0 %v1021, 120
        %v1203 = vpop.permute.xlu0 %1202
        %1204 = vrot.lane.b32.xlu0 %v1026, 120
        %v1205 = vpop.permute.xlu0 %1204
        %1206 = vrot.lane.b32.xlu0 %v1031, 120
        %v1207 = vpop.permute.xlu0 %1206
        %1208 = vrot.lane.b32.xlu0 %v1036, 120
        %v1209 = vpop.permute.xlu0 %1208
        %1210 = vrot.lane.b32.xlu0 %v1041, 120
        %v1211 = vpop.permute.xlu0 %1210
        %1212 = vrot.lane.b32.xlu0 %v1046, 120
        %v1213 = vpop.permute.xlu0 %1212
        %1214 = vrot.lane.b32.xlu0 %v1051, 120
        %v1215 = vpop.permute.xlu0 %1214
        %1216 = vrot.lane.b32.xlu0 %v1056, 120
        %v1217 = vpop.permute.xlu0 %1216
        %1218 = vrot.lane.b32.xlu0 %v1061, 120
        %v1219 = vpop.permute.xlu0 %1218
        %1220 = vrot.lane.b32.xlu0 %v1066, 120
        %v1221 = vpop.permute.xlu0 %1220
        %1222 = vrot.lane.b32.xlu0 %v1071, 120
        %v1223 = vpop.permute.xlu0 %1222
        %1224 = vrot.lane.b32.xlu0 %v1076, 120
        %v1225 = vpop.permute.xlu0 %1224
        %1226 = vrot.lane.b32.xlu0 %v1081, 120
        %v1227 = vpop.permute.xlu0 %1226
        %1228 = vrot.lane.b32.xlu0 %v1086, 120
        %v1229 = vpop.permute.xlu0 %1228
        %1230 = vrot.lane.b32.xlu0 %v1091, 120
        %v1231 = vpop.permute.xlu0 %1230
        %1232 = vrot.lane.b32.xlu0 %v1096, 120
        %v1233 = vpop.permute.xlu0 %1232
        %1234 = vrot.lane.b32.xlu0 %v1101, 120
        %v1235 = vpop.permute.xlu0 %1234
        %1236 = vrot.lane.b32.xlu0 %v1106, 120
        %v1237 = vpop.permute.xlu0 %1236
        %1238 = vrot.lane.b32.xlu0 %v1111, 120
        %v1239 = vpop.permute.xlu0 %1238
        %1240 = vrot.lane.b32.xlu0 %v1116, 120
        %v1241 = vpop.permute.xlu0 %1240
        %1242 = vrot.lane.b32.xlu0 %v1121, 120
        %v1243 = vpop.permute.xlu0 %1242
        %1244 = vrot.lane.b32.xlu0 %v1126, 120
        %v1245 = vpop.permute.xlu0 %1244
        %1246 = vrot.lane.b32.xlu0 %v1131, 120
        %v1247 = vpop.permute.xlu0 %1246
        %1248 = vrot.lane.b32.xlu0 %v1136, 120
        %v1249 = vpop.permute.xlu0 %1248
        %1250 = vrot.lane.b32.xlu0 %v1141, 120
        %v1251 = vpop.permute.xlu0 %1250
        %1252 = vrot.lane.b32.xlu0 %v1146, 120
        %v1253 = vpop.permute.xlu0 %1252
        %1254 = vrot.lane.b32.xlu0 %v1151, 120
        %v1255 = vpop.permute.xlu0 %1254
        %1256 = vrot.lane.b32.xlu0 %v1156, 120
        %v1257 = vpop.permute.xlu0 %1256
        %1258 = vrot.lane.b32.xlu0 %v1161, 120
        %v1259 = vpop.permute.xlu0 %1258
        %1260 = vrot.lane.b32.xlu0 %v1006, 112
        %v1261 = vpop.permute.xlu0 %1260
        %1262 = vrot.lane.b32.xlu0 %v1011, 112
        %v1263 = vpop.permute.xlu0 %1262
        %1264 = vrot.lane.b32.xlu0 %v1016, 112
        %v1265 = vpop.permute.xlu0 %1264
        %1266 = vrot.lane.b32.xlu0 %v1021, 112
        %v1267 = vpop.permute.xlu0 %1266
        %1268 = vrot.lane.b32.xlu0 %v1026, 112
        %v1269 = vpop.permute.xlu0 %1268
        %1270 = vrot.lane.b32.xlu0 %v1031, 112
        %v1271 = vpop.permute.xlu0 %1270
        %1272 = vrot.lane.b32.xlu0 %v1036, 112
        %v1273 = vpop.permute.xlu0 %1272
        %1274 = vrot.lane.b32.xlu0 %v1041, 112
        %v1275 = vpop.permute.xlu0 %1274
        %1276 = vrot.lane.b32.xlu0 %v1046, 112
        %v1277 = vpop.permute.xlu0 %1276
        %1278 = vrot.lane.b32.xlu0 %v1051, 112
        %v1279 = vpop.permute.xlu0 %1278
        %1280 = vrot.lane.b32.xlu0 %v1056, 112
        %v1281 = vpop.permute.xlu0 %1280
        %1282 = vrot.lane.b32.xlu0 %v1061, 112
        %v1283 = vpop.permute.xlu0 %1282
        %1284 = vrot.lane.b32.xlu0 %v1066, 112
        %v1285 = vpop.permute.xlu0 %1284
        %1286 = vrot.lane.b32.xlu0 %v1071, 112
        %v1287 = vpop.permute.xlu0 %1286
        %1288 = vrot.lane.b32.xlu0 %v1076, 112
        %v1289 = vpop.permute.xlu0 %1288
        %1290 = vrot.lane.b32.xlu0 %v1081, 112
        %v1291 = vpop.permute.xlu0 %1290
        %1292 = vrot.lane.b32.xlu0 %v1086, 112
        %v1293 = vpop.permute.xlu0 %1292
        %1294 = vrot.lane.b32.xlu0 %v1091, 112
        %v1295 = vpop.permute.xlu0 %1294
        %1296 = vrot.lane.b32.xlu0 %v1096, 112
        %v1297 = vpop.permute.xlu0 %1296
        %1298 = vrot.lane.b32.xlu0 %v1101, 112
        %v1299 = vpop.permute.xlu0 %1298
        %1300 = vrot.lane.b32.xlu0 %v1106, 112
        %v1301 = vpop.permute.xlu0 %1300
        %1302 = vrot.lane.b32.xlu0 %v1111, 112
        %v1303 = vpop.permute.xlu0 %1302
        %1304 = vrot.lane.b32.xlu0 %v1116, 112
        %v1305 = vpop.permute.xlu0 %1304
        %1306 = vrot.lane.b32.xlu0 %v1121, 112
        %v1307 = vpop.permute.xlu0 %1306
        %1308 = vrot.lane.b32.xlu0 %v1126, 112
        %v1309 = vpop.permute.xlu0 %1308
        %1310 = vrot.lane.b32.xlu0 %v1131, 112
        %v1311 = vpop.permute.xlu0 %1310
        %1312 = vrot.lane.b32.xlu0 %v1136, 112
        %v1313 = vpop.permute.xlu0 %1312
        %1314 = vrot.lane.b32.xlu0 %v1141, 112
        %v1315 = vpop.permute.xlu0 %1314
        %1316 = vrot.lane.b32.xlu0 %v1146, 112
        %v1317 = vpop.permute.xlu0 %1316
        %1318 = vrot.lane.b32.xlu0 %v1151, 112
        %v1319 = vpop.permute.xlu0 %1318
        %1320 = vrot.lane.b32.xlu0 %v1156, 112
        %v1321 = vpop.permute.xlu0 %1320
        %1322 = vrot.lane.b32.xlu0 %v1161, 112
        %v1323 = vpop.permute.xlu0 %1322
        %1324 = vrot.lane.b32.xlu0 %v1006, 104
        %v1325 = vpop.permute.xlu0 %1324
        %1326 = vrot.lane.b32.xlu0 %v1011, 104
        %v1327 = vpop.permute.xlu0 %1326
        %1328 = vrot.lane.b32.xlu0 %v1016, 104
        %v1329 = vpop.permute.xlu0 %1328
        %1330 = vrot.lane.b32.xlu0 %v1021, 104
        %v1331 = vpop.permute.xlu0 %1330
        %1332 = vrot.lane.b32.xlu0 %v1026, 104
        %v1333 = vpop.permute.xlu0 %1332
        %1334 = vrot.lane.b32.xlu0 %v1031, 104
        %v1335 = vpop.permute.xlu0 %1334
        %1336 = vrot.lane.b32.xlu0 %v1036, 104
        %v1337 = vpop.permute.xlu0 %1336
        %1338 = vrot.lane.b32.xlu0 %v1041, 104
        %v1339 = vpop.permute.xlu0 %1338
        %1340 = vrot.lane.b32.xlu0 %v1046, 104
        %v1341 = vpop.permute.xlu0 %1340
        %1342 = vrot.lane.b32.xlu0 %v1051, 104
        %v1343 = vpop.permute.xlu0 %1342
        %1344 = vrot.lane.b32.xlu0 %v1056, 104
        %v1345 = vpop.permute.xlu0 %1344
        %1346 = vrot.lane.b32.xlu0 %v1061, 104
        %v1347 = vpop.permute.xlu0 %1346
        %1348 = vrot.lane.b32.xlu0 %v1066, 104
        %v1349 = vpop.permute.xlu0 %1348
        %1350 = vrot.lane.b32.xlu0 %v1071, 104
        %v1351 = vpop.permute.xlu0 %1350
        %1352 = vrot.lane.b32.xlu0 %v1076, 104
        %v1353 = vpop.permute.xlu0 %1352
        %1354 = vrot.lane.b32.xlu0 %v1081, 104
        %v1355 = vpop.permute.xlu0 %1354
        %1356 = vrot.lane.b32.xlu0 %v1086, 104
        %v1357 = vpop.permute.xlu0 %1356
        %1358 = vrot.lane.b32.xlu0 %v1091, 104
        %v1359 = vpop.permute.xlu0 %1358
        %1360 = vrot.lane.b32.xlu0 %v1096, 104
        %v1361 = vpop.permute.xlu0 %1360
        %1362 = vrot.lane.b32.xlu0 %v1101, 104
        %v1363 = vpop.permute.xlu0 %1362
        %1364 = vrot.lane.b32.xlu0 %v1106, 104
        %v1365 = vpop.permute.xlu0 %1364
        %1366 = vrot.lane.b32.xlu0 %v1111, 104
        %v1367 = vpop.permute.xlu0 %1366
        %1368 = vrot.lane.b32.xlu0 %v1116, 104
        %v1369 = vpop.permute.xlu0 %1368
        %1370 = vrot.lane.b32.xlu0 %v1121, 104
        %v1371 = vpop.permute.xlu0 %1370
        %1372 = vrot.lane.b32.xlu0 %v1126, 104
        %v1373 = vpop.permute.xlu0 %1372
        %1374 = vrot.lane.b32.xlu0 %v1131, 104
        %v1375 = vpop.permute.xlu0 %1374
        %1376 = vrot.lane.b32.xlu0 %v1136, 104
        %v1377 = vpop.permute.xlu0 %1376
        %1378 = vrot.lane.b32.xlu0 %v1141, 104
        %v1379 = vpop.permute.xlu0 %1378
        %1380 = vrot.lane.b32.xlu0 %v1146, 104
        %v1381 = vpop.permute.xlu0 %1380
        %1382 = vrot.lane.b32.xlu0 %v1151, 104
        %v1383 = vpop.permute.xlu0 %1382
        %1384 = vrot.lane.b32.xlu0 %v1156, 104
        %v1385 = vpop.permute.xlu0 %1384
        %1386 = vrot.lane.b32.xlu0 %v1161, 104
        %v1387 = vpop.permute.xlu0 %1386
        %1388 = vrot.lane.b32.xlu0 %v1006, 96
        %v1389 = vpop.permute.xlu0 %1388
        %1390 = vrot.lane.b32.xlu0 %v1011, 96
        %v1391 = vpop.permute.xlu0 %1390
        %1392 = vrot.lane.b32.xlu0 %v1016, 96
        %v1393 = vpop.permute.xlu0 %1392
        %1394 = vrot.lane.b32.xlu0 %v1021, 96
        %v1395 = vpop.permute.xlu0 %1394
        %1396 = vrot.lane.b32.xlu0 %v1026, 96
        %v1397 = vpop.permute.xlu0 %1396
        %1398 = vrot.lane.b32.xlu0 %v1031, 96
        %v1399 = vpop.permute.xlu0 %1398
        %1400 = vrot.lane.b32.xlu0 %v1036, 96
        %v1401 = vpop.permute.xlu0 %1400
        %1402 = vrot.lane.b32.xlu0 %v1041, 96
        %v1403 = vpop.permute.xlu0 %1402
        %vm1404 = vcmask 64512
        %v1405 = vsel %vm1404, %v1006, 0
        %v1407 = vsel %vm1404, %v1011, 0
        %v1409 = vsel %vm1404, %v1016, 0
        %v1411 = vsel %vm1404, %v1021, 0
        %v1413 = vsel %vm1404, %v1026, 0
        %v1415 = vsel %vm1404, %v1031, 0
        %v1417 = vsel %vm1404, %v1036, 0
        %v1419 = vsel %vm1404, %v1041, 0
        %v1421 = vsel %vm1404, %v1389, 0
        %v1423 = vsel %vm1404, %v1391, 0
        %v1425 = vsel %vm1404, %v1393, 0
        %v1427 = vsel %vm1404, %v1395, 0
        %v1429 = vsel %vm1404, %v1397, 0
        %v1431 = vsel %vm1404, %v1399, 0
        %v1433 = vsel %vm1404, %v1401, 0
        %v1435 = vsel %vm1404, %v1403, 0
        %1437 = vmatprep.subr.mxu0 0.0
        %1438 = vmatpush1.xpose.msra.mxu0 0.0
        %1439 = vmatprep.subr.mxu0 0.0
        %1440 = vmatpush1.xpose.msra.mxu0 0.0
        %1441 = vmatprep.subr.mxu0 0.0
        %1442 = vmatpush1.xpose.msra.mxu0 0.0
        %1443 = vmatprep.subr.mxu0 0.0
        %1444 = vmatpush1.xpose.msra.mxu0 0.0
        %1445 = vmatprep.subr.mxu0 0.0
        %1446 = vmatpush1.xpose.msra.mxu0 0.0
        %1447 = vmatprep.subr.mxu0 0.0
        %1448 = vmatpush1.xpose.msra.mxu0 0.0
        %1449 = vmatprep.subr.mxu0 0.0
        %1450 = vmatpush1.xpose.msra.mxu0 0.0
        %1451 = vmatprep.subr.mxu0 0.0
        %1452 = vmatpush1.xpose.msra.mxu0 0.0
        %1453 = vmatprep.subr.mxu0 0.0
        %1454 = vmatpush1.xpose.msra.mxu0 %v1435
        %1455 = vmatprep.subr.mxu0 0.0
        %1456 = vmatpush1.xpose.msra.mxu0 %v1433
        %1457 = vmatprep.subr.mxu0 0.0
        %1458 = vmatpush1.xpose.msra.mxu0 %v1431
        %1459 = vmatprep.subr.mxu0 0.0
        %1460 = vmatpush1.xpose.msra.mxu0 %v1429
        %1461 = vmatprep.subr.mxu0 0.0
        %1462 = vmatpush1.xpose.msra.mxu0 %v1427
        %1463 = vmatprep.subr.mxu0 0.0
        %1464 = vmatpush1.xpose.msra.mxu0 %v1425
        %1465 = vmatprep.subr.mxu0 0.0
        %1466 = vmatpush1.xpose.msra.mxu0 %v1423
        %1467 = vmatprep.subr.mxu0 0.0
        %1468 = vmatpush1.xpose.msra.mxu0 %v1421
        %1469 = vmatprep.subr.mxu0 0.0
        %1470 = vmatpush2.xpose.msra.mxu0 0.0
        %1471 = vmatprep.subr.mxu0 0.0
        %1472 = vmatpush2.xpose.msra.mxu0 0.0
        %1473 = vmatprep.subr.mxu0 0.0
        %1474 = vmatpush2.xpose.msra.mxu0 0.0
        %1475 = vmatprep.subr.mxu0 0.0
        %1476 = vmatpush2.xpose.msra.mxu0 0.0
        %1477 = vmatprep.subr.mxu0 0.0
        %1478 = vmatpush2.xpose.msra.mxu0 0.0
        %1479 = vmatprep.subr.mxu0 0.0
        %1480 = vmatpush2.xpose.msra.mxu0 0.0
        %1481 = vmatprep.subr.mxu0 0.0
        %1482 = vmatpush2.xpose.msra.mxu0 0.0
        %1483 = vmatprep.subr.mxu0 0.0
        %1484 = vmatpush2.xpose.msra.mxu0 0.0
        %1485 = vmatprep.subr.mxu0 0.0
        %1486 = vmatpush2.xpose.msra.mxu0 0.0
        %1487 = vmatprep.subr.mxu0 0.0
        %1488 = vmatpush2.xpose.msra.mxu0 0.0
        %1489 = vmatprep.subr.mxu0 0.0
        %1490 = vmatpush2.xpose.msra.mxu0 0.0
        %1491 = vmatprep.subr.mxu0 0.0
        %1492 = vmatpush2.xpose.msra.mxu0 0.0
        %1493 = vmatprep.subr.mxu0 0.0
        %1494 = vmatpush2.xpose.msra.mxu0 0.0
        %1495 = vmatprep.subr.mxu0 0.0
        %1496 = vmatpush2.xpose.msra.mxu0 0.0
        %1497 = vmatprep.subr.mxu0 0.0
        %1498 = vmatpush2.xpose.msra.mxu0 0.0
        %1499 = vmatprep.subr.mxu0 0.0
        %1500 = vmatpush2.xpose.msra.mxu0 0.0
        %1501 = vmatprep.mubr.f32.mxu0 0.0
        %1502 = vmatmul.mubr.f32.gmra.mxu0 %v1405
        %v1503 = vpop.f32.mrf.mxu0
        %v1504 = vadd.f32 0.0, %v1503
        %v1505 = vpop.f32.mrf.mxu0
        %1506 = vmatprep.mubr.f32.mxu0 0.0
        %1507 = vmatmul.mubr.f32.gmra.mxu0 %v1407
        %v1508 = vpop.f32.mrf.mxu0
        %v1509 = vadd.f32 0.0, %v1508
        %v1510 = vpop.f32.mrf.mxu0
        %1511 = vmatprep.mubr.f32.mxu0 0.0
        %1512 = vmatmul.mubr.f32.gmra.mxu0 %v1409
        %v1513 = vpop.f32.mrf.mxu0
        %v1514 = vadd.f32 0.0, %v1513
        %v1515 = vpop.f32.mrf.mxu0
        %1516 = vmatprep.mubr.f32.mxu0 0.0
        %1517 = vmatmul.mubr.f32.gmra.mxu0 %v1411
        %v1518 = vpop.f32.mrf.mxu0
        %v1519 = vadd.f32 0.0, %v1518
        %v1520 = vpop.f32.mrf.mxu0
        %1521 = vmatprep.mubr.f32.mxu0 0.0
        %1522 = vmatmul.mubr.f32.gmra.mxu0 %v1413
        %v1523 = vpop.f32.mrf.mxu0
        %v1524 = vadd.f32 0.0, %v1523
        %v1525 = vpop.f32.mrf.mxu0
        %1526 = vmatprep.mubr.f32.mxu0 0.0
        %1527 = vmatmul.mubr.f32.gmra.mxu0 %v1415
        %v1528 = vpop.f32.mrf.mxu0
        %v1529 = vadd.f32 0.0, %v1528
        %v1530 = vpop.f32.mrf.mxu0
        %1531 = vmatprep.mubr.f32.mxu0 0.0
        %1532 = vmatmul.mubr.f32.gmra.mxu0 %v1417
        %v1533 = vpop.f32.mrf.mxu0
        %v1534 = vadd.f32 0.0, %v1533
        %v1535 = vpop.f32.mrf.mxu0
        %1536 = vmatprep.mubr.f32.mxu0 0.0
        %1537 = vmatmul.mubr.f32.gmra.mxu0 %v1419
        %v1538 = vpop.f32.mrf.mxu0
        %v1539 = vadd.f32 0.0, %v1538
        %v1540 = vpop.f32.mrf.mxu0
        %1541 = vdwg.mxu0
        %1542 = vrot.lane.b32.xlu0 %v1046, 96
        %v1543 = vpop.permute.xlu0 %1542
        %1544 = vrot.lane.b32.xlu0 %v1051, 96
        %v1545 = vpop.permute.xlu0 %1544
        %1546 = vrot.lane.b32.xlu0 %v1056, 96
        %v1547 = vpop.permute.xlu0 %1546
        %1548 = vrot.lane.b32.xlu0 %v1061, 96
        %v1549 = vpop.permute.xlu0 %1548
        %1550 = vrot.lane.b32.xlu0 %v1066, 96
        %v1551 = vpop.permute.xlu0 %1550
        %1552 = vrot.lane.b32.xlu0 %v1071, 96
        %v1553 = vpop.permute.xlu0 %1552
        %1554 = vrot.lane.b32.xlu0 %v1076, 96
        %v1555 = vpop.permute.xlu0 %1554
        %1556 = vrot.lane.b32.xlu0 %v1081, 96
        %v1557 = vpop.permute.xlu0 %1556
        %v1558 = vsel %vm1404, %v1046, 0
        %v1560 = vsel %vm1404, %v1051, 0
        %v1562 = vsel %vm1404, %v1056, 0
        %v1564 = vsel %vm1404, %v1061, 0
        %v1566 = vsel %vm1404, %v1066, 0
        %v1568 = vsel %vm1404, %v1071, 0
        %v1570 = vsel %vm1404, %v1076, 0
        %v1572 = vsel %vm1404, %v1081, 0
        %v1574 = vsel %vm1404, %v1543, 0
        %v1576 = vsel %vm1404, %v1545, 0
        %v1578 = vsel %vm1404, %v1547, 0
        %v1580 = vsel %vm1404, %v1549, 0
        %v1582 = vsel %vm1404, %v1551, 0
        %v1584 = vsel %vm1404, %v1553, 0
        %v1586 = vsel %vm1404, %v1555, 0
        %v1588 = vsel %vm1404, %v1557, 0
        %1590 = vmatprep.subr.mxu0 0.0
        %1591 = vmatpush1.xpose.msra.mxu0 0.0
        %1592 = vmatprep.subr.mxu0 0.0
        %1593 = vmatpush1.xpose.msra.mxu0 0.0
        %1594 = vmatprep.subr.mxu0 0.0
        %1595 = vmatpush1.xpose.msra.mxu0 0.0
        %1596 = vmatprep.subr.mxu0 0.0
        %1597 = vmatpush1.xpose.msra.mxu0 0.0
        %1598 = vmatprep.subr.mxu0 0.0
        %1599 = vmatpush1.xpose.msra.mxu0 0.0
        %1600 = vmatprep.subr.mxu0 0.0
        %1601 = vmatpush1.xpose.msra.mxu0 0.0
        %1602 = vmatprep.subr.mxu0 0.0
        %1603 = vmatpush1.xpose.msra.mxu0 0.0
        %1604 = vmatprep.subr.mxu0 0.0
        %1605 = vmatpush1.xpose.msra.mxu0 0.0
        %1606 = vmatprep.subr.mxu0 0.0
        %1607 = vmatpush1.xpose.msra.mxu0 %v1588
        %1608 = vmatprep.subr.mxu0 0.0
        %1609 = vmatpush1.xpose.msra.mxu0 %v1586
        %1610 = vmatprep.subr.mxu0 0.0
        %1611 = vmatpush1.xpose.msra.mxu0 %v1584
        %1612 = vmatprep.subr.mxu0 0.0
        %1613 = vmatpush1.xpose.msra.mxu0 %v1582
        %1614 = vmatprep.subr.mxu0 0.0
        %1615 = vmatpush1.xpose.msra.mxu0 %v1580
        %1616 = vmatprep.subr.mxu0 0.0
        %1617 = vmatpush1.xpose.msra.mxu0 %v1578
        %1618 = vmatprep.subr.mxu0 0.0
        %1619 = vmatpush1.xpose.msra.mxu0 %v1576
        %1620 = vmatprep.subr.mxu0 0.0
        %1621 = vmatpush1.xpose.msra.mxu0 %v1574
        %1622 = vmatprep.subr.mxu0 0.0
        %1623 = vmatpush2.xpose.msra.mxu0 0.0
        %1624 = vmatprep.subr.mxu0 0.0
        %1625 = vmatpush2.xpose.msra.mxu0 0.0
        %1626 = vmatprep.subr.mxu0 0.0
        %1627 = vmatpush2.xpose.msra.mxu0 0.0
        %1628 = vmatprep.subr.mxu0 0.0
        %1629 = vmatpush2.xpose.msra.mxu0 0.0
        %1630 = vmatprep.subr.mxu0 0.0
        %1631 = vmatpush2.xpose.msra.mxu0 0.0
        %1632 = vmatprep.subr.mxu0 0.0
        %1633 = vmatpush2.xpose.msra.mxu0 0.0
        %1634 = vmatprep.subr.mxu0 0.0
        %1635 = vmatpush2.xpose.msra.mxu0 0.0
        %1636 = vmatprep.subr.mxu0 0.0
        %1637 = vmatpush2.xpose.msra.mxu0 0.0
        %1638 = vmatprep.subr.mxu0 0.0
        %1639 = vmatpush2.xpose.msra.mxu0 0.0
        %1640 = vmatprep.subr.mxu0 0.0
        %1641 = vmatpush2.xpose.msra.mxu0 0.0
        %1642 = vmatprep.subr.mxu0 0.0
        %1643 = vmatpush2.xpose.msra.mxu0 0.0
        %1644 = vmatprep.subr.mxu0 0.0
        %1645 = vmatpush2.xpose.msra.mxu0 0.0
        %1646 = vmatprep.subr.mxu0 0.0
        %1647 = vmatpush2.xpose.msra.mxu0 0.0
        %1648 = vmatprep.subr.mxu0 0.0
        %1649 = vmatpush2.xpose.msra.mxu0 0.0
        %1650 = vmatprep.subr.mxu0 0.0
        %1651 = vmatpush2.xpose.msra.mxu0 0.0
        %1652 = vmatprep.subr.mxu0 0.0
        %1653 = vmatpush2.xpose.msra.mxu0 0.0
        %1654 = vmatprep.mubr.f32.mxu0 0.0
        %1655 = vmatmul.mubr.f32.gmra.mxu0 %v1558
        %v1656 = vpop.f32.mrf.mxu0
        %v1657 = vadd.f32 0.0, %v1656
        %v1658 = vpop.f32.mrf.mxu0
        %1659 = vmatprep.mubr.f32.mxu0 0.0
        %1660 = vmatmul.mubr.f32.gmra.mxu0 %v1560
        %v1661 = vpop.f32.mrf.mxu0
        %v1662 = vadd.f32 0.0, %v1661
        %v1663 = vpop.f32.mrf.mxu0
        %1664 = vmatprep.mubr.f32.mxu0 0.0
        %1665 = vmatmul.mubr.f32.gmra.mxu0 %v1562
        %v1666 = vpop.f32.mrf.mxu0
        %v1667 = vadd.f32 0.0, %v1666
        %v1668 = vpop.f32.mrf.mxu0
        %1669 = vmatprep.mubr.f32.mxu0 0.0
        %1670 = vmatmul.mubr.f32.gmra.mxu0 %v1564
        %v1671 = vpop.f32.mrf.mxu0
        %v1672 = vadd.f32 0.0, %v1671
        %v1673 = vpop.f32.mrf.mxu0
        %1674 = vmatprep.mubr.f32.mxu0 0.0
        %1675 = vmatmul.mubr.f32.gmra.mxu0 %v1566
        %v1676 = vpop.f32.mrf.mxu0
        %v1677 = vadd.f32 0.0, %v1676
        %v1678 = vpop.f32.mrf.mxu0
        %1679 = vmatprep.mubr.f32.mxu0 0.0
        %1680 = vmatmul.mubr.f32.gmra.mxu0 %v1568
        %v1681 = vpop.f32.mrf.mxu0
        %v1682 = vadd.f32 0.0, %v1681
        %v1683 = vpop.f32.mrf.mxu0
        %1684 = vmatprep.mubr.f32.mxu0 0.0
        %1685 = vmatmul.mubr.f32.gmra.mxu0 %v1570
        %v1686 = vpop.f32.mrf.mxu0
        %v1687 = vadd.f32 0.0, %v1686
        %v1688 = vpop.f32.mrf.mxu0
        %1689 = vmatprep.mubr.f32.mxu0 0.0
        %1690 = vmatmul.mubr.f32.gmra.mxu0 %v1572
        %v1691 = vpop.f32.mrf.mxu0
        %v1692 = vadd.f32 0.0, %v1691
        %v1693 = vpop.f32.mrf.mxu0
        %1694 = vdwg.mxu0
        %1695 = vrot.lane.b32.xlu0 %v1086, 96
        %v1696 = vpop.permute.xlu0 %1695
        %1697 = vrot.lane.b32.xlu0 %v1091, 96
        %v1698 = vpop.permute.xlu0 %1697
        %1699 = vrot.lane.b32.xlu0 %v1096, 96
        %v1700 = vpop.permute.xlu0 %1699
        %1701 = vrot.lane.b32.xlu0 %v1101, 96
        %v1702 = vpop.permute.xlu0 %1701
        %1703 = vrot.lane.b32.xlu0 %v1106, 96
        %v1704 = vpop.permute.xlu0 %1703
        %1705 = vrot.lane.b32.xlu0 %v1111, 96
        %v1706 = vpop.permute.xlu0 %1705
        %1707 = vrot.lane.b32.xlu0 %v1116, 96
        %v1708 = vpop.permute.xlu0 %1707
        %1709 = vrot.lane.b32.xlu0 %v1121, 96
        %v1710 = vpop.permute.xlu0 %1709
        %v1711 = vsel %vm1404, %v1086, 0
        %v1713 = vsel %vm1404, %v1091, 0
        %v1715 = vsel %vm1404, %v1096, 0
        %v1717 = vsel %vm1404, %v1101, 0
        %v1719 = vsel %vm1404, %v1106, 0
        %v1721 = vsel %vm1404, %v1111, 0
        %v1723 = vsel %vm1404, %v1116, 0
        %v1725 = vsel %vm1404, %v1121, 0
        %v1727 = vsel %vm1404, %v1696, 0
        %v1729 = vsel %vm1404, %v1698, 0
        %v1731 = vsel %vm1404, %v1700, 0
        %v1733 = vsel %vm1404, %v1702, 0
        %v1735 = vsel %vm1404, %v1704, 0
        %v1737 = vsel %vm1404, %v1706, 0
        %v1739 = vsel %vm1404, %v1708, 0
        %v1741 = vsel %vm1404, %v1710, 0
        %1743 = vmatprep.subr.mxu0 0.0
        %1744 = vmatpush1.xpose.msra.mxu0 0.0
        %1745 = vmatprep.subr.mxu0 0.0
        %1746 = vmatpush1.xpose.msra.mxu0 0.0
        %1747 = vmatprep.subr.mxu0 0.0
        %1748 = vmatpush1.xpose.msra.mxu0 0.0
        %1749 = vmatprep.subr.mxu0 0.0
        %1750 = vmatpush1.xpose.msra.mxu0 0.0
        %1751 = vmatprep.subr.mxu0 0.0
        %1752 = vmatpush1.xpose.msra.mxu0 0.0
        %1753 = vmatprep.subr.mxu0 0.0
        %1754 = vmatpush1.xpose.msra.mxu0 0.0
        %1755 = vmatprep.subr.mxu0 0.0
        %1756 = vmatpush1.xpose.msra.mxu0 0.0
        %1757 = vmatprep.subr.mxu0 0.0
        %1758 = vmatpush1.xpose.msra.mxu0 0.0
        %1759 = vmatprep.subr.mxu0 0.0
        %1760 = vmatpush1.xpose.msra.mxu0 %v1741
        %1761 = vmatprep.subr.mxu0 0.0
        %1762 = vmatpush1.xpose.msra.mxu0 %v1739
        %1763 = vmatprep.subr.mxu0 0.0
        %1764 = vmatpush1.xpose.msra.mxu0 %v1737
        %1765 = vmatprep.subr.mxu0 0.0
        %1766 = vmatpush1.xpose.msra.mxu0 %v1735
        %1767 = vmatprep.subr.mxu0 0.0
        %1768 = vmatpush1.xpose.msra.mxu0 %v1733
        %1769 = vmatprep.subr.mxu0 0.0
        %1770 = vmatpush1.xpose.msra.mxu0 %v1731
        %1771 = vmatprep.subr.mxu0 0.0
        %1772 = vmatpush1.xpose.msra.mxu0 %v1729
        %1773 = vmatprep.subr.mxu0 0.0
        %1774 = vmatpush1.xpose.msra.mxu0 %v1727
        %1775 = vmatprep.subr.mxu0 0.0
        %1776 = vmatpush2.xpose.msra.mxu0 0.0
        %1777 = vmatprep.subr.mxu0 0.0
        %1778 = vmatpush2.xpose.msra.mxu0 0.0
        %1779 = vmatprep.subr.mxu0 0.0
        %1780 = vmatpush2.xpose.msra.mxu0 0.0
        %1781 = vmatprep.subr.mxu0 0.0
        %1782 = vmatpush2.xpose.msra.mxu0 0.0
        %1783 = vmatprep.subr.mxu0 0.0
        %1784 = vmatpush2.xpose.msra.mxu0 0.0
        %1785 = vmatprep.subr.mxu0 0.0
        %1786 = vmatpush2.xpose.msra.mxu0 0.0
        %1787 = vmatprep.subr.mxu0 0.0
        %1788 = vmatpush2.xpose.msra.mxu0 0.0
        %1789 = vmatprep.subr.mxu0 0.0
        %1790 = vmatpush2.xpose.msra.mxu0 0.0
        %1791 = vmatprep.subr.mxu0 0.0
        %1792 = vmatpush2.xpose.msra.mxu0 0.0
        %1793 = vmatprep.subr.mxu0 0.0
        %1794 = vmatpush2.xpose.msra.mxu0 0.0
        %1795 = vmatprep.subr.mxu0 0.0
        %1796 = vmatpush2.xpose.msra.mxu0 0.0
        %1797 = vmatprep.subr.mxu0 0.0
        %1798 = vmatpush2.xpose.msra.mxu0 0.0
        %1799 = vmatprep.subr.mxu0 0.0
        %1800 = vmatpush2.xpose.msra.mxu0 0.0
        %1801 = vmatprep.subr.mxu0 0.0
        %1802 = vmatpush2.xpose.msra.mxu0 0.0
        %1803 = vmatprep.subr.mxu0 0.0
        %1804 = vmatpush2.xpose.msra.mxu0 0.0
        %1805 = vmatprep.subr.mxu0 0.0
        %1806 = vmatpush2.xpose.msra.mxu0 0.0
        %1807 = vmatprep.mubr.f32.mxu0 0.0
        %1808 = vmatmul.mubr.f32.gmra.mxu0 %v1711
        %v1809 = vpop.f32.mrf.mxu0
        %v1810 = vadd.f32 0.0, %v1809
        %v1811 = vpop.f32.mrf.mxu0
        %1812 = vmatprep.mubr.f32.mxu0 0.0
        %1813 = vmatmul.mubr.f32.gmra.mxu0 %v1713
        %v1814 = vpop.f32.mrf.mxu0
        %v1815 = vadd.f32 0.0, %v1814
        %v1816 = vpop.f32.mrf.mxu0
        %1817 = vmatprep.mubr.f32.mxu0 0.0
        %1818 = vmatmul.mubr.f32.gmra.mxu0 %v1715
        %v1819 = vpop.f32.mrf.mxu0
        %v1820 = vadd.f32 0.0, %v1819
        %v1821 = vpop.f32.mrf.mxu0
        %1822 = vmatprep.mubr.f32.mxu0 0.0
        %1823 = vmatmul.mubr.f32.gmra.mxu0 %v1717
        %v1824 = vpop.f32.mrf.mxu0
        %v1825 = vadd.f32 0.0, %v1824
        %v1826 = vpop.f32.mrf.mxu0
        %1827 = vmatprep.mubr.f32.mxu0 0.0
        %1828 = vmatmul.mubr.f32.gmra.mxu0 %v1719
        %v1829 = vpop.f32.mrf.mxu0
        %v1830 = vadd.f32 0.0, %v1829
        %v1831 = vpop.f32.mrf.mxu0
        %1832 = vmatprep.mubr.f32.mxu0 0.0
        %1833 = vmatmul.mubr.f32.gmra.mxu0 %v1721
        %v1834 = vpop.f32.mrf.mxu0
        %v1835 = vadd.f32 0.0, %v1834
        %v1836 = vpop.f32.mrf.mxu0
        %1837 = vmatprep.mubr.f32.mxu0 0.0
        %1838 = vmatmul.mubr.f32.gmra.mxu0 %v1723
        %v1839 = vpop.f32.mrf.mxu0
        %v1840 = vadd.f32 0.0, %v1839
        %v1841 = vpop.f32.mrf.mxu0
        %1842 = vmatprep.mubr.f32.mxu0 0.0
        %1843 = vmatmul.mubr.f32.gmra.mxu0 %v1725
        %v1844 = vpop.f32.mrf.mxu0
        %v1845 = vadd.f32 0.0, %v1844
        %v1846 = vpop.f32.mrf.mxu0
        %1847 = vdwg.mxu0
        %1848 = vrot.lane.b32.xlu0 %v1126, 96
        %v1849 = vpop.permute.xlu0 %1848
        %1850 = vrot.lane.b32.xlu0 %v1131, 96
        %v1851 = vpop.permute.xlu0 %1850
        %1852 = vrot.lane.b32.xlu0 %v1136, 96
        %v1853 = vpop.permute.xlu0 %1852
        %1854 = vrot.lane.b32.xlu0 %v1141, 96
        %v1855 = vpop.permute.xlu0 %1854
        %1856 = vrot.lane.b32.xlu0 %v1146, 96
        %v1857 = vpop.permute.xlu0 %1856
        %1858 = vrot.lane.b32.xlu0 %v1151, 96
        %v1859 = vpop.permute.xlu0 %1858
        %1860 = vrot.lane.b32.xlu0 %v1156, 96
        %v1861 = vpop.permute.xlu0 %1860
        %1862 = vrot.lane.b32.xlu0 %v1161, 96
        %v1863 = vpop.permute.xlu0 %1862
        %v1864 = vsel %vm1404, %v1126, 0
        %v1866 = vsel %vm1404, %v1131, 0
        %v1868 = vsel %vm1404, %v1136, 0
        %v1870 = vsel %vm1404, %v1141, 0
        %v1872 = vsel %vm1404, %v1146, 0
        %v1874 = vsel %vm1404, %v1151, 0
        %v1876 = vsel %vm1404, %v1156, 0
        %v1878 = vsel %vm1404, %v1161, 0
        %v1880 = vsel %vm1404, %v1849, 0
        %v1882 = vsel %vm1404, %v1851, 0
        %v1884 = vsel %vm1404, %v1853, 0
        %v1886 = vsel %vm1404, %v1855, 0
        %v1888 = vsel %vm1404, %v1857, 0
        %v1890 = vsel %vm1404, %v1859, 0
        %v1892 = vsel %vm1404, %v1861, 0
        %v1894 = vsel %vm1404, %v1863, 0
        %1896 = vmatprep.subr.mxu0 0.0
        %1897 = vmatpush1.xpose.msra.mxu0 0.0
        %1898 = vmatprep.subr.mxu0 0.0
        %1899 = vmatpush1.xpose.msra.mxu0 0.0
        %1900 = vmatprep.subr.mxu0 0.0
        %1901 = vmatpush1.xpose.msra.mxu0 0.0
        %1902 = vmatprep.subr.mxu0 0.0
        %1903 = vmatpush1.xpose.msra.mxu0 0.0
        %1904 = vmatprep.subr.mxu0 0.0
        %1905 = vmatpush1.xpose.msra.mxu0 0.0
        %1906 = vmatprep.subr.mxu0 0.0
        %1907 = vmatpush1.xpose.msra.mxu0 0.0
        %1908 = vmatprep.subr.mxu0 0.0
        %1909 = vmatpush1.xpose.msra.mxu0 0.0
        %1910 = vmatprep.subr.mxu0 0.0
        %1911 = vmatpush1.xpose.msra.mxu0 0.0
        %1912 = vmatprep.subr.mxu0 0.0
        %1913 = vmatpush1.xpose.msra.mxu0 %v1894
        %1914 = vmatprep.subr.mxu0 0.0
        %1915 = vmatpush1.xpose.msra.mxu0 %v1892
        %1916 = vmatprep.subr.mxu0 0.0
        %1917 = vmatpush1.xpose.msra.mxu0 %v1890
        %1918 = vmatprep.subr.mxu0 0.0
        %1919 = vmatpush1.xpose.msra.mxu0 %v1888
        %1920 = vmatprep.subr.mxu0 0.0
        %1921 = vmatpush1.xpose.msra.mxu0 %v1886
        %1922 = vmatprep.subr.mxu0 0.0
        %1923 = vmatpush1.xpose.msra.mxu0 %v1884
        %1924 = vmatprep.subr.mxu0 0.0
        %1925 = vmatpush1.xpose.msra.mxu0 %v1882
        %1926 = vmatprep.subr.mxu0 0.0
        %1927 = vmatpush1.xpose.msra.mxu0 %v1880
        %1928 = vmatprep.subr.mxu0 0.0
        %1929 = vmatpush2.xpose.msra.mxu0 0.0
        %1930 = vmatprep.subr.mxu0 0.0
        %1931 = vmatpush2.xpose.msra.mxu0 0.0
        %1932 = vmatprep.subr.mxu0 0.0
        %1933 = vmatpush2.xpose.msra.mxu0 0.0
        %1934 = vmatprep.subr.mxu0 0.0
        %1935 = vmatpush2.xpose.msra.mxu0 0.0
        %1936 = vmatprep.subr.mxu0 0.0
        %1937 = vmatpush2.xpose.msra.mxu0 0.0
        %1938 = vmatprep.subr.mxu0 0.0
        %1939 = vmatpush2.xpose.msra.mxu0 0.0
        %1940 = vmatprep.subr.mxu0 0.0
        %1941 = vmatpush2.xpose.msra.mxu0 0.0
        %1942 = vmatprep.subr.mxu0 0.0
        %1943 = vmatpush2.xpose.msra.mxu0 0.0
        %1944 = vmatprep.subr.mxu0 0.0
        %1945 = vmatpush2.xpose.msra.mxu0 0.0
        %1946 = vmatprep.subr.mxu0 0.0
        %1947 = vmatpush2.xpose.msra.mxu0 0.0
        %1948 = vmatprep.subr.mxu0 0.0
        %1949 = vmatpush2.xpose.msra.mxu0 0.0
        %1950 = vmatprep.subr.mxu0 0.0
        %1951 = vmatpush2.xpose.msra.mxu0 0.0
        %1952 = vmatprep.subr.mxu0 0.0
        %1953 = vmatpush2.xpose.msra.mxu0 0.0
        %1954 = vmatprep.subr.mxu0 0.0
        %1955 = vmatpush2.xpose.msra.mxu0 0.0
        %1956 = vmatprep.subr.mxu0 0.0
        %1957 = vmatpush2.xpose.msra.mxu0 0.0
        %1958 = vmatprep.subr.mxu0 0.0
        %1959 = vmatpush2.xpose.msra.mxu0 0.0
        %1960 = vmatprep.mubr.f32.mxu0 0.0
        %1961 = vmatmul.mubr.f32.gmra.mxu0 %v1864
        %v1962 = vpop.f32.mrf.mxu0
        %v1963 = vadd.f32 0.0, %v1962
        %v1964 = vpop.f32.mrf.mxu0
        %1965 = vmatprep.mubr.f32.mxu0 0.0
        %1966 = vmatmul.mubr.f32.gmra.mxu0 %v1866
        %v1967 = vpop.f32.mrf.mxu0
        %v1968 = vadd.f32 0.0, %v1967
        %v1969 = vpop.f32.mrf.mxu0
        %1970 = vmatprep.mubr.f32.mxu0 0.0
        %1971 = vmatmul.mubr.f32.gmra.mxu0 %v1868
        %v1972 = vpop.f32.mrf.mxu0
        %v1973 = vadd.f32 0.0, %v1972
        %v1974 = vpop.f32.mrf.mxu0
        %1975 = vmatprep.mubr.f32.mxu0 0.0
        %1976 = vmatmul.mubr.f32.gmra.mxu0 %v1870
        %v1977 = vpop.f32.mrf.mxu0
        %v1978 = vadd.f32 0.0, %v1977
        %v1979 = vpop.f32.mrf.mxu0
        %1980 = vmatprep.mubr.f32.mxu0 0.0
        %1981 = vmatmul.mubr.f32.gmra.mxu0 %v1872
        %v1982 = vpop.f32.mrf.mxu0
        %v1983 = vadd.f32 0.0, %v1982
        %v1984 = vpop.f32.mrf.mxu0
        %1985 = vmatprep.mubr.f32.mxu0 0.0
        %1986 = vmatmul.mubr.f32.gmra.mxu0 %v1874
        %v1987 = vpop.f32.mrf.mxu0
        %v1988 = vadd.f32 0.0, %v1987
        %v1989 = vpop.f32.mrf.mxu0
        %1990 = vmatprep.mubr.f32.mxu0 0.0
        %1991 = vmatmul.mubr.f32.gmra.mxu0 %v1876
        %v1992 = vpop.f32.mrf.mxu0
        %v1993 = vadd.f32 0.0, %v1992
        %v1994 = vpop.f32.mrf.mxu0
        %1995 = vmatprep.mubr.f32.mxu0 0.0
        %1996 = vmatmul.mubr.f32.gmra.mxu0 %v1878
        %v1997 = vpop.f32.mrf.mxu0
        %v1998 = vadd.f32 0.0, %v1997
        %v1999 = vpop.f32.mrf.mxu0
        %2000 = vdwg.mxu0
        %2001 = vrot.lane.b32.xlu0 %v1197, 96
        %v2002 = vpop.permute.xlu0 %2001
        %2003 = vrot.lane.b32.xlu0 %v1199, 96
        %v2004 = vpop.permute.xlu0 %2003
        %2005 = vrot.lane.b32.xlu0 %v1201, 96
        %v2006 = vpop.permute.xlu0 %2005
        %2007 = vrot.lane.b32.xlu0 %v1203, 96
        %v2008 = vpop.permute.xlu0 %2007
        %2009 = vrot.lane.b32.xlu0 %v1205, 96
        %v2010 = vpop.permute.xlu0 %2009
        %2011 = vrot.lane.b32.xlu0 %v1207, 96
        %v2012 = vpop.permute.xlu0 %2011
        %2013 = vrot.lane.b32.xlu0 %v1209, 96
        %v2014 = vpop.permute.xlu0 %2013
        %2015 = vrot.lane.b32.xlu0 %v1211, 96
        %v2016 = vpop.permute.xlu0 %2015
        %v2017 = vsel %vm1404, %v1197, 0
        %v2019 = vsel %vm1404, %v1199, 0
        %v2021 = vsel %vm1404, %v1201, 0
        %v2023 = vsel %vm1404, %v1203, 0
        %v2025 = vsel %vm1404, %v1205, 0
        %v2027 = vsel %vm1404, %v1207, 0
        %v2029 = vsel %vm1404, %v1209, 0
        %v2031 = vsel %vm1404, %v1211, 0
        %v2033 = vsel %vm1404, %v2002, 0
        %v2035 = vsel %vm1404, %v2004, 0
        %v2037 = vsel %vm1404, %v2006, 0
        %v2039 = vsel %vm1404, %v2008, 0
        %v2041 = vsel %vm1404, %v2010, 0
        %v2043 = vsel %vm1404, %v2012, 0
        %v2045 = vsel %vm1404, %v2014, 0
        %v2047 = vsel %vm1404, %v2016, 0
        %2049 = vmatprep.subr.mxu0 0.0
        %2050 = vmatpush1.xpose.msra.mxu0 0.0
        %2051 = vmatprep.subr.mxu0 0.0
        %2052 = vmatpush1.xpose.msra.mxu0 0.0
        %2053 = vmatprep.subr.mxu0 0.0
        %2054 = vmatpush1.xpose.msra.mxu0 0.0
        %2055 = vmatprep.subr.mxu0 0.0
        %2056 = vmatpush1.xpose.msra.mxu0 0.0
        %2057 = vmatprep.subr.mxu0 0.0
        %2058 = vmatpush1.xpose.msra.mxu0 0.0
        %2059 = vmatprep.subr.mxu0 0.0
        %2060 = vmatpush1.xpose.msra.mxu0 0.0
        %2061 = vmatprep.subr.mxu0 0.0
        %2062 = vmatpush1.xpose.msra.mxu0 0.0
        %2063 = vmatprep.subr.mxu0 0.0
        %2064 = vmatpush1.xpose.msra.mxu0 0.0
        %2065 = vmatprep.subr.mxu0 0.0
        %2066 = vmatpush1.xpose.msra.mxu0 %v2047
        %2067 = vmatprep.subr.mxu0 0.0
        %2068 = vmatpush1.xpose.msra.mxu0 %v2045
        %2069 = vmatprep.subr.mxu0 0.0
        %2070 = vmatpush1.xpose.msra.mxu0 %v2043
        %2071 = vmatprep.subr.mxu0 0.0
        %2072 = vmatpush1.xpose.msra.mxu0 %v2041
        %2073 = vmatprep.subr.mxu0 0.0
        %2074 = vmatpush1.xpose.msra.mxu0 %v2039
        %2075 = vmatprep.subr.mxu0 0.0
        %2076 = vmatpush1.xpose.msra.mxu0 %v2037
        %2077 = vmatprep.subr.mxu0 0.0
        %2078 = vmatpush1.xpose.msra.mxu0 %v2035
        %2079 = vmatprep.subr.mxu0 0.0
        %2080 = vmatpush1.xpose.msra.mxu0 %v2033
        %2081 = vmatprep.subr.mxu0 0.0
        %2082 = vmatpush2.xpose.msra.mxu0 0.0
        %2083 = vmatprep.subr.mxu0 0.0
        %2084 = vmatpush2.xpose.msra.mxu0 0.0
        %2085 = vmatprep.subr.mxu0 0.0
        %2086 = vmatpush2.xpose.msra.mxu0 0.0
        %2087 = vmatprep.subr.mxu0 0.0
        %2088 = vmatpush2.xpose.msra.mxu0 0.0
        %2089 = vmatprep.subr.mxu0 0.0
        %2090 = vmatpush2.xpose.msra.mxu0 0.0
        %2091 = vmatprep.subr.mxu0 0.0
        %2092 = vmatpush2.xpose.msra.mxu0 0.0
        %2093 = vmatprep.subr.mxu0 0.0
        %2094 = vmatpush2.xpose.msra.mxu0 0.0
        %2095 = vmatprep.subr.mxu0 0.0
        %2096 = vmatpush2.xpose.msra.mxu0 0.0
        %2097 = vmatprep.subr.mxu0 0.0
        %2098 = vmatpush2.xpose.msra.mxu0 0.0
        %2099 = vmatprep.subr.mxu0 0.0
        %2100 = vmatpush2.xpose.msra.mxu0 0.0
        %2101 = vmatprep.subr.mxu0 0.0
        %2102 = vmatpush2.xpose.msra.mxu0 0.0
        %2103 = vmatprep.subr.mxu0 0.0
        %2104 = vmatpush2.xpose.msra.mxu0 0.0
        %2105 = vmatprep.subr.mxu0 0.0
        %2106 = vmatpush2.xpose.msra.mxu0 0.0
        %2107 = vmatprep.subr.mxu0 0.0
        %2108 = vmatpush2.xpose.msra.mxu0 0.0
        %2109 = vmatprep.subr.mxu0 0.0
        %2110 = vmatpush2.xpose.msra.mxu0 0.0
        %2111 = vmatprep.subr.mxu0 0.0
        %2112 = vmatpush2.xpose.msra.mxu0 0.0
        %2113 = vmatprep.mubr.f32.mxu0 0.0
        %2114 = vmatmul.mubr.f32.gmra.mxu0 %v2017
        %v2115 = vpop.f32.mrf.mxu0
        %v2116 = vadd.f32 0.0, %v2115
        %v2117 = vpop.f32.mrf.mxu0
        %2118 = vmatprep.mubr.f32.mxu0 0.0
        %2119 = vmatmul.mubr.f32.gmra.mxu0 %v2019
        %v2120 = vpop.f32.mrf.mxu0
        %v2121 = vadd.f32 0.0, %v2120
        %v2122 = vpop.f32.mrf.mxu0
        %2123 = vmatprep.mubr.f32.mxu0 0.0
        %2124 = vmatmul.mubr.f32.gmra.mxu0 %v2021
        %v2125 = vpop.f32.mrf.mxu0
        %v2126 = vadd.f32 0.0, %v2125
        %v2127 = vpop.f32.mrf.mxu0
        %2128 = vmatprep.mubr.f32.mxu0 0.0
        %2129 = vmatmul.mubr.f32.gmra.mxu0 %v2023
        %v2130 = vpop.f32.mrf.mxu0
        %v2131 = vadd.f32 0.0, %v2130
        %v2132 = vpop.f32.mrf.mxu0
        %2133 = vmatprep.mubr.f32.mxu0 0.0
        %2134 = vmatmul.mubr.f32.gmra.mxu0 %v2025
        %v2135 = vpop.f32.mrf.mxu0
        %v2136 = vadd.f32 0.0, %v2135
        %v2137 = vpop.f32.mrf.mxu0
        %2138 = vmatprep.mubr.f32.mxu0 0.0
        %2139 = vmatmul.mubr.f32.gmra.mxu0 %v2027
        %v2140 = vpop.f32.mrf.mxu0
        %v2141 = vadd.f32 0.0, %v2140
        %v2142 = vpop.f32.mrf.mxu0
        %2143 = vmatprep.mubr.f32.mxu0 0.0
        %2144 = vmatmul.mubr.f32.gmra.mxu0 %v2029
        %v2145 = vpop.f32.mrf.mxu0
        %v2146 = vadd.f32 0.0, %v2145
        %v2147 = vpop.f32.mrf.mxu0
        %2148 = vmatprep.mubr.f32.mxu0 0.0
        %2149 = vmatmul.mubr.f32.gmra.mxu0 %v2031
        %v2150 = vpop.f32.mrf.mxu0
        %v2151 = vadd.f32 0.0, %v2150
        %v2152 = vpop.f32.mrf.mxu0
        %2153 = vdwg.mxu0
        %2154 = vrot.lane.b32.xlu0 %v1213, 96
        %v2155 = vpop.permute.xlu0 %2154
        %2156 = vrot.lane.b32.xlu0 %v1215, 96
        %v2157 = vpop.permute.xlu0 %2156
        %2158 = vrot.lane.b32.xlu0 %v1217, 96
        %v2159 = vpop.permute.xlu0 %2158
        %2160 = vrot.lane.b32.xlu0 %v1219, 96
        %v2161 = vpop.permute.xlu0 %2160
        %2162 = vrot.lane.b32.xlu0 %v1221, 96
        %v2163 = vpop.permute.xlu0 %2162
        %2164 = vrot.lane.b32.xlu0 %v1223, 96
        %v2165 = vpop.permute.xlu0 %2164
        %2166 = vrot.lane.b32.xlu0 %v1225, 96
        %v2167 = vpop.permute.xlu0 %2166
        %2168 = vrot.lane.b32.xlu0 %v1227, 96
        %v2169 = vpop.permute.xlu0 %2168
        %v2170 = vsel %vm1404, %v1213, 0
        %v2172 = vsel %vm1404, %v1215, 0
        %v2174 = vsel %vm1404, %v1217, 0
        %v2176 = vsel %vm1404, %v1219, 0
        %v2178 = vsel %vm1404, %v1221, 0
        %v2180 = vsel %vm1404, %v1223, 0
        %v2182 = vsel %vm1404, %v1225, 0
        %v2184 = vsel %vm1404, %v1227, 0
        %v2186 = vsel %vm1404, %v2155, 0
        %v2188 = vsel %vm1404, %v2157, 0
        %v2190 = vsel %vm1404, %v2159, 0
        %v2192 = vsel %vm1404, %v2161, 0
        %v2194 = vsel %vm1404, %v2163, 0
        %v2196 = vsel %vm1404, %v2165, 0
        %v2198 = vsel %vm1404, %v2167, 0
        %v2200 = vsel %vm1404, %v2169, 0
        %2202 = vmatprep.subr.mxu0 0.0
        %2203 = vmatpush1.xpose.msra.mxu0 0.0
        %2204 = vmatprep.subr.mxu0 0.0
        %2205 = vmatpush1.xpose.msra.mxu0 0.0
        %2206 = vmatprep.subr.mxu0 0.0
        %2207 = vmatpush1.xpose.msra.mxu0 0.0
        %2208 = vmatprep.subr.mxu0 0.0
        %2209 = vmatpush1.xpose.msra.mxu0 0.0
        %2210 = vmatprep.subr.mxu0 0.0
        %2211 = vmatpush1.xpose.msra.mxu0 0.0
        %2212 = vmatprep.subr.mxu0 0.0
        %2213 = vmatpush1.xpose.msra.mxu0 0.0
        %2214 = vmatprep.subr.mxu0 0.0
        %2215 = vmatpush1.xpose.msra.mxu0 0.0
        %2216 = vmatprep.subr.mxu0 0.0
        %2217 = vmatpush1.xpose.msra.mxu0 0.0
        %2218 = vmatprep.subr.mxu0 0.0
        %2219 = vmatpush1.xpose.msra.mxu0 %v2200
        %2220 = vmatprep.subr.mxu0 0.0
        %2221 = vmatpush1.xpose.msra.mxu0 %v2198
        %2222 = vmatprep.subr.mxu0 0.0
        %2223 = vmatpush1.xpose.msra.mxu0 %v2196
        %2224 = vmatprep.subr.mxu0 0.0
        %2225 = vmatpush1.xpose.msra.mxu0 %v2194
        %2226 = vmatprep.subr.mxu0 0.0
        %2227 = vmatpush1.xpose.msra.mxu0 %v2192
        %2228 = vmatprep.subr.mxu0 0.0
        %2229 = vmatpush1.xpose.msra.mxu0 %v2190
        %2230 = vmatprep.subr.mxu0 0.0
        %2231 = vmatpush1.xpose.msra.mxu0 %v2188
        %2232 = vmatprep.subr.mxu0 0.0
        %2233 = vmatpush1.xpose.msra.mxu0 %v2186
        %2234 = vmatprep.subr.mxu0 0.0
        %2235 = vmatpush2.xpose.msra.mxu0 0.0
        %2236 = vmatprep.subr.mxu0 0.0
        %2237 = vmatpush2.xpose.msra.mxu0 0.0
        %2238 = vmatprep.subr.mxu0 0.0
        %2239 = vmatpush2.xpose.msra.mxu0 0.0
        %2240 = vmatprep.subr.mxu0 0.0
        %2241 = vmatpush2.xpose.msra.mxu0 0.0
        %2242 = vmatprep.subr.mxu0 0.0
        %2243 = vmatpush2.xpose.msra.mxu0 0.0
        %2244 = vmatprep.subr.mxu0 0.0
        %2245 = vmatpush2.xpose.msra.mxu0 0.0
        %2246 = vmatprep.subr.mxu0 0.0
        %2247 = vmatpush2.xpose.msra.mxu0 0.0
        %2248 = vmatprep.subr.mxu0 0.0
        %2249 = vmatpush2.xpose.msra.mxu0 0.0
        %2250 = vmatprep.subr.mxu0 0.0
        %2251 = vmatpush2.xpose.msra.mxu0 0.0
        %2252 = vmatprep.subr.mxu0 0.0
        %2253 = vmatpush2.xpose.msra.mxu0 0.0
        %2254 = vmatprep.subr.mxu0 0.0
        %2255 = vmatpush2.xpose.msra.mxu0 0.0
        %2256 = vmatprep.subr.mxu0 0.0
        %2257 = vmatpush2.xpose.msra.mxu0 0.0
        %2258 = vmatprep.subr.mxu0 0.0
        %2259 = vmatpush2.xpose.msra.mxu0 0.0
        %2260 = vmatprep.subr.mxu0 0.0
        %2261 = vmatpush2.xpose.msra.mxu0 0.0
        %2262 = vmatprep.subr.mxu0 0.0
        %2263 = vmatpush2.xpose.msra.mxu0 0.0
        %2264 = vmatprep.subr.mxu0 0.0
        %2265 = vmatpush2.xpose.msra.mxu0 0.0
        %2266 = vmatprep.mubr.f32.mxu0 0.0
        %2267 = vmatmul.mubr.f32.gmra.mxu0 %v2170
        %v2268 = vpop.f32.mrf.mxu0
        %v2269 = vadd.f32 0.0, %v2268
        %v2270 = vpop.f32.mrf.mxu0
        %2271 = vmatprep.mubr.f32.mxu0 0.0
        %2272 = vmatmul.mubr.f32.gmra.mxu0 %v2172
        %v2273 = vpop.f32.mrf.mxu0
        %v2274 = vadd.f32 0.0, %v2273
        %v2275 = vpop.f32.mrf.mxu0
        %2276 = vmatprep.mubr.f32.mxu0 0.0
        %2277 = vmatmul.mubr.f32.gmra.mxu0 %v2174
        %v2278 = vpop.f32.mrf.mxu0
        %v2279 = vadd.f32 0.0, %v2278
        %v2280 = vpop.f32.mrf.mxu0
        %2281 = vmatprep.mubr.f32.mxu0 0.0
        %2282 = vmatmul.mubr.f32.gmra.mxu0 %v2176
        %v2283 = vpop.f32.mrf.mxu0
        %v2284 = vadd.f32 0.0, %v2283
        %v2285 = vpop.f32.mrf.mxu0
        %2286 = vmatprep.mubr.f32.mxu0 0.0
        %2287 = vmatmul.mubr.f32.gmra.mxu0 %v2178
        %v2288 = vpop.f32.mrf.mxu0
        %v2289 = vadd.f32 0.0, %v2288
        %v2290 = vpop.f32.mrf.mxu0
        %2291 = vmatprep.mubr.f32.mxu0 0.0
        %2292 = vmatmul.mubr.f32.gmra.mxu0 %v2180
        %v2293 = vpop.f32.mrf.mxu0
        %v2294 = vadd.f32 0.0, %v2293
        %v2295 = vpop.f32.mrf.mxu0
        %2296 = vmatprep.mubr.f32.mxu0 0.0
        %2297 = vmatmul.mubr.f32.gmra.mxu0 %v2182
        %v2298 = vpop.f32.mrf.mxu0
        %v2299 = vadd.f32 0.0, %v2298
        %v2300 = vpop.f32.mrf.mxu0
        %2301 = vmatprep.mubr.f32.mxu0 0.0
        %2302 = vmatmul.mubr.f32.gmra.mxu0 %v2184
        %v2303 = vpop.f32.mrf.mxu0
        %v2304 = vadd.f32 0.0, %v2303
        %v2305 = vpop.f32.mrf.mxu0
        %2306 = vdwg.mxu0
        %2307 = vrot.lane.b32.xlu0 %v1229, 96
        %v2308 = vpop.permute.xlu0 %2307
        %2309 = vrot.lane.b32.xlu0 %v1231, 96
        %v2310 = vpop.permute.xlu0 %2309
        %2311 = vrot.lane.b32.xlu0 %v1233, 96
        %v2312 = vpop.permute.xlu0 %2311
        %2313 = vrot.lane.b32.xlu0 %v1235, 96
        %v2314 = vpop.permute.xlu0 %2313
        %2315 = vrot.lane.b32.xlu0 %v1237, 96
        %v2316 = vpop.permute.xlu0 %2315
        %2317 = vrot.lane.b32.xlu0 %v1239, 96
        %v2318 = vpop.permute.xlu0 %2317
        %2319 = vrot.lane.b32.xlu0 %v1241, 96
        %v2320 = vpop.permute.xlu0 %2319
        %2321 = vrot.lane.b32.xlu0 %v1243, 96
        %v2322 = vpop.permute.xlu0 %2321
        %v2323 = vsel %vm1404, %v1229, 0
        %v2325 = vsel %vm1404, %v1231, 0
        %v2327 = vsel %vm1404, %v1233, 0
        %v2329 = vsel %vm1404, %v1235, 0
        %v2331 = vsel %vm1404, %v1237, 0
        %v2333 = vsel %vm1404, %v1239, 0
        %v2335 = vsel %vm1404, %v1241, 0
        %v2337 = vsel %vm1404, %v1243, 0
        %v2339 = vsel %vm1404, %v2308, 0
        %v2341 = vsel %vm1404, %v2310, 0
        %v2343 = vsel %vm1404, %v2312, 0
        %v2345 = vsel %vm1404, %v2314, 0
        %v2347 = vsel %vm1404, %v2316, 0
        %v2349 = vsel %vm1404, %v2318, 0
        %v2351 = vsel %vm1404, %v2320, 0
        %v2353 = vsel %vm1404, %v2322, 0
        %2355 = vmatprep.subr.mxu0 0.0
        %2356 = vmatpush1.xpose.msra.mxu0 0.0
        %2357 = vmatprep.subr.mxu0 0.0
        %2358 = vmatpush1.xpose.msra.mxu0 0.0
        %2359 = vmatprep.subr.mxu0 0.0
        %2360 = vmatpush1.xpose.msra.mxu0 0.0
        %2361 = vmatprep.subr.mxu0 0.0
        %2362 = vmatpush1.xpose.msra.mxu0 0.0
        %2363 = vmatprep.subr.mxu0 0.0
        %2364 = vmatpush1.xpose.msra.mxu0 0.0
        %2365 = vmatprep.subr.mxu0 0.0
        %2366 = vmatpush1.xpose.msra.mxu0 0.0
        %2367 = vmatprep.subr.mxu0 0.0
        %2368 = vmatpush1.xpose.msra.mxu0 0.0
        %2369 = vmatprep.subr.mxu0 0.0
        %2370 = vmatpush1.xpose.msra.mxu0 0.0
        %2371 = vmatprep.subr.mxu0 0.0
        %2372 = vmatpush1.xpose.msra.mxu0 %v2353
        %2373 = vmatprep.subr.mxu0 0.0
        %2374 = vmatpush1.xpose.msra.mxu0 %v2351
        %2375 = vmatprep.subr.mxu0 0.0
        %2376 = vmatpush1.xpose.msra.mxu0 %v2349
        %2377 = vmatprep.subr.mxu0 0.0
        %2378 = vmatpush1.xpose.msra.mxu0 %v2347
        %2379 = vmatprep.subr.mxu0 0.0
        %2380 = vmatpush1.xpose.msra.mxu0 %v2345
        %2381 = vmatprep.subr.mxu0 0.0
        %2382 = vmatpush1.xpose.msra.mxu0 %v2343
        %2383 = vmatprep.subr.mxu0 0.0
        %2384 = vmatpush1.xpose.msra.mxu0 %v2341
        %2385 = vmatprep.subr.mxu0 0.0
        %2386 = vmatpush1.xpose.msra.mxu0 %v2339
        %2387 = vmatprep.subr.mxu0 0.0
        %2388 = vmatpush2.xpose.msra.mxu0 0.0
        %2389 = vmatprep.subr.mxu0 0.0
        %2390 = vmatpush2.xpose.msra.mxu0 0.0
        %2391 = vmatprep.subr.mxu0 0.0
        %2392 = vmatpush2.xpose.msra.mxu0 0.0
        %2393 = vmatprep.subr.mxu0 0.0
        %2394 = vmatpush2.xpose.msra.mxu0 0.0
        %2395 = vmatprep.subr.mxu0 0.0
        %2396 = vmatpush2.xpose.msra.mxu0 0.0
        %2397 = vmatprep.subr.mxu0 0.0
        %2398 = vmatpush2.xpose.msra.mxu0 0.0
        %2399 = vmatprep.subr.mxu0 0.0
        %2400 = vmatpush2.xpose.msra.mxu0 0.0
        %2401 = vmatprep.subr.mxu0 0.0
        %2402 = vmatpush2.xpose.msra.mxu0 0.0
        %2403 = vmatprep.subr.mxu0 0.0
        %2404 = vmatpush2.xpose.msra.mxu0 0.0
        %2405 = vmatprep.subr.mxu0 0.0
        %2406 = vmatpush2.xpose.msra.mxu0 0.0
        %2407 = vmatprep.subr.mxu0 0.0
        %2408 = vmatpush2.xpose.msra.mxu0 0.0
        %2409 = vmatprep.subr.mxu0 0.0
        %2410 = vmatpush2.xpose.msra.mxu0 0.0
        %2411 = vmatprep.subr.mxu0 0.0
        %2412 = vmatpush2.xpose.msra.mxu0 0.0
        %2413 = vmatprep.subr.mxu0 0.0
        %2414 = vmatpush2.xpose.msra.mxu0 0.0
        %2415 = vmatprep.subr.mxu0 0.0
        %2416 = vmatpush2.xpose.msra.mxu0 0.0
        %2417 = vmatprep.subr.mxu0 0.0
        %2418 = vmatpush2.xpose.msra.mxu0 0.0
        %2419 = vmatprep.mubr.f32.mxu0 0.0
        %2420 = vmatmul.mubr.f32.gmra.mxu0 %v2323
        %v2421 = vpop.f32.mrf.mxu0
        %v2422 = vadd.f32 0.0, %v2421
        %v2423 = vpop.f32.mrf.mxu0
        %2424 = vmatprep.mubr.f32.mxu0 0.0
        %2425 = vmatmul.mubr.f32.gmra.mxu0 %v2325
        %v2426 = vpop.f32.mrf.mxu0
        %v2427 = vadd.f32 0.0, %v2426
        %v2428 = vpop.f32.mrf.mxu0
        %2429 = vmatprep.mubr.f32.mxu0 0.0
        %2430 = vmatmul.mubr.f32.gmra.mxu0 %v2327
        %v2431 = vpop.f32.mrf.mxu0
        %v2432 = vadd.f32 0.0, %v2431
        %v2433 = vpop.f32.mrf.mxu0
        %2434 = vmatprep.mubr.f32.mxu0 0.0
        %2435 = vmatmul.mubr.f32.gmra.mxu0 %v2329
        %v2436 = vpop.f32.mrf.mxu0
        %v2437 = vadd.f32 0.0, %v2436
        %v2438 = vpop.f32.mrf.mxu0
        %2439 = vmatprep.mubr.f32.mxu0 0.0
        %2440 = vmatmul.mubr.f32.gmra.mxu0 %v2331
        %v2441 = vpop.f32.mrf.mxu0
        %v2442 = vadd.f32 0.0, %v2441
        %v2443 = vpop.f32.mrf.mxu0
        %2444 = vmatprep.mubr.f32.mxu0 0.0
        %2445 = vmatmul.mubr.f32.gmra.mxu0 %v2333
        %v2446 = vpop.f32.mrf.mxu0
        %v2447 = vadd.f32 0.0, %v2446
        %v2448 = vpop.f32.mrf.mxu0
        %2449 = vmatprep.mubr.f32.mxu0 0.0
        %2450 = vmatmul.mubr.f32.gmra.mxu0 %v2335
        %v2451 = vpop.f32.mrf.mxu0
        %v2452 = vadd.f32 0.0, %v2451
        %v2453 = vpop.f32.mrf.mxu0
        %2454 = vmatprep.mubr.f32.mxu0 0.0
        %2455 = vmatmul.mubr.f32.gmra.mxu0 %v2337
        %v2456 = vpop.f32.mrf.mxu0
        %v2457 = vadd.f32 0.0, %v2456
        %v2458 = vpop.f32.mrf.mxu0
        %2459 = vdwg.mxu0
        %2460 = vrot.lane.b32.xlu0 %v1245, 96
        %v2461 = vpop.permute.xlu0 %2460
        %2462 = vrot.lane.b32.xlu0 %v1247, 96
        %v2463 = vpop.permute.xlu0 %2462
        %2464 = vrot.lane.b32.xlu0 %v1249, 96
        %v2465 = vpop.permute.xlu0 %2464
        %2466 = vrot.lane.b32.xlu0 %v1251, 96
        %v2467 = vpop.permute.xlu0 %2466
        %2468 = vrot.lane.b32.xlu0 %v1253, 96
        %v2469 = vpop.permute.xlu0 %2468
        %2470 = vrot.lane.b32.xlu0 %v1255, 96
        %v2471 = vpop.permute.xlu0 %2470
        %2472 = vrot.lane.b32.xlu0 %v1257, 96
        %v2473 = vpop.permute.xlu0 %2472
        %2474 = vrot.lane.b32.xlu0 %v1259, 96
        %v2475 = vpop.permute.xlu0 %2474
        %v2476 = vsel %vm1404, %v1245, 0
        %v2478 = vsel %vm1404, %v1247, 0
        %v2480 = vsel %vm1404, %v1249, 0
        %v2482 = vsel %vm1404, %v1251, 0
        %v2484 = vsel %vm1404, %v1253, 0
        %v2486 = vsel %vm1404, %v1255, 0
        %v2488 = vsel %vm1404, %v1257, 0
        %v2490 = vsel %vm1404, %v1259, 0
        %v2492 = vsel %vm1404, %v2461, 0
        %v2494 = vsel %vm1404, %v2463, 0
        %v2496 = vsel %vm1404, %v2465, 0
        %v2498 = vsel %vm1404, %v2467, 0
        %v2500 = vsel %vm1404, %v2469, 0
        %v2502 = vsel %vm1404, %v2471, 0
        %v2504 = vsel %vm1404, %v2473, 0
        %v2506 = vsel %vm1404, %v2475, 0
        %2508 = vmatprep.subr.mxu0 0.0
        %2509 = vmatpush1.xpose.msra.mxu0 0.0
        %2510 = vmatprep.subr.mxu0 0.0
        %2511 = vmatpush1.xpose.msra.mxu0 0.0
        %2512 = vmatprep.subr.mxu0 0.0
        %2513 = vmatpush1.xpose.msra.mxu0 0.0
        %2514 = vmatprep.subr.mxu0 0.0
        %2515 = vmatpush1.xpose.msra.mxu0 0.0
        %2516 = vmatprep.subr.mxu0 0.0
        %2517 = vmatpush1.xpose.msra.mxu0 0.0
        %2518 = vmatprep.subr.mxu0 0.0
        %2519 = vmatpush1.xpose.msra.mxu0 0.0
        %2520 = vmatprep.subr.mxu0 0.0
        %2521 = vmatpush1.xpose.msra.mxu0 0.0
        %2522 = vmatprep.subr.mxu0 0.0
        %2523 = vmatpush1.xpose.msra.mxu0 0.0
        %2524 = vmatprep.subr.mxu0 0.0
        %2525 = vmatpush1.xpose.msra.mxu0 %v2506
        %2526 = vmatprep.subr.mxu0 0.0
        %2527 = vmatpush1.xpose.msra.mxu0 %v2504
        %2528 = vmatprep.subr.mxu0 0.0
        %2529 = vmatpush1.xpose.msra.mxu0 %v2502
        %2530 = vmatprep.subr.mxu0 0.0
        %2531 = vmatpush1.xpose.msra.mxu0 %v2500
        %2532 = vmatprep.subr.mxu0 0.0
        %2533 = vmatpush1.xpose.msra.mxu0 %v2498
        %2534 = vmatprep.subr.mxu0 0.0
        %2535 = vmatpush1.xpose.msra.mxu0 %v2496
        %2536 = vmatprep.subr.mxu0 0.0
        %2537 = vmatpush1.xpose.msra.mxu0 %v2494
        %2538 = vmatprep.subr.mxu0 0.0
        %2539 = vmatpush1.xpose.msra.mxu0 %v2492
        %2540 = vmatprep.subr.mxu0 0.0
        %2541 = vmatpush2.xpose.msra.mxu0 0.0
        %2542 = vmatprep.subr.mxu0 0.0
        %2543 = vmatpush2.xpose.msra.mxu0 0.0
        %2544 = vmatprep.subr.mxu0 0.0
        %2545 = vmatpush2.xpose.msra.mxu0 0.0
        %2546 = vmatprep.subr.mxu0 0.0
        %2547 = vmatpush2.xpose.msra.mxu0 0.0
        %2548 = vmatprep.subr.mxu0 0.0
        %2549 = vmatpush2.xpose.msra.mxu0 0.0
        %2550 = vmatprep.subr.mxu0 0.0
        %2551 = vmatpush2.xpose.msra.mxu0 0.0
        %2552 = vmatprep.subr.mxu0 0.0
        %2553 = vmatpush2.xpose.msra.mxu0 0.0
        %2554 = vmatprep.subr.mxu0 0.0
        %2555 = vmatpush2.xpose.msra.mxu0 0.0
        %2556 = vmatprep.subr.mxu0 0.0
        %2557 = vmatpush2.xpose.msra.mxu0 0.0
        %2558 = vmatprep.subr.mxu0 0.0
        %2559 = vmatpush2.xpose.msra.mxu0 0.0
        %2560 = vmatprep.subr.mxu0 0.0
        %2561 = vmatpush2.xpose.msra.mxu0 0.0
        %2562 = vmatprep.subr.mxu0 0.0
        %2563 = vmatpush2.xpose.msra.mxu0 0.0
        %2564 = vmatprep.subr.mxu0 0.0
        %2565 = vmatpush2.xpose.msra.mxu0 0.0
        %2566 = vmatprep.subr.mxu0 0.0
        %2567 = vmatpush2.xpose.msra.mxu0 0.0
        %2568 = vmatprep.subr.mxu0 0.0
        %2569 = vmatpush2.xpose.msra.mxu0 0.0
        %2570 = vmatprep.subr.mxu0 0.0
        %2571 = vmatpush2.xpose.msra.mxu0 0.0
        %2572 = vmatprep.mubr.f32.mxu0 0.0
        %2573 = vmatmul.mubr.f32.gmra.mxu0 %v2476
        %v2574 = vpop.f32.mrf.mxu0
        %v2575 = vadd.f32 0.0, %v2574
        %v2576 = vpop.f32.mrf.mxu0
        %2577 = vmatprep.mubr.f32.mxu0 0.0
        %2578 = vmatmul.mubr.f32.gmra.mxu0 %v2478
        %v2579 = vpop.f32.mrf.mxu0
        %v2580 = vadd.f32 0.0, %v2579
        %v2581 = vpop.f32.mrf.mxu0
        %2582 = vmatprep.mubr.f32.mxu0 0.0
        %2583 = vmatmul.mubr.f32.gmra.mxu0 %v2480
        %v2584 = vpop.f32.mrf.mxu0
        %v2585 = vadd.f32 0.0, %v2584
        %v2586 = vpop.f32.mrf.mxu0
        %2587 = vmatprep.mubr.f32.mxu0 0.0
        %2588 = vmatmul.mubr.f32.gmra.mxu0 %v2482
        %v2589 = vpop.f32.mrf.mxu0
        %v2590 = vadd.f32 0.0, %v2589
        %v2591 = vpop.f32.mrf.mxu0
        %2592 = vmatprep.mubr.f32.mxu0 0.0
        %2593 = vmatmul.mubr.f32.gmra.mxu0 %v2484
        %v2594 = vpop.f32.mrf.mxu0
        %v2595 = vadd.f32 0.0, %v2594
        %v2596 = vpop.f32.mrf.mxu0
        %2597 = vmatprep.mubr.f32.mxu0 0.0
        %2598 = vmatmul.mubr.f32.gmra.mxu0 %v2486
        %v2599 = vpop.f32.mrf.mxu0
        %v2600 = vadd.f32 0.0, %v2599
        %v2601 = vpop.f32.mrf.mxu0
        %2602 = vmatprep.mubr.f32.mxu0 0.0
        %2603 = vmatmul.mubr.f32.gmra.mxu0 %v2488
        %v2604 = vpop.f32.mrf.mxu0
        %v2605 = vadd.f32 0.0, %v2604
        %v2606 = vpop.f32.mrf.mxu0
        %2607 = vmatprep.mubr.f32.mxu0 0.0
        %2608 = vmatmul.mubr.f32.gmra.mxu0 %v2490
        %v2609 = vpop.f32.mrf.mxu0
        %v2610 = vadd.f32 0.0, %v2609
        %v2611 = vpop.f32.mrf.mxu0
        %2612 = vdwg.mxu0
        %2613 = vrot.lane.b32.xlu0 %v1261, 96
        %v2614 = vpop.permute.xlu0 %2613
        %2615 = vrot.lane.b32.xlu0 %v1263, 96
        %v2616 = vpop.permute.xlu0 %2615
        %2617 = vrot.lane.b32.xlu0 %v1265, 96
        %v2618 = vpop.permute.xlu0 %2617
        %2619 = vrot.lane.b32.xlu0 %v1267, 96
        %v2620 = vpop.permute.xlu0 %2619
        %2621 = vrot.lane.b32.xlu0 %v1269, 96
        %v2622 = vpop.permute.xlu0 %2621
        %2623 = vrot.lane.b32.xlu0 %v1271, 96
        %v2624 = vpop.permute.xlu0 %2623
        %2625 = vrot.lane.b32.xlu0 %v1273, 96
        %v2626 = vpop.permute.xlu0 %2625
        %2627 = vrot.lane.b32.xlu0 %v1275, 96
        %v2628 = vpop.permute.xlu0 %2627
        %v2629 = vsel %vm1404, %v1261, 0
        %v2631 = vsel %vm1404, %v1263, 0
        %v2633 = vsel %vm1404, %v1265, 0
        %v2635 = vsel %vm1404, %v1267, 0
        %v2637 = vsel %vm1404, %v1269, 0
        %v2639 = vsel %vm1404, %v1271, 0
        %v2641 = vsel %vm1404, %v1273, 0
        %v2643 = vsel %vm1404, %v1275, 0
        %v2645 = vsel %vm1404, %v2614, 0
        %v2647 = vsel %vm1404, %v2616, 0
        %v2649 = vsel %vm1404, %v2618, 0
        %v2651 = vsel %vm1404, %v2620, 0
        %v2653 = vsel %vm1404, %v2622, 0
        %v2655 = vsel %vm1404, %v2624, 0
        %v2657 = vsel %vm1404, %v2626, 0
        %v2659 = vsel %vm1404, %v2628, 0
        %2661 = vmatprep.subr.mxu0 0.0
        %2662 = vmatpush1.xpose.msra.mxu0 0.0
        %2663 = vmatprep.subr.mxu0 0.0
        %2664 = vmatpush1.xpose.msra.mxu0 0.0
        %2665 = vmatprep.subr.mxu0 0.0
        %2666 = vmatpush1.xpose.msra.mxu0 0.0
        %2667 = vmatprep.subr.mxu0 0.0
        %2668 = vmatpush1.xpose.msra.mxu0 0.0
        %2669 = vmatprep.subr.mxu0 0.0
        %2670 = vmatpush1.xpose.msra.mxu0 0.0
        %2671 = vmatprep.subr.mxu0 0.0
        %2672 = vmatpush1.xpose.msra.mxu0 0.0
        %2673 = vmatprep.subr.mxu0 0.0
        %2674 = vmatpush1.xpose.msra.mxu0 0.0
        %2675 = vmatprep.subr.mxu0 0.0
        %2676 = vmatpush1.xpose.msra.mxu0 0.0
        %2677 = vmatprep.subr.mxu0 0.0
        %2678 = vmatpush1.xpose.msra.mxu0 %v2659
        %2679 = vmatprep.subr.mxu0 0.0
        %2680 = vmatpush1.xpose.msra.mxu0 %v2657
        %2681 = vmatprep.subr.mxu0 0.0
        %2682 = vmatpush1.xpose.msra.mxu0 %v2655
        %2683 = vmatprep.subr.mxu0 0.0
        %2684 = vmatpush1.xpose.msra.mxu0 %v2653
        %2685 = vmatprep.subr.mxu0 0.0
        %2686 = vmatpush1.xpose.msra.mxu0 %v2651
        %2687 = vmatprep.subr.mxu0 0.0
        %2688 = vmatpush1.xpose.msra.mxu0 %v2649
        %2689 = vmatprep.subr.mxu0 0.0
        %2690 = vmatpush1.xpose.msra.mxu0 %v2647
        %2691 = vmatprep.subr.mxu0 0.0
        %2692 = vmatpush1.xpose.msra.mxu0 %v2645
        %2693 = vmatprep.subr.mxu0 0.0
        %2694 = vmatpush2.xpose.msra.mxu0 0.0
        %2695 = vmatprep.subr.mxu0 0.0
        %2696 = vmatpush2.xpose.msra.mxu0 0.0
        %2697 = vmatprep.subr.mxu0 0.0
        %2698 = vmatpush2.xpose.msra.mxu0 0.0
        %2699 = vmatprep.subr.mxu0 0.0
        %2700 = vmatpush2.xpose.msra.mxu0 0.0
        %2701 = vmatprep.subr.mxu0 0.0
        %2702 = vmatpush2.xpose.msra.mxu0 0.0
        %2703 = vmatprep.subr.mxu0 0.0
        %2704 = vmatpush2.xpose.msra.mxu0 0.0
        %2705 = vmatprep.subr.mxu0 0.0
        %2706 = vmatpush2.xpose.msra.mxu0 0.0
        %2707 = vmatprep.subr.mxu0 0.0
        %2708 = vmatpush2.xpose.msra.mxu0 0.0
        %2709 = vmatprep.subr.mxu0 0.0
        %2710 = vmatpush2.xpose.msra.mxu0 0.0
        %2711 = vmatprep.subr.mxu0 0.0
        %2712 = vmatpush2.xpose.msra.mxu0 0.0
        %2713 = vmatprep.subr.mxu0 0.0
        %2714 = vmatpush2.xpose.msra.mxu0 0.0
        %2715 = vmatprep.subr.mxu0 0.0
        %2716 = vmatpush2.xpose.msra.mxu0 0.0
        %2717 = vmatprep.subr.mxu0 0.0
        %2718 = vmatpush2.xpose.msra.mxu0 0.0
        %2719 = vmatprep.subr.mxu0 0.0
        %2720 = vmatpush2.xpose.msra.mxu0 0.0
        %2721 = vmatprep.subr.mxu0 0.0
        %2722 = vmatpush2.xpose.msra.mxu0 0.0
        %2723 = vmatprep.subr.mxu0 0.0
        %2724 = vmatpush2.xpose.msra.mxu0 0.0
        %2725 = vmatprep.mubr.f32.mxu0 0.0
        %2726 = vmatmul.mubr.f32.gmra.mxu0 %v2629
        %v2727 = vpop.f32.mrf.mxu0
        %v2728 = vadd.f32 0.0, %v2727
        %v2729 = vpop.f32.mrf.mxu0
        %2730 = vmatprep.mubr.f32.mxu0 0.0
        %2731 = vmatmul.mubr.f32.gmra.mxu0 %v2631
        %v2732 = vpop.f32.mrf.mxu0
        %v2733 = vadd.f32 0.0, %v2732
        %v2734 = vpop.f32.mrf.mxu0
        %2735 = vmatprep.mubr.f32.mxu0 0.0
        %2736 = vmatmul.mubr.f32.gmra.mxu0 %v2633
        %v2737 = vpop.f32.mrf.mxu0
        %v2738 = vadd.f32 0.0, %v2737
        %v2739 = vpop.f32.mrf.mxu0
        %2740 = vmatprep.mubr.f32.mxu0 0.0
        %2741 = vmatmul.mubr.f32.gmra.mxu0 %v2635
        %v2742 = vpop.f32.mrf.mxu0
        %v2743 = vadd.f32 0.0, %v2742
        %v2744 = vpop.f32.mrf.mxu0
        %2745 = vmatprep.mubr.f32.mxu0 0.0
        %2746 = vmatmul.mubr.f32.gmra.mxu0 %v2637
        %v2747 = vpop.f32.mrf.mxu0
        %v2748 = vadd.f32 0.0, %v2747
        %v2749 = vpop.f32.mrf.mxu0
        %2750 = vmatprep.mubr.f32.mxu0 0.0
        %2751 = vmatmul.mubr.f32.gmra.mxu0 %v2639
        %v2752 = vpop.f32.mrf.mxu0
        %v2753 = vadd.f32 0.0, %v2752
        %v2754 = vpop.f32.mrf.mxu0
        %2755 = vmatprep.mubr.f32.mxu0 0.0
        %2756 = vmatmul.mubr.f32.gmra.mxu0 %v2641
        %v2757 = vpop.f32.mrf.mxu0
        %v2758 = vadd.f32 0.0, %v2757
        %v2759 = vpop.f32.mrf.mxu0
        %2760 = vmatprep.mubr.f32.mxu0 0.0
        %2761 = vmatmul.mubr.f32.gmra.mxu0 %v2643
        %v2762 = vpop.f32.mrf.mxu0
        %v2763 = vadd.f32 0.0, %v2762
        %v2764 = vpop.f32.mrf.mxu0
        %2765 = vdwg.mxu0
        %2766 = vrot.lane.b32.xlu0 %v1277, 96
        %v2767 = vpop.permute.xlu0 %2766
        %2768 = vrot.lane.b32.xlu0 %v1279, 96
        %v2769 = vpop.permute.xlu0 %2768
        %2770 = vrot.lane.b32.xlu0 %v1281, 96
        %v2771 = vpop.permute.xlu0 %2770
        %2772 = vrot.lane.b32.xlu0 %v1283, 96
        %v2773 = vpop.permute.xlu0 %2772
        %2774 = vrot.lane.b32.xlu0 %v1285, 96
        %v2775 = vpop.permute.xlu0 %2774
        %2776 = vrot.lane.b32.xlu0 %v1287, 96
        %v2777 = vpop.permute.xlu0 %2776
        %2778 = vrot.lane.b32.xlu0 %v1289, 96
        %v2779 = vpop.permute.xlu0 %2778
        %2780 = vrot.lane.b32.xlu0 %v1291, 96
        %v2781 = vpop.permute.xlu0 %2780
        %v2782 = vsel %vm1404, %v1277, 0
        %v2784 = vsel %vm1404, %v1279, 0
        %v2786 = vsel %vm1404, %v1281, 0
        %v2788 = vsel %vm1404, %v1283, 0
        %v2790 = vsel %vm1404, %v1285, 0
        %v2792 = vsel %vm1404, %v1287, 0
        %v2794 = vsel %vm1404, %v1289, 0
        %v2796 = vsel %vm1404, %v1291, 0
        %v2798 = vsel %vm1404, %v2767, 0
        %v2800 = vsel %vm1404, %v2769, 0
        %v2802 = vsel %vm1404, %v2771, 0
        %v2804 = vsel %vm1404, %v2773, 0
        %v2806 = vsel %vm1404, %v2775, 0
        %v2808 = vsel %vm1404, %v2777, 0
        %v2810 = vsel %vm1404, %v2779, 0
        %v2812 = vsel %vm1404, %v2781, 0
        %2814 = vmatprep.subr.mxu0 0.0
        %2815 = vmatpush1.xpose.msra.mxu0 0.0
        %2816 = vmatprep.subr.mxu0 0.0
        %2817 = vmatpush1.xpose.msra.mxu0 0.0
        %2818 = vmatprep.subr.mxu0 0.0
        %2819 = vmatpush1.xpose.msra.mxu0 0.0
        %2820 = vmatprep.subr.mxu0 0.0
        %2821 = vmatpush1.xpose.msra.mxu0 0.0
        %2822 = vmatprep.subr.mxu0 0.0
        %2823 = vmatpush1.xpose.msra.mxu0 0.0
        %2824 = vmatprep.subr.mxu0 0.0
        %2825 = vmatpush1.xpose.msra.mxu0 0.0
        %2826 = vmatprep.subr.mxu0 0.0
        %2827 = vmatpush1.xpose.msra.mxu0 0.0
        %2828 = vmatprep.subr.mxu0 0.0
        %2829 = vmatpush1.xpose.msra.mxu0 0.0
        %2830 = vmatprep.subr.mxu0 0.0
        %2831 = vmatpush1.xpose.msra.mxu0 %v2812
        %2832 = vmatprep.subr.mxu0 0.0
        %2833 = vmatpush1.xpose.msra.mxu0 %v2810
        %2834 = vmatprep.subr.mxu0 0.0
        %2835 = vmatpush1.xpose.msra.mxu0 %v2808
        %2836 = vmatprep.subr.mxu0 0.0
        %2837 = vmatpush1.xpose.msra.mxu0 %v2806
        %2838 = vmatprep.subr.mxu0 0.0
        %2839 = vmatpush1.xpose.msra.mxu0 %v2804
        %2840 = vmatprep.subr.mxu0 0.0
        %2841 = vmatpush1.xpose.msra.mxu0 %v2802
        %2842 = vmatprep.subr.mxu0 0.0
        %2843 = vmatpush1.xpose.msra.mxu0 %v2800
        %2844 = vmatprep.subr.mxu0 0.0
        %2845 = vmatpush1.xpose.msra.mxu0 %v2798
        %2846 = vmatprep.subr.mxu0 0.0
        %2847 = vmatpush2.xpose.msra.mxu0 0.0
        %2848 = vmatprep.subr.mxu0 0.0
        %2849 = vmatpush2.xpose.msra.mxu0 0.0
        %2850 = vmatprep.subr.mxu0 0.0
        %2851 = vmatpush2.xpose.msra.mxu0 0.0
        %2852 = vmatprep.subr.mxu0 0.0
        %2853 = vmatpush2.xpose.msra.mxu0 0.0
        %2854 = vmatprep.subr.mxu0 0.0
        %2855 = vmatpush2.xpose.msra.mxu0 0.0
        %2856 = vmatprep.subr.mxu0 0.0
        %2857 = vmatpush2.xpose.msra.mxu0 0.0
        %2858 = vmatprep.subr.mxu0 0.0
        %2859 = vmatpush2.xpose.msra.mxu0 0.0
        %2860 = vmatprep.subr.mxu0 0.0
        %2861 = vmatpush2.xpose.msra.mxu0 0.0
        %2862 = vmatprep.subr.mxu0 0.0
        %2863 = vmatpush2.xpose.msra.mxu0 0.0
        %2864 = vmatprep.subr.mxu0 0.0
        %2865 = vmatpush2.xpose.msra.mxu0 0.0
        %2866 = vmatprep.subr.mxu0 0.0
        %2867 = vmatpush2.xpose.msra.mxu0 0.0
        %2868 = vmatprep.subr.mxu0 0.0
        %2869 = vmatpush2.xpose.msra.mxu0 0.0
        %2870 = vmatprep.subr.mxu0 0.0
        %2871 = vmatpush2.xpose.msra.mxu0 0.0
        %2872 = vmatprep.subr.mxu0 0.0
        %2873 = vmatpush2.xpose.msra.mxu0 0.0
        %2874 = vmatprep.subr.mxu0 0.0
        %2875 = vmatpush2.xpose.msra.mxu0 0.0
        %2876 = vmatprep.subr.mxu0 0.0
        %2877 = vmatpush2.xpose.msra.mxu0 0.0
        %2878 = vmatprep.mubr.f32.mxu0 0.0
        %2879 = vmatmul.mubr.f32.gmra.mxu0 %v2782
        %v2880 = vpop.f32.mrf.mxu0
        %v2881 = vadd.f32 0.0, %v2880
        %v2882 = vpop.f32.mrf.mxu0
        %2883 = vmatprep.mubr.f32.mxu0 0.0
        %2884 = vmatmul.mubr.f32.gmra.mxu0 %v2784
        %v2885 = vpop.f32.mrf.mxu0
        %v2886 = vadd.f32 0.0, %v2885
        %v2887 = vpop.f32.mrf.mxu0
        %2888 = vmatprep.mubr.f32.mxu0 0.0
        %2889 = vmatmul.mubr.f32.gmra.mxu0 %v2786
        %v2890 = vpop.f32.mrf.mxu0
        %v2891 = vadd.f32 0.0, %v2890
        %v2892 = vpop.f32.mrf.mxu0
        %2893 = vmatprep.mubr.f32.mxu0 0.0
        %2894 = vmatmul.mubr.f32.gmra.mxu0 %v2788
        %v2895 = vpop.f32.mrf.mxu0
        %v2896 = vadd.f32 0.0, %v2895
        %v2897 = vpop.f32.mrf.mxu0
        %2898 = vmatprep.mubr.f32.mxu0 0.0
        %2899 = vmatmul.mubr.f32.gmra.mxu0 %v2790
        %v2900 = vpop.f32.mrf.mxu0
        %v2901 = vadd.f32 0.0, %v2900
        %v2902 = vpop.f32.mrf.mxu0
        %2903 = vmatprep.mubr.f32.mxu0 0.0
        %2904 = vmatmul.mubr.f32.gmra.mxu0 %v2792
        %v2905 = vpop.f32.mrf.mxu0
        %v2906 = vadd.f32 0.0, %v2905
        %v2907 = vpop.f32.mrf.mxu0
        %2908 = vmatprep.mubr.f32.mxu0 0.0
        %2909 = vmatmul.mubr.f32.gmra.mxu0 %v2794
        %v2910 = vpop.f32.mrf.mxu0
        %v2911 = vadd.f32 0.0, %v2910
        %v2912 = vpop.f32.mrf.mxu0
        %2913 = vmatprep.mubr.f32.mxu0 0.0
        %2914 = vmatmul.mubr.f32.gmra.mxu0 %v2796
        %v2915 = vpop.f32.mrf.mxu0
        %v2916 = vadd.f32 0.0, %v2915
        %v2917 = vpop.f32.mrf.mxu0
        %2918 = vdwg.mxu0
        %2919 = vrot.lane.b32.xlu0 %v1293, 96
        %v2920 = vpop.permute.xlu0 %2919
        %2921 = vrot.lane.b32.xlu0 %v1295, 96
        %v2922 = vpop.permute.xlu0 %2921
        %2923 = vrot.lane.b32.xlu0 %v1297, 96
        %v2924 = vpop.permute.xlu0 %2923
        %2925 = vrot.lane.b32.xlu0 %v1299, 96
        %v2926 = vpop.permute.xlu0 %2925
        %2927 = vrot.lane.b32.xlu0 %v1301, 96
        %v2928 = vpop.permute.xlu0 %2927
        %2929 = vrot.lane.b32.xlu0 %v1303, 96
        %v2930 = vpop.permute.xlu0 %2929
        %2931 = vrot.lane.b32.xlu0 %v1305, 96
        %v2932 = vpop.permute.xlu0 %2931
        %2933 = vrot.lane.b32.xlu0 %v1307, 96
        %v2934 = vpop.permute.xlu0 %2933
        %v2935 = vsel %vm1404, %v1293, 0
        %v2937 = vsel %vm1404, %v1295, 0
        %v2939 = vsel %vm1404, %v1297, 0
        %v2941 = vsel %vm1404, %v1299, 0
        %v2943 = vsel %vm1404, %v1301, 0
        %v2945 = vsel %vm1404, %v1303, 0
        %v2947 = vsel %vm1404, %v1305, 0
        %v2949 = vsel %vm1404, %v1307, 0
        %v2951 = vsel %vm1404, %v2920, 0
        %v2953 = vsel %vm1404, %v2922, 0
        %v2955 = vsel %vm1404, %v2924, 0
        %v2957 = vsel %vm1404, %v2926, 0
        %v2959 = vsel %vm1404, %v2928, 0
        %v2961 = vsel %vm1404, %v2930, 0
        %v2963 = vsel %vm1404, %v2932, 0
        %v2965 = vsel %vm1404, %v2934, 0
        %2967 = vmatprep.subr.mxu0 0.0
        %2968 = vmatpush1.xpose.msra.mxu0 0.0
        %2969 = vmatprep.subr.mxu0 0.0
        %2970 = vmatpush1.xpose.msra.mxu0 0.0
        %2971 = vmatprep.subr.mxu0 0.0
        %2972 = vmatpush1.xpose.msra.mxu0 0.0
        %2973 = vmatprep.subr.mxu0 0.0
        %2974 = vmatpush1.xpose.msra.mxu0 0.0
        %2975 = vmatprep.subr.mxu0 0.0
        %2976 = vmatpush1.xpose.msra.mxu0 0.0
        %2977 = vmatprep.subr.mxu0 0.0
        %2978 = vmatpush1.xpose.msra.mxu0 0.0
        %2979 = vmatprep.subr.mxu0 0.0
        %2980 = vmatpush1.xpose.msra.mxu0 0.0
        %2981 = vmatprep.subr.mxu0 0.0
        %2982 = vmatpush1.xpose.msra.mxu0 0.0
        %2983 = vmatprep.subr.mxu0 0.0
        %2984 = vmatpush1.xpose.msra.mxu0 %v2965
        %2985 = vmatprep.subr.mxu0 0.0
        %2986 = vmatpush1.xpose.msra.mxu0 %v2963
        %2987 = vmatprep.subr.mxu0 0.0
        %2988 = vmatpush1.xpose.msra.mxu0 %v2961
        %2989 = vmatprep.subr.mxu0 0.0
        %2990 = vmatpush1.xpose.msra.mxu0 %v2959
        %2991 = vmatprep.subr.mxu0 0.0
        %2992 = vmatpush1.xpose.msra.mxu0 %v2957
        %2993 = vmatprep.subr.mxu0 0.0
        %2994 = vmatpush1.xpose.msra.mxu0 %v2955
        %2995 = vmatprep.subr.mxu0 0.0
        %2996 = vmatpush1.xpose.msra.mxu0 %v2953
        %2997 = vmatprep.subr.mxu0 0.0
        %2998 = vmatpush1.xpose.msra.mxu0 %v2951
        %2999 = vmatprep.subr.mxu0 0.0
        %3000 = vmatpush2.xpose.msra.mxu0 0.0
        %3001 = vmatprep.subr.mxu0 0.0
        %3002 = vmatpush2.xpose.msra.mxu0 0.0
        %3003 = vmatprep.subr.mxu0 0.0
        %3004 = vmatpush2.xpose.msra.mxu0 0.0
        %3005 = vmatprep.subr.mxu0 0.0
        %3006 = vmatpush2.xpose.msra.mxu0 0.0
        %3007 = vmatprep.subr.mxu0 0.0
        %3008 = vmatpush2.xpose.msra.mxu0 0.0
        %3009 = vmatprep.subr.mxu0 0.0
        %3010 = vmatpush2.xpose.msra.mxu0 0.0
        %3011 = vmatprep.subr.mxu0 0.0
        %3012 = vmatpush2.xpose.msra.mxu0 0.0
        %3013 = vmatprep.subr.mxu0 0.0
        %3014 = vmatpush2.xpose.msra.mxu0 0.0
        %3015 = vmatprep.subr.mxu0 0.0
        %3016 = vmatpush2.xpose.msra.mxu0 0.0
        %3017 = vmatprep.subr.mxu0 0.0
        %3018 = vmatpush2.xpose.msra.mxu0 0.0
        %3019 = vmatprep.subr.mxu0 0.0
        %3020 = vmatpush2.xpose.msra.mxu0 0.0
        %3021 = vmatprep.subr.mxu0 0.0
        %3022 = vmatpush2.xpose.msra.mxu0 0.0
        %3023 = vmatprep.subr.mxu0 0.0
        %3024 = vmatpush2.xpose.msra.mxu0 0.0
        %3025 = vmatprep.subr.mxu0 0.0
        %3026 = vmatpush2.xpose.msra.mxu0 0.0
        %3027 = vmatprep.subr.mxu0 0.0
        %3028 = vmatpush2.xpose.msra.mxu0 0.0
        %3029 = vmatprep.subr.mxu0 0.0
        %3030 = vmatpush2.xpose.msra.mxu0 0.0
        %3031 = vmatprep.mubr.f32.mxu0 0.0
        %3032 = vmatmul.mubr.f32.gmra.mxu0 %v2935
        %v3033 = vpop.f32.mrf.mxu0
        %v3034 = vadd.f32 0.0, %v3033
        %v3035 = vpop.f32.mrf.mxu0
        %3036 = vmatprep.mubr.f32.mxu0 0.0
        %3037 = vmatmul.mubr.f32.gmra.mxu0 %v2937
        %v3038 = vpop.f32.mrf.mxu0
        %v3039 = vadd.f32 0.0, %v3038
        %v3040 = vpop.f32.mrf.mxu0
        %3041 = vmatprep.mubr.f32.mxu0 0.0
        %3042 = vmatmul.mubr.f32.gmra.mxu0 %v2939
        %v3043 = vpop.f32.mrf.mxu0
        %v3044 = vadd.f32 0.0, %v3043
        %v3045 = vpop.f32.mrf.mxu0
        %3046 = vmatprep.mubr.f32.mxu0 0.0
        %3047 = vmatmul.mubr.f32.gmra.mxu0 %v2941
        %v3048 = vpop.f32.mrf.mxu0
        %v3049 = vadd.f32 0.0, %v3048
        %v3050 = vpop.f32.mrf.mxu0
        %3051 = vmatprep.mubr.f32.mxu0 0.0
        %3052 = vmatmul.mubr.f32.gmra.mxu0 %v2943
        %v3053 = vpop.f32.mrf.mxu0
        %v3054 = vadd.f32 0.0, %v3053
        %v3055 = vpop.f32.mrf.mxu0
        %3056 = vmatprep.mubr.f32.mxu0 0.0
        %3057 = vmatmul.mubr.f32.gmra.mxu0 %v2945
        %v3058 = vpop.f32.mrf.mxu0
        %v3059 = vadd.f32 0.0, %v3058
        %v3060 = vpop.f32.mrf.mxu0
        %3061 = vmatprep.mubr.f32.mxu0 0.0
        %3062 = vmatmul.mubr.f32.gmra.mxu0 %v2947
        %v3063 = vpop.f32.mrf.mxu0
        %v3064 = vadd.f32 0.0, %v3063
        %v3065 = vpop.f32.mrf.mxu0
        %3066 = vmatprep.mubr.f32.mxu0 0.0
        %3067 = vmatmul.mubr.f32.gmra.mxu0 %v2949
        %v3068 = vpop.f32.mrf.mxu0
        %v3069 = vadd.f32 0.0, %v3068
        %v3070 = vpop.f32.mrf.mxu0
        %3071 = vdwg.mxu0
        %3072 = vrot.lane.b32.xlu0 %v1309, 96
        %v3073 = vpop.permute.xlu0 %3072
        %3074 = vrot.lane.b32.xlu0 %v1311, 96
        %v3075 = vpop.permute.xlu0 %3074
        %3076 = vrot.lane.b32.xlu0 %v1313, 96
        %v3077 = vpop.permute.xlu0 %3076
        %3078 = vrot.lane.b32.xlu0 %v1315, 96
        %v3079 = vpop.permute.xlu0 %3078
        %3080 = vrot.lane.b32.xlu0 %v1317, 96
        %v3081 = vpop.permute.xlu0 %3080
        %3082 = vrot.lane.b32.xlu0 %v1319, 96
        %v3083 = vpop.permute.xlu0 %3082
        %3084 = vrot.lane.b32.xlu0 %v1321, 96
        %v3085 = vpop.permute.xlu0 %3084
        %3086 = vrot.lane.b32.xlu0 %v1323, 96
        %v3087 = vpop.permute.xlu0 %3086
        %v3088 = vsel %vm1404, %v1309, 0
        %v3090 = vsel %vm1404, %v1311, 0
        %v3092 = vsel %vm1404, %v1313, 0
        %v3094 = vsel %vm1404, %v1315, 0
        %v3096 = vsel %vm1404, %v1317, 0
        %v3098 = vsel %vm1404, %v1319, 0
        %v3100 = vsel %vm1404, %v1321, 0
        %v3102 = vsel %vm1404, %v1323, 0
        %v3104 = vsel %vm1404, %v3073, 0
        %v3106 = vsel %vm1404, %v3075, 0
        %v3108 = vsel %vm1404, %v3077, 0
        %v3110 = vsel %vm1404, %v3079, 0
        %v3112 = vsel %vm1404, %v3081, 0
        %v3114 = vsel %vm1404, %v3083, 0
        %v3116 = vsel %vm1404, %v3085, 0
        %v3118 = vsel %vm1404, %v3087, 0
        %3120 = vmatprep.subr.mxu0 0.0
        %3121 = vmatpush1.xpose.msra.mxu0 0.0
        %3122 = vmatprep.subr.mxu0 0.0
        %3123 = vmatpush1.xpose.msra.mxu0 0.0
        %3124 = vmatprep.subr.mxu0 0.0
        %3125 = vmatpush1.xpose.msra.mxu0 0.0
        %3126 = vmatprep.subr.mxu0 0.0
        %3127 = vmatpush1.xpose.msra.mxu0 0.0
        %3128 = vmatprep.subr.mxu0 0.0
        %3129 = vmatpush1.xpose.msra.mxu0 0.0
        %3130 = vmatprep.subr.mxu0 0.0
        %3131 = vmatpush1.xpose.msra.mxu0 0.0
        %3132 = vmatprep.subr.mxu0 0.0
        %3133 = vmatpush1.xpose.msra.mxu0 0.0
        %3134 = vmatprep.subr.mxu0 0.0
        %3135 = vmatpush1.xpose.msra.mxu0 0.0
        %3136 = vmatprep.subr.mxu0 0.0
        %3137 = vmatpush1.xpose.msra.mxu0 %v3118
        %3138 = vmatprep.subr.mxu0 0.0
        %3139 = vmatpush1.xpose.msra.mxu0 %v3116
        %3140 = vmatprep.subr.mxu0 0.0
        %3141 = vmatpush1.xpose.msra.mxu0 %v3114
        %3142 = vmatprep.subr.mxu0 0.0
        %3143 = vmatpush1.xpose.msra.mxu0 %v3112
        %3144 = vmatprep.subr.mxu0 0.0
        %3145 = vmatpush1.xpose.msra.mxu0 %v3110
        %3146 = vmatprep.subr.mxu0 0.0
        %3147 = vmatpush1.xpose.msra.mxu0 %v3108
        %3148 = vmatprep.subr.mxu0 0.0
        %3149 = vmatpush1.xpose.msra.mxu0 %v3106
        %3150 = vmatprep.subr.mxu0 0.0
        %3151 = vmatpush1.xpose.msra.mxu0 %v3104
        %3152 = vmatprep.subr.mxu0 0.0
        %3153 = vmatpush2.xpose.msra.mxu0 0.0
        %3154 = vmatprep.subr.mxu0 0.0
        %3155 = vmatpush2.xpose.msra.mxu0 0.0
        %3156 = vmatprep.subr.mxu0 0.0
        %3157 = vmatpush2.xpose.msra.mxu0 0.0
        %3158 = vmatprep.subr.mxu0 0.0
        %3159 = vmatpush2.xpose.msra.mxu0 0.0
        %3160 = vmatprep.subr.mxu0 0.0
        %3161 = vmatpush2.xpose.msra.mxu0 0.0
        %3162 = vmatprep.subr.mxu0 0.0
        %3163 = vmatpush2.xpose.msra.mxu0 0.0
        %3164 = vmatprep.subr.mxu0 0.0
        %3165 = vmatpush2.xpose.msra.mxu0 0.0
        %3166 = vmatprep.subr.mxu0 0.0
        %3167 = vmatpush2.xpose.msra.mxu0 0.0
        %3168 = vmatprep.subr.mxu0 0.0
        %3169 = vmatpush2.xpose.msra.mxu0 0.0
        %3170 = vmatprep.subr.mxu0 0.0
        %3171 = vmatpush2.xpose.msra.mxu0 0.0
        %3172 = vmatprep.subr.mxu0 0.0
        %3173 = vmatpush2.xpose.msra.mxu0 0.0
        %3174 = vmatprep.subr.mxu0 0.0
        %3175 = vmatpush2.xpose.msra.mxu0 0.0
        %3176 = vmatprep.subr.mxu0 0.0
        %3177 = vmatpush2.xpose.msra.mxu0 0.0
        %3178 = vmatprep.subr.mxu0 0.0
        %3179 = vmatpush2.xpose.msra.mxu0 0.0
        %3180 = vmatprep.subr.mxu0 0.0
        %3181 = vmatpush2.xpose.msra.mxu0 0.0
        %3182 = vmatprep.subr.mxu0 0.0
        %3183 = vmatpush2.xpose.msra.mxu0 0.0
        %3184 = vmatprep.mubr.f32.mxu0 0.0
        %3185 = vmatmul.mubr.f32.gmra.mxu0 %v3088
        %v3186 = vpop.f32.mrf.mxu0
        %v3187 = vadd.f32 0.0, %v3186
        %v3188 = vpop.f32.mrf.mxu0
        %3189 = vmatprep.mubr.f32.mxu0 0.0
        %3190 = vmatmul.mubr.f32.gmra.mxu0 %v3090
        %v3191 = vpop.f32.mrf.mxu0
        %v3192 = vadd.f32 0.0, %v3191
        %v3193 = vpop.f32.mrf.mxu0
        %3194 = vmatprep.mubr.f32.mxu0 0.0
        %3195 = vmatmul.mubr.f32.gmra.mxu0 %v3092
        %v3196 = vpop.f32.mrf.mxu0
        %v3197 = vadd.f32 0.0, %v3196
        %v3198 = vpop.f32.mrf.mxu0
        %3199 = vmatprep.mubr.f32.mxu0 0.0
        %3200 = vmatmul.mubr.f32.gmra.mxu0 %v3094
        %v3201 = vpop.f32.mrf.mxu0
        %v3202 = vadd.f32 0.0, %v3201
        %v3203 = vpop.f32.mrf.mxu0
        %3204 = vmatprep.mubr.f32.mxu0 0.0
        %3205 = vmatmul.mubr.f32.gmra.mxu0 %v3096
        %v3206 = vpop.f32.mrf.mxu0
        %v3207 = vadd.f32 0.0, %v3206
        %v3208 = vpop.f32.mrf.mxu0
        %3209 = vmatprep.mubr.f32.mxu0 0.0
        %3210 = vmatmul.mubr.f32.gmra.mxu0 %v3098
        %v3211 = vpop.f32.mrf.mxu0
        %v3212 = vadd.f32 0.0, %v3211
        %v3213 = vpop.f32.mrf.mxu0
        %3214 = vmatprep.mubr.f32.mxu0 0.0
        %3215 = vmatmul.mubr.f32.gmra.mxu0 %v3100
        %v3216 = vpop.f32.mrf.mxu0
        %v3217 = vadd.f32 0.0, %v3216
        %v3218 = vpop.f32.mrf.mxu0
        %3219 = vmatprep.mubr.f32.mxu0 0.0
        %3220 = vmatmul.mubr.f32.gmra.mxu0 %v3102
        %v3221 = vpop.f32.mrf.mxu0
        %v3222 = vadd.f32 0.0, %v3221
        %v3223 = vpop.f32.mrf.mxu0
        %3224 = vdwg.mxu0
        %3225 = vrot.lane.b32.xlu0 %v1325, 96
        %v3226 = vpop.permute.xlu0 %3225
        %3227 = vrot.lane.b32.xlu0 %v1327, 96
        %v3228 = vpop.permute.xlu0 %3227
        %3229 = vrot.lane.b32.xlu0 %v1329, 96
        %v3230 = vpop.permute.xlu0 %3229
        %3231 = vrot.lane.b32.xlu0 %v1331, 96
        %v3232 = vpop.permute.xlu0 %3231
        %3233 = vrot.lane.b32.xlu0 %v1333, 96
        %v3234 = vpop.permute.xlu0 %3233
        %3235 = vrot.lane.b32.xlu0 %v1335, 96
        %v3236 = vpop.permute.xlu0 %3235
        %3237 = vrot.lane.b32.xlu0 %v1337, 96
        %v3238 = vpop.permute.xlu0 %3237
        %3239 = vrot.lane.b32.xlu0 %v1339, 96
        %v3240 = vpop.permute.xlu0 %3239
        %v3241 = vsel %vm1404, %v1325, 0
        %v3243 = vsel %vm1404, %v1327, 0
        %v3245 = vsel %vm1404, %v1329, 0
        %v3247 = vsel %vm1404, %v1331, 0
        %v3249 = vsel %vm1404, %v1333, 0
        %v3251 = vsel %vm1404, %v1335, 0
        %v3253 = vsel %vm1404, %v1337, 0
        %v3255 = vsel %vm1404, %v1339, 0
        %v3257 = vsel %vm1404, %v3226, 0
        %v3259 = vsel %vm1404, %v3228, 0
        %v3261 = vsel %vm1404, %v3230, 0
        %v3263 = vsel %vm1404, %v3232, 0
        %v3265 = vsel %vm1404, %v3234, 0
        %v3267 = vsel %vm1404, %v3236, 0
        %v3269 = vsel %vm1404, %v3238, 0
        %v3271 = vsel %vm1404, %v3240, 0
        %3273 = vmatprep.subr.mxu0 0.0
        %3274 = vmatpush1.xpose.msra.mxu0 0.0
        %3275 = vmatprep.subr.mxu0 0.0
        %3276 = vmatpush1.xpose.msra.mxu0 0.0
        %3277 = vmatprep.subr.mxu0 0.0
        %3278 = vmatpush1.xpose.msra.mxu0 0.0
        %3279 = vmatprep.subr.mxu0 0.0
        %3280 = vmatpush1.xpose.msra.mxu0 0.0
        %3281 = vmatprep.subr.mxu0 0.0
        %3282 = vmatpush1.xpose.msra.mxu0 0.0
        %3283 = vmatprep.subr.mxu0 0.0
        %3284 = vmatpush1.xpose.msra.mxu0 0.0
        %3285 = vmatprep.subr.mxu0 0.0
        %3286 = vmatpush1.xpose.msra.mxu0 0.0
        %3287 = vmatprep.subr.mxu0 0.0
        %3288 = vmatpush1.xpose.msra.mxu0 0.0
        %3289 = vmatprep.subr.mxu0 0.0
        %3290 = vmatpush1.xpose.msra.mxu0 %v3271
        %3291 = vmatprep.subr.mxu0 0.0
        %3292 = vmatpush1.xpose.msra.mxu0 %v3269
        %3293 = vmatprep.subr.mxu0 0.0
        %3294 = vmatpush1.xpose.msra.mxu0 %v3267
        %3295 = vmatprep.subr.mxu0 0.0
        %3296 = vmatpush1.xpose.msra.mxu0 %v3265
        %3297 = vmatprep.subr.mxu0 0.0
        %3298 = vmatpush1.xpose.msra.mxu0 %v3263
        %3299 = vmatprep.subr.mxu0 0.0
        %3300 = vmatpush1.xpose.msra.mxu0 %v3261
        %3301 = vmatprep.subr.mxu0 0.0
        %3302 = vmatpush1.xpose.msra.mxu0 %v3259
        %3303 = vmatprep.subr.mxu0 0.0
        %3304 = vmatpush1.xpose.msra.mxu0 %v3257
        %3305 = vmatprep.subr.mxu0 0.0
        %3306 = vmatpush2.xpose.msra.mxu0 0.0
        %3307 = vmatprep.subr.mxu0 0.0
        %3308 = vmatpush2.xpose.msra.mxu0 0.0
        %3309 = vmatprep.subr.mxu0 0.0
        %3310 = vmatpush2.xpose.msra.mxu0 0.0
        %3311 = vmatprep.subr.mxu0 0.0
        %3312 = vmatpush2.xpose.msra.mxu0 0.0
        %3313 = vmatprep.subr.mxu0 0.0
        %3314 = vmatpush2.xpose.msra.mxu0 0.0
        %3315 = vmatprep.subr.mxu0 0.0
        %3316 = vmatpush2.xpose.msra.mxu0 0.0
        %3317 = vmatprep.subr.mxu0 0.0
        %3318 = vmatpush2.xpose.msra.mxu0 0.0
        %3319 = vmatprep.subr.mxu0 0.0
        %3320 = vmatpush2.xpose.msra.mxu0 0.0
        %3321 = vmatprep.subr.mxu0 0.0
        %3322 = vmatpush2.xpose.msra.mxu0 0.0
        %3323 = vmatprep.subr.mxu0 0.0
        %3324 = vmatpush2.xpose.msra.mxu0 0.0
        %3325 = vmatprep.subr.mxu0 0.0
        %3326 = vmatpush2.xpose.msra.mxu0 0.0
        %3327 = vmatprep.subr.mxu0 0.0
        %3328 = vmatpush2.xpose.msra.mxu0 0.0
        %3329 = vmatprep.subr.mxu0 0.0
        %3330 = vmatpush2.xpose.msra.mxu0 0.0
        %3331 = vmatprep.subr.mxu0 0.0
        %3332 = vmatpush2.xpose.msra.mxu0 0.0
        %3333 = vmatprep.subr.mxu0 0.0
        %3334 = vmatpush2.xpose.msra.mxu0 0.0
        %3335 = vmatprep.subr.mxu0 0.0
        %3336 = vmatpush2.xpose.msra.mxu0 0.0
        %3337 = vmatprep.mubr.f32.mxu0 0.0
        %3338 = vmatmul.mubr.f32.gmra.mxu0 %v3241
        %v3339 = vpop.f32.mrf.mxu0
        %v3340 = vadd.f32 0.0, %v3339
        %v3341 = vpop.f32.mrf.mxu0
        %3342 = vmatprep.mubr.f32.mxu0 0.0
        %3343 = vmatmul.mubr.f32.gmra.mxu0 %v3243
        %v3344 = vpop.f32.mrf.mxu0
        %v3345 = vadd.f32 0.0, %v3344
        %v3346 = vpop.f32.mrf.mxu0
        %3347 = vmatprep.mubr.f32.mxu0 0.0
        %3348 = vmatmul.mubr.f32.gmra.mxu0 %v3245
        %v3349 = vpop.f32.mrf.mxu0
        %v3350 = vadd.f32 0.0, %v3349
        %v3351 = vpop.f32.mrf.mxu0
        %3352 = vmatprep.mubr.f32.mxu0 0.0
        %3353 = vmatmul.mubr.f32.gmra.mxu0 %v3247
        %v3354 = vpop.f32.mrf.mxu0
        %v3355 = vadd.f32 0.0, %v3354
        %v3356 = vpop.f32.mrf.mxu0
        %3357 = vmatprep.mubr.f32.mxu0 0.0
        %3358 = vmatmul.mubr.f32.gmra.mxu0 %v3249
        %v3359 = vpop.f32.mrf.mxu0
        %v3360 = vadd.f32 0.0, %v3359
        %v3361 = vpop.f32.mrf.mxu0
        %3362 = vmatprep.mubr.f32.mxu0 0.0
        %3363 = vmatmul.mubr.f32.gmra.mxu0 %v3251
        %v3364 = vpop.f32.mrf.mxu0
        %v3365 = vadd.f32 0.0, %v3364
        %v3366 = vpop.f32.mrf.mxu0
        %3367 = vmatprep.mubr.f32.mxu0 0.0
        %3368 = vmatmul.mubr.f32.gmra.mxu0 %v3253
        %v3369 = vpop.f32.mrf.mxu0
        %v3370 = vadd.f32 0.0, %v3369
        %v3371 = vpop.f32.mrf.mxu0
        %3372 = vmatprep.mubr.f32.mxu0 0.0
        %3373 = vmatmul.mubr.f32.gmra.mxu0 %v3255
        %v3374 = vpop.f32.mrf.mxu0
        %v3375 = vadd.f32 0.0, %v3374
        %v3376 = vpop.f32.mrf.mxu0
        %3377 = vdwg.mxu0
        %3378 = vrot.lane.b32.xlu0 %v1341, 96
        %v3379 = vpop.permute.xlu0 %3378
        %3380 = vrot.lane.b32.xlu0 %v1343, 96
        %v3381 = vpop.permute.xlu0 %3380
        %3382 = vrot.lane.b32.xlu0 %v1345, 96
        %v3383 = vpop.permute.xlu0 %3382
        %3384 = vrot.lane.b32.xlu0 %v1347, 96
        %v3385 = vpop.permute.xlu0 %3384
        %3386 = vrot.lane.b32.xlu0 %v1349, 96
        %v3387 = vpop.permute.xlu0 %3386
        %3388 = vrot.lane.b32.xlu0 %v1351, 96
        %v3389 = vpop.permute.xlu0 %3388
        %3390 = vrot.lane.b32.xlu0 %v1353, 96
        %v3391 = vpop.permute.xlu0 %3390
        %3392 = vrot.lane.b32.xlu0 %v1355, 96
        %v3393 = vpop.permute.xlu0 %3392
        %v3394 = vsel %vm1404, %v1341, 0
        %v3396 = vsel %vm1404, %v1343, 0
        %v3398 = vsel %vm1404, %v1345, 0
        %v3400 = vsel %vm1404, %v1347, 0
        %v3402 = vsel %vm1404, %v1349, 0
        %v3404 = vsel %vm1404, %v1351, 0
        %v3406 = vsel %vm1404, %v1353, 0
        %v3408 = vsel %vm1404, %v1355, 0
        %v3410 = vsel %vm1404, %v3379, 0
        %v3412 = vsel %vm1404, %v3381, 0
        %v3414 = vsel %vm1404, %v3383, 0
        %v3416 = vsel %vm1404, %v3385, 0
        %v3418 = vsel %vm1404, %v3387, 0
        %v3420 = vsel %vm1404, %v3389, 0
        %v3422 = vsel %vm1404, %v3391, 0
        %v3424 = vsel %vm1404, %v3393, 0
        %3426 = vmatprep.subr.mxu0 0.0
        %3427 = vmatpush1.xpose.msra.mxu0 0.0
        %3428 = vmatprep.subr.mxu0 0.0
        %3429 = vmatpush1.xpose.msra.mxu0 0.0
        %3430 = vmatprep.subr.mxu0 0.0
        %3431 = vmatpush1.xpose.msra.mxu0 0.0
        %3432 = vmatprep.subr.mxu0 0.0
        %3433 = vmatpush1.xpose.msra.mxu0 0.0
        %3434 = vmatprep.subr.mxu0 0.0
        %3435 = vmatpush1.xpose.msra.mxu0 0.0
        %3436 = vmatprep.subr.mxu0 0.0
        %3437 = vmatpush1.xpose.msra.mxu0 0.0
        %3438 = vmatprep.subr.mxu0 0.0
        %3439 = vmatpush1.xpose.msra.mxu0 0.0
        %3440 = vmatprep.subr.mxu0 0.0
        %3441 = vmatpush1.xpose.msra.mxu0 0.0
        %3442 = vmatprep.subr.mxu0 0.0
        %3443 = vmatpush1.xpose.msra.mxu0 %v3424
        %3444 = vmatprep.subr.mxu0 0.0
        %3445 = vmatpush1.xpose.msra.mxu0 %v3422
        %3446 = vmatprep.subr.mxu0 0.0
        %3447 = vmatpush1.xpose.msra.mxu0 %v3420
        %3448 = vmatprep.subr.mxu0 0.0
        %3449 = vmatpush1.xpose.msra.mxu0 %v3418
        %3450 = vmatprep.subr.mxu0 0.0
        %3451 = vmatpush1.xpose.msra.mxu0 %v3416
        %3452 = vmatprep.subr.mxu0 0.0
        %3453 = vmatpush1.xpose.msra.mxu0 %v3414
        %3454 = vmatprep.subr.mxu0 0.0
        %3455 = vmatpush1.xpose.msra.mxu0 %v3412
        %3456 = vmatprep.subr.mxu0 0.0
        %3457 = vmatpush1.xpose.msra.mxu0 %v3410
        %3458 = vmatprep.subr.mxu0 0.0
        %3459 = vmatpush2.xpose.msra.mxu0 0.0
        %3460 = vmatprep.subr.mxu0 0.0
        %3461 = vmatpush2.xpose.msra.mxu0 0.0
        %3462 = vmatprep.subr.mxu0 0.0
        %3463 = vmatpush2.xpose.msra.mxu0 0.0
        %3464 = vmatprep.subr.mxu0 0.0
        %3465 = vmatpush2.xpose.msra.mxu0 0.0
        %3466 = vmatprep.subr.mxu0 0.0
        %3467 = vmatpush2.xpose.msra.mxu0 0.0
        %3468 = vmatprep.subr.mxu0 0.0
        %3469 = vmatpush2.xpose.msra.mxu0 0.0
        %3470 = vmatprep.subr.mxu0 0.0
        %3471 = vmatpush2.xpose.msra.mxu0 0.0
        %3472 = vmatprep.subr.mxu0 0.0
        %3473 = vmatpush2.xpose.msra.mxu0 0.0
        %3474 = vmatprep.subr.mxu0 0.0
        %3475 = vmatpush2.xpose.msra.mxu0 0.0
        %3476 = vmatprep.subr.mxu0 0.0
        %3477 = vmatpush2.xpose.msra.mxu0 0.0
        %3478 = vmatprep.subr.mxu0 0.0
        %3479 = vmatpush2.xpose.msra.mxu0 0.0
        %3480 = vmatprep.subr.mxu0 0.0
        %3481 = vmatpush2.xpose.msra.mxu0 0.0
        %3482 = vmatprep.subr.mxu0 0.0
        %3483 = vmatpush2.xpose.msra.mxu0 0.0
        %3484 = vmatprep.subr.mxu0 0.0
        %3485 = vmatpush2.xpose.msra.mxu0 0.0
        %3486 = vmatprep.subr.mxu0 0.0
        %3487 = vmatpush2.xpose.msra.mxu0 0.0
        %3488 = vmatprep.subr.mxu0 0.0
        %3489 = vmatpush2.xpose.msra.mxu0 0.0
        %3490 = vmatprep.mubr.f32.mxu0 0.0
        %3491 = vmatmul.mubr.f32.gmra.mxu0 %v3394
        %v3492 = vpop.f32.mrf.mxu0
        %v3493 = vadd.f32 0.0, %v3492
        %v3494 = vpop.f32.mrf.mxu0
        %3495 = vmatprep.mubr.f32.mxu0 0.0
        %3496 = vmatmul.mubr.f32.gmra.mxu0 %v3396
        %v3497 = vpop.f32.mrf.mxu0
        %v3498 = vadd.f32 0.0, %v3497
        %v3499 = vpop.f32.mrf.mxu0
        %3500 = vmatprep.mubr.f32.mxu0 0.0
        %3501 = vmatmul.mubr.f32.gmra.mxu0 %v3398
        %v3502 = vpop.f32.mrf.mxu0
        %v3503 = vadd.f32 0.0, %v3502
        %v3504 = vpop.f32.mrf.mxu0
        %3505 = vmatprep.mubr.f32.mxu0 0.0
        %3506 = vmatmul.mubr.f32.gmra.mxu0 %v3400
        %v3507 = vpop.f32.mrf.mxu0
        %v3508 = vadd.f32 0.0, %v3507
        %v3509 = vpop.f32.mrf.mxu0
        %3510 = vmatprep.mubr.f32.mxu0 0.0
        %3511 = vmatmul.mubr.f32.gmra.mxu0 %v3402
        %v3512 = vpop.f32.mrf.mxu0
        %v3513 = vadd.f32 0.0, %v3512
        %v3514 = vpop.f32.mrf.mxu0
        %3515 = vmatprep.mubr.f32.mxu0 0.0
        %3516 = vmatmul.mubr.f32.gmra.mxu0 %v3404
        %v3517 = vpop.f32.mrf.mxu0
        %v3518 = vadd.f32 0.0, %v3517
        %v3519 = vpop.f32.mrf.mxu0
        %3520 = vmatprep.mubr.f32.mxu0 0.0
        %3521 = vmatmul.mubr.f32.gmra.mxu0 %v3406
        %v3522 = vpop.f32.mrf.mxu0
        %v3523 = vadd.f32 0.0, %v3522
        %v3524 = vpop.f32.mrf.mxu0
        %3525 = vmatprep.mubr.f32.mxu0 0.0
        %3526 = vmatmul.mubr.f32.gmra.mxu0 %v3408
        %v3527 = vpop.f32.mrf.mxu0
        %v3528 = vadd.f32 0.0, %v3527
        %v3529 = vpop.f32.mrf.mxu0
        %3530 = vdwg.mxu0
        %3531 = vrot.lane.b32.xlu0 %v1357, 96
        %v3532 = vpop.permute.xlu0 %3531
        %3533 = vrot.lane.b32.xlu0 %v1359, 96
        %v3534 = vpop.permute.xlu0 %3533
        %3535 = vrot.lane.b32.xlu0 %v1361, 96
        %v3536 = vpop.permute.xlu0 %3535
        %3537 = vrot.lane.b32.xlu0 %v1363, 96
        %v3538 = vpop.permute.xlu0 %3537
        %3539 = vrot.lane.b32.xlu0 %v1365, 96
        %v3540 = vpop.permute.xlu0 %3539
        %3541 = vrot.lane.b32.xlu0 %v1367, 96
        %v3542 = vpop.permute.xlu0 %3541
        %3543 = vrot.lane.b32.xlu0 %v1369, 96
        %v3544 = vpop.permute.xlu0 %3543
        %3545 = vrot.lane.b32.xlu0 %v1371, 96
        %v3546 = vpop.permute.xlu0 %3545
        %v3547 = vsel %vm1404, %v1357, 0
        %v3549 = vsel %vm1404, %v1359, 0
        %v3551 = vsel %vm1404, %v1361, 0
        %v3553 = vsel %vm1404, %v1363, 0
        %v3555 = vsel %vm1404, %v1365, 0
        %v3557 = vsel %vm1404, %v1367, 0
        %v3559 = vsel %vm1404, %v1369, 0
        %v3561 = vsel %vm1404, %v1371, 0
        %v3563 = vsel %vm1404, %v3532, 0
        %v3565 = vsel %vm1404, %v3534, 0
        %v3567 = vsel %vm1404, %v3536, 0
        %v3569 = vsel %vm1404, %v3538, 0
        %v3571 = vsel %vm1404, %v3540, 0
        %v3573 = vsel %vm1404, %v3542, 0
        %v3575 = vsel %vm1404, %v3544, 0
        %v3577 = vsel %vm1404, %v3546, 0
        %3579 = vmatprep.subr.mxu0 0.0
        %3580 = vmatpush1.xpose.msra.mxu0 0.0
        %3581 = vmatprep.subr.mxu0 0.0
        %3582 = vmatpush1.xpose.msra.mxu0 0.0
        %3583 = vmatprep.subr.mxu0 0.0
        %3584 = vmatpush1.xpose.msra.mxu0 0.0
        %3585 = vmatprep.subr.mxu0 0.0
        %3586 = vmatpush1.xpose.msra.mxu0 0.0
        %3587 = vmatprep.subr.mxu0 0.0
        %3588 = vmatpush1.xpose.msra.mxu0 0.0
        %3589 = vmatprep.subr.mxu0 0.0
        %3590 = vmatpush1.xpose.msra.mxu0 0.0
        %3591 = vmatprep.subr.mxu0 0.0
        %3592 = vmatpush1.xpose.msra.mxu0 0.0
        %3593 = vmatprep.subr.mxu0 0.0
        %3594 = vmatpush1.xpose.msra.mxu0 0.0
        %3595 = vmatprep.subr.mxu0 0.0
        %3596 = vmatpush1.xpose.msra.mxu0 %v3577
        %3597 = vmatprep.subr.mxu0 0.0
        %3598 = vmatpush1.xpose.msra.mxu0 %v3575
        %3599 = vmatprep.subr.mxu0 0.0
        %3600 = vmatpush1.xpose.msra.mxu0 %v3573
        %3601 = vmatprep.subr.mxu0 0.0
        %3602 = vmatpush1.xpose.msra.mxu0 %v3571
        %3603 = vmatprep.subr.mxu0 0.0
        %3604 = vmatpush1.xpose.msra.mxu0 %v3569
        %3605 = vmatprep.subr.mxu0 0.0
        %3606 = vmatpush1.xpose.msra.mxu0 %v3567
        %3607 = vmatprep.subr.mxu0 0.0
        %3608 = vmatpush1.xpose.msra.mxu0 %v3565
        %3609 = vmatprep.subr.mxu0 0.0
        %3610 = vmatpush1.xpose.msra.mxu0 %v3563
        %3611 = vmatprep.subr.mxu0 0.0
        %3612 = vmatpush2.xpose.msra.mxu0 0.0
        %3613 = vmatprep.subr.mxu0 0.0
        %3614 = vmatpush2.xpose.msra.mxu0 0.0
        %3615 = vmatprep.subr.mxu0 0.0
        %3616 = vmatpush2.xpose.msra.mxu0 0.0
        %3617 = vmatprep.subr.mxu0 0.0
        %3618 = vmatpush2.xpose.msra.mxu0 0.0
        %3619 = vmatprep.subr.mxu0 0.0
        %3620 = vmatpush2.xpose.msra.mxu0 0.0
        %3621 = vmatprep.subr.mxu0 0.0
        %3622 = vmatpush2.xpose.msra.mxu0 0.0
        %3623 = vmatprep.subr.mxu0 0.0
        %3624 = vmatpush2.xpose.msra.mxu0 0.0
        %3625 = vmatprep.subr.mxu0 0.0
        %3626 = vmatpush2.xpose.msra.mxu0 0.0
        %3627 = vmatprep.subr.mxu0 0.0
        %3628 = vmatpush2.xpose.msra.mxu0 0.0
        %3629 = vmatprep.subr.mxu0 0.0
        %3630 = vmatpush2.xpose.msra.mxu0 0.0
        %3631 = vmatprep.subr.mxu0 0.0
        %3632 = vmatpush2.xpose.msra.mxu0 0.0
        %3633 = vmatprep.subr.mxu0 0.0
        %3634 = vmatpush2.xpose.msra.mxu0 0.0
        %3635 = vmatprep.subr.mxu0 0.0
        %3636 = vmatpush2.xpose.msra.mxu0 0.0
        %3637 = vmatprep.subr.mxu0 0.0
        %3638 = vmatpush2.xpose.msra.mxu0 0.0
        %3639 = vmatprep.subr.mxu0 0.0
        %3640 = vmatpush2.xpose.msra.mxu0 0.0
        %3641 = vmatprep.subr.mxu0 0.0
        %3642 = vmatpush2.xpose.msra.mxu0 0.0
        %3643 = vmatprep.mubr.f32.mxu0 0.0
        %3644 = vmatmul.mubr.f32.gmra.mxu0 %v3547
        %v3645 = vpop.f32.mrf.mxu0
        %v3646 = vadd.f32 0.0, %v3645
        %v3647 = vpop.f32.mrf.mxu0
        %3648 = vmatprep.mubr.f32.mxu0 0.0
        %3649 = vmatmul.mubr.f32.gmra.mxu0 %v3549
        %v3650 = vpop.f32.mrf.mxu0
        %v3651 = vadd.f32 0.0, %v3650
        %v3652 = vpop.f32.mrf.mxu0
        %3653 = vmatprep.mubr.f32.mxu0 0.0
        %3654 = vmatmul.mubr.f32.gmra.mxu0 %v3551
        %v3655 = vpop.f32.mrf.mxu0
        %v3656 = vadd.f32 0.0, %v3655
        %v3657 = vpop.f32.mrf.mxu0
        %3658 = vmatprep.mubr.f32.mxu0 0.0
        %3659 = vmatmul.mubr.f32.gmra.mxu0 %v3553
        %v3660 = vpop.f32.mrf.mxu0
        %v3661 = vadd.f32 0.0, %v3660
        %v3662 = vpop.f32.mrf.mxu0
        %3663 = vmatprep.mubr.f32.mxu0 0.0
        %3664 = vmatmul.mubr.f32.gmra.mxu0 %v3555
        %v3665 = vpop.f32.mrf.mxu0
        %v3666 = vadd.f32 0.0, %v3665
        %v3667 = vpop.f32.mrf.mxu0
        %3668 = vmatprep.mubr.f32.mxu0 0.0
        %3669 = vmatmul.mubr.f32.gmra.mxu0 %v3557
        %v3670 = vpop.f32.mrf.mxu0
        %v3671 = vadd.f32 0.0, %v3670
        %v3672 = vpop.f32.mrf.mxu0
        %3673 = vmatprep.mubr.f32.mxu0 0.0
        %3674 = vmatmul.mubr.f32.gmra.mxu0 %v3559
        %v3675 = vpop.f32.mrf.mxu0
        %v3676 = vadd.f32 0.0, %v3675
        %v3677 = vpop.f32.mrf.mxu0
        %3678 = vmatprep.mubr.f32.mxu0 0.0
        %3679 = vmatmul.mubr.f32.gmra.mxu0 %v3561
        %v3680 = vpop.f32.mrf.mxu0
        %v3681 = vadd.f32 0.0, %v3680
        %v3682 = vpop.f32.mrf.mxu0
        %3683 = vdwg.mxu0
        %3684 = vrot.lane.b32.xlu0 %v1373, 96
        %v3685 = vpop.permute.xlu0 %3684
        %3686 = vrot.lane.b32.xlu0 %v1375, 96
        %v3687 = vpop.permute.xlu0 %3686
        %3688 = vrot.lane.b32.xlu0 %v1377, 96
        %v3689 = vpop.permute.xlu0 %3688
        %3690 = vrot.lane.b32.xlu0 %v1379, 96
        %v3691 = vpop.permute.xlu0 %3690
        %3692 = vrot.lane.b32.xlu0 %v1381, 96
        %v3693 = vpop.permute.xlu0 %3692
        %3694 = vrot.lane.b32.xlu0 %v1383, 96
        %v3695 = vpop.permute.xlu0 %3694
        %3696 = vrot.lane.b32.xlu0 %v1385, 96
        %v3697 = vpop.permute.xlu0 %3696
        %3698 = vrot.lane.b32.xlu0 %v1387, 96
        %v3699 = vpop.permute.xlu0 %3698
        %v3700 = vsel %vm1404, %v1373, 0
        %v3702 = vsel %vm1404, %v1375, 0
        %v3704 = vsel %vm1404, %v1377, 0
        %v3706 = vsel %vm1404, %v1379, 0
        %v3708 = vsel %vm1404, %v1381, 0
        %v3710 = vsel %vm1404, %v1383, 0
        %v3712 = vsel %vm1404, %v1385, 0
        %v3714 = vsel %vm1404, %v1387, 0
        %v3716 = vsel %vm1404, %v3685, 0
        %v3718 = vsel %vm1404, %v3687, 0
        %v3720 = vsel %vm1404, %v3689, 0
        %v3722 = vsel %vm1404, %v3691, 0
        %v3724 = vsel %vm1404, %v3693, 0
        %v3726 = vsel %vm1404, %v3695, 0
        %v3728 = vsel %vm1404, %v3697, 0
        %v3730 = vsel %vm1404, %v3699, 0
        %3732 = vmatprep.subr.mxu0 0.0
        %3733 = vmatpush1.xpose.msra.mxu0 0.0
        %3734 = vmatprep.subr.mxu0 0.0
        %3735 = vmatpush1.xpose.msra.mxu0 0.0
        %3736 = vmatprep.subr.mxu0 0.0
        %3737 = vmatpush1.xpose.msra.mxu0 0.0
        %3738 = vmatprep.subr.mxu0 0.0
        %3739 = vmatpush1.xpose.msra.mxu0 0.0
        %3740 = vmatprep.subr.mxu0 0.0
        %3741 = vmatpush1.xpose.msra.mxu0 0.0
        %3742 = vmatprep.subr.mxu0 0.0
        %3743 = vmatpush1.xpose.msra.mxu0 0.0
        %3744 = vmatprep.subr.mxu0 0.0
        %3745 = vmatpush1.xpose.msra.mxu0 0.0
        %3746 = vmatprep.subr.mxu0 0.0
        %3747 = vmatpush1.xpose.msra.mxu0 0.0
        %3748 = vmatprep.subr.mxu0 0.0
        %3749 = vmatpush1.xpose.msra.mxu0 %v3730
        %3750 = vmatprep.subr.mxu0 0.0
        %3751 = vmatpush1.xpose.msra.mxu0 %v3728
        %3752 = vmatprep.subr.mxu0 0.0
        %3753 = vmatpush1.xpose.msra.mxu0 %v3726
        %3754 = vmatprep.subr.mxu0 0.0
        %3755 = vmatpush1.xpose.msra.mxu0 %v3724
        %3756 = vmatprep.subr.mxu0 0.0
        %3757 = vmatpush1.xpose.msra.mxu0 %v3722
        %3758 = vmatprep.subr.mxu0 0.0
        %3759 = vmatpush1.xpose.msra.mxu0 %v3720
        %3760 = vmatprep.subr.mxu0 0.0
        %3761 = vmatpush1.xpose.msra.mxu0 %v3718
        %3762 = vmatprep.subr.mxu0 0.0
        %3763 = vmatpush1.xpose.msra.mxu0 %v3716
        %3764 = vmatprep.subr.mxu0 0.0
        %3765 = vmatpush2.xpose.msra.mxu0 0.0
        %3766 = vmatprep.subr.mxu0 0.0
        %3767 = vmatpush2.xpose.msra.mxu0 0.0
        %3768 = vmatprep.subr.mxu0 0.0
        %3769 = vmatpush2.xpose.msra.mxu0 0.0
        %3770 = vmatprep.subr.mxu0 0.0
        %3771 = vmatpush2.xpose.msra.mxu0 0.0
        %3772 = vmatprep.subr.mxu0 0.0
        %3773 = vmatpush2.xpose.msra.mxu0 0.0
        %3774 = vmatprep.subr.mxu0 0.0
        %3775 = vmatpush2.xpose.msra.mxu0 0.0
        %3776 = vmatprep.subr.mxu0 0.0
        %3777 = vmatpush2.xpose.msra.mxu0 0.0
        %3778 = vmatprep.subr.mxu0 0.0
        %3779 = vmatpush2.xpose.msra.mxu0 0.0
        %3780 = vmatprep.subr.mxu0 0.0
        %3781 = vmatpush2.xpose.msra.mxu0 0.0
        %3782 = vmatprep.subr.mxu0 0.0
        %3783 = vmatpush2.xpose.msra.mxu0 0.0
        %3784 = vmatprep.subr.mxu0 0.0
        %3785 = vmatpush2.xpose.msra.mxu0 0.0
        %3786 = vmatprep.subr.mxu0 0.0
        %3787 = vmatpush2.xpose.msra.mxu0 0.0
        %3788 = vmatprep.subr.mxu0 0.0
        %3789 = vmatpush2.xpose.msra.mxu0 0.0
        %3790 = vmatprep.subr.mxu0 0.0
        %3791 = vmatpush2.xpose.msra.mxu0 0.0
        %3792 = vmatprep.subr.mxu0 0.0
        %3793 = vmatpush2.xpose.msra.mxu0 0.0
        %3794 = vmatprep.subr.mxu0 0.0
        %3795 = vmatpush2.xpose.msra.mxu0 0.0
        %3796 = vmatprep.mubr.f32.mxu0 0.0
        %3797 = vmatmul.mubr.f32.gmra.mxu0 %v3700
        %v3798 = vpop.f32.mrf.mxu0
        %v3799 = vadd.f32 0.0, %v3798
        %v3800 = vpop.f32.mrf.mxu0
        %3801 = vmatprep.mubr.f32.mxu0 0.0
        %3802 = vmatmul.mubr.f32.gmra.mxu0 %v3702
        %v3803 = vpop.f32.mrf.mxu0
        %v3804 = vadd.f32 0.0, %v3803
        %v3805 = vpop.f32.mrf.mxu0
        %3806 = vmatprep.mubr.f32.mxu0 0.0
        %3807 = vmatmul.mubr.f32.gmra.mxu0 %v3704
        %v3808 = vpop.f32.mrf.mxu0
        %v3809 = vadd.f32 0.0, %v3808
        %v3810 = vpop.f32.mrf.mxu0
        %3811 = vmatprep.mubr.f32.mxu0 0.0
        %3812 = vmatmul.mubr.f32.gmra.mxu0 %v3706
        %v3813 = vpop.f32.mrf.mxu0
        %v3814 = vadd.f32 0.0, %v3813
        %v3815 = vpop.f32.mrf.mxu0
        %3816 = vmatprep.mubr.f32.mxu0 0.0
        %3817 = vmatmul.mubr.f32.gmra.mxu0 %v3708
        %v3818 = vpop.f32.mrf.mxu0
        %v3819 = vadd.f32 0.0, %v3818
        %v3820 = vpop.f32.mrf.mxu0
        %3821 = vmatprep.mubr.f32.mxu0 0.0
        %3822 = vmatmul.mubr.f32.gmra.mxu0 %v3710
        %v3823 = vpop.f32.mrf.mxu0
        %v3824 = vadd.f32 0.0, %v3823
        %v3825 = vpop.f32.mrf.mxu0
        %3826 = vmatprep.mubr.f32.mxu0 0.0
        %3827 = vmatmul.mubr.f32.gmra.mxu0 %v3712
        %v3828 = vpop.f32.mrf.mxu0
        %v3829 = vadd.f32 0.0, %v3828
        %v3830 = vpop.f32.mrf.mxu0
        %3831 = vmatprep.mubr.f32.mxu0 0.0
        %3832 = vmatmul.mubr.f32.gmra.mxu0 %v3714
        %v3833 = vpop.f32.mrf.mxu0
        %v3834 = vadd.f32 0.0, %v3833
        %v3835 = vpop.f32.mrf.mxu0
        %3836 = vdwg.mxu0
        %v3837 = vld [vmem:[#allocation5] sm:$0xff]
        %v3838 = vld [vmem:[#allocation5 + $0x8] sm:$0xff]
        %v3839 = vld [vmem:[#allocation5 + $0x10] sm:$0xff]
        %v3840 = vld [vmem:[#allocation5 + $0x18] sm:$0xff]
        %v3841 = vld [vmem:[#allocation5 + $0x20] sm:$0xff]
        %v3842 = vld [vmem:[#allocation5 + $0x28] sm:$0xff]
        %v3843 = vld [vmem:[#allocation5 + $0x30] sm:$0xff]
        %v3844 = vld [vmem:[#allocation5 + $0x38] sm:$0xff]
        %v3845 = vld [vmem:[#allocation5 + $0x40] sm:$0xff]
        %v3846 = vld [vmem:[#allocation5 + $0x48] sm:$0xff]
        %v3847 = vld [vmem:[#allocation5 + $0x50] sm:$0xff]
        %v3848 = vld [vmem:[#allocation5 + $0x58] sm:$0xff]
        %v3849 = vld [vmem:[#allocation5 + $0x60] sm:$0xff]
        %v3850 = vld [vmem:[#allocation5 + $0x68] sm:$0xff]
        %v3851 = vld [vmem:[#allocation5 + $0x70] sm:$0xff]
        %v3852 = vld [vmem:[#allocation5 + $0x78] sm:$0xff]
        %v3853 = vld [vmem:[#allocation5 + $0x80] sm:$0xff]
        %v3854 = vld [vmem:[#allocation5 + $0x88] sm:$0xff]
        %v3855 = vld [vmem:[#allocation5 + $0x90] sm:$0xff]
        %v3856 = vld [vmem:[#allocation5 + $0x98] sm:$0xff]
        %v3857 = vld [vmem:[#allocation5 + $0xa0] sm:$0xff]
        %v3858 = vld [vmem:[#allocation5 + $0xa8] sm:$0xff]
        %v3859 = vld [vmem:[#allocation5 + $0xb0] sm:$0xff]
        %v3860 = vld [vmem:[#allocation5 + $0xb8] sm:$0xff]
        %v3861 = vld [vmem:[#allocation5 + $0xc0] sm:$0xff]
        %v3862 = vld [vmem:[#allocation5 + $0xc8] sm:$0xff]
        %v3863 = vld [vmem:[#allocation5 + $0xd0] sm:$0xff]
        %v3864 = vld [vmem:[#allocation5 + $0xd8] sm:$0xff]
        %v3865 = vld [vmem:[#allocation5 + $0xe0] sm:$0xff]
        %v3866 = vld [vmem:[#allocation5 + $0xe8] sm:$0xff]
        %v3867 = vld [vmem:[#allocation5 + $0xf0] sm:$0xff]
        %v3868 = vld [vmem:[#allocation5 + $0xf8] sm:$0xff]
        %v3869 = vadd.f32 %v1504, %v3837
        %v3870 = vadd.f32 %v1509, %v3838
        %v3871 = vadd.f32 %v1514, %v3839
        %v3872 = vadd.f32 %v1519, %v3840
        %v3873 = vadd.f32 %v1524, %v3841
        %v3874 = vadd.f32 %v1529, %v3842
        %v3875 = vadd.f32 %v1534, %v3843
        %v3876 = vadd.f32 %v1539, %v3844
        %v3877 = vadd.f32 %v1657, %v3837
        %v3878 = vadd.f32 %v1662, %v3838
        %v3879 = vadd.f32 %v1667, %v3839
        %v3880 = vadd.f32 %v1672, %v3840
        %v3881 = vadd.f32 %v1677, %v3841
        %v3882 = vadd.f32 %v1682, %v3842
        %v3883 = vadd.f32 %v1687, %v3843
        %v3884 = vadd.f32 %v1692, %v3844
        %v3885 = vadd.f32 %v1810, %v3837
        %v3886 = vadd.f32 %v1815, %v3838
        %v3887 = vadd.f32 %v1820, %v3839
        %v3888 = vadd.f32 %v1825, %v3840
        %v3889 = vadd.f32 %v1830, %v3841
        %v3890 = vadd.f32 %v1835, %v3842
        %v3891 = vadd.f32 %v1840, %v3843
        %v3892 = vadd.f32 %v1845, %v3844
        %v3893 = vadd.f32 %v1963, %v3837
        %v3894 = vadd.f32 %v1968, %v3838
        %v3895 = vadd.f32 %v1973, %v3839
        %v3896 = vadd.f32 %v1978, %v3840
        %v3897 = vadd.f32 %v1983, %v3841
        %v3898 = vadd.f32 %v1988, %v3842
        %v3899 = vadd.f32 %v1993, %v3843
        %v3900 = vadd.f32 %v1998, %v3844
        %v3901 = vadd.f32 %v2116, %v3845
        %v3902 = vadd.f32 %v2121, %v3846
        %v3903 = vadd.f32 %v2126, %v3847
        %v3904 = vadd.f32 %v2131, %v3848
        %v3905 = vadd.f32 %v2136, %v3849
        %v3906 = vadd.f32 %v2141, %v3850
        %v3907 = vadd.f32 %v2146, %v3851
        %v3908 = vadd.f32 %v2151, %v3852
        %v3909 = vadd.f32 %v2269, %v3845
        %v3910 = vadd.f32 %v2274, %v3846
        %v3911 = vadd.f32 %v2279, %v3847
        %v3912 = vadd.f32 %v2284, %v3848
        %v3913 = vadd.f32 %v2289, %v3849
        %v3914 = vadd.f32 %v2294, %v3850
        %v3915 = vadd.f32 %v2299, %v3851
        %v3916 = vadd.f32 %v2304, %v3852
        %v3917 = vadd.f32 %v2422, %v3845
        %v3918 = vadd.f32 %v2427, %v3846
        %v3919 = vadd.f32 %v2432, %v3847
        %v3920 = vadd.f32 %v2437, %v3848
        %v3921 = vadd.f32 %v2442, %v3849
        %v3922 = vadd.f32 %v2447, %v3850
        %v3923 = vadd.f32 %v2452, %v3851
        %v3924 = vadd.f32 %v2457, %v3852
        %v3925 = vadd.f32 %v2575, %v3845
        %v3926 = vadd.f32 %v2580, %v3846
        %v3927 = vadd.f32 %v2585, %v3847
        %v3928 = vadd.f32 %v2590, %v3848
        %v3929 = vadd.f32 %v2595, %v3849
        %v3930 = vadd.f32 %v2600, %v3850
        %v3931 = vadd.f32 %v2605, %v3851
        %v3932 = vadd.f32 %v2610, %v3852
        %v3933 = vadd.f32 %v2728, %v3853
        %v3934 = vadd.f32 %v2733, %v3854
        %v3935 = vadd.f32 %v2738, %v3855
        %v3936 = vadd.f32 %v2743, %v3856
        %v3937 = vadd.f32 %v2748, %v3857
        %v3938 = vadd.f32 %v2753, %v3858
        %v3939 = vadd.f32 %v2758, %v3859
        %v3940 = vadd.f32 %v2763, %v3860
        %v3941 = vadd.f32 %v2881, %v3853
        %v3942 = vadd.f32 %v2886, %v3854
        %v3943 = vadd.f32 %v2891, %v3855
        %v3944 = vadd.f32 %v2896, %v3856
        %v3945 = vadd.f32 %v2901, %v3857
        %v3946 = vadd.f32 %v2906, %v3858
        %v3947 = vadd.f32 %v2911, %v3859
        %v3948 = vadd.f32 %v2916, %v3860
        %v3949 = vadd.f32 %v3034, %v3853
        %v3950 = vadd.f32 %v3039, %v3854
        %v3951 = vadd.f32 %v3044, %v3855
        %v3952 = vadd.f32 %v3049, %v3856
        %v3953 = vadd.f32 %v3054, %v3857
        %v3954 = vadd.f32 %v3059, %v3858
        %v3955 = vadd.f32 %v3064, %v3859
        %v3956 = vadd.f32 %v3069, %v3860
        %v3957 = vadd.f32 %v3187, %v3853
        %v3958 = vadd.f32 %v3192, %v3854
        %v3959 = vadd.f32 %v3197, %v3855
        %v3960 = vadd.f32 %v3202, %v3856
        %v3961 = vadd.f32 %v3207, %v3857
        %v3962 = vadd.f32 %v3212, %v3858
        %v3963 = vadd.f32 %v3217, %v3859
        %v3964 = vadd.f32 %v3222, %v3860
        %v3965 = vadd.f32 %v3340, %v3861
        %v3966 = vadd.f32 %v3345, %v3862
        %v3967 = vadd.f32 %v3350, %v3863
        %v3968 = vadd.f32 %v3355, %v3864
        %v3969 = vadd.f32 %v3360, %v3865
        %v3970 = vadd.f32 %v3365, %v3866
        %v3971 = vadd.f32 %v3370, %v3867
        %v3972 = vadd.f32 %v3375, %v3868
        %v3973 = vadd.f32 %v3493, %v3861
        %v3974 = vadd.f32 %v3498, %v3862
        %v3975 = vadd.f32 %v3503, %v3863
        %v3976 = vadd.f32 %v3508, %v3864
        %v3977 = vadd.f32 %v3513, %v3865
        %v3978 = vadd.f32 %v3518, %v3866
        %v3979 = vadd.f32 %v3523, %v3867
        %v3980 = vadd.f32 %v3528, %v3868
        %v3981 = vadd.f32 %v3646, %v3861
        %v3982 = vadd.f32 %v3651, %v3862
        %v3983 = vadd.f32 %v3656, %v3863
        %v3984 = vadd.f32 %v3661, %v3864
        %v3985 = vadd.f32 %v3666, %v3865
        %v3986 = vadd.f32 %v3671, %v3866
        %v3987 = vadd.f32 %v3676, %v3867
        %v3988 = vadd.f32 %v3681, %v3868
        %v3989 = vadd.f32 %v3799, %v3861
        %v3990 = vadd.f32 %v3804, %v3862
        %v3991 = vadd.f32 %v3809, %v3863
        %v3992 = vadd.f32 %v3814, %v3864
        %v3993 = vadd.f32 %v3819, %v3865
        %v3994 = vadd.f32 %v3824, %v3866
        %v3995 = vadd.f32 %v3829, %v3867
        %v3996 = vadd.f32 %v3834, %v3868
        %vm3997 = vcmask 523264
        %v3998 = vsel %vm3997, %v3869, -inf
        %3999 = vmax.xlane.f32.xlu0 %v3998
        %v4000 = vpop.xlane.xlu0 %3999
        %v4001 = vsel %vm3997, %v3870, -inf
        %4002 = vmax.xlane.f32.xlu0 %v4001
        %v4003 = vpop.xlane.xlu0 %4002
        %v4004 = vsel %vm3997, %v3871, -inf
        %4005 = vmax.xlane.f32.xlu0 %v4004
        %v4006 = vpop.xlane.xlu0 %4005
        %v4007 = vsel %vm3997, %v3872, -inf
        %4008 = vmax.xlane.f32.xlu0 %v4007
        %v4009 = vpop.xlane.xlu0 %4008
        %v4010 = vsel %vm3997, %v3873, -inf
        %4011 = vmax.xlane.f32.xlu0 %v4010
        %v4012 = vpop.xlane.xlu0 %4011
        %v4013 = vsel %vm3997, %v3874, -inf
        %4014 = vmax.xlane.f32.xlu0 %v4013
        %v4015 = vpop.xlane.xlu0 %4014
        %v4016 = vsel %vm3997, %v3875, -inf
        %4017 = vmax.xlane.f32.xlu0 %v4016
        %v4018 = vpop.xlane.xlu0 %4017
        %v4019 = vsel %vm3997, %v3876, -inf
        %4020 = vmax.xlane.f32.xlu0 %v4019
        %v4021 = vpop.xlane.xlu0 %4020
        %v4022 = vsel %vm3997, %v3877, -inf
        %4023 = vmax.xlane.f32.xlu0 %v4022
        %v4024 = vpop.xlane.xlu0 %4023
        %v4025 = vsel %vm3997, %v3878, -inf
        %4026 = vmax.xlane.f32.xlu0 %v4025
        %v4027 = vpop.xlane.xlu0 %4026
        %v4028 = vsel %vm3997, %v3879, -inf
        %4029 = vmax.xlane.f32.xlu0 %v4028
        %v4030 = vpop.xlane.xlu0 %4029
        %v4031 = vsel %vm3997, %v3880, -inf
        %4032 = vmax.xlane.f32.xlu0 %v4031
        %v4033 = vpop.xlane.xlu0 %4032
        %v4034 = vsel %vm3997, %v3881, -inf
        %4035 = vmax.xlane.f32.xlu0 %v4034
        %v4036 = vpop.xlane.xlu0 %4035
        %v4037 = vsel %vm3997, %v3882, -inf
        %4038 = vmax.xlane.f32.xlu0 %v4037
        %v4039 = vpop.xlane.xlu0 %4038
        %v4040 = vsel %vm3997, %v3883, -inf
        %4041 = vmax.xlane.f32.xlu0 %v4040
        %v4042 = vpop.xlane.xlu0 %4041
        %v4043 = vsel %vm3997, %v3884, -inf
        %4044 = vmax.xlane.f32.xlu0 %v4043
        %v4045 = vpop.xlane.xlu0 %4044
        %v4046 = vsel %vm3997, %v3885, -inf
        %4047 = vmax.xlane.f32.xlu0 %v4046
        %v4048 = vpop.xlane.xlu0 %4047
        %v4049 = vsel %vm3997, %v3886, -inf
        %4050 = vmax.xlane.f32.xlu0 %v4049
        %v4051 = vpop.xlane.xlu0 %4050
        %v4052 = vsel %vm3997, %v3887, -inf
        %4053 = vmax.xlane.f32.xlu0 %v4052
        %v4054 = vpop.xlane.xlu0 %4053
        %v4055 = vsel %vm3997, %v3888, -inf
        %4056 = vmax.xlane.f32.xlu0 %v4055
        %v4057 = vpop.xlane.xlu0 %4056
        %v4058 = vsel %vm3997, %v3889, -inf
        %4059 = vmax.xlane.f32.xlu0 %v4058
        %v4060 = vpop.xlane.xlu0 %4059
        %v4061 = vsel %vm3997, %v3890, -inf
        %4062 = vmax.xlane.f32.xlu0 %v4061
        %v4063 = vpop.xlane.xlu0 %4062
        %v4064 = vsel %vm3997, %v3891, -inf
        %4065 = vmax.xlane.f32.xlu0 %v4064
        %v4066 = vpop.xlane.xlu0 %4065
        %v4067 = vsel %vm3997, %v3892, -inf
        %4068 = vmax.xlane.f32.xlu0 %v4067
        %v4069 = vpop.xlane.xlu0 %4068
        %v4070 = vsel %vm3997, %v3893, -inf
        %4071 = vmax.xlane.f32.xlu0 %v4070
        %v4072 = vpop.xlane.xlu0 %4071
        %v4073 = vsel %vm3997, %v3894, -inf
        %4074 = vmax.xlane.f32.xlu0 %v4073
        %v4075 = vpop.xlane.xlu0 %4074
        %v4076 = vsel %vm3997, %v3895, -inf
        %4077 = vmax.xlane.f32.xlu0 %v4076
        %v4078 = vpop.xlane.xlu0 %4077
        %v4079 = vsel %vm3997, %v3896, -inf
        %4080 = vmax.xlane.f32.xlu0 %v4079
        %v4081 = vpop.xlane.xlu0 %4080
        %v4082 = vsel %vm3997, %v3897, -inf
        %4083 = vmax.xlane.f32.xlu0 %v4082
        %v4084 = vpop.xlane.xlu0 %4083
        %v4085 = vsel %vm3997, %v3898, -inf
        %4086 = vmax.xlane.f32.xlu0 %v4085
        %v4087 = vpop.xlane.xlu0 %4086
        %v4088 = vsel %vm3997, %v3899, -inf
        %4089 = vmax.xlane.f32.xlu0 %v4088
        %v4090 = vpop.xlane.xlu0 %4089
        %v4091 = vsel %vm3997, %v3900, -inf
        %4092 = vmax.xlane.f32.xlu0 %v4091
        %v4093 = vpop.xlane.xlu0 %4092
        %v4094 = vsel %vm3997, %v3901, -inf
        %4095 = vmax.xlane.f32.xlu0 %v4094
        %v4096 = vpop.xlane.xlu0 %4095
        %v4097 = vsel %vm3997, %v3902, -inf
        %4098 = vmax.xlane.f32.xlu0 %v4097
        %v4099 = vpop.xlane.xlu0 %4098
        %v4100 = vsel %vm3997, %v3903, -inf
        %4101 = vmax.xlane.f32.xlu0 %v4100
        %v4102 = vpop.xlane.xlu0 %4101
        %v4103 = vsel %vm3997, %v3904, -inf
        %4104 = vmax.xlane.f32.xlu0 %v4103
        %v4105 = vpop.xlane.xlu0 %4104
        %v4106 = vsel %vm3997, %v3905, -inf
        %4107 = vmax.xlane.f32.xlu0 %v4106
        %v4108 = vpop.xlane.xlu0 %4107
        %v4109 = vsel %vm3997, %v3906, -inf
        %4110 = vmax.xlane.f32.xlu0 %v4109
        %v4111 = vpop.xlane.xlu0 %4110
        %v4112 = vsel %vm3997, %v3907, -inf
        %4113 = vmax.xlane.f32.xlu0 %v4112
        %v4114 = vpop.xlane.xlu0 %4113
        %v4115 = vsel %vm3997, %v3908, -inf
        %4116 = vmax.xlane.f32.xlu0 %v4115
        %v4117 = vpop.xlane.xlu0 %4116
        %v4118 = vsel %vm3997, %v3909, -inf
        %4119 = vmax.xlane.f32.xlu0 %v4118
        %v4120 = vpop.xlane.xlu0 %4119
        %v4121 = vsel %vm3997, %v3910, -inf
        %4122 = vmax.xlane.f32.xlu0 %v4121
        %v4123 = vpop.xlane.xlu0 %4122
        %v4124 = vsel %vm3997, %v3911, -inf
        %4125 = vmax.xlane.f32.xlu0 %v4124
        %v4126 = vpop.xlane.xlu0 %4125
        %v4127 = vsel %vm3997, %v3912, -inf
        %4128 = vmax.xlane.f32.xlu0 %v4127
        %v4129 = vpop.xlane.xlu0 %4128
        %v4130 = vsel %vm3997, %v3913, -inf
        %4131 = vmax.xlane.f32.xlu0 %v4130
        %v4132 = vpop.xlane.xlu0 %4131
        %v4133 = vsel %vm3997, %v3914, -inf
        %4134 = vmax.xlane.f32.xlu0 %v4133
        %v4135 = vpop.xlane.xlu0 %4134
        %v4136 = vsel %vm3997, %v3915, -inf
        %4137 = vmax.xlane.f32.xlu0 %v4136
        %v4138 = vpop.xlane.xlu0 %4137
        %v4139 = vsel %vm3997, %v3916, -inf
        %4140 = vmax.xlane.f32.xlu0 %v4139
        %v4141 = vpop.xlane.xlu0 %4140
        %v4142 = vsel %vm3997, %v3917, -inf
        %4143 = vmax.xlane.f32.xlu0 %v4142
        %v4144 = vpop.xlane.xlu0 %4143
        %v4145 = vsel %vm3997, %v3918, -inf
        %4146 = vmax.xlane.f32.xlu0 %v4145
        %v4147 = vpop.xlane.xlu0 %4146
        %v4148 = vsel %vm3997, %v3919, -inf
        %4149 = vmax.xlane.f32.xlu0 %v4148
        %v4150 = vpop.xlane.xlu0 %4149
        %v4151 = vsel %vm3997, %v3920, -inf
        %4152 = vmax.xlane.f32.xlu0 %v4151
        %v4153 = vpop.xlane.xlu0 %4152
        %v4154 = vsel %vm3997, %v3921, -inf
        %4155 = vmax.xlane.f32.xlu0 %v4154
        %v4156 = vpop.xlane.xlu0 %4155
        %v4157 = vsel %vm3997, %v3922, -inf
        %4158 = vmax.xlane.f32.xlu0 %v4157
        %v4159 = vpop.xlane.xlu0 %4158
        %v4160 = vsel %vm3997, %v3923, -inf
        %4161 = vmax.xlane.f32.xlu0 %v4160
        %v4162 = vpop.xlane.xlu0 %4161
        %v4163 = vsel %vm3997, %v3924, -inf
        %4164 = vmax.xlane.f32.xlu0 %v4163
        %v4165 = vpop.xlane.xlu0 %4164
        %v4166 = vsel %vm3997, %v3925, -inf
        %4167 = vmax.xlane.f32.xlu0 %v4166
        %v4168 = vpop.xlane.xlu0 %4167
        %v4169 = vsel %vm3997, %v3926, -inf
        %4170 = vmax.xlane.f32.xlu0 %v4169
        %v4171 = vpop.xlane.xlu0 %4170
        %v4172 = vsel %vm3997, %v3927, -inf
        %4173 = vmax.xlane.f32.xlu0 %v4172
        %v4174 = vpop.xlane.xlu0 %4173
        %v4175 = vsel %vm3997, %v3928, -inf
        %4176 = vmax.xlane.f32.xlu0 %v4175
        %v4177 = vpop.xlane.xlu0 %4176
        %v4178 = vsel %vm3997, %v3929, -inf
        %4179 = vmax.xlane.f32.xlu0 %v4178
        %v4180 = vpop.xlane.xlu0 %4179
        %v4181 = vsel %vm3997, %v3930, -inf
        %4182 = vmax.xlane.f32.xlu0 %v4181
        %v4183 = vpop.xlane.xlu0 %4182
        %v4184 = vsel %vm3997, %v3931, -inf
        %4185 = vmax.xlane.f32.xlu0 %v4184
        %v4186 = vpop.xlane.xlu0 %4185
        %v4187 = vsel %vm3997, %v3932, -inf
        %4188 = vmax.xlane.f32.xlu0 %v4187
        %v4189 = vpop.xlane.xlu0 %4188
        %v4190 = vsel %vm3997, %v3933, -inf
        %4191 = vmax.xlane.f32.xlu0 %v4190
        %v4192 = vpop.xlane.xlu0 %4191
        %v4193 = vsel %vm3997, %v3934, -inf
        %4194 = vmax.xlane.f32.xlu0 %v4193
        %v4195 = vpop.xlane.xlu0 %4194
        %v4196 = vsel %vm3997, %v3935, -inf
        %4197 = vmax.xlane.f32.xlu0 %v4196
        %v4198 = vpop.xlane.xlu0 %4197
        %v4199 = vsel %vm3997, %v3936, -inf
        %4200 = vmax.xlane.f32.xlu0 %v4199
        %v4201 = vpop.xlane.xlu0 %4200
        %v4202 = vsel %vm3997, %v3937, -inf
        %4203 = vmax.xlane.f32.xlu0 %v4202
        %v4204 = vpop.xlane.xlu0 %4203
        %v4205 = vsel %vm3997, %v3938, -inf
        %4206 = vmax.xlane.f32.xlu0 %v4205
        %v4207 = vpop.xlane.xlu0 %4206
        %v4208 = vsel %vm3997, %v3939, -inf
        %4209 = vmax.xlane.f32.xlu0 %v4208
        %v4210 = vpop.xlane.xlu0 %4209
        %v4211 = vsel %vm3997, %v3940, -inf
        %4212 = vmax.xlane.f32.xlu0 %v4211
        %v4213 = vpop.xlane.xlu0 %4212
        %v4214 = vsel %vm3997, %v3941, -inf
        %4215 = vmax.xlane.f32.xlu0 %v4214
        %v4216 = vpop.xlane.xlu0 %4215
        %v4217 = vsel %vm3997, %v3942, -inf
        %4218 = vmax.xlane.f32.xlu0 %v4217
        %v4219 = vpop.xlane.xlu0 %4218
        %v4220 = vsel %vm3997, %v3943, -inf
        %4221 = vmax.xlane.f32.xlu0 %v4220
        %v4222 = vpop.xlane.xlu0 %4221
        %v4223 = vsel %vm3997, %v3944, -inf
        %4224 = vmax.xlane.f32.xlu0 %v4223
        %v4225 = vpop.xlane.xlu0 %4224
        %v4226 = vsel %vm3997, %v3945, -inf
        %4227 = vmax.xlane.f32.xlu0 %v4226
        %v4228 = vpop.xlane.xlu0 %4227
        %v4229 = vsel %vm3997, %v3946, -inf
        %4230 = vmax.xlane.f32.xlu0 %v4229
        %v4231 = vpop.xlane.xlu0 %4230
        %v4232 = vsel %vm3997, %v3947, -inf
        %4233 = vmax.xlane.f32.xlu0 %v4232
        %v4234 = vpop.xlane.xlu0 %4233
        %v4235 = vsel %vm3997, %v3948, -inf
        %4236 = vmax.xlane.f32.xlu0 %v4235
        %v4237 = vpop.xlane.xlu0 %4236
        %v4238 = vsel %vm3997, %v3949, -inf
        %4239 = vmax.xlane.f32.xlu0 %v4238
        %v4240 = vpop.xlane.xlu0 %4239
        %v4241 = vsel %vm3997, %v3950, -inf
        %4242 = vmax.xlane.f32.xlu0 %v4241
        %v4243 = vpop.xlane.xlu0 %4242
        %v4244 = vsel %vm3997, %v3951, -inf
        %4245 = vmax.xlane.f32.xlu0 %v4244
        %v4246 = vpop.xlane.xlu0 %4245
        %v4247 = vsel %vm3997, %v3952, -inf
        %4248 = vmax.xlane.f32.xlu0 %v4247
        %v4249 = vpop.xlane.xlu0 %4248
        %v4250 = vsel %vm3997, %v3953, -inf
        %4251 = vmax.xlane.f32.xlu0 %v4250
        %v4252 = vpop.xlane.xlu0 %4251
        %v4253 = vsel %vm3997, %v3954, -inf
        %4254 = vmax.xlane.f32.xlu0 %v4253
        %v4255 = vpop.xlane.xlu0 %4254
        %v4256 = vsel %vm3997, %v3955, -inf
        %4257 = vmax.xlane.f32.xlu0 %v4256
        %v4258 = vpop.xlane.xlu0 %4257
        %v4259 = vsel %vm3997, %v3956, -inf
        %4260 = vmax.xlane.f32.xlu0 %v4259
        %v4261 = vpop.xlane.xlu0 %4260
        %v4262 = vsel %vm3997, %v3957, -inf
        %4263 = vmax.xlane.f32.xlu0 %v4262
        %v4264 = vpop.xlane.xlu0 %4263
        %v4265 = vsel %vm3997, %v3958, -inf
        %4266 = vmax.xlane.f32.xlu0 %v4265
        %v4267 = vpop.xlane.xlu0 %4266
        %v4268 = vsel %vm3997, %v3959, -inf
        %4269 = vmax.xlane.f32.xlu0 %v4268
        %v4270 = vpop.xlane.xlu0 %4269
        %v4271 = vsel %vm3997, %v3960, -inf
        %4272 = vmax.xlane.f32.xlu0 %v4271
        %v4273 = vpop.xlane.xlu0 %4272
        %v4274 = vsel %vm3997, %v3961, -inf
        %4275 = vmax.xlane.f32.xlu0 %v4274
        %v4276 = vpop.xlane.xlu0 %4275
        %v4277 = vsel %vm3997, %v3962, -inf
        %4278 = vmax.xlane.f32.xlu0 %v4277
        %v4279 = vpop.xlane.xlu0 %4278
        %v4280 = vsel %vm3997, %v3963, -inf
        %4281 = vmax.xlane.f32.xlu0 %v4280
        %v4282 = vpop.xlane.xlu0 %4281
        %v4283 = vsel %vm3997, %v3964, -inf
        %4284 = vmax.xlane.f32.xlu0 %v4283
        %v4285 = vpop.xlane.xlu0 %4284
        %v4286 = vsel %vm3997, %v3965, -inf
        %4287 = vmax.xlane.f32.xlu0 %v4286
        %v4288 = vpop.xlane.xlu0 %4287
        %v4289 = vsel %vm3997, %v3966, -inf
        %4290 = vmax.xlane.f32.xlu0 %v4289
        %v4291 = vpop.xlane.xlu0 %4290
        %v4292 = vsel %vm3997, %v3967, -inf
        %4293 = vmax.xlane.f32.xlu0 %v4292
        %v4294 = vpop.xlane.xlu0 %4293
        %v4295 = vsel %vm3997, %v3968, -inf
        %4296 = vmax.xlane.f32.xlu0 %v4295
        %v4297 = vpop.xlane.xlu0 %4296
        %v4298 = vsel %vm3997, %v3969, -inf
        %4299 = vmax.xlane.f32.xlu0 %v4298
        %v4300 = vpop.xlane.xlu0 %4299
        %v4301 = vsel %vm3997, %v3970, -inf
        %4302 = vmax.xlane.f32.xlu0 %v4301
        %v4303 = vpop.xlane.xlu0 %4302
        %v4304 = vsel %vm3997, %v3971, -inf
        %4305 = vmax.xlane.f32.xlu0 %v4304
        %v4306 = vpop.xlane.xlu0 %4305
        %v4307 = vsel %vm3997, %v3972, -inf
        %4308 = vmax.xlane.f32.xlu0 %v4307
        %v4309 = vpop.xlane.xlu0 %4308
        %v4310 = vsel %vm3997, %v3973, -inf
        %4311 = vmax.xlane.f32.xlu0 %v4310
        %v4312 = vpop.xlane.xlu0 %4311
        %v4313 = vsel %vm3997, %v3974, -inf
        %4314 = vmax.xlane.f32.xlu0 %v4313
        %v4315 = vpop.xlane.xlu0 %4314
        %v4316 = vsel %vm3997, %v3975, -inf
        %4317 = vmax.xlane.f32.xlu0 %v4316
        %v4318 = vpop.xlane.xlu0 %4317
        %v4319 = vsel %vm3997, %v3976, -inf
        %4320 = vmax.xlane.f32.xlu0 %v4319
        %v4321 = vpop.xlane.xlu0 %4320
        %v4322 = vsel %vm3997, %v3977, -inf
        %4323 = vmax.xlane.f32.xlu0 %v4322
        %v4324 = vpop.xlane.xlu0 %4323
        %v4325 = vsel %vm3997, %v3978, -inf
        %4326 = vmax.xlane.f32.xlu0 %v4325
        %v4327 = vpop.xlane.xlu0 %4326
        %v4328 = vsel %vm3997, %v3979, -inf
        %4329 = vmax.xlane.f32.xlu0 %v4328
        %v4330 = vpop.xlane.xlu0 %4329
        %v4331 = vsel %vm3997, %v3980, -inf
        %4332 = vmax.xlane.f32.xlu0 %v4331
        %v4333 = vpop.xlane.xlu0 %4332
        %v4334 = vsel %vm3997, %v3981, -inf
        %4335 = vmax.xlane.f32.xlu0 %v4334
        %v4336 = vpop.xlane.xlu0 %4335
        %v4337 = vsel %vm3997, %v3982, -inf
        %4338 = vmax.xlane.f32.xlu0 %v4337
        %v4339 = vpop.xlane.xlu0 %4338
        %v4340 = vsel %vm3997, %v3983, -inf
        %4341 = vmax.xlane.f32.xlu0 %v4340
        %v4342 = vpop.xlane.xlu0 %4341
        %v4343 = vsel %vm3997, %v3984, -inf
        %4344 = vmax.xlane.f32.xlu0 %v4343
        %v4345 = vpop.xlane.xlu0 %4344
        %v4346 = vsel %vm3997, %v3985, -inf
        %4347 = vmax.xlane.f32.xlu0 %v4346
        %v4348 = vpop.xlane.xlu0 %4347
        %v4349 = vsel %vm3997, %v3986, -inf
        %4350 = vmax.xlane.f32.xlu0 %v4349
        %v4351 = vpop.xlane.xlu0 %4350
        %v4352 = vsel %vm3997, %v3987, -inf
        %4353 = vmax.xlane.f32.xlu0 %v4352
        %v4354 = vpop.xlane.xlu0 %4353
        %v4355 = vsel %vm3997, %v3988, -inf
        %4356 = vmax.xlane.f32.xlu0 %v4355
        %v4357 = vpop.xlane.xlu0 %4356
        %v4358 = vsel %vm3997, %v3989, -inf
        %4359 = vmax.xlane.f32.xlu0 %v4358
        %v4360 = vpop.xlane.xlu0 %4359
        %v4361 = vsel %vm3997, %v3990, -inf
        %4362 = vmax.xlane.f32.xlu0 %v4361
        %v4363 = vpop.xlane.xlu0 %4362
        %v4364 = vsel %vm3997, %v3991, -inf
        %4365 = vmax.xlane.f32.xlu0 %v4364
        %v4366 = vpop.xlane.xlu0 %4365
        %v4367 = vsel %vm3997, %v3992, -inf
        %4368 = vmax.xlane.f32.xlu0 %v4367
        %v4369 = vpop.xlane.xlu0 %4368
        %v4370 = vsel %vm3997, %v3993, -inf
        %4371 = vmax.xlane.f32.xlu0 %v4370
        %v4372 = vpop.xlane.xlu0 %4371
        %v4373 = vsel %vm3997, %v3994, -inf
        %4374 = vmax.xlane.f32.xlu0 %v4373
        %v4375 = vpop.xlane.xlu0 %4374
        %v4376 = vsel %vm3997, %v3995, -inf
        %4377 = vmax.xlane.f32.xlu0 %v4376
        %v4378 = vpop.xlane.xlu0 %4377
        %v4379 = vsel %vm3997, %v3996, -inf
        %4380 = vmax.xlane.f32.xlu0 %v4379
        %v4381 = vpop.xlane.xlu0 %4380
        %v4382 = vsub.f32 %v3869, %v4000
        %v4383 = vsub.f32 %v3870, %v4003
        %v4384 = vsub.f32 %v3871, %v4006
        %v4385 = vsub.f32 %v3872, %v4009
        %v4386 = vsub.f32 %v3873, %v4012
        %v4387 = vsub.f32 %v3874, %v4015
        %v4388 = vsub.f32 %v3875, %v4018
        %v4389 = vsub.f32 %v3876, %v4021
        %v4390 = vsub.f32 %v3877, %v4024
        %v4391 = vsub.f32 %v3878, %v4027
        %v4392 = vsub.f32 %v3879, %v4030
        %v4393 = vsub.f32 %v3880, %v4033
        %v4394 = vsub.f32 %v3881, %v4036
        %v4395 = vsub.f32 %v3882, %v4039
        %v4396 = vsub.f32 %v3883, %v4042
        %v4397 = vsub.f32 %v3884, %v4045
        %v4398 = vsub.f32 %v3885, %v4048
        %v4399 = vsub.f32 %v3886, %v4051
        %v4400 = vsub.f32 %v3887, %v4054
        %v4401 = vsub.f32 %v3888, %v4057
        %v4402 = vsub.f32 %v3889, %v4060
        %v4403 = vsub.f32 %v3890, %v4063
        %v4404 = vsub.f32 %v3891, %v4066
        %v4405 = vsub.f32 %v3892, %v4069
        %v4406 = vsub.f32 %v3893, %v4072
        %v4407 = vsub.f32 %v3894, %v4075
        %v4408 = vsub.f32 %v3895, %v4078
        %v4409 = vsub.f32 %v3896, %v4081
        %v4410 = vsub.f32 %v3897, %v4084
        %v4411 = vsub.f32 %v3898, %v4087
        %v4412 = vsub.f32 %v3899, %v4090
        %v4413 = vsub.f32 %v3900, %v4093
        %v4414 = vsub.f32 %v3901, %v4096
        %v4415 = vsub.f32 %v3902, %v4099
        %v4416 = vsub.f32 %v3903, %v4102
        %v4417 = vsub.f32 %v3904, %v4105
        %v4418 = vsub.f32 %v3905, %v4108
        %v4419 = vsub.f32 %v3906, %v4111
        %v4420 = vsub.f32 %v3907, %v4114
        %v4421 = vsub.f32 %v3908, %v4117
        %v4422 = vsub.f32 %v3909, %v4120
        %v4423 = vsub.f32 %v3910, %v4123
        %v4424 = vsub.f32 %v3911, %v4126
        %v4425 = vsub.f32 %v3912, %v4129
        %v4426 = vsub.f32 %v3913, %v4132
        %v4427 = vsub.f32 %v3914, %v4135
        %v4428 = vsub.f32 %v3915, %v4138
        %v4429 = vsub.f32 %v3916, %v4141
        %v4430 = vsub.f32 %v3917, %v4144
        %v4431 = vsub.f32 %v3918, %v4147
        %v4432 = vsub.f32 %v3919, %v4150
        %v4433 = vsub.f32 %v3920, %v4153
        %v4434 = vsub.f32 %v3921, %v4156
        %v4435 = vsub.f32 %v3922, %v4159
        %v4436 = vsub.f32 %v3923, %v4162
        %v4437 = vsub.f32 %v3924, %v4165
        %v4438 = vsub.f32 %v3925, %v4168
        %v4439 = vsub.f32 %v3926, %v4171
        %v4440 = vsub.f32 %v3927, %v4174
        %v4441 = vsub.f32 %v3928, %v4177
        %v4442 = vsub.f32 %v3929, %v4180
        %v4443 = vsub.f32 %v3930, %v4183
        %v4444 = vsub.f32 %v3931, %v4186
        %v4445 = vsub.f32 %v3932, %v4189
        %v4446 = vsub.f32 %v3933, %v4192
        %v4447 = vsub.f32 %v3934, %v4195
        %v4448 = vsub.f32 %v3935, %v4198
        %v4449 = vsub.f32 %v3936, %v4201
        %v4450 = vsub.f32 %v3937, %v4204
        %v4451 = vsub.f32 %v3938, %v4207
        %v4452 = vsub.f32 %v3939, %v4210
        %v4453 = vsub.f32 %v3940, %v4213
        %v4454 = vsub.f32 %v3941, %v4216
        %v4455 = vsub.f32 %v3942, %v4219
        %v4456 = vsub.f32 %v3943, %v4222
        %v4457 = vsub.f32 %v3944, %v4225
        %v4458 = vsub.f32 %v3945, %v4228
        %v4459 = vsub.f32 %v3946, %v4231
        %v4460 = vsub.f32 %v3947, %v4234
        %v4461 = vsub.f32 %v3948, %v4237
        %v4462 = vsub.f32 %v3949, %v4240
        %v4463 = vsub.f32 %v3950, %v4243
        %v4464 = vsub.f32 %v3951, %v4246
        %v4465 = vsub.f32 %v3952, %v4249
        %v4466 = vsub.f32 %v3953, %v4252
        %v4467 = vsub.f32 %v3954, %v4255
        %v4468 = vsub.f32 %v3955, %v4258
        %v4469 = vsub.f32 %v3956, %v4261
        %v4470 = vsub.f32 %v3957, %v4264
        %v4471 = vsub.f32 %v3958, %v4267
        %v4472 = vsub.f32 %v3959, %v4270
        %v4473 = vsub.f32 %v3960, %v4273
        %v4474 = vsub.f32 %v3961, %v4276
        %v4475 = vsub.f32 %v3962, %v4279
        %v4476 = vsub.f32 %v3963, %v4282
        %v4477 = vsub.f32 %v3964, %v4285
        %v4478 = vsub.f32 %v3965, %v4288
        %v4479 = vsub.f32 %v3966, %v4291
        %v4480 = vsub.f32 %v3967, %v4294
        %v4481 = vsub.f32 %v3968, %v4297
        %v4482 = vsub.f32 %v3969, %v4300
        %v4483 = vsub.f32 %v3970, %v4303
        %v4484 = vsub.f32 %v3971, %v4306
        %v4485 = vsub.f32 %v3972, %v4309
        %v4486 = vsub.f32 %v3973, %v4312
        %v4487 = vsub.f32 %v3974, %v4315
        %v4488 = vsub.f32 %v3975, %v4318
        %v4489 = vsub.f32 %v3976, %v4321
        %v4490 = vsub.f32 %v3977, %v4324
        %v4491 = vsub.f32 %v3978, %v4327
        %v4492 = vsub.f32 %v3979, %v4330
        %v4493 = vsub.f32 %v3980, %v4333
        %v4494 = vsub.f32 %v3981, %v4336
        %v4495 = vsub.f32 %v3982, %v4339
        %v4496 = vsub.f32 %v3983, %v4342
        %v4497 = vsub.f32 %v3984, %v4345
        %v4498 = vsub.f32 %v3985, %v4348
        %v4499 = vsub.f32 %v3986, %v4351
        %v4500 = vsub.f32 %v3987, %v4354
        %v4501 = vsub.f32 %v3988, %v4357
        %v4502 = vsub.f32 %v3989, %v4360
        %v4503 = vsub.f32 %v3990, %v4363
        %v4504 = vsub.f32 %v3991, %v4366
        %v4505 = vsub.f32 %v3992, %v4369
        %v4506 = vsub.f32 %v3993, %v4372
        %v4507 = vsub.f32 %v3994, %v4375
        %v4508 = vsub.f32 %v3995, %v4378
        %v4509 = vsub.f32 %v3996, %v4381
        %v4510 = vmul.f32 %v4382, 1.442695
        %v4511 = vpow.pop %v4510
        %v4512 = vmul.f32 %v4383, 1.442695
        %v4513 = vpow.pop %v4512
        %v4514 = vmul.f32 %v4384, 1.442695
        %v4515 = vpow.pop %v4514
        %v4516 = vmul.f32 %v4385, 1.442695
        %v4517 = vpow.pop %v4516
        %v4518 = vmul.f32 %v4386, 1.442695
        %v4519 = vpow.pop %v4518
        %v4520 = vmul.f32 %v4387, 1.442695
        %v4521 = vpow.pop %v4520
        %v4522 = vmul.f32 %v4388, 1.442695
        %v4523 = vpow.pop %v4522
        %v4524 = vmul.f32 %v4389, 1.442695
        %v4525 = vpow.pop %v4524
        %v4526 = vmul.f32 %v4390, 1.442695
        %v4527 = vpow.pop %v4526
        %v4528 = vmul.f32 %v4391, 1.442695
        %v4529 = vpow.pop %v4528
        %v4530 = vmul.f32 %v4392, 1.442695
        %v4531 = vpow.pop %v4530
        %v4532 = vmul.f32 %v4393, 1.442695
        %v4533 = vpow.pop %v4532
        %v4534 = vmul.f32 %v4394, 1.442695
        %v4535 = vpow.pop %v4534
        %v4536 = vmul.f32 %v4395, 1.442695
        %v4537 = vpow.pop %v4536
        %v4538 = vmul.f32 %v4396, 1.442695
        %v4539 = vpow.pop %v4538
        %v4540 = vmul.f32 %v4397, 1.442695
        %v4541 = vpow.pop %v4540
        %v4542 = vmul.f32 %v4398, 1.442695
        %v4543 = vpow.pop %v4542
        %v4544 = vmul.f32 %v4399, 1.442695
        %v4545 = vpow.pop %v4544
        %v4546 = vmul.f32 %v4400, 1.442695
        %v4547 = vpow.pop %v4546
        %v4548 = vmul.f32 %v4401, 1.442695
        %v4549 = vpow.pop %v4548
        %v4550 = vmul.f32 %v4402, 1.442695
        %v4551 = vpow.pop %v4550
        %v4552 = vmul.f32 %v4403, 1.442695
        %v4553 = vpow.pop %v4552
        %v4554 = vmul.f32 %v4404, 1.442695
        %v4555 = vpow.pop %v4554
        %v4556 = vmul.f32 %v4405, 1.442695
        %v4557 = vpow.pop %v4556
        %v4558 = vmul.f32 %v4406, 1.442695
        %v4559 = vpow.pop %v4558
        %v4560 = vmul.f32 %v4407, 1.442695
        %v4561 = vpow.pop %v4560
        %v4562 = vmul.f32 %v4408, 1.442695
        %v4563 = vpow.pop %v4562
        %v4564 = vmul.f32 %v4409, 1.442695
        %v4565 = vpow.pop %v4564
        %v4566 = vmul.f32 %v4410, 1.442695
        %v4567 = vpow.pop %v4566
        %v4568 = vmul.f32 %v4411, 1.442695
        %v4569 = vpow.pop %v4568
        %v4570 = vmul.f32 %v4412, 1.442695
        %v4571 = vpow.pop %v4570
        %v4572 = vmul.f32 %v4413, 1.442695
        %v4573 = vpow.pop %v4572
        %v4574 = vmul.f32 %v4414, 1.442695
        %v4575 = vpow.pop %v4574
        %v4576 = vmul.f32 %v4415, 1.442695
        %v4577 = vpow.pop %v4576
        %v4578 = vmul.f32 %v4416, 1.442695
        %v4579 = vpow.pop %v4578
        %v4580 = vmul.f32 %v4417, 1.442695
        %v4581 = vpow.pop %v4580
        %v4582 = vmul.f32 %v4418, 1.442695
        %v4583 = vpow.pop %v4582
        %v4584 = vmul.f32 %v4419, 1.442695
        %v4585 = vpow.pop %v4584
        %v4586 = vmul.f32 %v4420, 1.442695
        %v4587 = vpow.pop %v4586
        %v4588 = vmul.f32 %v4421, 1.442695
        %v4589 = vpow.pop %v4588
        %v4590 = vmul.f32 %v4422, 1.442695
        %v4591 = vpow.pop %v4590
        %v4592 = vmul.f32 %v4423, 1.442695
        %v4593 = vpow.pop %v4592
        %v4594 = vmul.f32 %v4424, 1.442695
        %v4595 = vpow.pop %v4594
        %v4596 = vmul.f32 %v4425, 1.442695
        %v4597 = vpow.pop %v4596
        %v4598 = vmul.f32 %v4426, 1.442695
        %v4599 = vpow.pop %v4598
        %v4600 = vmul.f32 %v4427, 1.442695
        %v4601 = vpow.pop %v4600
        %v4602 = vmul.f32 %v4428, 1.442695
        %v4603 = vpow.pop %v4602
        %v4604 = vmul.f32 %v4429, 1.442695
        %v4605 = vpow.pop %v4604
        %v4606 = vmul.f32 %v4430, 1.442695
        %v4607 = vpow.pop %v4606
        %v4608 = vmul.f32 %v4431, 1.442695
        %v4609 = vpow.pop %v4608
        %v4610 = vmul.f32 %v4432, 1.442695
        %v4611 = vpow.pop %v4610
        %v4612 = vmul.f32 %v4433, 1.442695
        %v4613 = vpow.pop %v4612
        %v4614 = vmul.f32 %v4434, 1.442695
        %v4615 = vpow.pop %v4614
        %v4616 = vmul.f32 %v4435, 1.442695
        %v4617 = vpow.pop %v4616
        %v4618 = vmul.f32 %v4436, 1.442695
        %v4619 = vpow.pop %v4618
        %v4620 = vmul.f32 %v4437, 1.442695
        %v4621 = vpow.pop %v4620
        %v4622 = vmul.f32 %v4438, 1.442695
        %v4623 = vpow.pop %v4622
        %v4624 = vmul.f32 %v4439, 1.442695
        %v4625 = vpow.pop %v4624
        %v4626 = vmul.f32 %v4440, 1.442695
        %v4627 = vpow.pop %v4626
        %v4628 = vmul.f32 %v4441, 1.442695
        %v4629 = vpow.pop %v4628
        %v4630 = vmul.f32 %v4442, 1.442695
        %v4631 = vpow.pop %v4630
        %v4632 = vmul.f32 %v4443, 1.442695
        %v4633 = vpow.pop %v4632
        %v4634 = vmul.f32 %v4444, 1.442695
        %v4635 = vpow.pop %v4634
        %v4636 = vmul.f32 %v4445, 1.442695
        %v4637 = vpow.pop %v4636
        %v4638 = vmul.f32 %v4446, 1.442695
        %v4639 = vpow.pop %v4638
        %v4640 = vmul.f32 %v4447, 1.442695
        %v4641 = vpow.pop %v4640
        %v4642 = vmul.f32 %v4448, 1.442695
        %v4643 = vpow.pop %v4642
        %v4644 = vmul.f32 %v4449, 1.442695
        %v4645 = vpow.pop %v4644
        %v4646 = vmul.f32 %v4450, 1.442695
        %v4647 = vpow.pop %v4646
        %v4648 = vmul.f32 %v4451, 1.442695
        %v4649 = vpow.pop %v4648
        %v4650 = vmul.f32 %v4452, 1.442695
        %v4651 = vpow.pop %v4650
        %v4652 = vmul.f32 %v4453, 1.442695
        %v4653 = vpow.pop %v4652
        %v4654 = vmul.f32 %v4454, 1.442695
        %v4655 = vpow.pop %v4654
        %v4656 = vmul.f32 %v4455, 1.442695
        %v4657 = vpow.pop %v4656
        %v4658 = vmul.f32 %v4456, 1.442695
        %v4659 = vpow.pop %v4658
        %v4660 = vmul.f32 %v4457, 1.442695
        %v4661 = vpow.pop %v4660
        %v4662 = vmul.f32 %v4458, 1.442695
        %v4663 = vpow.pop %v4662
        %v4664 = vmul.f32 %v4459, 1.442695
        %v4665 = vpow.pop %v4664
        %v4666 = vmul.f32 %v4460, 1.442695
        %v4667 = vpow.pop %v4666
        %v4668 = vmul.f32 %v4461, 1.442695
        %v4669 = vpow.pop %v4668
        %v4670 = vmul.f32 %v4462, 1.442695
        %v4671 = vpow.pop %v4670
        %v4672 = vmul.f32 %v4463, 1.442695
        %v4673 = vpow.pop %v4672
        %v4674 = vmul.f32 %v4464, 1.442695
        %v4675 = vpow.pop %v4674
        %v4676 = vmul.f32 %v4465, 1.442695
        %v4677 = vpow.pop %v4676
        %v4678 = vmul.f32 %v4466, 1.442695
        %v4679 = vpow.pop %v4678
        %v4680 = vmul.f32 %v4467, 1.442695
        %v4681 = vpow.pop %v4680
        %v4682 = vmul.f32 %v4468, 1.442695
        %v4683 = vpow.pop %v4682
        %v4684 = vmul.f32 %v4469, 1.442695
        %v4685 = vpow.pop %v4684
        %v4686 = vmul.f32 %v4470, 1.442695
        %v4687 = vpow.pop %v4686
        %v4688 = vmul.f32 %v4471, 1.442695
        %v4689 = vpow.pop %v4688
        %v4690 = vmul.f32 %v4472, 1.442695
        %v4691 = vpow.pop %v4690
        %v4692 = vmul.f32 %v4473, 1.442695
        %v4693 = vpow.pop %v4692
        %v4694 = vmul.f32 %v4474, 1.442695
        %v4695 = vpow.pop %v4694
        %v4696 = vmul.f32 %v4475, 1.442695
        %v4697 = vpow.pop %v4696
        %v4698 = vmul.f32 %v4476, 1.442695
        %v4699 = vpow.pop %v4698
        %v4700 = vmul.f32 %v4477, 1.442695
        %v4701 = vpow.pop %v4700
        %v4702 = vmul.f32 %v4478, 1.442695
        %v4703 = vpow.pop %v4702
        %v4704 = vmul.f32 %v4479, 1.442695
        %v4705 = vpow.pop %v4704
        %v4706 = vmul.f32 %v4480, 1.442695
        %v4707 = vpow.pop %v4706
        %v4708 = vmul.f32 %v4481, 1.442695
        %v4709 = vpow.pop %v4708
        %v4710 = vmul.f32 %v4482, 1.442695
        %v4711 = vpow.pop %v4710
        %v4712 = vmul.f32 %v4483, 1.442695
        %v4713 = vpow.pop %v4712
        %v4714 = vmul.f32 %v4484, 1.442695
        %v4715 = vpow.pop %v4714
        %v4716 = vmul.f32 %v4485, 1.442695
        %v4717 = vpow.pop %v4716
        %v4718 = vmul.f32 %v4486, 1.442695
        %v4719 = vpow.pop %v4718
        %v4720 = vmul.f32 %v4487, 1.442695
        %v4721 = vpow.pop %v4720
        %v4722 = vmul.f32 %v4488, 1.442695
        %v4723 = vpow.pop %v4722
        %v4724 = vmul.f32 %v4489, 1.442695
        %v4725 = vpow.pop %v4724
        %v4726 = vmul.f32 %v4490, 1.442695
        %v4727 = vpow.pop %v4726
        %v4728 = vmul.f32 %v4491, 1.442695
        %v4729 = vpow.pop %v4728
        %v4730 = vmul.f32 %v4492, 1.442695
        %v4731 = vpow.pop %v4730
        %v4732 = vmul.f32 %v4493, 1.442695
        %v4733 = vpow.pop %v4732
        %v4734 = vmul.f32 %v4494, 1.442695
        %v4735 = vpow.pop %v4734
        %v4736 = vmul.f32 %v4495, 1.442695
        %v4737 = vpow.pop %v4736
        %v4738 = vmul.f32 %v4496, 1.442695
        %v4739 = vpow.pop %v4738
        %v4740 = vmul.f32 %v4497, 1.442695
        %v4741 = vpow.pop %v4740
        %v4742 = vmul.f32 %v4498, 1.442695
        %v4743 = vpow.pop %v4742
        %v4744 = vmul.f32 %v4499, 1.442695
        %v4745 = vpow.pop %v4744
        %v4746 = vmul.f32 %v4500, 1.442695
        %v4747 = vpow.pop %v4746
        %v4748 = vmul.f32 %v4501, 1.442695
        %v4749 = vpow.pop %v4748
        %v4750 = vmul.f32 %v4502, 1.442695
        %v4751 = vpow.pop %v4750
        %v4752 = vmul.f32 %v4503, 1.442695
        %v4753 = vpow.pop %v4752
        %v4754 = vmul.f32 %v4504, 1.442695
        %v4755 = vpow.pop %v4754
        %v4756 = vmul.f32 %v4505, 1.442695
        %v4757 = vpow.pop %v4756
        %v4758 = vmul.f32 %v4506, 1.442695
        %v4759 = vpow.pop %v4758
        %v4760 = vmul.f32 %v4507, 1.442695
        %v4761 = vpow.pop %v4760
        %v4762 = vmul.f32 %v4508, 1.442695
        %v4763 = vpow.pop %v4762
        %v4764 = vmul.f32 %v4509, 1.442695
        %v4765 = vpow.pop %v4764
        %v4766 = vsel %vm3997, %v4511, 0.0
        %4767 = vadd.xlane.f32.xlu0 %v4766
        %v4768 = vpop.xlane.xlu0 %4767
        %v4769 = vsel %vm3997, %v4513, 0.0
        %4770 = vadd.xlane.f32.xlu0 %v4769
        %v4771 = vpop.xlane.xlu0 %4770
        %v4772 = vsel %vm3997, %v4515, 0.0
        %4773 = vadd.xlane.f32.xlu0 %v4772
        %v4774 = vpop.xlane.xlu0 %4773
        %v4775 = vsel %vm3997, %v4517, 0.0
        %4776 = vadd.xlane.f32.xlu0 %v4775
        %v4777 = vpop.xlane.xlu0 %4776
        %v4778 = vsel %vm3997, %v4519, 0.0
        %4779 = vadd.xlane.f32.xlu0 %v4778
        %v4780 = vpop.xlane.xlu0 %4779
        %v4781 = vsel %vm3997, %v4521, 0.0
        %4782 = vadd.xlane.f32.xlu0 %v4781
        %v4783 = vpop.xlane.xlu0 %4782
        %v4784 = vsel %vm3997, %v4523, 0.0
        %4785 = vadd.xlane.f32.xlu0 %v4784
        %v4786 = vpop.xlane.xlu0 %4785
        %v4787 = vsel %vm3997, %v4525, 0.0
        %4788 = vadd.xlane.f32.xlu0 %v4787
        %v4789 = vpop.xlane.xlu0 %4788
        %v4790 = vsel %vm3997, %v4527, 0.0
        %4791 = vadd.xlane.f32.xlu0 %v4790
        %v4792 = vpop.xlane.xlu0 %4791
        %v4793 = vsel %vm3997, %v4529, 0.0
        %4794 = vadd.xlane.f32.xlu0 %v4793
        %v4795 = vpop.xlane.xlu0 %4794
        %v4796 = vsel %vm3997, %v4531, 0.0
        %4797 = vadd.xlane.f32.xlu0 %v4796
        %v4798 = vpop.xlane.xlu0 %4797
        %v4799 = vsel %vm3997, %v4533, 0.0
        %4800 = vadd.xlane.f32.xlu0 %v4799
        %v4801 = vpop.xlane.xlu0 %4800
        %v4802 = vsel %vm3997, %v4535, 0.0
        %4803 = vadd.xlane.f32.xlu0 %v4802
        %v4804 = vpop.xlane.xlu0 %4803
        %v4805 = vsel %vm3997, %v4537, 0.0
        %4806 = vadd.xlane.f32.xlu0 %v4805
        %v4807 = vpop.xlane.xlu0 %4806
        %v4808 = vsel %vm3997, %v4539, 0.0
        %4809 = vadd.xlane.f32.xlu0 %v4808
        %v4810 = vpop.xlane.xlu0 %4809
        %v4811 = vsel %vm3997, %v4541, 0.0
        %4812 = vadd.xlane.f32.xlu0 %v4811
        %v4813 = vpop.xlane.xlu0 %4812
        %v4814 = vsel %vm3997, %v4543, 0.0
        %4815 = vadd.xlane.f32.xlu0 %v4814
        %v4816 = vpop.xlane.xlu0 %4815
        %v4817 = vsel %vm3997, %v4545, 0.0
        %4818 = vadd.xlane.f32.xlu0 %v4817
        %v4819 = vpop.xlane.xlu0 %4818
        %v4820 = vsel %vm3997, %v4547, 0.0
        %4821 = vadd.xlane.f32.xlu0 %v4820
        %v4822 = vpop.xlane.xlu0 %4821
        %v4823 = vsel %vm3997, %v4549, 0.0
        %4824 = vadd.xlane.f32.xlu0 %v4823
        %v4825 = vpop.xlane.xlu0 %4824
        %v4826 = vsel %vm3997, %v4551, 0.0
        %4827 = vadd.xlane.f32.xlu0 %v4826
        %v4828 = vpop.xlane.xlu0 %4827
        %v4829 = vsel %vm3997, %v4553, 0.0
        %4830 = vadd.xlane.f32.xlu0 %v4829
        %v4831 = vpop.xlane.xlu0 %4830
        %v4832 = vsel %vm3997, %v4555, 0.0
        %4833 = vadd.xlane.f32.xlu0 %v4832
        %v4834 = vpop.xlane.xlu0 %4833
        %v4835 = vsel %vm3997, %v4557, 0.0
        %4836 = vadd.xlane.f32.xlu0 %v4835
        %v4837 = vpop.xlane.xlu0 %4836
        %v4838 = vsel %vm3997, %v4559, 0.0
        %4839 = vadd.xlane.f32.xlu0 %v4838
        %v4840 = vpop.xlane.xlu0 %4839
        %v4841 = vsel %vm3997, %v4561, 0.0
        %4842 = vadd.xlane.f32.xlu0 %v4841
        %v4843 = vpop.xlane.xlu0 %4842
        %v4844 = vsel %vm3997, %v4563, 0.0
        %4845 = vadd.xlane.f32.xlu0 %v4844
        %v4846 = vpop.xlane.xlu0 %4845
        %v4847 = vsel %vm3997, %v4565, 0.0
        %4848 = vadd.xlane.f32.xlu0 %v4847
        %v4849 = vpop.xlane.xlu0 %4848
        %v4850 = vsel %vm3997, %v4567, 0.0
        %4851 = vadd.xlane.f32.xlu0 %v4850
        %v4852 = vpop.xlane.xlu0 %4851
        %v4853 = vsel %vm3997, %v4569, 0.0
        %4854 = vadd.xlane.f32.xlu0 %v4853
        %v4855 = vpop.xlane.xlu0 %4854
        %v4856 = vsel %vm3997, %v4571, 0.0
        %4857 = vadd.xlane.f32.xlu0 %v4856
        %v4858 = vpop.xlane.xlu0 %4857
        %v4859 = vsel %vm3997, %v4573, 0.0
        %4860 = vadd.xlane.f32.xlu0 %v4859
        %v4861 = vpop.xlane.xlu0 %4860
        %v4862 = vsel %vm3997, %v4575, 0.0
        %4863 = vadd.xlane.f32.xlu0 %v4862
        %v4864 = vpop.xlane.xlu0 %4863
        %v4865 = vsel %vm3997, %v4577, 0.0
        %4866 = vadd.xlane.f32.xlu0 %v4865
        %v4867 = vpop.xlane.xlu0 %4866
        %v4868 = vsel %vm3997, %v4579, 0.0
        %4869 = vadd.xlane.f32.xlu0 %v4868
        %v4870 = vpop.xlane.xlu0 %4869
        %v4871 = vsel %vm3997, %v4581, 0.0
        %4872 = vadd.xlane.f32.xlu0 %v4871
        %v4873 = vpop.xlane.xlu0 %4872
        %v4874 = vsel %vm3997, %v4583, 0.0
        %4875 = vadd.xlane.f32.xlu0 %v4874
        %v4876 = vpop.xlane.xlu0 %4875
        %v4877 = vsel %vm3997, %v4585, 0.0
        %4878 = vadd.xlane.f32.xlu0 %v4877
        %v4879 = vpop.xlane.xlu0 %4878
        %v4880 = vsel %vm3997, %v4587, 0.0
        %4881 = vadd.xlane.f32.xlu0 %v4880
        %v4882 = vpop.xlane.xlu0 %4881
        %v4883 = vsel %vm3997, %v4589, 0.0
        %4884 = vadd.xlane.f32.xlu0 %v4883
        %v4885 = vpop.xlane.xlu0 %4884
        %v4886 = vsel %vm3997, %v4591, 0.0
        %4887 = vadd.xlane.f32.xlu0 %v4886
        %v4888 = vpop.xlane.xlu0 %4887
        %v4889 = vsel %vm3997, %v4593, 0.0
        %4890 = vadd.xlane.f32.xlu0 %v4889
        %v4891 = vpop.xlane.xlu0 %4890
        %v4892 = vsel %vm3997, %v4595, 0.0
        %4893 = vadd.xlane.f32.xlu0 %v4892
        %v4894 = vpop.xlane.xlu0 %4893
        %v4895 = vsel %vm3997, %v4597, 0.0
        %4896 = vadd.xlane.f32.xlu0 %v4895
        %v4897 = vpop.xlane.xlu0 %4896
        %v4898 = vsel %vm3997, %v4599, 0.0
        %4899 = vadd.xlane.f32.xlu0 %v4898
        %v4900 = vpop.xlane.xlu0 %4899
        %v4901 = vsel %vm3997, %v4601, 0.0
        %4902 = vadd.xlane.f32.xlu0 %v4901
        %v4903 = vpop.xlane.xlu0 %4902
        %v4904 = vsel %vm3997, %v4603, 0.0
        %4905 = vadd.xlane.f32.xlu0 %v4904
        %v4906 = vpop.xlane.xlu0 %4905
        %v4907 = vsel %vm3997, %v4605, 0.0
        %4908 = vadd.xlane.f32.xlu0 %v4907
        %v4909 = vpop.xlane.xlu0 %4908
        %v4910 = vsel %vm3997, %v4607, 0.0
        %4911 = vadd.xlane.f32.xlu0 %v4910
        %v4912 = vpop.xlane.xlu0 %4911
        %v4913 = vsel %vm3997, %v4609, 0.0
        %4914 = vadd.xlane.f32.xlu0 %v4913
        %v4915 = vpop.xlane.xlu0 %4914
        %v4916 = vsel %vm3997, %v4611, 0.0
        %4917 = vadd.xlane.f32.xlu0 %v4916
        %v4918 = vpop.xlane.xlu0 %4917
        %v4919 = vsel %vm3997, %v4613, 0.0
        %4920 = vadd.xlane.f32.xlu0 %v4919
        %v4921 = vpop.xlane.xlu0 %4920
        %v4922 = vsel %vm3997, %v4615, 0.0
        %4923 = vadd.xlane.f32.xlu0 %v4922
        %v4924 = vpop.xlane.xlu0 %4923
        %v4925 = vsel %vm3997, %v4617, 0.0
        %4926 = vadd.xlane.f32.xlu0 %v4925
        %v4927 = vpop.xlane.xlu0 %4926
        %v4928 = vsel %vm3997, %v4619, 0.0
        %4929 = vadd.xlane.f32.xlu0 %v4928
        %v4930 = vpop.xlane.xlu0 %4929
        %v4931 = vsel %vm3997, %v4621, 0.0
        %4932 = vadd.xlane.f32.xlu0 %v4931
        %v4933 = vpop.xlane.xlu0 %4932
        %v4934 = vsel %vm3997, %v4623, 0.0
        %4935 = vadd.xlane.f32.xlu0 %v4934
        %v4936 = vpop.xlane.xlu0 %4935
        %v4937 = vsel %vm3997, %v4625, 0.0
        %4938 = vadd.xlane.f32.xlu0 %v4937
        %v4939 = vpop.xlane.xlu0 %4938
        %v4940 = vsel %vm3997, %v4627, 0.0
        %4941 = vadd.xlane.f32.xlu0 %v4940
        %v4942 = vpop.xlane.xlu0 %4941
        %v4943 = vsel %vm3997, %v4629, 0.0
        %4944 = vadd.xlane.f32.xlu0 %v4943
        %v4945 = vpop.xlane.xlu0 %4944
        %v4946 = vsel %vm3997, %v4631, 0.0
        %4947 = vadd.xlane.f32.xlu0 %v4946
        %v4948 = vpop.xlane.xlu0 %4947
        %v4949 = vsel %vm3997, %v4633, 0.0
        %4950 = vadd.xlane.f32.xlu0 %v4949
        %v4951 = vpop.xlane.xlu0 %4950
        %v4952 = vsel %vm3997, %v4635, 0.0
        %4953 = vadd.xlane.f32.xlu0 %v4952
        %v4954 = vpop.xlane.xlu0 %4953
        %v4955 = vsel %vm3997, %v4637, 0.0
        %4956 = vadd.xlane.f32.xlu0 %v4955
        %v4957 = vpop.xlane.xlu0 %4956
        %v4958 = vsel %vm3997, %v4639, 0.0
        %4959 = vadd.xlane.f32.xlu0 %v4958
        %v4960 = vpop.xlane.xlu0 %4959
        %v4961 = vsel %vm3997, %v4641, 0.0
        %4962 = vadd.xlane.f32.xlu0 %v4961
        %v4963 = vpop.xlane.xlu0 %4962
        %v4964 = vsel %vm3997, %v4643, 0.0
        %4965 = vadd.xlane.f32.xlu0 %v4964
        %v4966 = vpop.xlane.xlu0 %4965
        %v4967 = vsel %vm3997, %v4645, 0.0
        %4968 = vadd.xlane.f32.xlu0 %v4967
        %v4969 = vpop.xlane.xlu0 %4968
        %v4970 = vsel %vm3997, %v4647, 0.0
        %4971 = vadd.xlane.f32.xlu0 %v4970
        %v4972 = vpop.xlane.xlu0 %4971
        %v4973 = vsel %vm3997, %v4649, 0.0
        %4974 = vadd.xlane.f32.xlu0 %v4973
        %v4975 = vpop.xlane.xlu0 %4974
        %v4976 = vsel %vm3997, %v4651, 0.0
        %4977 = vadd.xlane.f32.xlu0 %v4976
        %v4978 = vpop.xlane.xlu0 %4977
        %v4979 = vsel %vm3997, %v4653, 0.0
        %4980 = vadd.xlane.f32.xlu0 %v4979
        %v4981 = vpop.xlane.xlu0 %4980
        %v4982 = vsel %vm3997, %v4655, 0.0
        %4983 = vadd.xlane.f32.xlu0 %v4982
        %v4984 = vpop.xlane.xlu0 %4983
        %v4985 = vsel %vm3997, %v4657, 0.0
        %4986 = vadd.xlane.f32.xlu0 %v4985
        %v4987 = vpop.xlane.xlu0 %4986
        %v4988 = vsel %vm3997, %v4659, 0.0
        %4989 = vadd.xlane.f32.xlu0 %v4988
        %v4990 = vpop.xlane.xlu0 %4989
        %v4991 = vsel %vm3997, %v4661, 0.0
        %4992 = vadd.xlane.f32.xlu0 %v4991
        %v4993 = vpop.xlane.xlu0 %4992
        %v4994 = vsel %vm3997, %v4663, 0.0
        %4995 = vadd.xlane.f32.xlu0 %v4994
        %v4996 = vpop.xlane.xlu0 %4995
        %v4997 = vsel %vm3997, %v4665, 0.0
        %4998 = vadd.xlane.f32.xlu0 %v4997
        %v4999 = vpop.xlane.xlu0 %4998
        %v5000 = vsel %vm3997, %v4667, 0.0
        %5001 = vadd.xlane.f32.xlu0 %v5000
        %v5002 = vpop.xlane.xlu0 %5001
        %v5003 = vsel %vm3997, %v4669, 0.0
        %5004 = vadd.xlane.f32.xlu0 %v5003
        %v5005 = vpop.xlane.xlu0 %5004
        %v5006 = vsel %vm3997, %v4671, 0.0
        %5007 = vadd.xlane.f32.xlu0 %v5006
        %v5008 = vpop.xlane.xlu0 %5007
        %v5009 = vsel %vm3997, %v4673, 0.0
        %5010 = vadd.xlane.f32.xlu0 %v5009
        %v5011 = vpop.xlane.xlu0 %5010
        %v5012 = vsel %vm3997, %v4675, 0.0
        %5013 = vadd.xlane.f32.xlu0 %v5012
        %v5014 = vpop.xlane.xlu0 %5013
        %v5015 = vsel %vm3997, %v4677, 0.0
        %5016 = vadd.xlane.f32.xlu0 %v5015
        %v5017 = vpop.xlane.xlu0 %5016
        %v5018 = vsel %vm3997, %v4679, 0.0
        %5019 = vadd.xlane.f32.xlu0 %v5018
        %v5020 = vpop.xlane.xlu0 %5019
        %v5021 = vsel %vm3997, %v4681, 0.0
        %5022 = vadd.xlane.f32.xlu0 %v5021
        %v5023 = vpop.xlane.xlu0 %5022
        %v5024 = vsel %vm3997, %v4683, 0.0
        %5025 = vadd.xlane.f32.xlu0 %v5024
        %v5026 = vpop.xlane.xlu0 %5025
        %v5027 = vsel %vm3997, %v4685, 0.0
        %5028 = vadd.xlane.f32.xlu0 %v5027
        %v5029 = vpop.xlane.xlu0 %5028
        %v5030 = vsel %vm3997, %v4687, 0.0
        %5031 = vadd.xlane.f32.xlu0 %v5030
        %v5032 = vpop.xlane.xlu0 %5031
        %v5033 = vsel %vm3997, %v4689, 0.0
        %5034 = vadd.xlane.f32.xlu0 %v5033
        %v5035 = vpop.xlane.xlu0 %5034
        %v5036 = vsel %vm3997, %v4691, 0.0
        %5037 = vadd.xlane.f32.xlu0 %v5036
        %v5038 = vpop.xlane.xlu0 %5037
        %v5039 = vsel %vm3997, %v4693, 0.0
        %5040 = vadd.xlane.f32.xlu0 %v5039
        %v5041 = vpop.xlane.xlu0 %5040
        %v5042 = vsel %vm3997, %v4695, 0.0
        %5043 = vadd.xlane.f32.xlu0 %v5042
        %v5044 = vpop.xlane.xlu0 %5043
        %v5045 = vsel %vm3997, %v4697, 0.0
        %5046 = vadd.xlane.f32.xlu0 %v5045
        %v5047 = vpop.xlane.xlu0 %5046
        %v5048 = vsel %vm3997, %v4699, 0.0
        %5049 = vadd.xlane.f32.xlu0 %v5048
        %v5050 = vpop.xlane.xlu0 %5049
        %v5051 = vsel %vm3997, %v4701, 0.0
        %5052 = vadd.xlane.f32.xlu0 %v5051
        %v5053 = vpop.xlane.xlu0 %5052
        %v5054 = vsel %vm3997, %v4703, 0.0
        %5055 = vadd.xlane.f32.xlu0 %v5054
        %v5056 = vpop.xlane.xlu0 %5055
        %v5057 = vsel %vm3997, %v4705, 0.0
        %5058 = vadd.xlane.f32.xlu0 %v5057
        %v5059 = vpop.xlane.xlu0 %5058
        %v5060 = vsel %vm3997, %v4707, 0.0
        %5061 = vadd.xlane.f32.xlu0 %v5060
        %v5062 = vpop.xlane.xlu0 %5061
        %v5063 = vsel %vm3997, %v4709, 0.0
        %5064 = vadd.xlane.f32.xlu0 %v5063
        %v5065 = vpop.xlane.xlu0 %5064
        %v5066 = vsel %vm3997, %v4711, 0.0
        %5067 = vadd.xlane.f32.xlu0 %v5066
        %v5068 = vpop.xlane.xlu0 %5067
        %v5069 = vsel %vm3997, %v4713, 0.0
        %5070 = vadd.xlane.f32.xlu0 %v5069
        %v5071 = vpop.xlane.xlu0 %5070
        %v5072 = vsel %vm3997, %v4715, 0.0
        %5073 = vadd.xlane.f32.xlu0 %v5072
        %v5074 = vpop.xlane.xlu0 %5073
        %v5075 = vsel %vm3997, %v4717, 0.0
        %5076 = vadd.xlane.f32.xlu0 %v5075
        %v5077 = vpop.xlane.xlu0 %5076
        %v5078 = vsel %vm3997, %v4719, 0.0
        %5079 = vadd.xlane.f32.xlu0 %v5078
        %v5080 = vpop.xlane.xlu0 %5079
        %v5081 = vsel %vm3997, %v4721, 0.0
        %5082 = vadd.xlane.f32.xlu0 %v5081
        %v5083 = vpop.xlane.xlu0 %5082
        %v5084 = vsel %vm3997, %v4723, 0.0
        %5085 = vadd.xlane.f32.xlu0 %v5084
        %v5086 = vpop.xlane.xlu0 %5085
        %v5087 = vsel %vm3997, %v4725, 0.0
        %5088 = vadd.xlane.f32.xlu0 %v5087
        %v5089 = vpop.xlane.xlu0 %5088
        %v5090 = vsel %vm3997, %v4727, 0.0
        %5091 = vadd.xlane.f32.xlu0 %v5090
        %v5092 = vpop.xlane.xlu0 %5091
        %v5093 = vsel %vm3997, %v4729, 0.0
        %5094 = vadd.xlane.f32.xlu0 %v5093
        %v5095 = vpop.xlane.xlu0 %5094
        %v5096 = vsel %vm3997, %v4731, 0.0
        %5097 = vadd.xlane.f32.xlu0 %v5096
        %v5098 = vpop.xlane.xlu0 %5097
        %v5099 = vsel %vm3997, %v4733, 0.0
        %5100 = vadd.xlane.f32.xlu0 %v5099
        %v5101 = vpop.xlane.xlu0 %5100
        %v5102 = vsel %vm3997, %v4735, 0.0
        %5103 = vadd.xlane.f32.xlu0 %v5102
        %v5104 = vpop.xlane.xlu0 %5103
        %v5105 = vsel %vm3997, %v4737, 0.0
        %5106 = vadd.xlane.f32.xlu0 %v5105
        %v5107 = vpop.xlane.xlu0 %5106
        %v5108 = vsel %vm3997, %v4739, 0.0
        %5109 = vadd.xlane.f32.xlu0 %v5108
        %v5110 = vpop.xlane.xlu0 %5109
        %v5111 = vsel %vm3997, %v4741, 0.0
        %5112 = vadd.xlane.f32.xlu0 %v5111
        %v5113 = vpop.xlane.xlu0 %5112
        %v5114 = vsel %vm3997, %v4743, 0.0
        %5115 = vadd.xlane.f32.xlu0 %v5114
        %v5116 = vpop.xlane.xlu0 %5115
        %v5117 = vsel %vm3997, %v4745, 0.0
        %5118 = vadd.xlane.f32.xlu0 %v5117
        %v5119 = vpop.xlane.xlu0 %5118
        %v5120 = vsel %vm3997, %v4747, 0.0
        %5121 = vadd.xlane.f32.xlu0 %v5120
        %v5122 = vpop.xlane.xlu0 %5121
        %v5123 = vsel %vm3997, %v4749, 0.0
        %5124 = vadd.xlane.f32.xlu0 %v5123
        %v5125 = vpop.xlane.xlu0 %5124
        %v5126 = vsel %vm3997, %v4751, 0.0
        %5127 = vadd.xlane.f32.xlu0 %v5126
        %v5128 = vpop.xlane.xlu0 %5127
        %v5129 = vsel %vm3997, %v4753, 0.0
        %5130 = vadd.xlane.f32.xlu0 %v5129
        %v5131 = vpop.xlane.xlu0 %5130
        %v5132 = vsel %vm3997, %v4755, 0.0
        %5133 = vadd.xlane.f32.xlu0 %v5132
        %v5134 = vpop.xlane.xlu0 %5133
        %v5135 = vsel %vm3997, %v4757, 0.0
        %5136 = vadd.xlane.f32.xlu0 %v5135
        %v5137 = vpop.xlane.xlu0 %5136
        %v5138 = vsel %vm3997, %v4759, 0.0
        %5139 = vadd.xlane.f32.xlu0 %v5138
        %v5140 = vpop.xlane.xlu0 %5139
        %v5141 = vsel %vm3997, %v4761, 0.0
        %5142 = vadd.xlane.f32.xlu0 %v5141
        %v5143 = vpop.xlane.xlu0 %5142
        %v5144 = vsel %vm3997, %v4763, 0.0
        %5145 = vadd.xlane.f32.xlu0 %v5144
        %v5146 = vpop.xlane.xlu0 %5145
        %v5147 = vsel %vm3997, %v4765, 0.0
        %5148 = vadd.xlane.f32.xlu0 %v5147
        %v5149 = vpop.xlane.xlu0 %5148
        %5150 = vrot.lane.b32.xlu0 %v1006, 64
        %v5151 = vpop.permute.xlu0 %5150
        %5152 = vrot.lane.b32.xlu0 %v1011, 64
        %v5153 = vpop.permute.xlu0 %5152
        %5154 = vrot.lane.b32.xlu0 %v1016, 64
        %v5155 = vpop.permute.xlu0 %5154
        %5156 = vrot.lane.b32.xlu0 %v1021, 64
        %v5157 = vpop.permute.xlu0 %5156
        %5158 = vrot.lane.b32.xlu0 %v1026, 64
        %v5159 = vpop.permute.xlu0 %5158
        %5160 = vrot.lane.b32.xlu0 %v1031, 64
        %v5161 = vpop.permute.xlu0 %5160
        %5162 = vrot.lane.b32.xlu0 %v1036, 64
        %v5163 = vpop.permute.xlu0 %5162
        %5164 = vrot.lane.b32.xlu0 %v1041, 64
        %v5165 = vpop.permute.xlu0 %5164
        %v5175 = vsel %vm3997, %v4511, 0
        %v5178 = vsel %vm3997, %v4513, 0
        %v5181 = vsel %vm3997, %v4515, 0
        %v5184 = vsel %vm3997, %v4517, 0
        %v5187 = vsel %vm3997, %v4519, 0
        %v5190 = vsel %vm3997, %v4521, 0
        %v5193 = vsel %vm3997, %v4523, 0
        %v5196 = vsel %vm3997, %v4525, 0
        %5198 = vmatprep.subr.mxu0 0.0
        %5199 = vmatpush1.msra.mxu0 0.0
        %5200 = vmatprep.subr.mxu0 0.0
        %5201 = vmatpush1.msra.mxu0 0.0
        %5202 = vmatprep.subr.mxu0 0.0
        %5203 = vmatpush1.msra.mxu0 0.0
        %5204 = vmatprep.subr.mxu0 0.0
        %5205 = vmatpush1.msra.mxu0 0.0
        %5206 = vmatprep.subr.mxu0 0.0
        %5207 = vmatpush1.msra.mxu0 0.0
        %5208 = vmatprep.subr.mxu0 0.0
        %5209 = vmatpush1.msra.mxu0 0.0
        %5210 = vmatprep.subr.mxu0 0.0
        %5211 = vmatpush1.msra.mxu0 0.0
        %5212 = vmatprep.subr.mxu0 0.0
        %5213 = vmatpush1.msra.mxu0 0.0
        %5214 = vmatprep.subr.mxu0 0.0
        %5215 = vmatpush1.msra.mxu0 %v5165
        %5216 = vmatprep.subr.mxu0 0.0
        %5217 = vmatpush1.msra.mxu0 %v5163
        %5218 = vmatprep.subr.mxu0 0.0
        %5219 = vmatpush1.msra.mxu0 %v5161
        %5220 = vmatprep.subr.mxu0 0.0
        %5221 = vmatpush1.msra.mxu0 %v5159
        %5222 = vmatprep.subr.mxu0 0.0
        %5223 = vmatpush1.msra.mxu0 %v5157
        %5224 = vmatprep.subr.mxu0 0.0
        %5225 = vmatpush1.msra.mxu0 %v5155
        %5226 = vmatprep.subr.mxu0 0.0
        %5227 = vmatpush1.msra.mxu0 %v5153
        %5228 = vmatprep.subr.mxu0 0.0
        %5229 = vmatpush1.msra.mxu0 %v5151
        %5230 = vmatprep.subr.mxu0 0.0
        %5231 = vmatpush2.msra.mxu0 0.0
        %5232 = vmatprep.subr.mxu0 0.0
        %5233 = vmatpush2.msra.mxu0 0.0
        %5234 = vmatprep.subr.mxu0 0.0
        %5235 = vmatpush2.msra.mxu0 0.0
        %5236 = vmatprep.subr.mxu0 0.0
        %5237 = vmatpush2.msra.mxu0 0.0
        %5238 = vmatprep.subr.mxu0 0.0
        %5239 = vmatpush2.msra.mxu0 0.0
        %5240 = vmatprep.subr.mxu0 0.0
        %5241 = vmatpush2.msra.mxu0 0.0
        %5242 = vmatprep.subr.mxu0 0.0
        %5243 = vmatpush2.msra.mxu0 0.0
        %5244 = vmatprep.subr.mxu0 0.0
        %5245 = vmatpush2.msra.mxu0 0.0
        %5246 = vmatprep.subr.mxu0 0.0
        %5247 = vmatpush2.msra.mxu0 0.0
        %5248 = vmatprep.subr.mxu0 0.0
        %5249 = vmatpush2.msra.mxu0 0.0
        %5250 = vmatprep.subr.mxu0 0.0
        %5251 = vmatpush2.msra.mxu0 0.0
        %5252 = vmatprep.subr.mxu0 0.0
        %5253 = vmatpush2.msra.mxu0 0.0
        %5254 = vmatprep.subr.mxu0 0.0
        %5255 = vmatpush2.msra.mxu0 0.0
        %5256 = vmatprep.subr.mxu0 0.0
        %5257 = vmatpush2.msra.mxu0 0.0
        %5258 = vmatprep.subr.mxu0 0.0
        %5259 = vmatpush2.msra.mxu0 0.0
        %5260 = vmatprep.subr.mxu0 0.0
        %5261 = vmatpush2.msra.mxu0 0.0
        %5262 = vmatprep.mubr.f32.mxu0 0.0
        %5263 = vmatmul.mubr.f32.gmra.mxu0 %v5175
        %v5264 = vpop.f32.mrf.mxu0
        %v5265 = vadd.f32 0.0, %v5264
        %v5266 = vpop.f32.mrf.mxu0
        %5267 = vmatprep.mubr.f32.mxu0 0.0
        %5268 = vmatmul.mubr.f32.gmra.mxu0 %v5178
        %v5269 = vpop.f32.mrf.mxu0
        %v5270 = vadd.f32 0.0, %v5269
        %v5271 = vpop.f32.mrf.mxu0
        %5272 = vmatprep.mubr.f32.mxu0 0.0
        %5273 = vmatmul.mubr.f32.gmra.mxu0 %v5181
        %v5274 = vpop.f32.mrf.mxu0
        %v5275 = vadd.f32 0.0, %v5274
        %v5276 = vpop.f32.mrf.mxu0
        %5277 = vmatprep.mubr.f32.mxu0 0.0
        %5278 = vmatmul.mubr.f32.gmra.mxu0 %v5184
        %v5279 = vpop.f32.mrf.mxu0
        %v5280 = vadd.f32 0.0, %v5279
        %v5281 = vpop.f32.mrf.mxu0
        %5282 = vmatprep.mubr.f32.mxu0 0.0
        %5283 = vmatmul.mubr.f32.gmra.mxu0 %v5187
        %v5284 = vpop.f32.mrf.mxu0
        %v5285 = vadd.f32 0.0, %v5284
        %v5286 = vpop.f32.mrf.mxu0
        %5287 = vmatprep.mubr.f32.mxu0 0.0
        %5288 = vmatmul.mubr.f32.gmra.mxu0 %v5190
        %v5289 = vpop.f32.mrf.mxu0
        %v5290 = vadd.f32 0.0, %v5289
        %v5291 = vpop.f32.mrf.mxu0
        %5292 = vmatprep.mubr.f32.mxu0 0.0
        %5293 = vmatmul.mubr.f32.gmra.mxu0 %v5193
        %v5294 = vpop.f32.mrf.mxu0
        %v5295 = vadd.f32 0.0, %v5294
        %v5296 = vpop.f32.mrf.mxu0
        %5297 = vmatprep.mubr.f32.mxu0 0.0
        %5298 = vmatmul.mubr.f32.gmra.mxu0 %v5196
        %v5299 = vpop.f32.mrf.mxu0
        %v5300 = vadd.f32 0.0, %v5299
        %v5301 = vpop.f32.mrf.mxu0
        %5302 = vdwg.mxu0
        %5303 = vrot.lane.b32.xlu0 %v1046, 64
        %v5304 = vpop.permute.xlu0 %5303
        %5305 = vrot.lane.b32.xlu0 %v1051, 64
        %v5306 = vpop.permute.xlu0 %5305
        %5307 = vrot.lane.b32.xlu0 %v1056, 64
        %v5308 = vpop.permute.xlu0 %5307
        %5309 = vrot.lane.b32.xlu0 %v1061, 64
        %v5310 = vpop.permute.xlu0 %5309
        %5311 = vrot.lane.b32.xlu0 %v1066, 64
        %v5312 = vpop.permute.xlu0 %5311
        %5313 = vrot.lane.b32.xlu0 %v1071, 64
        %v5314 = vpop.permute.xlu0 %5313
        %5315 = vrot.lane.b32.xlu0 %v1076, 64
        %v5316 = vpop.permute.xlu0 %5315
        %5317 = vrot.lane.b32.xlu0 %v1081, 64
        %v5318 = vpop.permute.xlu0 %5317
        %v5328 = vsel %vm3997, %v4527, 0
        %v5331 = vsel %vm3997, %v4529, 0
        %v5334 = vsel %vm3997, %v4531, 0
        %v5337 = vsel %vm3997, %v4533, 0
        %v5340 = vsel %vm3997, %v4535, 0
        %v5343 = vsel %vm3997, %v4537, 0
        %v5346 = vsel %vm3997, %v4539, 0
        %v5349 = vsel %vm3997, %v4541, 0
        %5351 = vmatprep.subr.mxu0 0.0
        %5352 = vmatpush1.msra.mxu0 0.0
        %5353 = vmatprep.subr.mxu0 0.0
        %5354 = vmatpush1.msra.mxu0 0.0
        %5355 = vmatprep.subr.mxu0 0.0
        %5356 = vmatpush1.msra.mxu0 0.0
        %5357 = vmatprep.subr.mxu0 0.0
        %5358 = vmatpush1.msra.mxu0 0.0
        %5359 = vmatprep.subr.mxu0 0.0
        %5360 = vmatpush1.msra.mxu0 0.0
        %5361 = vmatprep.subr.mxu0 0.0
        %5362 = vmatpush1.msra.mxu0 0.0
        %5363 = vmatprep.subr.mxu0 0.0
        %5364 = vmatpush1.msra.mxu0 0.0
        %5365 = vmatprep.subr.mxu0 0.0
        %5366 = vmatpush1.msra.mxu0 0.0
        %5367 = vmatprep.subr.mxu0 0.0
        %5368 = vmatpush1.msra.mxu0 %v5318
        %5369 = vmatprep.subr.mxu0 0.0
        %5370 = vmatpush1.msra.mxu0 %v5316
        %5371 = vmatprep.subr.mxu0 0.0
        %5372 = vmatpush1.msra.mxu0 %v5314
        %5373 = vmatprep.subr.mxu0 0.0
        %5374 = vmatpush1.msra.mxu0 %v5312
        %5375 = vmatprep.subr.mxu0 0.0
        %5376 = vmatpush1.msra.mxu0 %v5310
        %5377 = vmatprep.subr.mxu0 0.0
        %5378 = vmatpush1.msra.mxu0 %v5308
        %5379 = vmatprep.subr.mxu0 0.0
        %5380 = vmatpush1.msra.mxu0 %v5306
        %5381 = vmatprep.subr.mxu0 0.0
        %5382 = vmatpush1.msra.mxu0 %v5304
        %5383 = vmatprep.subr.mxu0 0.0
        %5384 = vmatpush2.msra.mxu0 0.0
        %5385 = vmatprep.subr.mxu0 0.0
        %5386 = vmatpush2.msra.mxu0 0.0
        %5387 = vmatprep.subr.mxu0 0.0
        %5388 = vmatpush2.msra.mxu0 0.0
        %5389 = vmatprep.subr.mxu0 0.0
        %5390 = vmatpush2.msra.mxu0 0.0
        %5391 = vmatprep.subr.mxu0 0.0
        %5392 = vmatpush2.msra.mxu0 0.0
        %5393 = vmatprep.subr.mxu0 0.0
        %5394 = vmatpush2.msra.mxu0 0.0
        %5395 = vmatprep.subr.mxu0 0.0
        %5396 = vmatpush2.msra.mxu0 0.0
        %5397 = vmatprep.subr.mxu0 0.0
        %5398 = vmatpush2.msra.mxu0 0.0
        %5399 = vmatprep.subr.mxu0 0.0
        %5400 = vmatpush2.msra.mxu0 0.0
        %5401 = vmatprep.subr.mxu0 0.0
        %5402 = vmatpush2.msra.mxu0 0.0
        %5403 = vmatprep.subr.mxu0 0.0
        %5404 = vmatpush2.msra.mxu0 0.0
        %5405 = vmatprep.subr.mxu0 0.0
        %5406 = vmatpush2.msra.mxu0 0.0
        %5407 = vmatprep.subr.mxu0 0.0
        %5408 = vmatpush2.msra.mxu0 0.0
        %5409 = vmatprep.subr.mxu0 0.0
        %5410 = vmatpush2.msra.mxu0 0.0
        %5411 = vmatprep.subr.mxu0 0.0
        %5412 = vmatpush2.msra.mxu0 0.0
        %5413 = vmatprep.subr.mxu0 0.0
        %5414 = vmatpush2.msra.mxu0 0.0
        %5415 = vmatprep.mubr.f32.mxu0 0.0
        %5416 = vmatmul.mubr.f32.gmra.mxu0 %v5328
        %v5417 = vpop.f32.mrf.mxu0
        %v5418 = vadd.f32 0.0, %v5417
        %v5419 = vpop.f32.mrf.mxu0
        %5420 = vmatprep.mubr.f32.mxu0 0.0
        %5421 = vmatmul.mubr.f32.gmra.mxu0 %v5331
        %v5422 = vpop.f32.mrf.mxu0
        %v5423 = vadd.f32 0.0, %v5422
        %v5424 = vpop.f32.mrf.mxu0
        %5425 = vmatprep.mubr.f32.mxu0 0.0
        %5426 = vmatmul.mubr.f32.gmra.mxu0 %v5334
        %v5427 = vpop.f32.mrf.mxu0
        %v5428 = vadd.f32 0.0, %v5427
        %v5429 = vpop.f32.mrf.mxu0
        %5430 = vmatprep.mubr.f32.mxu0 0.0
        %5431 = vmatmul.mubr.f32.gmra.mxu0 %v5337
        %v5432 = vpop.f32.mrf.mxu0
        %v5433 = vadd.f32 0.0, %v5432
        %v5434 = vpop.f32.mrf.mxu0
        %5435 = vmatprep.mubr.f32.mxu0 0.0
        %5436 = vmatmul.mubr.f32.gmra.mxu0 %v5340
        %v5437 = vpop.f32.mrf.mxu0
        %v5438 = vadd.f32 0.0, %v5437
        %v5439 = vpop.f32.mrf.mxu0
        %5440 = vmatprep.mubr.f32.mxu0 0.0
        %5441 = vmatmul.mubr.f32.gmra.mxu0 %v5343
        %v5442 = vpop.f32.mrf.mxu0
        %v5443 = vadd.f32 0.0, %v5442
        %v5444 = vpop.f32.mrf.mxu0
        %5445 = vmatprep.mubr.f32.mxu0 0.0
        %5446 = vmatmul.mubr.f32.gmra.mxu0 %v5346
        %v5447 = vpop.f32.mrf.mxu0
        %v5448 = vadd.f32 0.0, %v5447
        %v5449 = vpop.f32.mrf.mxu0
        %5450 = vmatprep.mubr.f32.mxu0 0.0
        %5451 = vmatmul.mubr.f32.gmra.mxu0 %v5349
        %v5452 = vpop.f32.mrf.mxu0
        %v5453 = vadd.f32 0.0, %v5452
        %v5454 = vpop.f32.mrf.mxu0
        %5455 = vdwg.mxu0
        %5456 = vrot.lane.b32.xlu0 %v1086, 64
        %v5457 = vpop.permute.xlu0 %5456
        %5458 = vrot.lane.b32.xlu0 %v1091, 64
        %v5459 = vpop.permute.xlu0 %5458
        %5460 = vrot.lane.b32.xlu0 %v1096, 64
        %v5461 = vpop.permute.xlu0 %5460
        %5462 = vrot.lane.b32.xlu0 %v1101, 64
        %v5463 = vpop.permute.xlu0 %5462
        %5464 = vrot.lane.b32.xlu0 %v1106, 64
        %v5465 = vpop.permute.xlu0 %5464
        %5466 = vrot.lane.b32.xlu0 %v1111, 64
        %v5467 = vpop.permute.xlu0 %5466
        %5468 = vrot.lane.b32.xlu0 %v1116, 64
        %v5469 = vpop.permute.xlu0 %5468
        %5470 = vrot.lane.b32.xlu0 %v1121, 64
        %v5471 = vpop.permute.xlu0 %5470
        %v5481 = vsel %vm3997, %v4543, 0
        %v5484 = vsel %vm3997, %v4545, 0
        %v5487 = vsel %vm3997, %v4547, 0
        %v5490 = vsel %vm3997, %v4549, 0
        %v5493 = vsel %vm3997, %v4551, 0
        %v5496 = vsel %vm3997, %v4553, 0
        %v5499 = vsel %vm3997, %v4555, 0
        %v5502 = vsel %vm3997, %v4557, 0
        %5504 = vmatprep.subr.mxu0 0.0
        %5505 = vmatpush1.msra.mxu0 0.0
        %5506 = vmatprep.subr.mxu0 0.0
        %5507 = vmatpush1.msra.mxu0 0.0
        %5508 = vmatprep.subr.mxu0 0.0
        %5509 = vmatpush1.msra.mxu0 0.0
        %5510 = vmatprep.subr.mxu0 0.0
        %5511 = vmatpush1.msra.mxu0 0.0
        %5512 = vmatprep.subr.mxu0 0.0
        %5513 = vmatpush1.msra.mxu0 0.0
        %5514 = vmatprep.subr.mxu0 0.0
        %5515 = vmatpush1.msra.mxu0 0.0
        %5516 = vmatprep.subr.mxu0 0.0
        %5517 = vmatpush1.msra.mxu0 0.0
        %5518 = vmatprep.subr.mxu0 0.0
        %5519 = vmatpush1.msra.mxu0 0.0
        %5520 = vmatprep.subr.mxu0 0.0
        %5521 = vmatpush1.msra.mxu0 %v5471
        %5522 = vmatprep.subr.mxu0 0.0
        %5523 = vmatpush1.msra.mxu0 %v5469
        %5524 = vmatprep.subr.mxu0 0.0
        %5525 = vmatpush1.msra.mxu0 %v5467
        %5526 = vmatprep.subr.mxu0 0.0
        %5527 = vmatpush1.msra.mxu0 %v5465
        %5528 = vmatprep.subr.mxu0 0.0
        %5529 = vmatpush1.msra.mxu0 %v5463
        %5530 = vmatprep.subr.mxu0 0.0
        %5531 = vmatpush1.msra.mxu0 %v5461
        %5532 = vmatprep.subr.mxu0 0.0
        %5533 = vmatpush1.msra.mxu0 %v5459
        %5534 = vmatprep.subr.mxu0 0.0
        %5535 = vmatpush1.msra.mxu0 %v5457
        %5536 = vmatprep.subr.mxu0 0.0
        %5537 = vmatpush2.msra.mxu0 0.0
        %5538 = vmatprep.subr.mxu0 0.0
        %5539 = vmatpush2.msra.mxu0 0.0
        %5540 = vmatprep.subr.mxu0 0.0
        %5541 = vmatpush2.msra.mxu0 0.0
        %5542 = vmatprep.subr.mxu0 0.0
        %5543 = vmatpush2.msra.mxu0 0.0
        %5544 = vmatprep.subr.mxu0 0.0
        %5545 = vmatpush2.msra.mxu0 0.0
        %5546 = vmatprep.subr.mxu0 0.0
        %5547 = vmatpush2.msra.mxu0 0.0
        %5548 = vmatprep.subr.mxu0 0.0
        %5549 = vmatpush2.msra.mxu0 0.0
        %5550 = vmatprep.subr.mxu0 0.0
        %5551 = vmatpush2.msra.mxu0 0.0
        %5552 = vmatprep.subr.mxu0 0.0
        %5553 = vmatpush2.msra.mxu0 0.0
        %5554 = vmatprep.subr.mxu0 0.0
        %5555 = vmatpush2.msra.mxu0 0.0
        %5556 = vmatprep.subr.mxu0 0.0
        %5557 = vmatpush2.msra.mxu0 0.0
        %5558 = vmatprep.subr.mxu0 0.0
        %5559 = vmatpush2.msra.mxu0 0.0
        %5560 = vmatprep.subr.mxu0 0.0
        %5561 = vmatpush2.msra.mxu0 0.0
        %5562 = vmatprep.subr.mxu0 0.0
        %5563 = vmatpush2.msra.mxu0 0.0
        %5564 = vmatprep.subr.mxu0 0.0
        %5565 = vmatpush2.msra.mxu0 0.0
        %5566 = vmatprep.subr.mxu0 0.0
        %5567 = vmatpush2.msra.mxu0 0.0
        %5568 = vmatprep.mubr.f32.mxu0 0.0
        %5569 = vmatmul.mubr.f32.gmra.mxu0 %v5481
        %v5570 = vpop.f32.mrf.mxu0
        %v5571 = vadd.f32 0.0, %v5570
        %v5572 = vpop.f32.mrf.mxu0
        %5573 = vmatprep.mubr.f32.mxu0 0.0
        %5574 = vmatmul.mubr.f32.gmra.mxu0 %v5484
        %v5575 = vpop.f32.mrf.mxu0
        %v5576 = vadd.f32 0.0, %v5575
        %v5577 = vpop.f32.mrf.mxu0
        %5578 = vmatprep.mubr.f32.mxu0 0.0
        %5579 = vmatmul.mubr.f32.gmra.mxu0 %v5487
        %v5580 = vpop.f32.mrf.mxu0
        %v5581 = vadd.f32 0.0, %v5580
        %v5582 = vpop.f32.mrf.mxu0
        %5583 = vmatprep.mubr.f32.mxu0 0.0
        %5584 = vmatmul.mubr.f32.gmra.mxu0 %v5490
        %v5585 = vpop.f32.mrf.mxu0
        %v5586 = vadd.f32 0.0, %v5585
        %v5587 = vpop.f32.mrf.mxu0
        %5588 = vmatprep.mubr.f32.mxu0 0.0
        %5589 = vmatmul.mubr.f32.gmra.mxu0 %v5493
        %v5590 = vpop.f32.mrf.mxu0
        %v5591 = vadd.f32 0.0, %v5590
        %v5592 = vpop.f32.mrf.mxu0
        %5593 = vmatprep.mubr.f32.mxu0 0.0
        %5594 = vmatmul.mubr.f32.gmra.mxu0 %v5496
        %v5595 = vpop.f32.mrf.mxu0
        %v5596 = vadd.f32 0.0, %v5595
        %v5597 = vpop.f32.mrf.mxu0
        %5598 = vmatprep.mubr.f32.mxu0 0.0
        %5599 = vmatmul.mubr.f32.gmra.mxu0 %v5499
        %v5600 = vpop.f32.mrf.mxu0
        %v5601 = vadd.f32 0.0, %v5600
        %v5602 = vpop.f32.mrf.mxu0
        %5603 = vmatprep.mubr.f32.mxu0 0.0
        %5604 = vmatmul.mubr.f32.gmra.mxu0 %v5502
        %v5605 = vpop.f32.mrf.mxu0
        %v5606 = vadd.f32 0.0, %v5605
        %v5607 = vpop.f32.mrf.mxu0
        %5608 = vdwg.mxu0
        %5609 = vrot.lane.b32.xlu0 %v1126, 64
        %v5610 = vpop.permute.xlu0 %5609
        %5611 = vrot.lane.b32.xlu0 %v1131, 64
        %v5612 = vpop.permute.xlu0 %5611
        %5613 = vrot.lane.b32.xlu0 %v1136, 64
        %v5614 = vpop.permute.xlu0 %5613
        %5615 = vrot.lane.b32.xlu0 %v1141, 64
        %v5616 = vpop.permute.xlu0 %5615
        %5617 = vrot.lane.b32.xlu0 %v1146, 64
        %v5618 = vpop.permute.xlu0 %5617
        %5619 = vrot.lane.b32.xlu0 %v1151, 64
        %v5620 = vpop.permute.xlu0 %5619
        %5621 = vrot.lane.b32.xlu0 %v1156, 64
        %v5622 = vpop.permute.xlu0 %5621
        %5623 = vrot.lane.b32.xlu0 %v1161, 64
        %v5624 = vpop.permute.xlu0 %5623
        %v5634 = vsel %vm3997, %v4559, 0
        %v5637 = vsel %vm3997, %v4561, 0
        %v5640 = vsel %vm3997, %v4563, 0
        %v5643 = vsel %vm3997, %v4565, 0
        %v5646 = vsel %vm3997, %v4567, 0
        %v5649 = vsel %vm3997, %v4569, 0
        %v5652 = vsel %vm3997, %v4571, 0
        %v5655 = vsel %vm3997, %v4573, 0
        %5657 = vmatprep.subr.mxu0 0.0
        %5658 = vmatpush1.msra.mxu0 0.0
        %5659 = vmatprep.subr.mxu0 0.0
        %5660 = vmatpush1.msra.mxu0 0.0
        %5661 = vmatprep.subr.mxu0 0.0
        %5662 = vmatpush1.msra.mxu0 0.0
        %5663 = vmatprep.subr.mxu0 0.0
        %5664 = vmatpush1.msra.mxu0 0.0
        %5665 = vmatprep.subr.mxu0 0.0
        %5666 = vmatpush1.msra.mxu0 0.0
        %5667 = vmatprep.subr.mxu0 0.0
        %5668 = vmatpush1.msra.mxu0 0.0
        %5669 = vmatprep.subr.mxu0 0.0
        %5670 = vmatpush1.msra.mxu0 0.0
        %5671 = vmatprep.subr.mxu0 0.0
        %5672 = vmatpush1.msra.mxu0 0.0
        %5673 = vmatprep.subr.mxu0 0.0
        %5674 = vmatpush1.msra.mxu0 %v5624
        %5675 = vmatprep.subr.mxu0 0.0
        %5676 = vmatpush1.msra.mxu0 %v5622
        %5677 = vmatprep.subr.mxu0 0.0
        %5678 = vmatpush1.msra.mxu0 %v5620
        %5679 = vmatprep.subr.mxu0 0.0
        %5680 = vmatpush1.msra.mxu0 %v5618
        %5681 = vmatprep.subr.mxu0 0.0
        %5682 = vmatpush1.msra.mxu0 %v5616
        %5683 = vmatprep.subr.mxu0 0.0
        %5684 = vmatpush1.msra.mxu0 %v5614
        %5685 = vmatprep.subr.mxu0 0.0
        %5686 = vmatpush1.msra.mxu0 %v5612
        %5687 = vmatprep.subr.mxu0 0.0
        %5688 = vmatpush1.msra.mxu0 %v5610
        %5689 = vmatprep.subr.mxu0 0.0
        %5690 = vmatpush2.msra.mxu0 0.0
        %5691 = vmatprep.subr.mxu0 0.0
        %5692 = vmatpush2.msra.mxu0 0.0
        %5693 = vmatprep.subr.mxu0 0.0
        %5694 = vmatpush2.msra.mxu0 0.0
        %5695 = vmatprep.subr.mxu0 0.0
        %5696 = vmatpush2.msra.mxu0 0.0
        %5697 = vmatprep.subr.mxu0 0.0
        %5698 = vmatpush2.msra.mxu0 0.0
        %5699 = vmatprep.subr.mxu0 0.0
        %5700 = vmatpush2.msra.mxu0 0.0
        %5701 = vmatprep.subr.mxu0 0.0
        %5702 = vmatpush2.msra.mxu0 0.0
        %5703 = vmatprep.subr.mxu0 0.0
        %5704 = vmatpush2.msra.mxu0 0.0
        %5705 = vmatprep.subr.mxu0 0.0
        %5706 = vmatpush2.msra.mxu0 0.0
        %5707 = vmatprep.subr.mxu0 0.0
        %5708 = vmatpush2.msra.mxu0 0.0
        %5709 = vmatprep.subr.mxu0 0.0
        %5710 = vmatpush2.msra.mxu0 0.0
        %5711 = vmatprep.subr.mxu0 0.0
        %5712 = vmatpush2.msra.mxu0 0.0
        %5713 = vmatprep.subr.mxu0 0.0
        %5714 = vmatpush2.msra.mxu0 0.0
        %5715 = vmatprep.subr.mxu0 0.0
        %5716 = vmatpush2.msra.mxu0 0.0
        %5717 = vmatprep.subr.mxu0 0.0
        %5718 = vmatpush2.msra.mxu0 0.0
        %5719 = vmatprep.subr.mxu0 0.0
        %5720 = vmatpush2.msra.mxu0 0.0
        %5721 = vmatprep.mubr.f32.mxu0 0.0
        %5722 = vmatmul.mubr.f32.gmra.mxu0 %v5634
        %v5723 = vpop.f32.mrf.mxu0
        %v5724 = vadd.f32 0.0, %v5723
        %v5725 = vpop.f32.mrf.mxu0
        %5726 = vmatprep.mubr.f32.mxu0 0.0
        %5727 = vmatmul.mubr.f32.gmra.mxu0 %v5637
        %v5728 = vpop.f32.mrf.mxu0
        %v5729 = vadd.f32 0.0, %v5728
        %v5730 = vpop.f32.mrf.mxu0
        %5731 = vmatprep.mubr.f32.mxu0 0.0
        %5732 = vmatmul.mubr.f32.gmra.mxu0 %v5640
        %v5733 = vpop.f32.mrf.mxu0
        %v5734 = vadd.f32 0.0, %v5733
        %v5735 = vpop.f32.mrf.mxu0
        %5736 = vmatprep.mubr.f32.mxu0 0.0
        %5737 = vmatmul.mubr.f32.gmra.mxu0 %v5643
        %v5738 = vpop.f32.mrf.mxu0
        %v5739 = vadd.f32 0.0, %v5738
        %v5740 = vpop.f32.mrf.mxu0
        %5741 = vmatprep.mubr.f32.mxu0 0.0
        %5742 = vmatmul.mubr.f32.gmra.mxu0 %v5646
        %v5743 = vpop.f32.mrf.mxu0
        %v5744 = vadd.f32 0.0, %v5743
        %v5745 = vpop.f32.mrf.mxu0
        %5746 = vmatprep.mubr.f32.mxu0 0.0
        %5747 = vmatmul.mubr.f32.gmra.mxu0 %v5649
        %v5748 = vpop.f32.mrf.mxu0
        %v5749 = vadd.f32 0.0, %v5748
        %v5750 = vpop.f32.mrf.mxu0
        %5751 = vmatprep.mubr.f32.mxu0 0.0
        %5752 = vmatmul.mubr.f32.gmra.mxu0 %v5652
        %v5753 = vpop.f32.mrf.mxu0
        %v5754 = vadd.f32 0.0, %v5753
        %v5755 = vpop.f32.mrf.mxu0
        %5756 = vmatprep.mubr.f32.mxu0 0.0
        %5757 = vmatmul.mubr.f32.gmra.mxu0 %v5655
        %v5758 = vpop.f32.mrf.mxu0
        %v5759 = vadd.f32 0.0, %v5758
        %v5760 = vpop.f32.mrf.mxu0
        %5761 = vdwg.mxu0
        %5762 = vrot.lane.b32.xlu0 %v1197, 64
        %v5763 = vpop.permute.xlu0 %5762
        %5764 = vrot.lane.b32.xlu0 %v1199, 64
        %v5765 = vpop.permute.xlu0 %5764
        %5766 = vrot.lane.b32.xlu0 %v1201, 64
        %v5767 = vpop.permute.xlu0 %5766
        %5768 = vrot.lane.b32.xlu0 %v1203, 64
        %v5769 = vpop.permute.xlu0 %5768
        %5770 = vrot.lane.b32.xlu0 %v1205, 64
        %v5771 = vpop.permute.xlu0 %5770
        %5772 = vrot.lane.b32.xlu0 %v1207, 64
        %v5773 = vpop.permute.xlu0 %5772
        %5774 = vrot.lane.b32.xlu0 %v1209, 64
        %v5775 = vpop.permute.xlu0 %5774
        %5776 = vrot.lane.b32.xlu0 %v1211, 64
        %v5777 = vpop.permute.xlu0 %5776
        %v5787 = vsel %vm3997, %v4575, 0
        %v5790 = vsel %vm3997, %v4577, 0
        %v5793 = vsel %vm3997, %v4579, 0
        %v5796 = vsel %vm3997, %v4581, 0
        %v5799 = vsel %vm3997, %v4583, 0
        %v5802 = vsel %vm3997, %v4585, 0
        %v5805 = vsel %vm3997, %v4587, 0
        %v5808 = vsel %vm3997, %v4589, 0
        %5810 = vmatprep.subr.mxu0 0.0
        %5811 = vmatpush1.msra.mxu0 0.0
        %5812 = vmatprep.subr.mxu0 0.0
        %5813 = vmatpush1.msra.mxu0 0.0
        %5814 = vmatprep.subr.mxu0 0.0
        %5815 = vmatpush1.msra.mxu0 0.0
        %5816 = vmatprep.subr.mxu0 0.0
        %5817 = vmatpush1.msra.mxu0 0.0
        %5818 = vmatprep.subr.mxu0 0.0
        %5819 = vmatpush1.msra.mxu0 0.0
        %5820 = vmatprep.subr.mxu0 0.0
        %5821 = vmatpush1.msra.mxu0 0.0
        %5822 = vmatprep.subr.mxu0 0.0
        %5823 = vmatpush1.msra.mxu0 0.0
        %5824 = vmatprep.subr.mxu0 0.0
        %5825 = vmatpush1.msra.mxu0 0.0
        %5826 = vmatprep.subr.mxu0 0.0
        %5827 = vmatpush1.msra.mxu0 %v5777
        %5828 = vmatprep.subr.mxu0 0.0
        %5829 = vmatpush1.msra.mxu0 %v5775
        %5830 = vmatprep.subr.mxu0 0.0
        %5831 = vmatpush1.msra.mxu0 %v5773
        %5832 = vmatprep.subr.mxu0 0.0
        %5833 = vmatpush1.msra.mxu0 %v5771
        %5834 = vmatprep.subr.mxu0 0.0
        %5835 = vmatpush1.msra.mxu0 %v5769
        %5836 = vmatprep.subr.mxu0 0.0
        %5837 = vmatpush1.msra.mxu0 %v5767
        %5838 = vmatprep.subr.mxu0 0.0
        %5839 = vmatpush1.msra.mxu0 %v5765
        %5840 = vmatprep.subr.mxu0 0.0
        %5841 = vmatpush1.msra.mxu0 %v5763
        %5842 = vmatprep.subr.mxu0 0.0
        %5843 = vmatpush2.msra.mxu0 0.0
        %5844 = vmatprep.subr.mxu0 0.0
        %5845 = vmatpush2.msra.mxu0 0.0
        %5846 = vmatprep.subr.mxu0 0.0
        %5847 = vmatpush2.msra.mxu0 0.0
        %5848 = vmatprep.subr.mxu0 0.0
        %5849 = vmatpush2.msra.mxu0 0.0
        %5850 = vmatprep.subr.mxu0 0.0
        %5851 = vmatpush2.msra.mxu0 0.0
        %5852 = vmatprep.subr.mxu0 0.0
        %5853 = vmatpush2.msra.mxu0 0.0
        %5854 = vmatprep.subr.mxu0 0.0
        %5855 = vmatpush2.msra.mxu0 0.0
        %5856 = vmatprep.subr.mxu0 0.0
        %5857 = vmatpush2.msra.mxu0 0.0
        %5858 = vmatprep.subr.mxu0 0.0
        %5859 = vmatpush2.msra.mxu0 0.0
        %5860 = vmatprep.subr.mxu0 0.0
        %5861 = vmatpush2.msra.mxu0 0.0
        %5862 = vmatprep.subr.mxu0 0.0
        %5863 = vmatpush2.msra.mxu0 0.0
        %5864 = vmatprep.subr.mxu0 0.0
        %5865 = vmatpush2.msra.mxu0 0.0
        %5866 = vmatprep.subr.mxu0 0.0
        %5867 = vmatpush2.msra.mxu0 0.0
        %5868 = vmatprep.subr.mxu0 0.0
        %5869 = vmatpush2.msra.mxu0 0.0
        %5870 = vmatprep.subr.mxu0 0.0
        %5871 = vmatpush2.msra.mxu0 0.0
        %5872 = vmatprep.subr.mxu0 0.0
        %5873 = vmatpush2.msra.mxu0 0.0
        %5874 = vmatprep.mubr.f32.mxu0 0.0
        %5875 = vmatmul.mubr.f32.gmra.mxu0 %v5787
        %v5876 = vpop.f32.mrf.mxu0
        %v5877 = vadd.f32 0.0, %v5876
        %v5878 = vpop.f32.mrf.mxu0
        %5879 = vmatprep.mubr.f32.mxu0 0.0
        %5880 = vmatmul.mubr.f32.gmra.mxu0 %v5790
        %v5881 = vpop.f32.mrf.mxu0
        %v5882 = vadd.f32 0.0, %v5881
        %v5883 = vpop.f32.mrf.mxu0
        %5884 = vmatprep.mubr.f32.mxu0 0.0
        %5885 = vmatmul.mubr.f32.gmra.mxu0 %v5793
        %v5886 = vpop.f32.mrf.mxu0
        %v5887 = vadd.f32 0.0, %v5886
        %v5888 = vpop.f32.mrf.mxu0
        %5889 = vmatprep.mubr.f32.mxu0 0.0
        %5890 = vmatmul.mubr.f32.gmra.mxu0 %v5796
        %v5891 = vpop.f32.mrf.mxu0
        %v5892 = vadd.f32 0.0, %v5891
        %v5893 = vpop.f32.mrf.mxu0
        %5894 = vmatprep.mubr.f32.mxu0 0.0
        %5895 = vmatmul.mubr.f32.gmra.mxu0 %v5799
        %v5896 = vpop.f32.mrf.mxu0
        %v5897 = vadd.f32 0.0, %v5896
        %v5898 = vpop.f32.mrf.mxu0
        %5899 = vmatprep.mubr.f32.mxu0 0.0
        %5900 = vmatmul.mubr.f32.gmra.mxu0 %v5802
        %v5901 = vpop.f32.mrf.mxu0
        %v5902 = vadd.f32 0.0, %v5901
        %v5903 = vpop.f32.mrf.mxu0
        %5904 = vmatprep.mubr.f32.mxu0 0.0
        %5905 = vmatmul.mubr.f32.gmra.mxu0 %v5805
        %v5906 = vpop.f32.mrf.mxu0
        %v5907 = vadd.f32 0.0, %v5906
        %v5908 = vpop.f32.mrf.mxu0
        %5909 = vmatprep.mubr.f32.mxu0 0.0
        %5910 = vmatmul.mubr.f32.gmra.mxu0 %v5808
        %v5911 = vpop.f32.mrf.mxu0
        %v5912 = vadd.f32 0.0, %v5911
        %v5913 = vpop.f32.mrf.mxu0
        %5914 = vdwg.mxu0
        %5915 = vrot.lane.b32.xlu0 %v1213, 64
        %v5916 = vpop.permute.xlu0 %5915
        %5917 = vrot.lane.b32.xlu0 %v1215, 64
        %v5918 = vpop.permute.xlu0 %5917
        %5919 = vrot.lane.b32.xlu0 %v1217, 64
        %v5920 = vpop.permute.xlu0 %5919
        %5921 = vrot.lane.b32.xlu0 %v1219, 64
        %v5922 = vpop.permute.xlu0 %5921
        %5923 = vrot.lane.b32.xlu0 %v1221, 64
        %v5924 = vpop.permute.xlu0 %5923
        %5925 = vrot.lane.b32.xlu0 %v1223, 64
        %v5926 = vpop.permute.xlu0 %5925
        %5927 = vrot.lane.b32.xlu0 %v1225, 64
        %v5928 = vpop.permute.xlu0 %5927
        %5929 = vrot.lane.b32.xlu0 %v1227, 64
        %v5930 = vpop.permute.xlu0 %5929
        %v5940 = vsel %vm3997, %v4591, 0
        %v5943 = vsel %vm3997, %v4593, 0
        %v5946 = vsel %vm3997, %v4595, 0
        %v5949 = vsel %vm3997, %v4597, 0
        %v5952 = vsel %vm3997, %v4599, 0
        %v5955 = vsel %vm3997, %v4601, 0
        %v5958 = vsel %vm3997, %v4603, 0
        %v5961 = vsel %vm3997, %v4605, 0
        %5963 = vmatprep.subr.mxu0 0.0
        %5964 = vmatpush1.msra.mxu0 0.0
        %5965 = vmatprep.subr.mxu0 0.0
        %5966 = vmatpush1.msra.mxu0 0.0
        %5967 = vmatprep.subr.mxu0 0.0
        %5968 = vmatpush1.msra.mxu0 0.0
        %5969 = vmatprep.subr.mxu0 0.0
        %5970 = vmatpush1.msra.mxu0 0.0
        %5971 = vmatprep.subr.mxu0 0.0
        %5972 = vmatpush1.msra.mxu0 0.0
        %5973 = vmatprep.subr.mxu0 0.0
        %5974 = vmatpush1.msra.mxu0 0.0
        %5975 = vmatprep.subr.mxu0 0.0
        %5976 = vmatpush1.msra.mxu0 0.0
        %5977 = vmatprep.subr.mxu0 0.0
        %5978 = vmatpush1.msra.mxu0 0.0
        %5979 = vmatprep.subr.mxu0 0.0
        %5980 = vmatpush1.msra.mxu0 %v5930
        %5981 = vmatprep.subr.mxu0 0.0
        %5982 = vmatpush1.msra.mxu0 %v5928
        %5983 = vmatprep.subr.mxu0 0.0
        %5984 = vmatpush1.msra.mxu0 %v5926
        %5985 = vmatprep.subr.mxu0 0.0
        %5986 = vmatpush1.msra.mxu0 %v5924
        %5987 = vmatprep.subr.mxu0 0.0
        %5988 = vmatpush1.msra.mxu0 %v5922
        %5989 = vmatprep.subr.mxu0 0.0
        %5990 = vmatpush1.msra.mxu0 %v5920
        %5991 = vmatprep.subr.mxu0 0.0
        %5992 = vmatpush1.msra.mxu0 %v5918
        %5993 = vmatprep.subr.mxu0 0.0
        %5994 = vmatpush1.msra.mxu0 %v5916
        %5995 = vmatprep.subr.mxu0 0.0
        %5996 = vmatpush2.msra.mxu0 0.0
        %5997 = vmatprep.subr.mxu0 0.0
        %5998 = vmatpush2.msra.mxu0 0.0
        %5999 = vmatprep.subr.mxu0 0.0
        %6000 = vmatpush2.msra.mxu0 0.0
        %6001 = vmatprep.subr.mxu0 0.0
        %6002 = vmatpush2.msra.mxu0 0.0
        %6003 = vmatprep.subr.mxu0 0.0
        %6004 = vmatpush2.msra.mxu0 0.0
        %6005 = vmatprep.subr.mxu0 0.0
        %6006 = vmatpush2.msra.mxu0 0.0
        %6007 = vmatprep.subr.mxu0 0.0
        %6008 = vmatpush2.msra.mxu0 0.0
        %6009 = vmatprep.subr.mxu0 0.0
        %6010 = vmatpush2.msra.mxu0 0.0
        %6011 = vmatprep.subr.mxu0 0.0
        %6012 = vmatpush2.msra.mxu0 0.0
        %6013 = vmatprep.subr.mxu0 0.0
        %6014 = vmatpush2.msra.mxu0 0.0
        %6015 = vmatprep.subr.mxu0 0.0
        %6016 = vmatpush2.msra.mxu0 0.0
        %6017 = vmatprep.subr.mxu0 0.0
        %6018 = vmatpush2.msra.mxu0 0.0
        %6019 = vmatprep.subr.mxu0 0.0
        %6020 = vmatpush2.msra.mxu0 0.0
        %6021 = vmatprep.subr.mxu0 0.0
        %6022 = vmatpush2.msra.mxu0 0.0
        %6023 = vmatprep.subr.mxu0 0.0
        %6024 = vmatpush2.msra.mxu0 0.0
        %6025 = vmatprep.subr.mxu0 0.0
        %6026 = vmatpush2.msra.mxu0 0.0
        %6027 = vmatprep.mubr.f32.mxu0 0.0
        %6028 = vmatmul.mubr.f32.gmra.mxu0 %v5940
        %v6029 = vpop.f32.mrf.mxu0
        %v6030 = vadd.f32 0.0, %v6029
        %v6031 = vpop.f32.mrf.mxu0
        %6032 = vmatprep.mubr.f32.mxu0 0.0
        %6033 = vmatmul.mubr.f32.gmra.mxu0 %v5943
        %v6034 = vpop.f32.mrf.mxu0
        %v6035 = vadd.f32 0.0, %v6034
        %v6036 = vpop.f32.mrf.mxu0
        %6037 = vmatprep.mubr.f32.mxu0 0.0
        %6038 = vmatmul.mubr.f32.gmra.mxu0 %v5946
        %v6039 = vpop.f32.mrf.mxu0
        %v6040 = vadd.f32 0.0, %v6039
        %v6041 = vpop.f32.mrf.mxu0
        %6042 = vmatprep.mubr.f32.mxu0 0.0
        %6043 = vmatmul.mubr.f32.gmra.mxu0 %v5949
        %v6044 = vpop.f32.mrf.mxu0
        %v6045 = vadd.f32 0.0, %v6044
        %v6046 = vpop.f32.mrf.mxu0
        %6047 = vmatprep.mubr.f32.mxu0 0.0
        %6048 = vmatmul.mubr.f32.gmra.mxu0 %v5952
        %v6049 = vpop.f32.mrf.mxu0
        %v6050 = vadd.f32 0.0, %v6049
        %v6051 = vpop.f32.mrf.mxu0
        %6052 = vmatprep.mubr.f32.mxu0 0.0
        %6053 = vmatmul.mubr.f32.gmra.mxu0 %v5955
        %v6054 = vpop.f32.mrf.mxu0
        %v6055 = vadd.f32 0.0, %v6054
        %v6056 = vpop.f32.mrf.mxu0
        %6057 = vmatprep.mubr.f32.mxu0 0.0
        %6058 = vmatmul.mubr.f32.gmra.mxu0 %v5958
        %v6059 = vpop.f32.mrf.mxu0
        %v6060 = vadd.f32 0.0, %v6059
        %v6061 = vpop.f32.mrf.mxu0
        %6062 = vmatprep.mubr.f32.mxu0 0.0
        %6063 = vmatmul.mubr.f32.gmra.mxu0 %v5961
        %v6064 = vpop.f32.mrf.mxu0
        %v6065 = vadd.f32 0.0, %v6064
        %v6066 = vpop.f32.mrf.mxu0
        %6067 = vdwg.mxu0
        %6068 = vrot.lane.b32.xlu0 %v1229, 64
        %v6069 = vpop.permute.xlu0 %6068
        %6070 = vrot.lane.b32.xlu0 %v1231, 64
        %v6071 = vpop.permute.xlu0 %6070
        %6072 = vrot.lane.b32.xlu0 %v1233, 64
        %v6073 = vpop.permute.xlu0 %6072
        %6074 = vrot.lane.b32.xlu0 %v1235, 64
        %v6075 = vpop.permute.xlu0 %6074
        %6076 = vrot.lane.b32.xlu0 %v1237, 64
        %v6077 = vpop.permute.xlu0 %6076
        %6078 = vrot.lane.b32.xlu0 %v1239, 64
        %v6079 = vpop.permute.xlu0 %6078
        %6080 = vrot.lane.b32.xlu0 %v1241, 64
        %v6081 = vpop.permute.xlu0 %6080
        %6082 = vrot.lane.b32.xlu0 %v1243, 64
        %v6083 = vpop.permute.xlu0 %6082
        %v6093 = vsel %vm3997, %v4607, 0
        %v6096 = vsel %vm3997, %v4609, 0
        %v6099 = vsel %vm3997, %v4611, 0
        %v6102 = vsel %vm3997, %v4613, 0
        %v6105 = vsel %vm3997, %v4615, 0
        %v6108 = vsel %vm3997, %v4617, 0
        %v6111 = vsel %vm3997, %v4619, 0
        %v6114 = vsel %vm3997, %v4621, 0
        %6116 = vmatprep.subr.mxu0 0.0
        %6117 = vmatpush1.msra.mxu0 0.0
        %6118 = vmatprep.subr.mxu0 0.0
        %6119 = vmatpush1.msra.mxu0 0.0
        %6120 = vmatprep.subr.mxu0 0.0
        %6121 = vmatpush1.msra.mxu0 0.0
        %6122 = vmatprep.subr.mxu0 0.0
        %6123 = vmatpush1.msra.mxu0 0.0
        %6124 = vmatprep.subr.mxu0 0.0
        %6125 = vmatpush1.msra.mxu0 0.0
        %6126 = vmatprep.subr.mxu0 0.0
        %6127 = vmatpush1.msra.mxu0 0.0
        %6128 = vmatprep.subr.mxu0 0.0
        %6129 = vmatpush1.msra.mxu0 0.0
        %6130 = vmatprep.subr.mxu0 0.0
        %6131 = vmatpush1.msra.mxu0 0.0
        %6132 = vmatprep.subr.mxu0 0.0
        %6133 = vmatpush1.msra.mxu0 %v6083
        %6134 = vmatprep.subr.mxu0 0.0
        %6135 = vmatpush1.msra.mxu0 %v6081
        %6136 = vmatprep.subr.mxu0 0.0
        %6137 = vmatpush1.msra.mxu0 %v6079
        %6138 = vmatprep.subr.mxu0 0.0
        %6139 = vmatpush1.msra.mxu0 %v6077
        %6140 = vmatprep.subr.mxu0 0.0
        %6141 = vmatpush1.msra.mxu0 %v6075
        %6142 = vmatprep.subr.mxu0 0.0
        %6143 = vmatpush1.msra.mxu0 %v6073
        %6144 = vmatprep.subr.mxu0 0.0
        %6145 = vmatpush1.msra.mxu0 %v6071
        %6146 = vmatprep.subr.mxu0 0.0
        %6147 = vmatpush1.msra.mxu0 %v6069
        %6148 = vmatprep.subr.mxu0 0.0
        %6149 = vmatpush2.msra.mxu0 0.0
        %6150 = vmatprep.subr.mxu0 0.0
        %6151 = vmatpush2.msra.mxu0 0.0
        %6152 = vmatprep.subr.mxu0 0.0
        %6153 = vmatpush2.msra.mxu0 0.0
        %6154 = vmatprep.subr.mxu0 0.0
        %6155 = vmatpush2.msra.mxu0 0.0
        %6156 = vmatprep.subr.mxu0 0.0
        %6157 = vmatpush2.msra.mxu0 0.0
        %6158 = vmatprep.subr.mxu0 0.0
        %6159 = vmatpush2.msra.mxu0 0.0
        %6160 = vmatprep.subr.mxu0 0.0
        %6161 = vmatpush2.msra.mxu0 0.0
        %6162 = vmatprep.subr.mxu0 0.0
        %6163 = vmatpush2.msra.mxu0 0.0
        %6164 = vmatprep.subr.mxu0 0.0
        %6165 = vmatpush2.msra.mxu0 0.0
        %6166 = vmatprep.subr.mxu0 0.0
        %6167 = vmatpush2.msra.mxu0 0.0
        %6168 = vmatprep.subr.mxu0 0.0
        %6169 = vmatpush2.msra.mxu0 0.0
        %6170 = vmatprep.subr.mxu0 0.0
        %6171 = vmatpush2.msra.mxu0 0.0
        %6172 = vmatprep.subr.mxu0 0.0
        %6173 = vmatpush2.msra.mxu0 0.0
        %6174 = vmatprep.subr.mxu0 0.0
        %6175 = vmatpush2.msra.mxu0 0.0
        %6176 = vmatprep.subr.mxu0 0.0
        %6177 = vmatpush2.msra.mxu0 0.0
        %6178 = vmatprep.subr.mxu0 0.0
        %6179 = vmatpush2.msra.mxu0 0.0
        %6180 = vmatprep.mubr.f32.mxu0 0.0
        %6181 = vmatmul.mubr.f32.gmra.mxu0 %v6093
        %v6182 = vpop.f32.mrf.mxu0
        %v6183 = vadd.f32 0.0, %v6182
        %v6184 = vpop.f32.mrf.mxu0
        %6185 = vmatprep.mubr.f32.mxu0 0.0
        %6186 = vmatmul.mubr.f32.gmra.mxu0 %v6096
        %v6187 = vpop.f32.mrf.mxu0
        %v6188 = vadd.f32 0.0, %v6187
        %v6189 = vpop.f32.mrf.mxu0
        %6190 = vmatprep.mubr.f32.mxu0 0.0
        %6191 = vmatmul.mubr.f32.gmra.mxu0 %v6099
        %v6192 = vpop.f32.mrf.mxu0
        %v6193 = vadd.f32 0.0, %v6192
        %v6194 = vpop.f32.mrf.mxu0
        %6195 = vmatprep.mubr.f32.mxu0 0.0
        %6196 = vmatmul.mubr.f32.gmra.mxu0 %v6102
        %v6197 = vpop.f32.mrf.mxu0
        %v6198 = vadd.f32 0.0, %v6197
        %v6199 = vpop.f32.mrf.mxu0
        %6200 = vmatprep.mubr.f32.mxu0 0.0
        %6201 = vmatmul.mubr.f32.gmra.mxu0 %v6105
        %v6202 = vpop.f32.mrf.mxu0
        %v6203 = vadd.f32 0.0, %v6202
        %v6204 = vpop.f32.mrf.mxu0
        %6205 = vmatprep.mubr.f32.mxu0 0.0
        %6206 = vmatmul.mubr.f32.gmra.mxu0 %v6108
        %v6207 = vpop.f32.mrf.mxu0
        %v6208 = vadd.f32 0.0, %v6207
        %v6209 = vpop.f32.mrf.mxu0
        %6210 = vmatprep.mubr.f32.mxu0 0.0
        %6211 = vmatmul.mubr.f32.gmra.mxu0 %v6111
        %v6212 = vpop.f32.mrf.mxu0
        %v6213 = vadd.f32 0.0, %v6212
        %v6214 = vpop.f32.mrf.mxu0
        %6215 = vmatprep.mubr.f32.mxu0 0.0
        %6216 = vmatmul.mubr.f32.gmra.mxu0 %v6114
        %v6217 = vpop.f32.mrf.mxu0
        %v6218 = vadd.f32 0.0, %v6217
        %v6219 = vpop.f32.mrf.mxu0
        %6220 = vdwg.mxu0
        %6221 = vrot.lane.b32.xlu0 %v1245, 64
        %v6222 = vpop.permute.xlu0 %6221
        %6223 = vrot.lane.b32.xlu0 %v1247, 64
        %v6224 = vpop.permute.xlu0 %6223
        %6225 = vrot.lane.b32.xlu0 %v1249, 64
        %v6226 = vpop.permute.xlu0 %6225
        %6227 = vrot.lane.b32.xlu0 %v1251, 64
        %v6228 = vpop.permute.xlu0 %6227
        %6229 = vrot.lane.b32.xlu0 %v1253, 64
        %v6230 = vpop.permute.xlu0 %6229
        %6231 = vrot.lane.b32.xlu0 %v1255, 64
        %v6232 = vpop.permute.xlu0 %6231
        %6233 = vrot.lane.b32.xlu0 %v1257, 64
        %v6234 = vpop.permute.xlu0 %6233
        %6235 = vrot.lane.b32.xlu0 %v1259, 64
        %v6236 = vpop.permute.xlu0 %6235
        %v6246 = vsel %vm3997, %v4623, 0
        %v6249 = vsel %vm3997, %v4625, 0
        %v6252 = vsel %vm3997, %v4627, 0
        %v6255 = vsel %vm3997, %v4629, 0
        %v6258 = vsel %vm3997, %v4631, 0
        %v6261 = vsel %vm3997, %v4633, 0
        %v6264 = vsel %vm3997, %v4635, 0
        %v6267 = vsel %vm3997, %v4637, 0
        %6269 = vmatprep.subr.mxu0 0.0
        %6270 = vmatpush1.msra.mxu0 0.0
        %6271 = vmatprep.subr.mxu0 0.0
        %6272 = vmatpush1.msra.mxu0 0.0
        %6273 = vmatprep.subr.mxu0 0.0
        %6274 = vmatpush1.msra.mxu0 0.0
        %6275 = vmatprep.subr.mxu0 0.0
        %6276 = vmatpush1.msra.mxu0 0.0
        %6277 = vmatprep.subr.mxu0 0.0
        %6278 = vmatpush1.msra.mxu0 0.0
        %6279 = vmatprep.subr.mxu0 0.0
        %6280 = vmatpush1.msra.mxu0 0.0
        %6281 = vmatprep.subr.mxu0 0.0
        %6282 = vmatpush1.msra.mxu0 0.0
        %6283 = vmatprep.subr.mxu0 0.0
        %6284 = vmatpush1.msra.mxu0 0.0
        %6285 = vmatprep.subr.mxu0 0.0
        %6286 = vmatpush1.msra.mxu0 %v6236
        %6287 = vmatprep.subr.mxu0 0.0
        %6288 = vmatpush1.msra.mxu0 %v6234
        %6289 = vmatprep.subr.mxu0 0.0
        %6290 = vmatpush1.msra.mxu0 %v6232
        %6291 = vmatprep.subr.mxu0 0.0
        %6292 = vmatpush1.msra.mxu0 %v6230
        %6293 = vmatprep.subr.mxu0 0.0
        %6294 = vmatpush1.msra.mxu0 %v6228
        %6295 = vmatprep.subr.mxu0 0.0
        %6296 = vmatpush1.msra.mxu0 %v6226
        %6297 = vmatprep.subr.mxu0 0.0
        %6298 = vmatpush1.msra.mxu0 %v6224
        %6299 = vmatprep.subr.mxu0 0.0
        %6300 = vmatpush1.msra.mxu0 %v6222
        %6301 = vmatprep.subr.mxu0 0.0
        %6302 = vmatpush2.msra.mxu0 0.0
        %6303 = vmatprep.subr.mxu0 0.0
        %6304 = vmatpush2.msra.mxu0 0.0
        %6305 = vmatprep.subr.mxu0 0.0
        %6306 = vmatpush2.msra.mxu0 0.0
        %6307 = vmatprep.subr.mxu0 0.0
        %6308 = vmatpush2.msra.mxu0 0.0
        %6309 = vmatprep.subr.mxu0 0.0
        %6310 = vmatpush2.msra.mxu0 0.0
        %6311 = vmatprep.subr.mxu0 0.0
        %6312 = vmatpush2.msra.mxu0 0.0
        %6313 = vmatprep.subr.mxu0 0.0
        %6314 = vmatpush2.msra.mxu0 0.0
        %6315 = vmatprep.subr.mxu0 0.0
        %6316 = vmatpush2.msra.mxu0 0.0
        %6317 = vmatprep.subr.mxu0 0.0
        %6318 = vmatpush2.msra.mxu0 0.0
        %6319 = vmatprep.subr.mxu0 0.0
        %6320 = vmatpush2.msra.mxu0 0.0
        %6321 = vmatprep.subr.mxu0 0.0
        %6322 = vmatpush2.msra.mxu0 0.0
        %6323 = vmatprep.subr.mxu0 0.0
        %6324 = vmatpush2.msra.mxu0 0.0
        %6325 = vmatprep.subr.mxu0 0.0
        %6326 = vmatpush2.msra.mxu0 0.0
        %6327 = vmatprep.subr.mxu0 0.0
        %6328 = vmatpush2.msra.mxu0 0.0
        %6329 = vmatprep.subr.mxu0 0.0
        %6330 = vmatpush2.msra.mxu0 0.0
        %6331 = vmatprep.subr.mxu0 0.0
        %6332 = vmatpush2.msra.mxu0 0.0
        %6333 = vmatprep.mubr.f32.mxu0 0.0
        %6334 = vmatmul.mubr.f32.gmra.mxu0 %v6246
        %v6335 = vpop.f32.mrf.mxu0
        %v6336 = vadd.f32 0.0, %v6335
        %v6337 = vpop.f32.mrf.mxu0
        %6338 = vmatprep.mubr.f32.mxu0 0.0
        %6339 = vmatmul.mubr.f32.gmra.mxu0 %v6249
        %v6340 = vpop.f32.mrf.mxu0
        %v6341 = vadd.f32 0.0, %v6340
        %v6342 = vpop.f32.mrf.mxu0
        %6343 = vmatprep.mubr.f32.mxu0 0.0
        %6344 = vmatmul.mubr.f32.gmra.mxu0 %v6252
        %v6345 = vpop.f32.mrf.mxu0
        %v6346 = vadd.f32 0.0, %v6345
        %v6347 = vpop.f32.mrf.mxu0
        %6348 = vmatprep.mubr.f32.mxu0 0.0
        %6349 = vmatmul.mubr.f32.gmra.mxu0 %v6255
        %v6350 = vpop.f32.mrf.mxu0
        %v6351 = vadd.f32 0.0, %v6350
        %v6352 = vpop.f32.mrf.mxu0
        %6353 = vmatprep.mubr.f32.mxu0 0.0
        %6354 = vmatmul.mubr.f32.gmra.mxu0 %v6258
        %v6355 = vpop.f32.mrf.mxu0
        %v6356 = vadd.f32 0.0, %v6355
        %v6357 = vpop.f32.mrf.mxu0
        %6358 = vmatprep.mubr.f32.mxu0 0.0
        %6359 = vmatmul.mubr.f32.gmra.mxu0 %v6261
        %v6360 = vpop.f32.mrf.mxu0
        %v6361 = vadd.f32 0.0, %v6360
        %v6362 = vpop.f32.mrf.mxu0
        %6363 = vmatprep.mubr.f32.mxu0 0.0
        %6364 = vmatmul.mubr.f32.gmra.mxu0 %v6264
        %v6365 = vpop.f32.mrf.mxu0
        %v6366 = vadd.f32 0.0, %v6365
        %v6367 = vpop.f32.mrf.mxu0
        %6368 = vmatprep.mubr.f32.mxu0 0.0
        %6369 = vmatmul.mubr.f32.gmra.mxu0 %v6267
        %v6370 = vpop.f32.mrf.mxu0
        %v6371 = vadd.f32 0.0, %v6370
        %v6372 = vpop.f32.mrf.mxu0
        %6373 = vdwg.mxu0
        %6374 = vrot.lane.b32.xlu0 %v1261, 64
        %v6375 = vpop.permute.xlu0 %6374
        %6376 = vrot.lane.b32.xlu0 %v1263, 64
        %v6377 = vpop.permute.xlu0 %6376
        %6378 = vrot.lane.b32.xlu0 %v1265, 64
        %v6379 = vpop.permute.xlu0 %6378
        %6380 = vrot.lane.b32.xlu0 %v1267, 64
        %v6381 = vpop.permute.xlu0 %6380
        %6382 = vrot.lane.b32.xlu0 %v1269, 64
        %v6383 = vpop.permute.xlu0 %6382
        %6384 = vrot.lane.b32.xlu0 %v1271, 64
        %v6385 = vpop.permute.xlu0 %6384
        %6386 = vrot.lane.b32.xlu0 %v1273, 64
        %v6387 = vpop.permute.xlu0 %6386
        %6388 = vrot.lane.b32.xlu0 %v1275, 64
        %v6389 = vpop.permute.xlu0 %6388
        %v6399 = vsel %vm3997, %v4639, 0
        %v6402 = vsel %vm3997, %v4641, 0
        %v6405 = vsel %vm3997, %v4643, 0
        %v6408 = vsel %vm3997, %v4645, 0
        %v6411 = vsel %vm3997, %v4647, 0
        %v6414 = vsel %vm3997, %v4649, 0
        %v6417 = vsel %vm3997, %v4651, 0
        %v6420 = vsel %vm3997, %v4653, 0
        %6422 = vmatprep.subr.mxu0 0.0
        %6423 = vmatpush1.msra.mxu0 0.0
        %6424 = vmatprep.subr.mxu0 0.0
        %6425 = vmatpush1.msra.mxu0 0.0
        %6426 = vmatprep.subr.mxu0 0.0
        %6427 = vmatpush1.msra.mxu0 0.0
        %6428 = vmatprep.subr.mxu0 0.0
        %6429 = vmatpush1.msra.mxu0 0.0
        %6430 = vmatprep.subr.mxu0 0.0
        %6431 = vmatpush1.msra.mxu0 0.0
        %6432 = vmatprep.subr.mxu0 0.0
        %6433 = vmatpush1.msra.mxu0 0.0
        %6434 = vmatprep.subr.mxu0 0.0
        %6435 = vmatpush1.msra.mxu0 0.0
        %6436 = vmatprep.subr.mxu0 0.0
        %6437 = vmatpush1.msra.mxu0 0.0
        %6438 = vmatprep.subr.mxu0 0.0
        %6439 = vmatpush1.msra.mxu0 %v6389
        %6440 = vmatprep.subr.mxu0 0.0
        %6441 = vmatpush1.msra.mxu0 %v6387
        %6442 = vmatprep.subr.mxu0 0.0
        %6443 = vmatpush1.msra.mxu0 %v6385
        %6444 = vmatprep.subr.mxu0 0.0
        %6445 = vmatpush1.msra.mxu0 %v6383
        %6446 = vmatprep.subr.mxu0 0.0
        %6447 = vmatpush1.msra.mxu0 %v6381
        %6448 = vmatprep.subr.mxu0 0.0
        %6449 = vmatpush1.msra.mxu0 %v6379
        %6450 = vmatprep.subr.mxu0 0.0
        %6451 = vmatpush1.msra.mxu0 %v6377
        %6452 = vmatprep.subr.mxu0 0.0
        %6453 = vmatpush1.msra.mxu0 %v6375
        %6454 = vmatprep.subr.mxu0 0.0
        %6455 = vmatpush2.msra.mxu0 0.0
        %6456 = vmatprep.subr.mxu0 0.0
        %6457 = vmatpush2.msra.mxu0 0.0
        %6458 = vmatprep.subr.mxu0 0.0
        %6459 = vmatpush2.msra.mxu0 0.0
        %6460 = vmatprep.subr.mxu0 0.0
        %6461 = vmatpush2.msra.mxu0 0.0
        %6462 = vmatprep.subr.mxu0 0.0
        %6463 = vmatpush2.msra.mxu0 0.0
        %6464 = vmatprep.subr.mxu0 0.0
        %6465 = vmatpush2.msra.mxu0 0.0
        %6466 = vmatprep.subr.mxu0 0.0
        %6467 = vmatpush2.msra.mxu0 0.0
        %6468 = vmatprep.subr.mxu0 0.0
        %6469 = vmatpush2.msra.mxu0 0.0
        %6470 = vmatprep.subr.mxu0 0.0
        %6471 = vmatpush2.msra.mxu0 0.0
        %6472 = vmatprep.subr.mxu0 0.0
        %6473 = vmatpush2.msra.mxu0 0.0
        %6474 = vmatprep.subr.mxu0 0.0
        %6475 = vmatpush2.msra.mxu0 0.0
        %6476 = vmatprep.subr.mxu0 0.0
        %6477 = vmatpush2.msra.mxu0 0.0
        %6478 = vmatprep.subr.mxu0 0.0
        %6479 = vmatpush2.msra.mxu0 0.0
        %6480 = vmatprep.subr.mxu0 0.0
        %6481 = vmatpush2.msra.mxu0 0.0
        %6482 = vmatprep.subr.mxu0 0.0
        %6483 = vmatpush2.msra.mxu0 0.0
        %6484 = vmatprep.subr.mxu0 0.0
        %6485 = vmatpush2.msra.mxu0 0.0
        %6486 = vmatprep.mubr.f32.mxu0 0.0
        %6487 = vmatmul.mubr.f32.gmra.mxu0 %v6399
        %v6488 = vpop.f32.mrf.mxu0
        %v6489 = vadd.f32 0.0, %v6488
        %v6490 = vpop.f32.mrf.mxu0
        %6491 = vmatprep.mubr.f32.mxu0 0.0
        %6492 = vmatmul.mubr.f32.gmra.mxu0 %v6402
        %v6493 = vpop.f32.mrf.mxu0
        %v6494 = vadd.f32 0.0, %v6493
        %v6495 = vpop.f32.mrf.mxu0
        %6496 = vmatprep.mubr.f32.mxu0 0.0
        %6497 = vmatmul.mubr.f32.gmra.mxu0 %v6405
        %v6498 = vpop.f32.mrf.mxu0
        %v6499 = vadd.f32 0.0, %v6498
        %v6500 = vpop.f32.mrf.mxu0
        %6501 = vmatprep.mubr.f32.mxu0 0.0
        %6502 = vmatmul.mubr.f32.gmra.mxu0 %v6408
        %v6503 = vpop.f32.mrf.mxu0
        %v6504 = vadd.f32 0.0, %v6503
        %v6505 = vpop.f32.mrf.mxu0
        %6506 = vmatprep.mubr.f32.mxu0 0.0
        %6507 = vmatmul.mubr.f32.gmra.mxu0 %v6411
        %v6508 = vpop.f32.mrf.mxu0
        %v6509 = vadd.f32 0.0, %v6508
        %v6510 = vpop.f32.mrf.mxu0
        %6511 = vmatprep.mubr.f32.mxu0 0.0
        %6512 = vmatmul.mubr.f32.gmra.mxu0 %v6414
        %v6513 = vpop.f32.mrf.mxu0
        %v6514 = vadd.f32 0.0, %v6513
        %v6515 = vpop.f32.mrf.mxu0
        %6516 = vmatprep.mubr.f32.mxu0 0.0
        %6517 = vmatmul.mubr.f32.gmra.mxu0 %v6417
        %v6518 = vpop.f32.mrf.mxu0
        %v6519 = vadd.f32 0.0, %v6518
        %v6520 = vpop.f32.mrf.mxu0
        %6521 = vmatprep.mubr.f32.mxu0 0.0
        %6522 = vmatmul.mubr.f32.gmra.mxu0 %v6420
        %v6523 = vpop.f32.mrf.mxu0
        %v6524 = vadd.f32 0.0, %v6523
        %v6525 = vpop.f32.mrf.mxu0
        %6526 = vdwg.mxu0
        %6527 = vrot.lane.b32.xlu0 %v1277, 64
        %v6528 = vpop.permute.xlu0 %6527
        %6529 = vrot.lane.b32.xlu0 %v1279, 64
        %v6530 = vpop.permute.xlu0 %6529
        %6531 = vrot.lane.b32.xlu0 %v1281, 64
        %v6532 = vpop.permute.xlu0 %6531
        %6533 = vrot.lane.b32.xlu0 %v1283, 64
        %v6534 = vpop.permute.xlu0 %6533
        %6535 = vrot.lane.b32.xlu0 %v1285, 64
        %v6536 = vpop.permute.xlu0 %6535
        %6537 = vrot.lane.b32.xlu0 %v1287, 64
        %v6538 = vpop.permute.xlu0 %6537
        %6539 = vrot.lane.b32.xlu0 %v1289, 64
        %v6540 = vpop.permute.xlu0 %6539
        %6541 = vrot.lane.b32.xlu0 %v1291, 64
        %v6542 = vpop.permute.xlu0 %6541
        %v6552 = vsel %vm3997, %v4655, 0
        %v6555 = vsel %vm3997, %v4657, 0
        %v6558 = vsel %vm3997, %v4659, 0
        %v6561 = vsel %vm3997, %v4661, 0
        %v6564 = vsel %vm3997, %v4663, 0
        %v6567 = vsel %vm3997, %v4665, 0
        %v6570 = vsel %vm3997, %v4667, 0
        %v6573 = vsel %vm3997, %v4669, 0
        %6575 = vmatprep.subr.mxu0 0.0
        %6576 = vmatpush1.msra.mxu0 0.0
        %6577 = vmatprep.subr.mxu0 0.0
        %6578 = vmatpush1.msra.mxu0 0.0
        %6579 = vmatprep.subr.mxu0 0.0
        %6580 = vmatpush1.msra.mxu0 0.0
        %6581 = vmatprep.subr.mxu0 0.0
        %6582 = vmatpush1.msra.mxu0 0.0
        %6583 = vmatprep.subr.mxu0 0.0
        %6584 = vmatpush1.msra.mxu0 0.0
        %6585 = vmatprep.subr.mxu0 0.0
        %6586 = vmatpush1.msra.mxu0 0.0
        %6587 = vmatprep.subr.mxu0 0.0
        %6588 = vmatpush1.msra.mxu0 0.0
        %6589 = vmatprep.subr.mxu0 0.0
        %6590 = vmatpush1.msra.mxu0 0.0
        %6591 = vmatprep.subr.mxu0 0.0
        %6592 = vmatpush1.msra.mxu0 %v6542
        %6593 = vmatprep.subr.mxu0 0.0
        %6594 = vmatpush1.msra.mxu0 %v6540
        %6595 = vmatprep.subr.mxu0 0.0
        %6596 = vmatpush1.msra.mxu0 %v6538
        %6597 = vmatprep.subr.mxu0 0.0
        %6598 = vmatpush1.msra.mxu0 %v6536
        %6599 = vmatprep.subr.mxu0 0.0
        %6600 = vmatpush1.msra.mxu0 %v6534
        %6601 = vmatprep.subr.mxu0 0.0
        %6602 = vmatpush1.msra.mxu0 %v6532
        %6603 = vmatprep.subr.mxu0 0.0
        %6604 = vmatpush1.msra.mxu0 %v6530
        %6605 = vmatprep.subr.mxu0 0.0
        %6606 = vmatpush1.msra.mxu0 %v6528
        %6607 = vmatprep.subr.mxu0 0.0
        %6608 = vmatpush2.msra.mxu0 0.0
        %6609 = vmatprep.subr.mxu0 0.0
        %6610 = vmatpush2.msra.mxu0 0.0
        %6611 = vmatprep.subr.mxu0 0.0
        %6612 = vmatpush2.msra.mxu0 0.0
        %6613 = vmatprep.subr.mxu0 0.0
        %6614 = vmatpush2.msra.mxu0 0.0
        %6615 = vmatprep.subr.mxu0 0.0
        %6616 = vmatpush2.msra.mxu0 0.0
        %6617 = vmatprep.subr.mxu0 0.0
        %6618 = vmatpush2.msra.mxu0 0.0
        %6619 = vmatprep.subr.mxu0 0.0
        %6620 = vmatpush2.msra.mxu0 0.0
        %6621 = vmatprep.subr.mxu0 0.0
        %6622 = vmatpush2.msra.mxu0 0.0
        %6623 = vmatprep.subr.mxu0 0.0
        %6624 = vmatpush2.msra.mxu0 0.0
        %6625 = vmatprep.subr.mxu0 0.0
        %6626 = vmatpush2.msra.mxu0 0.0
        %6627 = vmatprep.subr.mxu0 0.0
        %6628 = vmatpush2.msra.mxu0 0.0
        %6629 = vmatprep.subr.mxu0 0.0
        %6630 = vmatpush2.msra.mxu0 0.0
        %6631 = vmatprep.subr.mxu0 0.0
        %6632 = vmatpush2.msra.mxu0 0.0
        %6633 = vmatprep.subr.mxu0 0.0
        %6634 = vmatpush2.msra.mxu0 0.0
        %6635 = vmatprep.subr.mxu0 0.0
        %6636 = vmatpush2.msra.mxu0 0.0
        %6637 = vmatprep.subr.mxu0 0.0
        %6638 = vmatpush2.msra.mxu0 0.0
        %6639 = vmatprep.mubr.f32.mxu0 0.0
        %6640 = vmatmul.mubr.f32.gmra.mxu0 %v6552
        %v6641 = vpop.f32.mrf.mxu0
        %v6642 = vadd.f32 0.0, %v6641
        %v6643 = vpop.f32.mrf.mxu0
        %6644 = vmatprep.mubr.f32.mxu0 0.0
        %6645 = vmatmul.mubr.f32.gmra.mxu0 %v6555
        %v6646 = vpop.f32.mrf.mxu0
        %v6647 = vadd.f32 0.0, %v6646
        %v6648 = vpop.f32.mrf.mxu0
        %6649 = vmatprep.mubr.f32.mxu0 0.0
        %6650 = vmatmul.mubr.f32.gmra.mxu0 %v6558
        %v6651 = vpop.f32.mrf.mxu0
        %v6652 = vadd.f32 0.0, %v6651
        %v6653 = vpop.f32.mrf.mxu0
        %6654 = vmatprep.mubr.f32.mxu0 0.0
        %6655 = vmatmul.mubr.f32.gmra.mxu0 %v6561
        %v6656 = vpop.f32.mrf.mxu0
        %v6657 = vadd.f32 0.0, %v6656
        %v6658 = vpop.f32.mrf.mxu0
        %6659 = vmatprep.mubr.f32.mxu0 0.0
        %6660 = vmatmul.mubr.f32.gmra.mxu0 %v6564
        %v6661 = vpop.f32.mrf.mxu0
        %v6662 = vadd.f32 0.0, %v6661
        %v6663 = vpop.f32.mrf.mxu0
        %6664 = vmatprep.mubr.f32.mxu0 0.0
        %6665 = vmatmul.mubr.f32.gmra.mxu0 %v6567
        %v6666 = vpop.f32.mrf.mxu0
        %v6667 = vadd.f32 0.0, %v6666
        %v6668 = vpop.f32.mrf.mxu0
        %6669 = vmatprep.mubr.f32.mxu0 0.0
        %6670 = vmatmul.mubr.f32.gmra.mxu0 %v6570
        %v6671 = vpop.f32.mrf.mxu0
        %v6672 = vadd.f32 0.0, %v6671
        %v6673 = vpop.f32.mrf.mxu0
        %6674 = vmatprep.mubr.f32.mxu0 0.0
        %6675 = vmatmul.mubr.f32.gmra.mxu0 %v6573
        %v6676 = vpop.f32.mrf.mxu0
        %v6677 = vadd.f32 0.0, %v6676
        %v6678 = vpop.f32.mrf.mxu0
        %6679 = vdwg.mxu0
        %6680 = vrot.lane.b32.xlu0 %v1293, 64
        %v6681 = vpop.permute.xlu0 %6680
        %6682 = vrot.lane.b32.xlu0 %v1295, 64
        %v6683 = vpop.permute.xlu0 %6682
        %6684 = vrot.lane.b32.xlu0 %v1297, 64
        %v6685 = vpop.permute.xlu0 %6684
        %6686 = vrot.lane.b32.xlu0 %v1299, 64
        %v6687 = vpop.permute.xlu0 %6686
        %6688 = vrot.lane.b32.xlu0 %v1301, 64
        %v6689 = vpop.permute.xlu0 %6688
        %6690 = vrot.lane.b32.xlu0 %v1303, 64
        %v6691 = vpop.permute.xlu0 %6690
        %6692 = vrot.lane.b32.xlu0 %v1305, 64
        %v6693 = vpop.permute.xlu0 %6692
        %6694 = vrot.lane.b32.xlu0 %v1307, 64
        %v6695 = vpop.permute.xlu0 %6694
        %v6705 = vsel %vm3997, %v4671, 0
        %v6708 = vsel %vm3997, %v4673, 0
        %v6711 = vsel %vm3997, %v4675, 0
        %v6714 = vsel %vm3997, %v4677, 0
        %v6717 = vsel %vm3997, %v4679, 0
        %v6720 = vsel %vm3997, %v4681, 0
        %v6723 = vsel %vm3997, %v4683, 0
        %v6726 = vsel %vm3997, %v4685, 0
        %6728 = vmatprep.subr.mxu0 0.0
        %6729 = vmatpush1.msra.mxu0 0.0
        %6730 = vmatprep.subr.mxu0 0.0
        %6731 = vmatpush1.msra.mxu0 0.0
        %6732 = vmatprep.subr.mxu0 0.0
        %6733 = vmatpush1.msra.mxu0 0.0
        %6734 = vmatprep.subr.mxu0 0.0
        %6735 = vmatpush1.msra.mxu0 0.0
        %6736 = vmatprep.subr.mxu0 0.0
        %6737 = vmatpush1.msra.mxu0 0.0
        %6738 = vmatprep.subr.mxu0 0.0
        %6739 = vmatpush1.msra.mxu0 0.0
        %6740 = vmatprep.subr.mxu0 0.0
        %6741 = vmatpush1.msra.mxu0 0.0
        %6742 = vmatprep.subr.mxu0 0.0
        %6743 = vmatpush1.msra.mxu0 0.0
        %6744 = vmatprep.subr.mxu0 0.0
        %6745 = vmatpush1.msra.mxu0 %v6695
        %6746 = vmatprep.subr.mxu0 0.0
        %6747 = vmatpush1.msra.mxu0 %v6693
        %6748 = vmatprep.subr.mxu0 0.0
        %6749 = vmatpush1.msra.mxu0 %v6691
        %6750 = vmatprep.subr.mxu0 0.0
        %6751 = vmatpush1.msra.mxu0 %v6689
        %6752 = vmatprep.subr.mxu0 0.0
        %6753 = vmatpush1.msra.mxu0 %v6687
        %6754 = vmatprep.subr.mxu0 0.0
        %6755 = vmatpush1.msra.mxu0 %v6685
        %6756 = vmatprep.subr.mxu0 0.0
        %6757 = vmatpush1.msra.mxu0 %v6683
        %6758 = vmatprep.subr.mxu0 0.0
        %6759 = vmatpush1.msra.mxu0 %v6681
        %6760 = vmatprep.subr.mxu0 0.0
        %6761 = vmatpush2.msra.mxu0 0.0
        %6762 = vmatprep.subr.mxu0 0.0
        %6763 = vmatpush2.msra.mxu0 0.0
        %6764 = vmatprep.subr.mxu0 0.0
        %6765 = vmatpush2.msra.mxu0 0.0
        %6766 = vmatprep.subr.mxu0 0.0
        %6767 = vmatpush2.msra.mxu0 0.0
        %6768 = vmatprep.subr.mxu0 0.0
        %6769 = vmatpush2.msra.mxu0 0.0
        %6770 = vmatprep.subr.mxu0 0.0
        %6771 = vmatpush2.msra.mxu0 0.0
        %6772 = vmatprep.subr.mxu0 0.0
        %6773 = vmatpush2.msra.mxu0 0.0
        %6774 = vmatprep.subr.mxu0 0.0
        %6775 = vmatpush2.msra.mxu0 0.0
        %6776 = vmatprep.subr.mxu0 0.0
        %6777 = vmatpush2.msra.mxu0 0.0
        %6778 = vmatprep.subr.mxu0 0.0
        %6779 = vmatpush2.msra.mxu0 0.0
        %6780 = vmatprep.subr.mxu0 0.0
        %6781 = vmatpush2.msra.mxu0 0.0
        %6782 = vmatprep.subr.mxu0 0.0
        %6783 = vmatpush2.msra.mxu0 0.0
        %6784 = vmatprep.subr.mxu0 0.0
        %6785 = vmatpush2.msra.mxu0 0.0
        %6786 = vmatprep.subr.mxu0 0.0
        %6787 = vmatpush2.msra.mxu0 0.0
        %6788 = vmatprep.subr.mxu0 0.0
        %6789 = vmatpush2.msra.mxu0 0.0
        %6790 = vmatprep.subr.mxu0 0.0
        %6791 = vmatpush2.msra.mxu0 0.0
        %6792 = vmatprep.mubr.f32.mxu0 0.0
        %6793 = vmatmul.mubr.f32.gmra.mxu0 %v6705
        %v6794 = vpop.f32.mrf.mxu0
        %v6795 = vadd.f32 0.0, %v6794
        %v6796 = vpop.f32.mrf.mxu0
        %6797 = vmatprep.mubr.f32.mxu0 0.0
        %6798 = vmatmul.mubr.f32.gmra.mxu0 %v6708
        %v6799 = vpop.f32.mrf.mxu0
        %v6800 = vadd.f32 0.0, %v6799
        %v6801 = vpop.f32.mrf.mxu0
        %6802 = vmatprep.mubr.f32.mxu0 0.0
        %6803 = vmatmul.mubr.f32.gmra.mxu0 %v6711
        %v6804 = vpop.f32.mrf.mxu0
        %v6805 = vadd.f32 0.0, %v6804
        %v6806 = vpop.f32.mrf.mxu0
        %6807 = vmatprep.mubr.f32.mxu0 0.0
        %6808 = vmatmul.mubr.f32.gmra.mxu0 %v6714
        %v6809 = vpop.f32.mrf.mxu0
        %v6810 = vadd.f32 0.0, %v6809
        %v6811 = vpop.f32.mrf.mxu0
        %6812 = vmatprep.mubr.f32.mxu0 0.0
        %6813 = vmatmul.mubr.f32.gmra.mxu0 %v6717
        %v6814 = vpop.f32.mrf.mxu0
        %v6815 = vadd.f32 0.0, %v6814
        %v6816 = vpop.f32.mrf.mxu0
        %6817 = vmatprep.mubr.f32.mxu0 0.0
        %6818 = vmatmul.mubr.f32.gmra.mxu0 %v6720
        %v6819 = vpop.f32.mrf.mxu0
        %v6820 = vadd.f32 0.0, %v6819
        %v6821 = vpop.f32.mrf.mxu0
        %6822 = vmatprep.mubr.f32.mxu0 0.0
        %6823 = vmatmul.mubr.f32.gmra.mxu0 %v6723
        %v6824 = vpop.f32.mrf.mxu0
        %v6825 = vadd.f32 0.0, %v6824
        %v6826 = vpop.f32.mrf.mxu0
        %6827 = vmatprep.mubr.f32.mxu0 0.0
        %6828 = vmatmul.mubr.f32.gmra.mxu0 %v6726
        %v6829 = vpop.f32.mrf.mxu0
        %v6830 = vadd.f32 0.0, %v6829
        %v6831 = vpop.f32.mrf.mxu0
        %6832 = vdwg.mxu0
        %6833 = vrot.lane.b32.xlu0 %v1309, 64
        %v6834 = vpop.permute.xlu0 %6833
        %6835 = vrot.lane.b32.xlu0 %v1311, 64
        %v6836 = vpop.permute.xlu0 %6835
        %6837 = vrot.lane.b32.xlu0 %v1313, 64
        %v6838 = vpop.permute.xlu0 %6837
        %6839 = vrot.lane.b32.xlu0 %v1315, 64
        %v6840 = vpop.permute.xlu0 %6839
        %6841 = vrot.lane.b32.xlu0 %v1317, 64
        %v6842 = vpop.permute.xlu0 %6841
        %6843 = vrot.lane.b32.xlu0 %v1319, 64
        %v6844 = vpop.permute.xlu0 %6843
        %6845 = vrot.lane.b32.xlu0 %v1321, 64
        %v6846 = vpop.permute.xlu0 %6845
        %6847 = vrot.lane.b32.xlu0 %v1323, 64
        %v6848 = vpop.permute.xlu0 %6847
        %v6858 = vsel %vm3997, %v4687, 0
        %v6861 = vsel %vm3997, %v4689, 0
        %v6864 = vsel %vm3997, %v4691, 0
        %v6867 = vsel %vm3997, %v4693, 0
        %v6870 = vsel %vm3997, %v4695, 0
        %v6873 = vsel %vm3997, %v4697, 0
        %v6876 = vsel %vm3997, %v4699, 0
        %v6879 = vsel %vm3997, %v4701, 0
        %6881 = vmatprep.subr.mxu0 0.0
        %6882 = vmatpush1.msra.mxu0 0.0
        %6883 = vmatprep.subr.mxu0 0.0
        %6884 = vmatpush1.msra.mxu0 0.0
        %6885 = vmatprep.subr.mxu0 0.0
        %6886 = vmatpush1.msra.mxu0 0.0
        %6887 = vmatprep.subr.mxu0 0.0
        %6888 = vmatpush1.msra.mxu0 0.0
        %6889 = vmatprep.subr.mxu0 0.0
        %6890 = vmatpush1.msra.mxu0 0.0
        %6891 = vmatprep.subr.mxu0 0.0
        %6892 = vmatpush1.msra.mxu0 0.0
        %6893 = vmatprep.subr.mxu0 0.0
        %6894 = vmatpush1.msra.mxu0 0.0
        %6895 = vmatprep.subr.mxu0 0.0
        %6896 = vmatpush1.msra.mxu0 0.0
        %6897 = vmatprep.subr.mxu0 0.0
        %6898 = vmatpush1.msra.mxu0 %v6848
        %6899 = vmatprep.subr.mxu0 0.0
        %6900 = vmatpush1.msra.mxu0 %v6846
        %6901 = vmatprep.subr.mxu0 0.0
        %6902 = vmatpush1.msra.mxu0 %v6844
        %6903 = vmatprep.subr.mxu0 0.0
        %6904 = vmatpush1.msra.mxu0 %v6842
        %6905 = vmatprep.subr.mxu0 0.0
        %6906 = vmatpush1.msra.mxu0 %v6840
        %6907 = vmatprep.subr.mxu0 0.0
        %6908 = vmatpush1.msra.mxu0 %v6838
        %6909 = vmatprep.subr.mxu0 0.0
        %6910 = vmatpush1.msra.mxu0 %v6836
        %6911 = vmatprep.subr.mxu0 0.0
        %6912 = vmatpush1.msra.mxu0 %v6834
        %6913 = vmatprep.subr.mxu0 0.0
        %6914 = vmatpush2.msra.mxu0 0.0
        %6915 = vmatprep.subr.mxu0 0.0
        %6916 = vmatpush2.msra.mxu0 0.0
        %6917 = vmatprep.subr.mxu0 0.0
        %6918 = vmatpush2.msra.mxu0 0.0
        %6919 = vmatprep.subr.mxu0 0.0
        %6920 = vmatpush2.msra.mxu0 0.0
        %6921 = vmatprep.subr.mxu0 0.0
        %6922 = vmatpush2.msra.mxu0 0.0
        %6923 = vmatprep.subr.mxu0 0.0
        %6924 = vmatpush2.msra.mxu0 0.0
        %6925 = vmatprep.subr.mxu0 0.0
        %6926 = vmatpush2.msra.mxu0 0.0
        %6927 = vmatprep.subr.mxu0 0.0
        %6928 = vmatpush2.msra.mxu0 0.0
        %6929 = vmatprep.subr.mxu0 0.0
        %6930 = vmatpush2.msra.mxu0 0.0
        %6931 = vmatprep.subr.mxu0 0.0
        %6932 = vmatpush2.msra.mxu0 0.0
        %6933 = vmatprep.subr.mxu0 0.0
        %6934 = vmatpush2.msra.mxu0 0.0
        %6935 = vmatprep.subr.mxu0 0.0
        %6936 = vmatpush2.msra.mxu0 0.0
        %6937 = vmatprep.subr.mxu0 0.0
        %6938 = vmatpush2.msra.mxu0 0.0
        %6939 = vmatprep.subr.mxu0 0.0
        %6940 = vmatpush2.msra.mxu0 0.0
        %6941 = vmatprep.subr.mxu0 0.0
        %6942 = vmatpush2.msra.mxu0 0.0
        %6943 = vmatprep.subr.mxu0 0.0
        %6944 = vmatpush2.msra.mxu0 0.0
        %6945 = vmatprep.mubr.f32.mxu0 0.0
        %6946 = vmatmul.mubr.f32.gmra.mxu0 %v6858
        %v6947 = vpop.f32.mrf.mxu0
        %v6948 = vadd.f32 0.0, %v6947
        %v6949 = vpop.f32.mrf.mxu0
        %6950 = vmatprep.mubr.f32.mxu0 0.0
        %6951 = vmatmul.mubr.f32.gmra.mxu0 %v6861
        %v6952 = vpop.f32.mrf.mxu0
        %v6953 = vadd.f32 0.0, %v6952
        %v6954 = vpop.f32.mrf.mxu0
        %6955 = vmatprep.mubr.f32.mxu0 0.0
        %6956 = vmatmul.mubr.f32.gmra.mxu0 %v6864
        %v6957 = vpop.f32.mrf.mxu0
        %v6958 = vadd.f32 0.0, %v6957
        %v6959 = vpop.f32.mrf.mxu0
        %6960 = vmatprep.mubr.f32.mxu0 0.0
        %6961 = vmatmul.mubr.f32.gmra.mxu0 %v6867
        %v6962 = vpop.f32.mrf.mxu0
        %v6963 = vadd.f32 0.0, %v6962
        %v6964 = vpop.f32.mrf.mxu0
        %6965 = vmatprep.mubr.f32.mxu0 0.0
        %6966 = vmatmul.mubr.f32.gmra.mxu0 %v6870
        %v6967 = vpop.f32.mrf.mxu0
        %v6968 = vadd.f32 0.0, %v6967
        %v6969 = vpop.f32.mrf.mxu0
        %6970 = vmatprep.mubr.f32.mxu0 0.0
        %6971 = vmatmul.mubr.f32.gmra.mxu0 %v6873
        %v6972 = vpop.f32.mrf.mxu0
        %v6973 = vadd.f32 0.0, %v6972
        %v6974 = vpop.f32.mrf.mxu0
        %6975 = vmatprep.mubr.f32.mxu0 0.0
        %6976 = vmatmul.mubr.f32.gmra.mxu0 %v6876
        %v6977 = vpop.f32.mrf.mxu0
        %v6978 = vadd.f32 0.0, %v6977
        %v6979 = vpop.f32.mrf.mxu0
        %6980 = vmatprep.mubr.f32.mxu0 0.0
        %6981 = vmatmul.mubr.f32.gmra.mxu0 %v6879
        %v6982 = vpop.f32.mrf.mxu0
        %v6983 = vadd.f32 0.0, %v6982
        %v6984 = vpop.f32.mrf.mxu0
        %6985 = vdwg.mxu0
        %6986 = vrot.lane.b32.xlu0 %v1325, 64
        %v6987 = vpop.permute.xlu0 %6986
        %6988 = vrot.lane.b32.xlu0 %v1327, 64
        %v6989 = vpop.permute.xlu0 %6988
        %6990 = vrot.lane.b32.xlu0 %v1329, 64
        %v6991 = vpop.permute.xlu0 %6990
        %6992 = vrot.lane.b32.xlu0 %v1331, 64
        %v6993 = vpop.permute.xlu0 %6992
        %6994 = vrot.lane.b32.xlu0 %v1333, 64
        %v6995 = vpop.permute.xlu0 %6994
        %6996 = vrot.lane.b32.xlu0 %v1335, 64
        %v6997 = vpop.permute.xlu0 %6996
        %6998 = vrot.lane.b32.xlu0 %v1337, 64
        %v6999 = vpop.permute.xlu0 %6998
        %7000 = vrot.lane.b32.xlu0 %v1339, 64
        %v7001 = vpop.permute.xlu0 %7000
        %v7011 = vsel %vm3997, %v4703, 0
        %v7014 = vsel %vm3997, %v4705, 0
        %v7017 = vsel %vm3997, %v4707, 0
        %v7020 = vsel %vm3997, %v4709, 0
        %v7023 = vsel %vm3997, %v4711, 0
        %v7026 = vsel %vm3997, %v4713, 0
        %v7029 = vsel %vm3997, %v4715, 0
        %v7032 = vsel %vm3997, %v4717, 0
        %7034 = vmatprep.subr.mxu0 0.0
        %7035 = vmatpush1.msra.mxu0 0.0
        %7036 = vmatprep.subr.mxu0 0.0
        %7037 = vmatpush1.msra.mxu0 0.0
        %7038 = vmatprep.subr.mxu0 0.0
        %7039 = vmatpush1.msra.mxu0 0.0
        %7040 = vmatprep.subr.mxu0 0.0
        %7041 = vmatpush1.msra.mxu0 0.0
        %7042 = vmatprep.subr.mxu0 0.0
        %7043 = vmatpush1.msra.mxu0 0.0
        %7044 = vmatprep.subr.mxu0 0.0
        %7045 = vmatpush1.msra.mxu0 0.0
        %7046 = vmatprep.subr.mxu0 0.0
        %7047 = vmatpush1.msra.mxu0 0.0
        %7048 = vmatprep.subr.mxu0 0.0
        %7049 = vmatpush1.msra.mxu0 0.0
        %7050 = vmatprep.subr.mxu0 0.0
        %7051 = vmatpush1.msra.mxu0 %v7001
        %7052 = vmatprep.subr.mxu0 0.0
        %7053 = vmatpush1.msra.mxu0 %v6999
        %7054 = vmatprep.subr.mxu0 0.0
        %7055 = vmatpush1.msra.mxu0 %v6997
        %7056 = vmatprep.subr.mxu0 0.0
        %7057 = vmatpush1.msra.mxu0 %v6995
        %7058 = vmatprep.subr.mxu0 0.0
        %7059 = vmatpush1.msra.mxu0 %v6993
        %7060 = vmatprep.subr.mxu0 0.0
        %7061 = vmatpush1.msra.mxu0 %v6991
        %7062 = vmatprep.subr.mxu0 0.0
        %7063 = vmatpush1.msra.mxu0 %v6989
        %7064 = vmatprep.subr.mxu0 0.0
        %7065 = vmatpush1.msra.mxu0 %v6987
        %7066 = vmatprep.subr.mxu0 0.0
        %7067 = vmatpush2.msra.mxu0 0.0
        %7068 = vmatprep.subr.mxu0 0.0
        %7069 = vmatpush2.msra.mxu0 0.0
        %7070 = vmatprep.subr.mxu0 0.0
        %7071 = vmatpush2.msra.mxu0 0.0
        %7072 = vmatprep.subr.mxu0 0.0
        %7073 = vmatpush2.msra.mxu0 0.0
        %7074 = vmatprep.subr.mxu0 0.0
        %7075 = vmatpush2.msra.mxu0 0.0
        %7076 = vmatprep.subr.mxu0 0.0
        %7077 = vmatpush2.msra.mxu0 0.0
        %7078 = vmatprep.subr.mxu0 0.0
        %7079 = vmatpush2.msra.mxu0 0.0
        %7080 = vmatprep.subr.mxu0 0.0
        %7081 = vmatpush2.msra.mxu0 0.0
        %7082 = vmatprep.subr.mxu0 0.0
        %7083 = vmatpush2.msra.mxu0 0.0
        %7084 = vmatprep.subr.mxu0 0.0
        %7085 = vmatpush2.msra.mxu0 0.0
        %7086 = vmatprep.subr.mxu0 0.0
        %7087 = vmatpush2.msra.mxu0 0.0
        %7088 = vmatprep.subr.mxu0 0.0
        %7089 = vmatpush2.msra.mxu0 0.0
        %7090 = vmatprep.subr.mxu0 0.0
        %7091 = vmatpush2.msra.mxu0 0.0
        %7092 = vmatprep.subr.mxu0 0.0
        %7093 = vmatpush2.msra.mxu0 0.0
        %7094 = vmatprep.subr.mxu0 0.0
        %7095 = vmatpush2.msra.mxu0 0.0
        %7096 = vmatprep.subr.mxu0 0.0
        %7097 = vmatpush2.msra.mxu0 0.0
        %7098 = vmatprep.mubr.f32.mxu0 0.0
        %7099 = vmatmul.mubr.f32.gmra.mxu0 %v7011
        %v7100 = vpop.f32.mrf.mxu0
        %v7101 = vadd.f32 0.0, %v7100
        %v7102 = vpop.f32.mrf.mxu0
        %7103 = vmatprep.mubr.f32.mxu0 0.0
        %7104 = vmatmul.mubr.f32.gmra.mxu0 %v7014
        %v7105 = vpop.f32.mrf.mxu0
        %v7106 = vadd.f32 0.0, %v7105
        %v7107 = vpop.f32.mrf.mxu0
        %7108 = vmatprep.mubr.f32.mxu0 0.0
        %7109 = vmatmul.mubr.f32.gmra.mxu0 %v7017
        %v7110 = vpop.f32.mrf.mxu0
        %v7111 = vadd.f32 0.0, %v7110
        %v7112 = vpop.f32.mrf.mxu0
        %7113 = vmatprep.mubr.f32.mxu0 0.0
        %7114 = vmatmul.mubr.f32.gmra.mxu0 %v7020
        %v7115 = vpop.f32.mrf.mxu0
        %v7116 = vadd.f32 0.0, %v7115
        %v7117 = vpop.f32.mrf.mxu0
        %7118 = vmatprep.mubr.f32.mxu0 0.0
        %7119 = vmatmul.mubr.f32.gmra.mxu0 %v7023
        %v7120 = vpop.f32.mrf.mxu0
        %v7121 = vadd.f32 0.0, %v7120
        %v7122 = vpop.f32.mrf.mxu0
        %7123 = vmatprep.mubr.f32.mxu0 0.0
        %7124 = vmatmul.mubr.f32.gmra.mxu0 %v7026
        %v7125 = vpop.f32.mrf.mxu0
        %v7126 = vadd.f32 0.0, %v7125
        %v7127 = vpop.f32.mrf.mxu0
        %7128 = vmatprep.mubr.f32.mxu0 0.0
        %7129 = vmatmul.mubr.f32.gmra.mxu0 %v7029
        %v7130 = vpop.f32.mrf.mxu0
        %v7131 = vadd.f32 0.0, %v7130
        %v7132 = vpop.f32.mrf.mxu0
        %7133 = vmatprep.mubr.f32.mxu0 0.0
        %7134 = vmatmul.mubr.f32.gmra.mxu0 %v7032
        %v7135 = vpop.f32.mrf.mxu0
        %v7136 = vadd.f32 0.0, %v7135
        %v7137 = vpop.f32.mrf.mxu0
        %7138 = vdwg.mxu0
        %7139 = vrot.lane.b32.xlu0 %v1341, 64
        %v7140 = vpop.permute.xlu0 %7139
        %7141 = vrot.lane.b32.xlu0 %v1343, 64
        %v7142 = vpop.permute.xlu0 %7141
        %7143 = vrot.lane.b32.xlu0 %v1345, 64
        %v7144 = vpop.permute.xlu0 %7143
        %7145 = vrot.lane.b32.xlu0 %v1347, 64
        %v7146 = vpop.permute.xlu0 %7145
        %7147 = vrot.lane.b32.xlu0 %v1349, 64
        %v7148 = vpop.permute.xlu0 %7147
        %7149 = vrot.lane.b32.xlu0 %v1351, 64
        %v7150 = vpop.permute.xlu0 %7149
        %7151 = vrot.lane.b32.xlu0 %v1353, 64
        %v7152 = vpop.permute.xlu0 %7151
        %7153 = vrot.lane.b32.xlu0 %v1355, 64
        %v7154 = vpop.permute.xlu0 %7153
        %v7164 = vsel %vm3997, %v4719, 0
        %v7167 = vsel %vm3997, %v4721, 0
        %v7170 = vsel %vm3997, %v4723, 0
        %v7173 = vsel %vm3997, %v4725, 0
        %v7176 = vsel %vm3997, %v4727, 0
        %v7179 = vsel %vm3997, %v4729, 0
        %v7182 = vsel %vm3997, %v4731, 0
        %v7185 = vsel %vm3997, %v4733, 0
        %7187 = vmatprep.subr.mxu0 0.0
        %7188 = vmatpush1.msra.mxu0 0.0
        %7189 = vmatprep.subr.mxu0 0.0
        %7190 = vmatpush1.msra.mxu0 0.0
        %7191 = vmatprep.subr.mxu0 0.0
        %7192 = vmatpush1.msra.mxu0 0.0
        %7193 = vmatprep.subr.mxu0 0.0
        %7194 = vmatpush1.msra.mxu0 0.0
        %7195 = vmatprep.subr.mxu0 0.0
        %7196 = vmatpush1.msra.mxu0 0.0
        %7197 = vmatprep.subr.mxu0 0.0
        %7198 = vmatpush1.msra.mxu0 0.0
        %7199 = vmatprep.subr.mxu0 0.0
        %7200 = vmatpush1.msra.mxu0 0.0
        %7201 = vmatprep.subr.mxu0 0.0
        %7202 = vmatpush1.msra.mxu0 0.0
        %7203 = vmatprep.subr.mxu0 0.0
        %7204 = vmatpush1.msra.mxu0 %v7154
        %7205 = vmatprep.subr.mxu0 0.0
        %7206 = vmatpush1.msra.mxu0 %v7152
        %7207 = vmatprep.subr.mxu0 0.0
        %7208 = vmatpush1.msra.mxu0 %v7150
        %7209 = vmatprep.subr.mxu0 0.0
        %7210 = vmatpush1.msra.mxu0 %v7148
        %7211 = vmatprep.subr.mxu0 0.0
        %7212 = vmatpush1.msra.mxu0 %v7146
        %7213 = vmatprep.subr.mxu0 0.0
        %7214 = vmatpush1.msra.mxu0 %v7144
        %7215 = vmatprep.subr.mxu0 0.0
        %7216 = vmatpush1.msra.mxu0 %v7142
        %7217 = vmatprep.subr.mxu0 0.0
        %7218 = vmatpush1.msra.mxu0 %v7140
        %7219 = vmatprep.subr.mxu0 0.0
        %7220 = vmatpush2.msra.mxu0 0.0
        %7221 = vmatprep.subr.mxu0 0.0
        %7222 = vmatpush2.msra.mxu0 0.0
        %7223 = vmatprep.subr.mxu0 0.0
        %7224 = vmatpush2.msra.mxu0 0.0
        %7225 = vmatprep.subr.mxu0 0.0
        %7226 = vmatpush2.msra.mxu0 0.0
        %7227 = vmatprep.subr.mxu0 0.0
        %7228 = vmatpush2.msra.mxu0 0.0
        %7229 = vmatprep.subr.mxu0 0.0
        %7230 = vmatpush2.msra.mxu0 0.0
        %7231 = vmatprep.subr.mxu0 0.0
        %7232 = vmatpush2.msra.mxu0 0.0
        %7233 = vmatprep.subr.mxu0 0.0
        %7234 = vmatpush2.msra.mxu0 0.0
        %7235 = vmatprep.subr.mxu0 0.0
        %7236 = vmatpush2.msra.mxu0 0.0
        %7237 = vmatprep.subr.mxu0 0.0
        %7238 = vmatpush2.msra.mxu0 0.0
        %7239 = vmatprep.subr.mxu0 0.0
        %7240 = vmatpush2.msra.mxu0 0.0
        %7241 = vmatprep.subr.mxu0 0.0
        %7242 = vmatpush2.msra.mxu0 0.0
        %7243 = vmatprep.subr.mxu0 0.0
        %7244 = vmatpush2.msra.mxu0 0.0
        %7245 = vmatprep.subr.mxu0 0.0
        %7246 = vmatpush2.msra.mxu0 0.0
        %7247 = vmatprep.subr.mxu0 0.0
        %7248 = vmatpush2.msra.mxu0 0.0
        %7249 = vmatprep.subr.mxu0 0.0
        %7250 = vmatpush2.msra.mxu0 0.0
        %7251 = vmatprep.mubr.f32.mxu0 0.0
        %7252 = vmatmul.mubr.f32.gmra.mxu0 %v7164
        %v7253 = vpop.f32.mrf.mxu0
        %v7254 = vadd.f32 0.0, %v7253
        %v7255 = vpop.f32.mrf.mxu0
        %7256 = vmatprep.mubr.f32.mxu0 0.0
        %7257 = vmatmul.mubr.f32.gmra.mxu0 %v7167
        %v7258 = vpop.f32.mrf.mxu0
        %v7259 = vadd.f32 0.0, %v7258
        %v7260 = vpop.f32.mrf.mxu0
        %7261 = vmatprep.mubr.f32.mxu0 0.0
        %7262 = vmatmul.mubr.f32.gmra.mxu0 %v7170
        %v7263 = vpop.f32.mrf.mxu0
        %v7264 = vadd.f32 0.0, %v7263
        %v7265 = vpop.f32.mrf.mxu0
        %7266 = vmatprep.mubr.f32.mxu0 0.0
        %7267 = vmatmul.mubr.f32.gmra.mxu0 %v7173
        %v7268 = vpop.f32.mrf.mxu0
        %v7269 = vadd.f32 0.0, %v7268
        %v7270 = vpop.f32.mrf.mxu0
        %7271 = vmatprep.mubr.f32.mxu0 0.0
        %7272 = vmatmul.mubr.f32.gmra.mxu0 %v7176
        %v7273 = vpop.f32.mrf.mxu0
        %v7274 = vadd.f32 0.0, %v7273
        %v7275 = vpop.f32.mrf.mxu0
        %7276 = vmatprep.mubr.f32.mxu0 0.0
        %7277 = vmatmul.mubr.f32.gmra.mxu0 %v7179
        %v7278 = vpop.f32.mrf.mxu0
        %v7279 = vadd.f32 0.0, %v7278
        %v7280 = vpop.f32.mrf.mxu0
        %7281 = vmatprep.mubr.f32.mxu0 0.0
        %7282 = vmatmul.mubr.f32.gmra.mxu0 %v7182
        %v7283 = vpop.f32.mrf.mxu0
        %v7284 = vadd.f32 0.0, %v7283
        %v7285 = vpop.f32.mrf.mxu0
        %7286 = vmatprep.mubr.f32.mxu0 0.0
        %7287 = vmatmul.mubr.f32.gmra.mxu0 %v7185
        %v7288 = vpop.f32.mrf.mxu0
        %v7289 = vadd.f32 0.0, %v7288
        %v7290 = vpop.f32.mrf.mxu0
        %7291 = vdwg.mxu0
        %7292 = vrot.lane.b32.xlu0 %v1357, 64
        %v7293 = vpop.permute.xlu0 %7292
        %7294 = vrot.lane.b32.xlu0 %v1359, 64
        %v7295 = vpop.permute.xlu0 %7294
        %7296 = vrot.lane.b32.xlu0 %v1361, 64
        %v7297 = vpop.permute.xlu0 %7296
        %7298 = vrot.lane.b32.xlu0 %v1363, 64
        %v7299 = vpop.permute.xlu0 %7298
        %7300 = vrot.lane.b32.xlu0 %v1365, 64
        %v7301 = vpop.permute.xlu0 %7300
        %7302 = vrot.lane.b32.xlu0 %v1367, 64
        %v7303 = vpop.permute.xlu0 %7302
        %7304 = vrot.lane.b32.xlu0 %v1369, 64
        %v7305 = vpop.permute.xlu0 %7304
        %7306 = vrot.lane.b32.xlu0 %v1371, 64
        %v7307 = vpop.permute.xlu0 %7306
        %v7317 = vsel %vm3997, %v4735, 0
        %v7320 = vsel %vm3997, %v4737, 0
        %v7323 = vsel %vm3997, %v4739, 0
        %v7326 = vsel %vm3997, %v4741, 0
        %v7329 = vsel %vm3997, %v4743, 0
        %v7332 = vsel %vm3997, %v4745, 0
        %v7335 = vsel %vm3997, %v4747, 0
        %v7338 = vsel %vm3997, %v4749, 0
        %7340 = vmatprep.subr.mxu0 0.0
        %7341 = vmatpush1.msra.mxu0 0.0
        %7342 = vmatprep.subr.mxu0 0.0
        %7343 = vmatpush1.msra.mxu0 0.0
        %7344 = vmatprep.subr.mxu0 0.0
        %7345 = vmatpush1.msra.mxu0 0.0
        %7346 = vmatprep.subr.mxu0 0.0
        %7347 = vmatpush1.msra.mxu0 0.0
        %7348 = vmatprep.subr.mxu0 0.0
        %7349 = vmatpush1.msra.mxu0 0.0
        %7350 = vmatprep.subr.mxu0 0.0
        %7351 = vmatpush1.msra.mxu0 0.0
        %7352 = vmatprep.subr.mxu0 0.0
        %7353 = vmatpush1.msra.mxu0 0.0
        %7354 = vmatprep.subr.mxu0 0.0
        %7355 = vmatpush1.msra.mxu0 0.0
        %7356 = vmatprep.subr.mxu0 0.0
        %7357 = vmatpush1.msra.mxu0 %v7307
        %7358 = vmatprep.subr.mxu0 0.0
        %7359 = vmatpush1.msra.mxu0 %v7305
        %7360 = vmatprep.subr.mxu0 0.0
        %7361 = vmatpush1.msra.mxu0 %v7303
        %7362 = vmatprep.subr.mxu0 0.0
        %7363 = vmatpush1.msra.mxu0 %v7301
        %7364 = vmatprep.subr.mxu0 0.0
        %7365 = vmatpush1.msra.mxu0 %v7299
        %7366 = vmatprep.subr.mxu0 0.0
        %7367 = vmatpush1.msra.mxu0 %v7297
        %7368 = vmatprep.subr.mxu0 0.0
        %7369 = vmatpush1.msra.mxu0 %v7295
        %7370 = vmatprep.subr.mxu0 0.0
        %7371 = vmatpush1.msra.mxu0 %v7293
        %7372 = vmatprep.subr.mxu0 0.0
        %7373 = vmatpush2.msra.mxu0 0.0
        %7374 = vmatprep.subr.mxu0 0.0
        %7375 = vmatpush2.msra.mxu0 0.0
        %7376 = vmatprep.subr.mxu0 0.0
        %7377 = vmatpush2.msra.mxu0 0.0
        %7378 = vmatprep.subr.mxu0 0.0
        %7379 = vmatpush2.msra.mxu0 0.0
        %7380 = vmatprep.subr.mxu0 0.0
        %7381 = vmatpush2.msra.mxu0 0.0
        %7382 = vmatprep.subr.mxu0 0.0
        %7383 = vmatpush2.msra.mxu0 0.0
        %7384 = vmatprep.subr.mxu0 0.0
        %7385 = vmatpush2.msra.mxu0 0.0
        %7386 = vmatprep.subr.mxu0 0.0
        %7387 = vmatpush2.msra.mxu0 0.0
        %7388 = vmatprep.subr.mxu0 0.0
        %7389 = vmatpush2.msra.mxu0 0.0
        %7390 = vmatprep.subr.mxu0 0.0
        %7391 = vmatpush2.msra.mxu0 0.0
        %7392 = vmatprep.subr.mxu0 0.0
        %7393 = vmatpush2.msra.mxu0 0.0
        %7394 = vmatprep.subr.mxu0 0.0
        %7395 = vmatpush2.msra.mxu0 0.0
        %7396 = vmatprep.subr.mxu0 0.0
        %7397 = vmatpush2.msra.mxu0 0.0
        %7398 = vmatprep.subr.mxu0 0.0
        %7399 = vmatpush2.msra.mxu0 0.0
        %7400 = vmatprep.subr.mxu0 0.0
        %7401 = vmatpush2.msra.mxu0 0.0
        %7402 = vmatprep.subr.mxu0 0.0
        %7403 = vmatpush2.msra.mxu0 0.0
        %7404 = vmatprep.mubr.f32.mxu0 0.0
        %7405 = vmatmul.mubr.f32.gmra.mxu0 %v7317
        %v7406 = vpop.f32.mrf.mxu0
        %v7407 = vadd.f32 0.0, %v7406
        %v7408 = vpop.f32.mrf.mxu0
        %7409 = vmatprep.mubr.f32.mxu0 0.0
        %7410 = vmatmul.mubr.f32.gmra.mxu0 %v7320
        %v7411 = vpop.f32.mrf.mxu0
        %v7412 = vadd.f32 0.0, %v7411
        %v7413 = vpop.f32.mrf.mxu0
        %7414 = vmatprep.mubr.f32.mxu0 0.0
        %7415 = vmatmul.mubr.f32.gmra.mxu0 %v7323
        %v7416 = vpop.f32.mrf.mxu0
        %v7417 = vadd.f32 0.0, %v7416
        %v7418 = vpop.f32.mrf.mxu0
        %7419 = vmatprep.mubr.f32.mxu0 0.0
        %7420 = vmatmul.mubr.f32.gmra.mxu0 %v7326
        %v7421 = vpop.f32.mrf.mxu0
        %v7422 = vadd.f32 0.0, %v7421
        %v7423 = vpop.f32.mrf.mxu0
        %7424 = vmatprep.mubr.f32.mxu0 0.0
        %7425 = vmatmul.mubr.f32.gmra.mxu0 %v7329
        %v7426 = vpop.f32.mrf.mxu0
        %v7427 = vadd.f32 0.0, %v7426
        %v7428 = vpop.f32.mrf.mxu0
        %7429 = vmatprep.mubr.f32.mxu0 0.0
        %7430 = vmatmul.mubr.f32.gmra.mxu0 %v7332
        %v7431 = vpop.f32.mrf.mxu0
        %v7432 = vadd.f32 0.0, %v7431
        %v7433 = vpop.f32.mrf.mxu0
        %7434 = vmatprep.mubr.f32.mxu0 0.0
        %7435 = vmatmul.mubr.f32.gmra.mxu0 %v7335
        %v7436 = vpop.f32.mrf.mxu0
        %v7437 = vadd.f32 0.0, %v7436
        %v7438 = vpop.f32.mrf.mxu0
        %7439 = vmatprep.mubr.f32.mxu0 0.0
        %7440 = vmatmul.mubr.f32.gmra.mxu0 %v7338
        %v7441 = vpop.f32.mrf.mxu0
        %v7442 = vadd.f32 0.0, %v7441
        %v7443 = vpop.f32.mrf.mxu0
        %7444 = vdwg.mxu0
        %7445 = vrot.lane.b32.xlu0 %v1373, 64
        %v7446 = vpop.permute.xlu0 %7445
        %7447 = vrot.lane.b32.xlu0 %v1375, 64
        %v7448 = vpop.permute.xlu0 %7447
        %7449 = vrot.lane.b32.xlu0 %v1377, 64
        %v7450 = vpop.permute.xlu0 %7449
        %7451 = vrot.lane.b32.xlu0 %v1379, 64
        %v7452 = vpop.permute.xlu0 %7451
        %7453 = vrot.lane.b32.xlu0 %v1381, 64
        %v7454 = vpop.permute.xlu0 %7453
        %7455 = vrot.lane.b32.xlu0 %v1383, 64
        %v7456 = vpop.permute.xlu0 %7455
        %7457 = vrot.lane.b32.xlu0 %v1385, 64
        %v7458 = vpop.permute.xlu0 %7457
        %7459 = vrot.lane.b32.xlu0 %v1387, 64
        %v7460 = vpop.permute.xlu0 %7459
        %v7470 = vsel %vm3997, %v4751, 0
        %v7473 = vsel %vm3997, %v4753, 0
        %v7476 = vsel %vm3997, %v4755, 0
        %v7479 = vsel %vm3997, %v4757, 0
        %v7482 = vsel %vm3997, %v4759, 0
        %v7485 = vsel %vm3997, %v4761, 0
        %v7488 = vsel %vm3997, %v4763, 0
        %v7491 = vsel %vm3997, %v4765, 0
        %7493 = vmatprep.subr.mxu0 0.0
        %7494 = vmatpush1.msra.mxu0 0.0
        %7495 = vmatprep.subr.mxu0 0.0
        %7496 = vmatpush1.msra.mxu0 0.0
        %7497 = vmatprep.subr.mxu0 0.0
        %7498 = vmatpush1.msra.mxu0 0.0
        %7499 = vmatprep.subr.mxu0 0.0
        %7500 = vmatpush1.msra.mxu0 0.0
        %7501 = vmatprep.subr.mxu0 0.0
        %7502 = vmatpush1.msra.mxu0 0.0
        %7503 = vmatprep.subr.mxu0 0.0
        %7504 = vmatpush1.msra.mxu0 0.0
        %7505 = vmatprep.subr.mxu0 0.0
        %7506 = vmatpush1.msra.mxu0 0.0
        %7507 = vmatprep.subr.mxu0 0.0
        %7508 = vmatpush1.msra.mxu0 0.0
        %7509 = vmatprep.subr.mxu0 0.0
        %7510 = vmatpush1.msra.mxu0 %v7460
        %7511 = vmatprep.subr.mxu0 0.0
        %7512 = vmatpush1.msra.mxu0 %v7458
        %7513 = vmatprep.subr.mxu0 0.0
        %7514 = vmatpush1.msra.mxu0 %v7456
        %7515 = vmatprep.subr.mxu0 0.0
        %7516 = vmatpush1.msra.mxu0 %v7454
        %7517 = vmatprep.subr.mxu0 0.0
        %7518 = vmatpush1.msra.mxu0 %v7452
        %7519 = vmatprep.subr.mxu0 0.0
        %7520 = vmatpush1.msra.mxu0 %v7450
        %7521 = vmatprep.subr.mxu0 0.0
        %7522 = vmatpush1.msra.mxu0 %v7448
        %7523 = vmatprep.subr.mxu0 0.0
        %7524 = vmatpush1.msra.mxu0 %v7446
        %7525 = vmatprep.subr.mxu0 0.0
        %7526 = vmatpush2.msra.mxu0 0.0
        %7527 = vmatprep.subr.mxu0 0.0
        %7528 = vmatpush2.msra.mxu0 0.0
        %7529 = vmatprep.subr.mxu0 0.0
        %7530 = vmatpush2.msra.mxu0 0.0
        %7531 = vmatprep.subr.mxu0 0.0
        %7532 = vmatpush2.msra.mxu0 0.0
        %7533 = vmatprep.subr.mxu0 0.0
        %7534 = vmatpush2.msra.mxu0 0.0
        %7535 = vmatprep.subr.mxu0 0.0
        %7536 = vmatpush2.msra.mxu0 0.0
        %7537 = vmatprep.subr.mxu0 0.0
        %7538 = vmatpush2.msra.mxu0 0.0
        %7539 = vmatprep.subr.mxu0 0.0
        %7540 = vmatpush2.msra.mxu0 0.0
        %7541 = vmatprep.subr.mxu0 0.0
        %7542 = vmatpush2.msra.mxu0 0.0
        %7543 = vmatprep.subr.mxu0 0.0
        %7544 = vmatpush2.msra.mxu0 0.0
        %7545 = vmatprep.subr.mxu0 0.0
        %7546 = vmatpush2.msra.mxu0 0.0
        %7547 = vmatprep.subr.mxu0 0.0
        %7548 = vmatpush2.msra.mxu0 0.0
        %7549 = vmatprep.subr.mxu0 0.0
        %7550 = vmatpush2.msra.mxu0 0.0
        %7551 = vmatprep.subr.mxu0 0.0
        %7552 = vmatpush2.msra.mxu0 0.0
        %7553 = vmatprep.subr.mxu0 0.0
        %7554 = vmatpush2.msra.mxu0 0.0
        %7555 = vmatprep.subr.mxu0 0.0
        %7556 = vmatpush2.msra.mxu0 0.0
        %7557 = vmatprep.mubr.f32.mxu0 0.0
        %7558 = vmatmul.mubr.f32.gmra.mxu0 %v7470
        %v7559 = vpop.f32.mrf.mxu0
        %v7560 = vadd.f32 0.0, %v7559
        %v7561 = vpop.f32.mrf.mxu0
        %7562 = vmatprep.mubr.f32.mxu0 0.0
        %7563 = vmatmul.mubr.f32.gmra.mxu0 %v7473
        %v7564 = vpop.f32.mrf.mxu0
        %v7565 = vadd.f32 0.0, %v7564
        %v7566 = vpop.f32.mrf.mxu0
        %7567 = vmatprep.mubr.f32.mxu0 0.0
        %7568 = vmatmul.mubr.f32.gmra.mxu0 %v7476
        %v7569 = vpop.f32.mrf.mxu0
        %v7570 = vadd.f32 0.0, %v7569
        %v7571 = vpop.f32.mrf.mxu0
        %7572 = vmatprep.mubr.f32.mxu0 0.0
        %7573 = vmatmul.mubr.f32.gmra.mxu0 %v7479
        %v7574 = vpop.f32.mrf.mxu0
        %v7575 = vadd.f32 0.0, %v7574
        %v7576 = vpop.f32.mrf.mxu0
        %7577 = vmatprep.mubr.f32.mxu0 0.0
        %7578 = vmatmul.mubr.f32.gmra.mxu0 %v7482
        %v7579 = vpop.f32.mrf.mxu0
        %v7580 = vadd.f32 0.0, %v7579
        %v7581 = vpop.f32.mrf.mxu0
        %7582 = vmatprep.mubr.f32.mxu0 0.0
        %7583 = vmatmul.mubr.f32.gmra.mxu0 %v7485
        %v7584 = vpop.f32.mrf.mxu0
        %v7585 = vadd.f32 0.0, %v7584
        %v7586 = vpop.f32.mrf.mxu0
        %7587 = vmatprep.mubr.f32.mxu0 0.0
        %7588 = vmatmul.mubr.f32.gmra.mxu0 %v7488
        %v7589 = vpop.f32.mrf.mxu0
        %v7590 = vadd.f32 0.0, %v7589
        %v7591 = vpop.f32.mrf.mxu0
        %7592 = vmatprep.mubr.f32.mxu0 0.0
        %7593 = vmatmul.mubr.f32.gmra.mxu0 %v7491
        %v7594 = vpop.f32.mrf.mxu0
        %v7595 = vadd.f32 0.0, %v7594
        %v7596 = vpop.f32.mrf.mxu0
        %7597 = vdwg.mxu0
        %v7598 = vrcp.pop %v4768
        %v7599 = vmul.f32 %v5265, %v7598
        %v7600 = vrcp.pop %v4771
        %v7601 = vmul.f32 %v5270, %v7600
        %v7602 = vrcp.pop %v4774
        %v7603 = vmul.f32 %v5275, %v7602
        %v7604 = vrcp.pop %v4777
        %v7605 = vmul.f32 %v5280, %v7604
        %v7606 = vrcp.pop %v4780
        %v7607 = vmul.f32 %v5285, %v7606
        %v7608 = vrcp.pop %v4783
        %v7609 = vmul.f32 %v5290, %v7608
        %v7610 = vrcp.pop %v4786
        %v7611 = vmul.f32 %v5295, %v7610
        %v7612 = vrcp.pop %v4789
        %v7613 = vmul.f32 %v5300, %v7612
        %v7614 = vrcp.pop %v4792
        %v7615 = vmul.f32 %v5418, %v7614
        %v7616 = vrcp.pop %v4795
        %v7617 = vmul.f32 %v5423, %v7616
        %v7618 = vrcp.pop %v4798
        %v7619 = vmul.f32 %v5428, %v7618
        %v7620 = vrcp.pop %v4801
        %v7621 = vmul.f32 %v5433, %v7620
        %v7622 = vrcp.pop %v4804
        %v7623 = vmul.f32 %v5438, %v7622
        %v7624 = vrcp.pop %v4807
        %v7625 = vmul.f32 %v5443, %v7624
        %v7626 = vrcp.pop %v4810
        %v7627 = vmul.f32 %v5448, %v7626
        %v7628 = vrcp.pop %v4813
        %v7629 = vmul.f32 %v5453, %v7628
        %v7630 = vrcp.pop %v4816
        %v7631 = vmul.f32 %v5571, %v7630
        %v7632 = vrcp.pop %v4819
        %v7633 = vmul.f32 %v5576, %v7632
        %v7634 = vrcp.pop %v4822
        %v7635 = vmul.f32 %v5581, %v7634
        %v7636 = vrcp.pop %v4825
        %v7637 = vmul.f32 %v5586, %v7636
        %v7638 = vrcp.pop %v4828
        %v7639 = vmul.f32 %v5591, %v7638
        %v7640 = vrcp.pop %v4831
        %v7641 = vmul.f32 %v5596, %v7640
        %v7642 = vrcp.pop %v4834
        %v7643 = vmul.f32 %v5601, %v7642
        %v7644 = vrcp.pop %v4837
        %v7645 = vmul.f32 %v5606, %v7644
        %v7646 = vrcp.pop %v4840
        %v7647 = vmul.f32 %v5724, %v7646
        %v7648 = vrcp.pop %v4843
        %v7649 = vmul.f32 %v5729, %v7648
        %v7650 = vrcp.pop %v4846
        %v7651 = vmul.f32 %v5734, %v7650
        %v7652 = vrcp.pop %v4849
        %v7653 = vmul.f32 %v5739, %v7652
        %v7654 = vrcp.pop %v4852
        %v7655 = vmul.f32 %v5744, %v7654
        %v7656 = vrcp.pop %v4855
        %v7657 = vmul.f32 %v5749, %v7656
        %v7658 = vrcp.pop %v4858
        %v7659 = vmul.f32 %v5754, %v7658
        %v7660 = vrcp.pop %v4861
        %v7661 = vmul.f32 %v5759, %v7660
        %v7662 = vrcp.pop %v4864
        %v7663 = vmul.f32 %v5877, %v7662
        %v7664 = vrcp.pop %v4867
        %v7665 = vmul.f32 %v5882, %v7664
        %v7666 = vrcp.pop %v4870
        %v7667 = vmul.f32 %v5887, %v7666
        %v7668 = vrcp.pop %v4873
        %v7669 = vmul.f32 %v5892, %v7668
        %v7670 = vrcp.pop %v4876
        %v7671 = vmul.f32 %v5897, %v7670
        %v7672 = vrcp.pop %v4879
        %v7673 = vmul.f32 %v5902, %v7672
        %v7674 = vrcp.pop %v4882
        %v7675 = vmul.f32 %v5907, %v7674
        %v7676 = vrcp.pop %v4885
        %v7677 = vmul.f32 %v5912, %v7676
        %v7678 = vrcp.pop %v4888
        %v7679 = vmul.f32 %v6030, %v7678
        %v7680 = vrcp.pop %v4891
        %v7681 = vmul.f32 %v6035, %v7680
        %v7682 = vrcp.pop %v4894
        %v7683 = vmul.f32 %v6040, %v7682
        %v7684 = vrcp.pop %v4897
        %v7685 = vmul.f32 %v6045, %v7684
        %v7686 = vrcp.pop %v4900
        %v7687 = vmul.f32 %v6050, %v7686
        %v7688 = vrcp.pop %v4903
        %v7689 = vmul.f32 %v6055, %v7688
        %v7690 = vrcp.pop %v4906
        %v7691 = vmul.f32 %v6060, %v7690
        %v7692 = vrcp.pop %v4909
        %v7693 = vmul.f32 %v6065, %v7692
        %v7694 = vrcp.pop %v4912
        %v7695 = vmul.f32 %v6183, %v7694
        %v7696 = vrcp.pop %v4915
        %v7697 = vmul.f32 %v6188, %v7696
        %v7698 = vrcp.pop %v4918
        %v7699 = vmul.f32 %v6193, %v7698
        %v7700 = vrcp.pop %v4921
        %v7701 = vmul.f32 %v6198, %v7700
        %v7702 = vrcp.pop %v4924
        %v7703 = vmul.f32 %v6203, %v7702
        %v7704 = vrcp.pop %v4927
        %v7705 = vmul.f32 %v6208, %v7704
        %v7706 = vrcp.pop %v4930
        %v7707 = vmul.f32 %v6213, %v7706
        %v7708 = vrcp.pop %v4933
        %v7709 = vmul.f32 %v6218, %v7708
        %v7710 = vrcp.pop %v4936
        %v7711 = vmul.f32 %v6336, %v7710
        %v7712 = vrcp.pop %v4939
        %v7713 = vmul.f32 %v6341, %v7712
        %v7714 = vrcp.pop %v4942
        %v7715 = vmul.f32 %v6346, %v7714
        %v7716 = vrcp.pop %v4945
        %v7717 = vmul.f32 %v6351, %v7716
        %v7718 = vrcp.pop %v4948
        %v7719 = vmul.f32 %v6356, %v7718
        %v7720 = vrcp.pop %v4951
        %v7721 = vmul.f32 %v6361, %v7720
        %v7722 = vrcp.pop %v4954
        %v7723 = vmul.f32 %v6366, %v7722
        %v7724 = vrcp.pop %v4957
        %v7725 = vmul.f32 %v6371, %v7724
        %v7726 = vrcp.pop %v4960
        %v7727 = vmul.f32 %v6489, %v7726
        %v7728 = vrcp.pop %v4963
        %v7729 = vmul.f32 %v6494, %v7728
        %v7730 = vrcp.pop %v4966
        %v7731 = vmul.f32 %v6499, %v7730
        %v7732 = vrcp.pop %v4969
        %v7733 = vmul.f32 %v6504, %v7732
        %v7734 = vrcp.pop %v4972
        %v7735 = vmul.f32 %v6509, %v7734
        %v7736 = vrcp.pop %v4975
        %v7737 = vmul.f32 %v6514, %v7736
        %v7738 = vrcp.pop %v4978
        %v7739 = vmul.f32 %v6519, %v7738
        %v7740 = vrcp.pop %v4981
        %v7741 = vmul.f32 %v6524, %v7740
        %v7742 = vrcp.pop %v4984
        %v7743 = vmul.f32 %v6642, %v7742
        %v7744 = vrcp.pop %v4987
        %v7745 = vmul.f32 %v6647, %v7744
        %v7746 = vrcp.pop %v4990
        %v7747 = vmul.f32 %v6652, %v7746
        %v7748 = vrcp.pop %v4993
        %v7749 = vmul.f32 %v6657, %v7748
        %v7750 = vrcp.pop %v4996
        %v7751 = vmul.f32 %v6662, %v7750
        %v7752 = vrcp.pop %v4999
        %v7753 = vmul.f32 %v6667, %v7752
        %v7754 = vrcp.pop %v5002
        %v7755 = vmul.f32 %v6672, %v7754
        %v7756 = vrcp.pop %v5005
        %v7757 = vmul.f32 %v6677, %v7756
        %v7758 = vrcp.pop %v5008
        %v7759 = vmul.f32 %v6795, %v7758
        %v7760 = vrcp.pop %v5011
        %v7761 = vmul.f32 %v6800, %v7760
        %v7762 = vrcp.pop %v5014
        %v7763 = vmul.f32 %v6805, %v7762
        %v7764 = vrcp.pop %v5017
        %v7765 = vmul.f32 %v6810, %v7764
        %v7766 = vrcp.pop %v5020
        %v7767 = vmul.f32 %v6815, %v7766
        %v7768 = vrcp.pop %v5023
        %v7769 = vmul.f32 %v6820, %v7768
        %v7770 = vrcp.pop %v5026
        %v7771 = vmul.f32 %v6825, %v7770
        %v7772 = vrcp.pop %v5029
        %v7773 = vmul.f32 %v6830, %v7772
        %v7774 = vrcp.pop %v5032
        %v7775 = vmul.f32 %v6948, %v7774
        %v7776 = vrcp.pop %v5035
        %v7777 = vmul.f32 %v6953, %v7776
        %v7778 = vrcp.pop %v5038
        %v7779 = vmul.f32 %v6958, %v7778
        %v7780 = vrcp.pop %v5041
        %v7781 = vmul.f32 %v6963, %v7780
        %v7782 = vrcp.pop %v5044
        %v7783 = vmul.f32 %v6968, %v7782
        %v7784 = vrcp.pop %v5047
        %v7785 = vmul.f32 %v6973, %v7784
        %v7786 = vrcp.pop %v5050
        %v7787 = vmul.f32 %v6978, %v7786
        %v7788 = vrcp.pop %v5053
        %v7789 = vmul.f32 %v6983, %v7788
        %v7790 = vrcp.pop %v5056
        %v7791 = vmul.f32 %v7101, %v7790
        %v7792 = vrcp.pop %v5059
        %v7793 = vmul.f32 %v7106, %v7792
        %v7794 = vrcp.pop %v5062
        %v7795 = vmul.f32 %v7111, %v7794
        %v7796 = vrcp.pop %v5065
        %v7797 = vmul.f32 %v7116, %v7796
        %v7798 = vrcp.pop %v5068
        %v7799 = vmul.f32 %v7121, %v7798
        %v7800 = vrcp.pop %v5071
        %v7801 = vmul.f32 %v7126, %v7800
        %v7802 = vrcp.pop %v5074
        %v7803 = vmul.f32 %v7131, %v7802
        %v7804 = vrcp.pop %v5077
        %v7805 = vmul.f32 %v7136, %v7804
        %v7806 = vrcp.pop %v5080
        %v7807 = vmul.f32 %v7254, %v7806
        %v7808 = vrcp.pop %v5083
        %v7809 = vmul.f32 %v7259, %v7808
        %v7810 = vrcp.pop %v5086
        %v7811 = vmul.f32 %v7264, %v7810
        %v7812 = vrcp.pop %v5089
        %v7813 = vmul.f32 %v7269, %v7812
        %v7814 = vrcp.pop %v5092
        %v7815 = vmul.f32 %v7274, %v7814
        %v7816 = vrcp.pop %v5095
        %v7817 = vmul.f32 %v7279, %v7816
        %v7818 = vrcp.pop %v5098
        %v7819 = vmul.f32 %v7284, %v7818
        %v7820 = vrcp.pop %v5101
        %v7821 = vmul.f32 %v7289, %v7820
        %v7822 = vrcp.pop %v5104
        %v7823 = vmul.f32 %v7407, %v7822
        %v7824 = vrcp.pop %v5107
        %v7825 = vmul.f32 %v7412, %v7824
        %v7826 = vrcp.pop %v5110
        %v7827 = vmul.f32 %v7417, %v7826
        %v7828 = vrcp.pop %v5113
        %v7829 = vmul.f32 %v7422, %v7828
        %v7830 = vrcp.pop %v5116
        %v7831 = vmul.f32 %v7427, %v7830
        %v7832 = vrcp.pop %v5119
        %v7833 = vmul.f32 %v7432, %v7832
        %v7834 = vrcp.pop %v5122
        %v7835 = vmul.f32 %v7437, %v7834
        %v7836 = vrcp.pop %v5125
        %v7837 = vmul.f32 %v7442, %v7836
        %v7838 = vrcp.pop %v5128
        %v7839 = vmul.f32 %v7560, %v7838
        %v7840 = vrcp.pop %v5131
        %v7841 = vmul.f32 %v7565, %v7840
        %v7842 = vrcp.pop %v5134
        %v7843 = vmul.f32 %v7570, %v7842
        %v7844 = vrcp.pop %v5137
        %v7845 = vmul.f32 %v7575, %v7844
        %v7846 = vrcp.pop %v5140
        %v7847 = vmul.f32 %v7580, %v7846
        %v7848 = vrcp.pop %v5143
        %v7849 = vmul.f32 %v7585, %v7848
        %v7850 = vrcp.pop %v5146
        %v7851 = vmul.f32 %v7590, %v7850
        %v7852 = vrcp.pop %v5149
        %v7853 = vmul.f32 %v7595, %v7852
        %7886 = vrot.lane.b32.xlu0 %v7663, 8
        %v7887 = vpop.permute.xlu0 %7886
        %7888 = vrot.lane.b32.xlu0 %v7665, 8
        %v7889 = vpop.permute.xlu0 %7888
        %7890 = vrot.lane.b32.xlu0 %v7667, 8
        %v7891 = vpop.permute.xlu0 %7890
        %7892 = vrot.lane.b32.xlu0 %v7669, 8
        %v7893 = vpop.permute.xlu0 %7892
        %7894 = vrot.lane.b32.xlu0 %v7671, 8
        %v7895 = vpop.permute.xlu0 %7894
        %7896 = vrot.lane.b32.xlu0 %v7673, 8
        %v7897 = vpop.permute.xlu0 %7896
        %7898 = vrot.lane.b32.xlu0 %v7675, 8
        %v7899 = vpop.permute.xlu0 %7898
        %7900 = vrot.lane.b32.xlu0 %v7677, 8
        %v7901 = vpop.permute.xlu0 %7900
        %7902 = vrot.lane.b32.xlu0 %v7679, 8
        %v7903 = vpop.permute.xlu0 %7902
        %7904 = vrot.lane.b32.xlu0 %v7681, 8
        %v7905 = vpop.permute.xlu0 %7904
        %7906 = vrot.lane.b32.xlu0 %v7683, 8
        %v7907 = vpop.permute.xlu0 %7906
        %7908 = vrot.lane.b32.xlu0 %v7685, 8
        %v7909 = vpop.permute.xlu0 %7908
        %7910 = vrot.lane.b32.xlu0 %v7687, 8
        %v7911 = vpop.permute.xlu0 %7910
        %7912 = vrot.lane.b32.xlu0 %v7689, 8
        %v7913 = vpop.permute.xlu0 %7912
        %7914 = vrot.lane.b32.xlu0 %v7691, 8
        %v7915 = vpop.permute.xlu0 %7914
        %7916 = vrot.lane.b32.xlu0 %v7693, 8
        %v7917 = vpop.permute.xlu0 %7916
        %7918 = vrot.lane.b32.xlu0 %v7695, 8
        %v7919 = vpop.permute.xlu0 %7918
        %7920 = vrot.lane.b32.xlu0 %v7697, 8
        %v7921 = vpop.permute.xlu0 %7920
        %7922 = vrot.lane.b32.xlu0 %v7699, 8
        %v7923 = vpop.permute.xlu0 %7922
        %7924 = vrot.lane.b32.xlu0 %v7701, 8
        %v7925 = vpop.permute.xlu0 %7924
        %7926 = vrot.lane.b32.xlu0 %v7703, 8
        %v7927 = vpop.permute.xlu0 %7926
        %7928 = vrot.lane.b32.xlu0 %v7705, 8
        %v7929 = vpop.permute.xlu0 %7928
        %7930 = vrot.lane.b32.xlu0 %v7707, 8
        %v7931 = vpop.permute.xlu0 %7930
        %7932 = vrot.lane.b32.xlu0 %v7709, 8
        %v7933 = vpop.permute.xlu0 %7932
        %7934 = vrot.lane.b32.xlu0 %v7711, 8
        %v7935 = vpop.permute.xlu0 %7934
        %7936 = vrot.lane.b32.xlu0 %v7713, 8
        %v7937 = vpop.permute.xlu0 %7936
        %7938 = vrot.lane.b32.xlu0 %v7715, 8
        %v7939 = vpop.permute.xlu0 %7938
        %7940 = vrot.lane.b32.xlu0 %v7717, 8
        %v7941 = vpop.permute.xlu0 %7940
        %7942 = vrot.lane.b32.xlu0 %v7719, 8
        %v7943 = vpop.permute.xlu0 %7942
        %7944 = vrot.lane.b32.xlu0 %v7721, 8
        %v7945 = vpop.permute.xlu0 %7944
        %7946 = vrot.lane.b32.xlu0 %v7723, 8
        %v7947 = vpop.permute.xlu0 %7946
        %7948 = vrot.lane.b32.xlu0 %v7725, 8
        %v7949 = vpop.permute.xlu0 %7948
        %8014 = vrot.lane.b32.xlu0 %v7727, 16
        %v8015 = vpop.permute.xlu0 %8014
        %8016 = vrot.lane.b32.xlu0 %v7729, 16
        %v8017 = vpop.permute.xlu0 %8016
        %8018 = vrot.lane.b32.xlu0 %v7731, 16
        %v8019 = vpop.permute.xlu0 %8018
        %8020 = vrot.lane.b32.xlu0 %v7733, 16
        %v8021 = vpop.permute.xlu0 %8020
        %8022 = vrot.lane.b32.xlu0 %v7735, 16
        %v8023 = vpop.permute.xlu0 %8022
        %8024 = vrot.lane.b32.xlu0 %v7737, 16
        %v8025 = vpop.permute.xlu0 %8024
        %8026 = vrot.lane.b32.xlu0 %v7739, 16
        %v8027 = vpop.permute.xlu0 %8026
        %8028 = vrot.lane.b32.xlu0 %v7741, 16
        %v8029 = vpop.permute.xlu0 %8028
        %8030 = vrot.lane.b32.xlu0 %v7743, 16
        %v8031 = vpop.permute.xlu0 %8030
        %8032 = vrot.lane.b32.xlu0 %v7745, 16
        %v8033 = vpop.permute.xlu0 %8032
        %8034 = vrot.lane.b32.xlu0 %v7747, 16
        %v8035 = vpop.permute.xlu0 %8034
        %8036 = vrot.lane.b32.xlu0 %v7749, 16
        %v8037 = vpop.permute.xlu0 %8036
        %8038 = vrot.lane.b32.xlu0 %v7751, 16
        %v8039 = vpop.permute.xlu0 %8038
        %8040 = vrot.lane.b32.xlu0 %v7753, 16
        %v8041 = vpop.permute.xlu0 %8040
        %8042 = vrot.lane.b32.xlu0 %v7755, 16
        %v8043 = vpop.permute.xlu0 %8042
        %8044 = vrot.lane.b32.xlu0 %v7757, 16
        %v8045 = vpop.permute.xlu0 %8044
        %8046 = vrot.lane.b32.xlu0 %v7759, 16
        %v8047 = vpop.permute.xlu0 %8046
        %8048 = vrot.lane.b32.xlu0 %v7761, 16
        %v8049 = vpop.permute.xlu0 %8048
        %8050 = vrot.lane.b32.xlu0 %v7763, 16
        %v8051 = vpop.permute.xlu0 %8050
        %8052 = vrot.lane.b32.xlu0 %v7765, 16
        %v8053 = vpop.permute.xlu0 %8052
        %8054 = vrot.lane.b32.xlu0 %v7767, 16
        %v8055 = vpop.permute.xlu0 %8054
        %8056 = vrot.lane.b32.xlu0 %v7769, 16
        %v8057 = vpop.permute.xlu0 %8056
        %8058 = vrot.lane.b32.xlu0 %v7771, 16
        %v8059 = vpop.permute.xlu0 %8058
        %8060 = vrot.lane.b32.xlu0 %v7773, 16
        %v8061 = vpop.permute.xlu0 %8060
        %8062 = vrot.lane.b32.xlu0 %v7775, 16
        %v8063 = vpop.permute.xlu0 %8062
        %8064 = vrot.lane.b32.xlu0 %v7777, 16
        %v8065 = vpop.permute.xlu0 %8064
        %8066 = vrot.lane.b32.xlu0 %v7779, 16
        %v8067 = vpop.permute.xlu0 %8066
        %8068 = vrot.lane.b32.xlu0 %v7781, 16
        %v8069 = vpop.permute.xlu0 %8068
        %8070 = vrot.lane.b32.xlu0 %v7783, 16
        %v8071 = vpop.permute.xlu0 %8070
        %8072 = vrot.lane.b32.xlu0 %v7785, 16
        %v8073 = vpop.permute.xlu0 %8072
        %8074 = vrot.lane.b32.xlu0 %v7787, 16
        %v8075 = vpop.permute.xlu0 %8074
        %8076 = vrot.lane.b32.xlu0 %v7789, 16
        %v8077 = vpop.permute.xlu0 %8076
        %8142 = vrot.lane.b32.xlu0 %v7791, 24
        %v8143 = vpop.permute.xlu0 %8142
        %8144 = vrot.lane.b32.xlu0 %v7793, 24
        %v8145 = vpop.permute.xlu0 %8144
        %8146 = vrot.lane.b32.xlu0 %v7795, 24
        %v8147 = vpop.permute.xlu0 %8146
        %8148 = vrot.lane.b32.xlu0 %v7797, 24
        %v8149 = vpop.permute.xlu0 %8148
        %8150 = vrot.lane.b32.xlu0 %v7799, 24
        %v8151 = vpop.permute.xlu0 %8150
        %8152 = vrot.lane.b32.xlu0 %v7801, 24
        %v8153 = vpop.permute.xlu0 %8152
        %8154 = vrot.lane.b32.xlu0 %v7803, 24
        %v8155 = vpop.permute.xlu0 %8154
        %8156 = vrot.lane.b32.xlu0 %v7805, 24
        %v8157 = vpop.permute.xlu0 %8156
        %8158 = vrot.lane.b32.xlu0 %v7807, 24
        %v8159 = vpop.permute.xlu0 %8158
        %8160 = vrot.lane.b32.xlu0 %v7809, 24
        %v8161 = vpop.permute.xlu0 %8160
        %8162 = vrot.lane.b32.xlu0 %v7811, 24
        %v8163 = vpop.permute.xlu0 %8162
        %8164 = vrot.lane.b32.xlu0 %v7813, 24
        %v8165 = vpop.permute.xlu0 %8164
        %8166 = vrot.lane.b32.xlu0 %v7815, 24
        %v8167 = vpop.permute.xlu0 %8166
        %8168 = vrot.lane.b32.xlu0 %v7817, 24
        %v8169 = vpop.permute.xlu0 %8168
        %8170 = vrot.lane.b32.xlu0 %v7819, 24
        %v8171 = vpop.permute.xlu0 %8170
        %8172 = vrot.lane.b32.xlu0 %v7821, 24
        %v8173 = vpop.permute.xlu0 %8172
        %8174 = vrot.lane.b32.xlu0 %v7823, 24
        %v8175 = vpop.permute.xlu0 %8174
        %8176 = vrot.lane.b32.xlu0 %v7825, 24
        %v8177 = vpop.permute.xlu0 %8176
        %8178 = vrot.lane.b32.xlu0 %v7827, 24
        %v8179 = vpop.permute.xlu0 %8178
        %8180 = vrot.lane.b32.xlu0 %v7829, 24
        %v8181 = vpop.permute.xlu0 %8180
        %8182 = vrot.lane.b32.xlu0 %v7831, 24
        %v8183 = vpop.permute.xlu0 %8182
        %8184 = vrot.lane.b32.xlu0 %v7833, 24
        %v8185 = vpop.permute.xlu0 %8184
        %8186 = vrot.lane.b32.xlu0 %v7835, 24
        %v8187 = vpop.permute.xlu0 %8186
        %8188 = vrot.lane.b32.xlu0 %v7837, 24
        %v8189 = vpop.permute.xlu0 %8188
        %8190 = vrot.lane.b32.xlu0 %v7839, 24
        %v8191 = vpop.permute.xlu0 %8190
        %8192 = vrot.lane.b32.xlu0 %v7841, 24
        %v8193 = vpop.permute.xlu0 %8192
        %8194 = vrot.lane.b32.xlu0 %v7843, 24
        %v8195 = vpop.permute.xlu0 %8194
        %8196 = vrot.lane.b32.xlu0 %v7845, 24
        %v8197 = vpop.permute.xlu0 %8196
        %8198 = vrot.lane.b32.xlu0 %v7847, 24
        %v8199 = vpop.permute.xlu0 %8198
        %8200 = vrot.lane.b32.xlu0 %v7849, 24
        %v8201 = vpop.permute.xlu0 %8200
        %8202 = vrot.lane.b32.xlu0 %v7851, 24
        %v8203 = vpop.permute.xlu0 %8202
        %8204 = vrot.lane.b32.xlu0 %v7853, 24
        %v8205 = vpop.permute.xlu0 %8204
        %v8238 = vsel %vm1404, %v7599, %v7887
        %v8239 = vsel %vm1404, %v7601, %v7889
        %v8240 = vsel %vm1404, %v7603, %v7891
        %v8241 = vsel %vm1404, %v7605, %v7893
        %v8242 = vsel %vm1404, %v7607, %v7895
        %v8243 = vsel %vm1404, %v7609, %v7897
        %v8244 = vsel %vm1404, %v7611, %v7899
        %v8245 = vsel %vm1404, %v7613, %v7901
        %v8246 = vsel %vm1404, %v7615, %v7903
        %v8247 = vsel %vm1404, %v7617, %v7905
        %v8248 = vsel %vm1404, %v7619, %v7907
        %v8249 = vsel %vm1404, %v7621, %v7909
        %v8250 = vsel %vm1404, %v7623, %v7911
        %v8251 = vsel %vm1404, %v7625, %v7913
        %v8252 = vsel %vm1404, %v7627, %v7915
        %v8253 = vsel %vm1404, %v7629, %v7917
        %v8254 = vsel %vm1404, %v7631, %v7919
        %v8255 = vsel %vm1404, %v7633, %v7921
        %v8256 = vsel %vm1404, %v7635, %v7923
        %v8257 = vsel %vm1404, %v7637, %v7925
        %v8258 = vsel %vm1404, %v7639, %v7927
        %v8259 = vsel %vm1404, %v7641, %v7929
        %v8260 = vsel %vm1404, %v7643, %v7931
        %v8261 = vsel %vm1404, %v7645, %v7933
        %v8262 = vsel %vm1404, %v7647, %v7935
        %v8263 = vsel %vm1404, %v7649, %v7937
        %v8264 = vsel %vm1404, %v7651, %v7939
        %v8265 = vsel %vm1404, %v7653, %v7941
        %v8266 = vsel %vm1404, %v7655, %v7943
        %v8267 = vsel %vm1404, %v7657, %v7945
        %v8268 = vsel %vm1404, %v7659, %v7947
        %v8269 = vsel %vm1404, %v7661, %v7949
        %vm8270 = vcmask 130048
        %v8271 = vsel %vm8270, %v8238, %v8015
        %v8272 = vsel %vm8270, %v8239, %v8017
        %v8273 = vsel %vm8270, %v8240, %v8019
        %v8274 = vsel %vm8270, %v8241, %v8021
        %v8275 = vsel %vm8270, %v8242, %v8023
        %v8276 = vsel %vm8270, %v8243, %v8025
        %v8277 = vsel %vm8270, %v8244, %v8027
        %v8278 = vsel %vm8270, %v8245, %v8029
        %v8279 = vsel %vm8270, %v8246, %v8031
        %v8280 = vsel %vm8270, %v8247, %v8033
        %v8281 = vsel %vm8270, %v8248, %v8035
        %v8282 = vsel %vm8270, %v8249, %v8037
        %v8283 = vsel %vm8270, %v8250, %v8039
        %v8284 = vsel %vm8270, %v8251, %v8041
        %v8285 = vsel %vm8270, %v8252, %v8043
        %v8286 = vsel %vm8270, %v8253, %v8045
        %v8287 = vsel %vm8270, %v8254, %v8047
        %v8288 = vsel %vm8270, %v8255, %v8049
        %v8289 = vsel %vm8270, %v8256, %v8051
        %v8290 = vsel %vm8270, %v8257, %v8053
        %v8291 = vsel %vm8270, %v8258, %v8055
        %v8292 = vsel %vm8270, %v8259, %v8057
        %v8293 = vsel %vm8270, %v8260, %v8059
        %v8294 = vsel %vm8270, %v8261, %v8061
        %v8295 = vsel %vm8270, %v8262, %v8063
        %v8296 = vsel %vm8270, %v8263, %v8065
        %v8297 = vsel %vm8270, %v8264, %v8067
        %v8298 = vsel %vm8270, %v8265, %v8069
        %v8299 = vsel %vm8270, %v8266, %v8071
        %v8300 = vsel %vm8270, %v8267, %v8073
        %v8301 = vsel %vm8270, %v8268, %v8075
        %v8302 = vsel %vm8270, %v8269, %v8077
        %vm8303 = vcmask 195584
        %v8304 = vsel %vm8303, %v8271, %v8143
        %v8305 = vsel %vm8303, %v8272, %v8145
        %v8306 = vsel %vm8303, %v8273, %v8147
        %v8307 = vsel %vm8303, %v8274, %v8149
        %v8308 = vsel %vm8303, %v8275, %v8151
        %v8309 = vsel %vm8303, %v8276, %v8153
        %v8310 = vsel %vm8303, %v8277, %v8155
        %v8311 = vsel %vm8303, %v8278, %v8157
        %v8312 = vsel %vm8303, %v8279, %v8159
        %v8313 = vsel %vm8303, %v8280, %v8161
        %v8314 = vsel %vm8303, %v8281, %v8163
        %v8315 = vsel %vm8303, %v8282, %v8165
        %v8316 = vsel %vm8303, %v8283, %v8167
        %v8317 = vsel %vm8303, %v8284, %v8169
        %v8318 = vsel %vm8303, %v8285, %v8171
        %v8319 = vsel %vm8303, %v8286, %v8173
        %v8320 = vsel %vm8303, %v8287, %v8175
        %v8321 = vsel %vm8303, %v8288, %v8177
        %v8322 = vsel %vm8303, %v8289, %v8179
        %v8323 = vsel %vm8303, %v8290, %v8181
        %v8324 = vsel %vm8303, %v8291, %v8183
        %v8325 = vsel %vm8303, %v8292, %v8185
        %v8326 = vsel %vm8303, %v8293, %v8187
        %v8327 = vsel %vm8303, %v8294, %v8189
        %v8328 = vsel %vm8303, %v8295, %v8191
        %v8329 = vsel %vm8303, %v8296, %v8193
        %v8330 = vsel %vm8303, %v8297, %v8195
        %v8331 = vsel %vm8303, %v8298, %v8197
        %v8332 = vsel %vm8303, %v8299, %v8199
        %v8333 = vsel %vm8303, %v8300, %v8201
        %v8334 = vsel %vm8303, %v8301, %v8203
        %v8335 = vsel %vm8303, %v8302, %v8205
        %v8336 = vld [vmem:[%s4] sm:$0xff]
        %v8337 = vld [vmem:[%s4 + $0x8] sm:$0xff]
        %v8338 = vld [vmem:[%s4 + $0x10] sm:$0xff]
        %v8339 = vld [vmem:[%s4 + $0x18] sm:$0xff]
        %v8340 = vlaneseq
        %v8341 = vshrl.u32 %v8340, 7
        %v8342 = vsub.s32 3, %v8341
        %v8343 = vrot.slane %v312, %v8342
        %v8345 = vsel %vm345, %v8304, 0
        %v8348 = vsel %vm345, %v8305, 0
        %v8351 = vsel %vm345, %v8306, 0
        %v8354 = vsel %vm345, %v8307, 0
        %v8357 = vsel %vm345, %v8308, 0
        %v8360 = vsel %vm345, %v8309, 0
        %v8363 = vsel %vm345, %v8310, 0
        %v8366 = vsel %vm345, %v8311, 0
        %v8369 = vsel %vm345, %v8312, 0
        %v8372 = vsel %vm345, %v8313, 0
        %v8375 = vsel %vm345, %v8314, 0
        %v8378 = vsel %vm345, %v8315, 0
        %v8381 = vsel %vm345, %v8316, 0
        %v8384 = vsel %vm345, %v8317, 0
        %v8387 = vsel %vm345, %v8318, 0
        %v8390 = vsel %vm345, %v8319, 0
        %v8393 = vsel %vm345, %v8320, 0
        %v8396 = vsel %vm345, %v8321, 0
        %v8399 = vsel %vm345, %v8322, 0
        %v8402 = vsel %vm345, %v8323, 0
        %v8405 = vsel %vm345, %v8324, 0
        %v8408 = vsel %vm345, %v8325, 0
        %v8411 = vsel %vm345, %v8326, 0
        %v8414 = vsel %vm345, %v8327, 0
        %v8417 = vsel %vm345, %v8328, 0
        %v8420 = vsel %vm345, %v8329, 0
        %v8423 = vsel %vm345, %v8330, 0
        %v8426 = vsel %vm345, %v8331, 0
        %v8429 = vsel %vm345, %v8332, 0
        %v8432 = vsel %vm345, %v8333, 0
        %v8435 = vsel %vm345, %v8334, 0
        %v8438 = vsel %vm345, %v8335, 0
        %8440 = vmatprep.subr.mxu0 0.0
        %8441 = vmatpush1.msra.mxu0 0.0
        %8442 = vmatprep.subr.mxu0 0.0
        %8443 = vmatpush1.msra.mxu0 0.0
        %8444 = vmatprep.subr.mxu0 0.0
        %8445 = vmatpush1.msra.mxu0 0.0
        %8446 = vmatprep.subr.mxu0 0.0
        %8447 = vmatpush1.msra.mxu0 0.0
        %8448 = vmatprep.subr.mxu0 0.0
        %8449 = vmatpush1.msra.mxu0 0.0
        %8450 = vmatprep.subr.mxu0 0.0
        %8451 = vmatpush1.msra.mxu0 0.0
        %8452 = vmatprep.subr.mxu0 0.0
        %8453 = vmatpush1.msra.mxu0 0.0
        %8454 = vmatprep.subr.mxu0 0.0
        %8455 = vmatpush1.msra.mxu0 0.0
        %8456 = vmatprep.subr.mxu0 0.0
        %8457 = vmatpush1.msra.mxu0 0.0
        %8458 = vmatprep.subr.mxu0 0.0
        %8459 = vmatpush1.msra.mxu0 0.0
        %8460 = vmatprep.subr.mxu0 0.0
        %8461 = vmatpush1.msra.mxu0 0.0
        %8462 = vmatprep.subr.mxu0 0.0
        %8463 = vmatpush1.msra.mxu0 0.0
        %8464 = vmatprep.subr.mxu0 0.0
        %8465 = vmatpush1.msra.mxu0 %v8339
        %8466 = vmatprep.subr.mxu0 0.0
        %8467 = vmatpush1.msra.mxu0 %v8338
        %8468 = vmatprep.subr.mxu0 0.0
        %8469 = vmatpush1.msra.mxu0 %v8337
        %8470 = vmatprep.subr.mxu0 0.0
        %8471 = vmatpush1.msra.mxu0 %v8336
        %8472 = vmatprep.subr.mxu0 0.0
        %8473 = vmatpush2.msra.mxu0 0.0
        %8474 = vmatprep.subr.mxu0 0.0
        %8475 = vmatpush2.msra.mxu0 0.0
        %8476 = vmatprep.subr.mxu0 0.0
        %8477 = vmatpush2.msra.mxu0 0.0
        %8478 = vmatprep.subr.mxu0 0.0
        %8479 = vmatpush2.msra.mxu0 0.0
        %8480 = vmatprep.subr.mxu0 0.0
        %8481 = vmatpush2.msra.mxu0 0.0
        %8482 = vmatprep.subr.mxu0 0.0
        %8483 = vmatpush2.msra.mxu0 0.0
        %8484 = vmatprep.subr.mxu0 0.0
        %8485 = vmatpush2.msra.mxu0 0.0
        %8486 = vmatprep.subr.mxu0 0.0
        %8487 = vmatpush2.msra.mxu0 0.0
        %8488 = vmatprep.subr.mxu0 0.0
        %8489 = vmatpush2.msra.mxu0 0.0
        %8490 = vmatprep.subr.mxu0 0.0
        %8491 = vmatpush2.msra.mxu0 0.0
        %8492 = vmatprep.subr.mxu0 0.0
        %8493 = vmatpush2.msra.mxu0 0.0
        %8494 = vmatprep.subr.mxu0 0.0
        %8495 = vmatpush2.msra.mxu0 0.0
        %8496 = vmatprep.subr.mxu0 0.0
        %8497 = vmatpush2.msra.mxu0 0.0
        %8498 = vmatprep.subr.mxu0 0.0
        %8499 = vmatpush2.msra.mxu0 0.0
        %8500 = vmatprep.subr.mxu0 0.0
        %8501 = vmatpush2.msra.mxu0 0.0
        %8502 = vmatprep.subr.mxu0 0.0
        %8503 = vmatpush2.msra.mxu0 0.0
        %8504 = vmatprep.mubr.f32.mxu0 0.0
        %8505 = vmatmul.mubr.f32.gmra.mxu0 %v8345
        %v8506 = vpop.f32.mrf.mxu0
        %v8507 = vadd.f32 %v8343, %v8506
        %v8508 = vpop.f32.mrf.mxu0
        %8509 = vmatprep.mubr.f32.mxu0 0.0
        %8510 = vmatmul.mubr.f32.gmra.mxu0 %v8348
        %v8511 = vpop.f32.mrf.mxu0
        %v8512 = vadd.f32 %v8343, %v8511
        %v8513 = vpop.f32.mrf.mxu0
        %8514 = vmatprep.mubr.f32.mxu0 0.0
        %8515 = vmatmul.mubr.f32.gmra.mxu0 %v8351
        %v8516 = vpop.f32.mrf.mxu0
        %v8517 = vadd.f32 %v8343, %v8516
        %v8518 = vpop.f32.mrf.mxu0
        %8519 = vmatprep.mubr.f32.mxu0 0.0
        %8520 = vmatmul.mubr.f32.gmra.mxu0 %v8354
        %v8521 = vpop.f32.mrf.mxu0
        %v8522 = vadd.f32 %v8343, %v8521
        %v8523 = vpop.f32.mrf.mxu0
        %8524 = vmatprep.mubr.f32.mxu0 0.0
        %8525 = vmatmul.mubr.f32.gmra.mxu0 %v8357
        %v8526 = vpop.f32.mrf.mxu0
        %v8527 = vadd.f32 %v8343, %v8526
        %v8528 = vpop.f32.mrf.mxu0
        %8529 = vmatprep.mubr.f32.mxu0 0.0
        %8530 = vmatmul.mubr.f32.gmra.mxu0 %v8360
        %v8531 = vpop.f32.mrf.mxu0
        %v8532 = vadd.f32 %v8343, %v8531
        %v8533 = vpop.f32.mrf.mxu0
        %8534 = vmatprep.mubr.f32.mxu0 0.0
        %8535 = vmatmul.mubr.f32.gmra.mxu0 %v8363
        %v8536 = vpop.f32.mrf.mxu0
        %v8537 = vadd.f32 %v8343, %v8536
        %v8538 = vpop.f32.mrf.mxu0
        %8539 = vmatprep.mubr.f32.mxu0 0.0
        %8540 = vmatmul.mubr.f32.gmra.mxu0 %v8366
        %v8541 = vpop.f32.mrf.mxu0
        %v8542 = vadd.f32 %v8343, %v8541
        %v8543 = vpop.f32.mrf.mxu0
        %8544 = vmatprep.mubr.f32.mxu0 0.0
        %8545 = vmatmul.mubr.f32.gmra.mxu0 %v8369
        %v8546 = vpop.f32.mrf.mxu0
        %v8547 = vadd.f32 %v8343, %v8546
        %v8548 = vpop.f32.mrf.mxu0
        %8549 = vmatprep.mubr.f32.mxu0 0.0
        %8550 = vmatmul.mubr.f32.gmra.mxu0 %v8372
        %v8551 = vpop.f32.mrf.mxu0
        %v8552 = vadd.f32 %v8343, %v8551
        %v8553 = vpop.f32.mrf.mxu0
        %8554 = vmatprep.mubr.f32.mxu0 0.0
        %8555 = vmatmul.mubr.f32.gmra.mxu0 %v8375
        %v8556 = vpop.f32.mrf.mxu0
        %v8557 = vadd.f32 %v8343, %v8556
        %v8558 = vpop.f32.mrf.mxu0
        %8559 = vmatprep.mubr.f32.mxu0 0.0
        %8560 = vmatmul.mubr.f32.gmra.mxu0 %v8378
        %v8561 = vpop.f32.mrf.mxu0
        %v8562 = vadd.f32 %v8343, %v8561
        %v8563 = vpop.f32.mrf.mxu0
        %8564 = vmatprep.mubr.f32.mxu0 0.0
        %8565 = vmatmul.mubr.f32.gmra.mxu0 %v8381
        %v8566 = vpop.f32.mrf.mxu0
        %v8567 = vadd.f32 %v8343, %v8566
        %v8568 = vpop.f32.mrf.mxu0
        %8569 = vmatprep.mubr.f32.mxu0 0.0
        %8570 = vmatmul.mubr.f32.gmra.mxu0 %v8384
        %v8571 = vpop.f32.mrf.mxu0
        %v8572 = vadd.f32 %v8343, %v8571
        %v8573 = vpop.f32.mrf.mxu0
        %8574 = vmatprep.mubr.f32.mxu0 0.0
        %8575 = vmatmul.mubr.f32.gmra.mxu0 %v8387
        %v8576 = vpop.f32.mrf.mxu0
        %v8577 = vadd.f32 %v8343, %v8576
        %v8578 = vpop.f32.mrf.mxu0
        %8579 = vmatprep.mubr.f32.mxu0 0.0
        %8580 = vmatmul.mubr.f32.gmra.mxu0 %v8390
        %v8581 = vpop.f32.mrf.mxu0
        %v8582 = vadd.f32 %v8343, %v8581
        %v8583 = vpop.f32.mrf.mxu0
        %8584 = vmatprep.mubr.f32.mxu0 0.0
        %8585 = vmatmul.mubr.f32.gmra.mxu0 %v8393
        %v8586 = vpop.f32.mrf.mxu0
        %v8587 = vadd.f32 %v8343, %v8586
        %v8588 = vpop.f32.mrf.mxu0
        %8589 = vmatprep.mubr.f32.mxu0 0.0
        %8590 = vmatmul.mubr.f32.gmra.mxu0 %v8396
        %v8591 = vpop.f32.mrf.mxu0
        %v8592 = vadd.f32 %v8343, %v8591
        %v8593 = vpop.f32.mrf.mxu0
        %8594 = vmatprep.mubr.f32.mxu0 0.0
        %8595 = vmatmul.mubr.f32.gmra.mxu0 %v8399
        %v8596 = vpop.f32.mrf.mxu0
        %v8597 = vadd.f32 %v8343, %v8596
        %v8598 = vpop.f32.mrf.mxu0
        %8599 = vmatprep.mubr.f32.mxu0 0.0
        %8600 = vmatmul.mubr.f32.gmra.mxu0 %v8402
        %v8601 = vpop.f32.mrf.mxu0
        %v8602 = vadd.f32 %v8343, %v8601
        %v8603 = vpop.f32.mrf.mxu0
        %8604 = vmatprep.mubr.f32.mxu0 0.0
        %8605 = vmatmul.mubr.f32.gmra.mxu0 %v8405
        %v8606 = vpop.f32.mrf.mxu0
        %v8607 = vadd.f32 %v8343, %v8606
        %v8608 = vpop.f32.mrf.mxu0
        %8609 = vmatprep.mubr.f32.mxu0 0.0
        %8610 = vmatmul.mubr.f32.gmra.mxu0 %v8408
        %v8611 = vpop.f32.mrf.mxu0
        %v8612 = vadd.f32 %v8343, %v8611
        %v8613 = vpop.f32.mrf.mxu0
        %8614 = vmatprep.mubr.f32.mxu0 0.0
        %8615 = vmatmul.mubr.f32.gmra.mxu0 %v8411
        %v8616 = vpop.f32.mrf.mxu0
        %v8617 = vadd.f32 %v8343, %v8616
        %v8618 = vpop.f32.mrf.mxu0
        %8619 = vmatprep.mubr.f32.mxu0 0.0
        %8620 = vmatmul.mubr.f32.gmra.mxu0 %v8414
        %v8621 = vpop.f32.mrf.mxu0
        %v8622 = vadd.f32 %v8343, %v8621
        %v8623 = vpop.f32.mrf.mxu0
        %8624 = vmatprep.mubr.f32.mxu0 0.0
        %8625 = vmatmul.mubr.f32.gmra.mxu0 %v8417
        %v8626 = vpop.f32.mrf.mxu0
        %v8627 = vadd.f32 %v8343, %v8626
        %v8628 = vpop.f32.mrf.mxu0
        %8629 = vmatprep.mubr.f32.mxu0 0.0
        %8630 = vmatmul.mubr.f32.gmra.mxu0 %v8420
        %v8631 = vpop.f32.mrf.mxu0
        %v8632 = vadd.f32 %v8343, %v8631
        %v8633 = vpop.f32.mrf.mxu0
        %8634 = vmatprep.mubr.f32.mxu0 0.0
        %8635 = vmatmul.mubr.f32.gmra.mxu0 %v8423
        %v8636 = vpop.f32.mrf.mxu0
        %v8637 = vadd.f32 %v8343, %v8636
        %v8638 = vpop.f32.mrf.mxu0
        %8639 = vmatprep.mubr.f32.mxu0 0.0
        %8640 = vmatmul.mubr.f32.gmra.mxu0 %v8426
        %v8641 = vpop.f32.mrf.mxu0
        %v8642 = vadd.f32 %v8343, %v8641
        %v8643 = vpop.f32.mrf.mxu0
        %8644 = vmatprep.mubr.f32.mxu0 0.0
        %8645 = vmatmul.mubr.f32.gmra.mxu0 %v8429
        %v8646 = vpop.f32.mrf.mxu0
        %v8647 = vadd.f32 %v8343, %v8646
        %v8648 = vpop.f32.mrf.mxu0
        %8649 = vmatprep.mubr.f32.mxu0 0.0
        %8650 = vmatmul.mubr.f32.gmra.mxu0 %v8432
        %v8651 = vpop.f32.mrf.mxu0
        %v8652 = vadd.f32 %v8343, %v8651
        %v8653 = vpop.f32.mrf.mxu0
        %8654 = vmatprep.mubr.f32.mxu0 0.0
        %8655 = vmatmul.mubr.f32.gmra.mxu0 %v8435
        %v8656 = vpop.f32.mrf.mxu0
        %v8657 = vadd.f32 %v8343, %v8656
        %v8658 = vpop.f32.mrf.mxu0
        %8659 = vmatprep.mubr.f32.mxu0 0.0
        %8660 = vmatmul.mubr.f32.gmra.mxu0 %v8438
        %v8661 = vpop.f32.mrf.mxu0
        %v8662 = vadd.f32 %v8343, %v8661
        %v8663 = vpop.f32.mrf.mxu0
        %8664 = vdwg.mxu0
        %v8665 = vadd.f32 %v313, %v8507
        %v8666 = vadd.f32 %v315, %v8512
        %v8667 = vadd.f32 %v317, %v8517
        %v8668 = vadd.f32 %v319, %v8522
        %v8669 = vadd.f32 %v321, %v8527
        %v8670 = vadd.f32 %v323, %v8532
        %v8671 = vadd.f32 %v325, %v8537
        %v8672 = vadd.f32 %v327, %v8542
        %v8673 = vadd.f32 %v314, %v8547
        %v8674 = vadd.f32 %v316, %v8552
        %v8675 = vadd.f32 %v318, %v8557
        %v8676 = vadd.f32 %v320, %v8562
        %v8677 = vadd.f32 %v322, %v8567
        %v8678 = vadd.f32 %v324, %v8572
        %v8679 = vadd.f32 %v326, %v8577
        %v8680 = vadd.f32 %v328, %v8582
        %v8681 = vadd.f32 %v329, %v8587
        %v8682 = vadd.f32 %v331, %v8592
        %v8683 = vadd.f32 %v333, %v8597
        %v8684 = vadd.f32 %v335, %v8602
        %v8685 = vadd.f32 %v337, %v8607
        %v8686 = vadd.f32 %v339, %v8612
        %v8687 = vadd.f32 %v341, %v8617
        %v8688 = vadd.f32 %v343, %v8622
        %v8689 = vadd.f32 %v330, %v8627
        %v8690 = vadd.f32 %v332, %v8632
        %v8691 = vadd.f32 %v334, %v8637
        %v8692 = vadd.f32 %v336, %v8642
        %v8693 = vadd.f32 %v338, %v8647
        %v8694 = vadd.f32 %v340, %v8652
        %v8695 = vadd.f32 %v342, %v8657
        %v8696 = vadd.f32 %v344, %v8662
        %v8697 = vsel %vm345, %v8665, 0.0
        %8698 = vadd.xlane.f32.xlu0 %v8697
        %v8699 = vpop.xlane.xlu0 %8698
        %v8700 = vsel %vm345, %v8666, 0.0
        %8701 = vadd.xlane.f32.xlu0 %v8700
        %v8702 = vpop.xlane.xlu0 %8701
        %v8703 = vsel %vm345, %v8667, 0.0
        %8704 = vadd.xlane.f32.xlu0 %v8703
        %v8705 = vpop.xlane.xlu0 %8704
        %v8706 = vsel %vm345, %v8668, 0.0
        %8707 = vadd.xlane.f32.xlu0 %v8706
        %v8708 = vpop.xlane.xlu0 %8707
        %v8709 = vsel %vm345, %v8669, 0.0
        %8710 = vadd.xlane.f32.xlu0 %v8709
        %v8711 = vpop.xlane.xlu0 %8710
        %v8712 = vsel %vm345, %v8670, 0.0
        %8713 = vadd.xlane.f32.xlu0 %v8712
        %v8714 = vpop.xlane.xlu0 %8713
        %v8715 = vsel %vm345, %v8671, 0.0
        %8716 = vadd.xlane.f32.xlu0 %v8715
        %v8717 = vpop.xlane.xlu0 %8716
        %v8718 = vsel %vm345, %v8672, 0.0
        %8719 = vadd.xlane.f32.xlu0 %v8718
        %v8720 = vpop.xlane.xlu0 %8719
        %v8721 = vsel %vm345, %v8673, 0.0
        %8722 = vadd.xlane.f32.xlu0 %v8721
        %v8723 = vpop.xlane.xlu0 %8722
        %v8724 = vsel %vm345, %v8674, 0.0
        %8725 = vadd.xlane.f32.xlu0 %v8724
        %v8726 = vpop.xlane.xlu0 %8725
        %v8727 = vsel %vm345, %v8675, 0.0
        %8728 = vadd.xlane.f32.xlu0 %v8727
        %v8729 = vpop.xlane.xlu0 %8728
        %v8730 = vsel %vm345, %v8676, 0.0
        %8731 = vadd.xlane.f32.xlu0 %v8730
        %v8732 = vpop.xlane.xlu0 %8731
        %v8733 = vsel %vm345, %v8677, 0.0
        %8734 = vadd.xlane.f32.xlu0 %v8733
        %v8735 = vpop.xlane.xlu0 %8734
        %v8736 = vsel %vm345, %v8678, 0.0
        %8737 = vadd.xlane.f32.xlu0 %v8736
        %v8738 = vpop.xlane.xlu0 %8737
        %v8739 = vsel %vm345, %v8679, 0.0
        %8740 = vadd.xlane.f32.xlu0 %v8739
        %v8741 = vpop.xlane.xlu0 %8740
        %v8742 = vsel %vm345, %v8680, 0.0
        %8743 = vadd.xlane.f32.xlu0 %v8742
        %v8744 = vpop.xlane.xlu0 %8743
        %v8745 = vsel %vm345, %v8681, 0.0
        %8746 = vadd.xlane.f32.xlu0 %v8745
        %v8747 = vpop.xlane.xlu0 %8746
        %v8748 = vsel %vm345, %v8682, 0.0
        %8749 = vadd.xlane.f32.xlu0 %v8748
        %v8750 = vpop.xlane.xlu0 %8749
        %v8751 = vsel %vm345, %v8683, 0.0
        %8752 = vadd.xlane.f32.xlu0 %v8751
        %v8753 = vpop.xlane.xlu0 %8752
        %v8754 = vsel %vm345, %v8684, 0.0
        %8755 = vadd.xlane.f32.xlu0 %v8754
        %v8756 = vpop.xlane.xlu0 %8755
        %v8757 = vsel %vm345, %v8685, 0.0
        %8758 = vadd.xlane.f32.xlu0 %v8757
        %v8759 = vpop.xlane.xlu0 %8758
        %v8760 = vsel %vm345, %v8686, 0.0
        %8761 = vadd.xlane.f32.xlu0 %v8760
        %v8762 = vpop.xlane.xlu0 %8761
        %v8763 = vsel %vm345, %v8687, 0.0
        %8764 = vadd.xlane.f32.xlu0 %v8763
        %v8765 = vpop.xlane.xlu0 %8764
        %v8766 = vsel %vm345, %v8688, 0.0
        %8767 = vadd.xlane.f32.xlu0 %v8766
        %v8768 = vpop.xlane.xlu0 %8767
        %v8769 = vsel %vm345, %v8689, 0.0
        %8770 = vadd.xlane.f32.xlu0 %v8769
        %v8771 = vpop.xlane.xlu0 %8770
        %v8772 = vsel %vm345, %v8690, 0.0
        %8773 = vadd.xlane.f32.xlu0 %v8772
        %v8774 = vpop.xlane.xlu0 %8773
        %v8775 = vsel %vm345, %v8691, 0.0
        %8776 = vadd.xlane.f32.xlu0 %v8775
        %v8777 = vpop.xlane.xlu0 %8776
        %v8778 = vsel %vm345, %v8692, 0.0
        %8779 = vadd.xlane.f32.xlu0 %v8778
        %v8780 = vpop.xlane.xlu0 %8779
        %v8781 = vsel %vm345, %v8693, 0.0
        %8782 = vadd.xlane.f32.xlu0 %v8781
        %v8783 = vpop.xlane.xlu0 %8782
        %v8784 = vsel %vm345, %v8694, 0.0
        %8785 = vadd.xlane.f32.xlu0 %v8784
        %v8786 = vpop.xlane.xlu0 %8785
        %v8787 = vsel %vm345, %v8695, 0.0
        %8788 = vadd.xlane.f32.xlu0 %v8787
        %v8789 = vpop.xlane.xlu0 %8788
        %v8790 = vsel %vm345, %v8696, 0.0
        %8791 = vadd.xlane.f32.xlu0 %v8790
        %v8792 = vpop.xlane.xlu0 %8791
        %v8793 = vmul.f32 %v8699, %v442
        %v8794 = vmul.f32 %v8702, %v442
        %v8795 = vmul.f32 %v8705, %v442
        %v8796 = vmul.f32 %v8708, %v442
        %v8797 = vmul.f32 %v8711, %v442
        %v8798 = vmul.f32 %v8714, %v442
        %v8799 = vmul.f32 %v8717, %v442
        %v8800 = vmul.f32 %v8720, %v442
        %v8801 = vmul.f32 %v8723, %v442
        %v8802 = vmul.f32 %v8726, %v442
        %v8803 = vmul.f32 %v8729, %v442
        %v8804 = vmul.f32 %v8732, %v442
        %v8805 = vmul.f32 %v8735, %v442
        %v8806 = vmul.f32 %v8738, %v442
        %v8807 = vmul.f32 %v8741, %v442
        %v8808 = vmul.f32 %v8744, %v442
        %v8809 = vmul.f32 %v8747, %v442
        %v8810 = vmul.f32 %v8750, %v442
        %v8811 = vmul.f32 %v8753, %v442
        %v8812 = vmul.f32 %v8756, %v442
        %v8813 = vmul.f32 %v8759, %v442
        %v8814 = vmul.f32 %v8762, %v442
        %v8815 = vmul.f32 %v8765, %v442
        %v8816 = vmul.f32 %v8768, %v442
        %v8817 = vmul.f32 %v8771, %v442
        %v8818 = vmul.f32 %v8774, %v442
        %v8819 = vmul.f32 %v8777, %v442
        %v8820 = vmul.f32 %v8780, %v442
        %v8821 = vmul.f32 %v8783, %v442
        %v8822 = vmul.f32 %v8786, %v442
        %v8823 = vmul.f32 %v8789, %v442
        %v8824 = vmul.f32 %v8792, %v442
        %v8825 = vsub.f32 %v8665, %v8793
        %v8826 = vsub.f32 %v8666, %v8794
        %v8827 = vsub.f32 %v8667, %v8795
        %v8828 = vsub.f32 %v8668, %v8796
        %v8829 = vsub.f32 %v8669, %v8797
        %v8830 = vsub.f32 %v8670, %v8798
        %v8831 = vsub.f32 %v8671, %v8799
        %v8832 = vsub.f32 %v8672, %v8800
        %v8833 = vsub.f32 %v8673, %v8801
        %v8834 = vsub.f32 %v8674, %v8802
        %v8835 = vsub.f32 %v8675, %v8803
        %v8836 = vsub.f32 %v8676, %v8804
        %v8837 = vsub.f32 %v8677, %v8805
        %v8838 = vsub.f32 %v8678, %v8806
        %v8839 = vsub.f32 %v8679, %v8807
        %v8840 = vsub.f32 %v8680, %v8808
        %v8841 = vsub.f32 %v8681, %v8809
        %v8842 = vsub.f32 %v8682, %v8810
        %v8843 = vsub.f32 %v8683, %v8811
        %v8844 = vsub.f32 %v8684, %v8812
        %v8845 = vsub.f32 %v8685, %v8813
        %v8846 = vsub.f32 %v8686, %v8814
        %v8847 = vsub.f32 %v8687, %v8815
        %v8848 = vsub.f32 %v8688, %v8816
        %v8849 = vsub.f32 %v8689, %v8817
        %v8850 = vsub.f32 %v8690, %v8818
        %v8851 = vsub.f32 %v8691, %v8819
        %v8852 = vsub.f32 %v8692, %v8820
        %v8853 = vsub.f32 %v8693, %v8821
        %v8854 = vsub.f32 %v8694, %v8822
        %v8855 = vsub.f32 %v8695, %v8823
        %v8856 = vsub.f32 %v8696, %v8824
        %v8857 = vmul.f32 %v8825, %v8825
        %v8858 = vmul.f32 %v8826, %v8826
        %v8859 = vmul.f32 %v8827, %v8827
        %v8860 = vmul.f32 %v8828, %v8828
        %v8861 = vmul.f32 %v8829, %v8829
        %v8862 = vmul.f32 %v8830, %v8830
        %v8863 = vmul.f32 %v8831, %v8831
        %v8864 = vmul.f32 %v8832, %v8832
        %v8865 = vmul.f32 %v8833, %v8833
        %v8866 = vmul.f32 %v8834, %v8834
        %v8867 = vmul.f32 %v8835, %v8835
        %v8868 = vmul.f32 %v8836, %v8836
        %v8869 = vmul.f32 %v8837, %v8837
        %v8870 = vmul.f32 %v8838, %v8838
        %v8871 = vmul.f32 %v8839, %v8839
        %v8872 = vmul.f32 %v8840, %v8840
        %v8873 = vmul.f32 %v8841, %v8841
        %v8874 = vmul.f32 %v8842, %v8842
        %v8875 = vmul.f32 %v8843, %v8843
        %v8876 = vmul.f32 %v8844, %v8844
        %v8877 = vmul.f32 %v8845, %v8845
        %v8878 = vmul.f32 %v8846, %v8846
        %v8879 = vmul.f32 %v8847, %v8847
        %v8880 = vmul.f32 %v8848, %v8848
        %v8881 = vmul.f32 %v8849, %v8849
        %v8882 = vmul.f32 %v8850, %v8850
        %v8883 = vmul.f32 %v8851, %v8851
        %v8884 = vmul.f32 %v8852, %v8852
        %v8885 = vmul.f32 %v8853, %v8853
        %v8886 = vmul.f32 %v8854, %v8854
        %v8887 = vmul.f32 %v8855, %v8855
        %v8888 = vmul.f32 %v8856, %v8856
        %v8889 = vsel %vm345, %v8857, 0.0
        %8890 = vadd.xlane.f32.xlu0 %v8889
        %v8891 = vpop.xlane.xlu0 %8890
        %v8892 = vsel %vm345, %v8858, 0.0
        %8893 = vadd.xlane.f32.xlu0 %v8892
        %v8894 = vpop.xlane.xlu0 %8893
        %v8895 = vsel %vm345, %v8859, 0.0
        %8896 = vadd.xlane.f32.xlu0 %v8895
        %v8897 = vpop.xlane.xlu0 %8896
        %v8898 = vsel %vm345, %v8860, 0.0
        %8899 = vadd.xlane.f32.xlu0 %v8898
        %v8900 = vpop.xlane.xlu0 %8899
        %v8901 = vsel %vm345, %v8861, 0.0
        %8902 = vadd.xlane.f32.xlu0 %v8901
        %v8903 = vpop.xlane.xlu0 %8902
        %v8904 = vsel %vm345, %v8862, 0.0
        %8905 = vadd.xlane.f32.xlu0 %v8904
        %v8906 = vpop.xlane.xlu0 %8905
        %v8907 = vsel %vm345, %v8863, 0.0
        %8908 = vadd.xlane.f32.xlu0 %v8907
        %v8909 = vpop.xlane.xlu0 %8908
        %v8910 = vsel %vm345, %v8864, 0.0
        %8911 = vadd.xlane.f32.xlu0 %v8910
        %v8912 = vpop.xlane.xlu0 %8911
        %v8913 = vsel %vm345, %v8865, 0.0
        %8914 = vadd.xlane.f32.xlu0 %v8913
        %v8915 = vpop.xlane.xlu0 %8914
        %v8916 = vsel %vm345, %v8866, 0.0
        %8917 = vadd.xlane.f32.xlu0 %v8916
        %v8918 = vpop.xlane.xlu0 %8917
        %v8919 = vsel %vm345, %v8867, 0.0
        %8920 = vadd.xlane.f32.xlu0 %v8919
        %v8921 = vpop.xlane.xlu0 %8920
        %v8922 = vsel %vm345, %v8868, 0.0
        %8923 = vadd.xlane.f32.xlu0 %v8922
        %v8924 = vpop.xlane.xlu0 %8923
        %v8925 = vsel %vm345, %v8869, 0.0
        %8926 = vadd.xlane.f32.xlu0 %v8925
        %v8927 = vpop.xlane.xlu0 %8926
        %v8928 = vsel %vm345, %v8870, 0.0
        %8929 = vadd.xlane.f32.xlu0 %v8928
        %v8930 = vpop.xlane.xlu0 %8929
        %v8931 = vsel %vm345, %v8871, 0.0
        %8932 = vadd.xlane.f32.xlu0 %v8931
        %v8933 = vpop.xlane.xlu0 %8932
        %v8934 = vsel %vm345, %v8872, 0.0
        %8935 = vadd.xlane.f32.xlu0 %v8934
        %v8936 = vpop.xlane.xlu0 %8935
        %v8937 = vsel %vm345, %v8873, 0.0
        %8938 = vadd.xlane.f32.xlu0 %v8937
        %v8939 = vpop.xlane.xlu0 %8938
        %v8940 = vsel %vm345, %v8874, 0.0
        %8941 = vadd.xlane.f32.xlu0 %v8940
        %v8942 = vpop.xlane.xlu0 %8941
        %v8943 = vsel %vm345, %v8875, 0.0
        %8944 = vadd.xlane.f32.xlu0 %v8943
        %v8945 = vpop.xlane.xlu0 %8944
        %v8946 = vsel %vm345, %v8876, 0.0
        %8947 = vadd.xlane.f32.xlu0 %v8946
        %v8948 = vpop.xlane.xlu0 %8947
        %v8949 = vsel %vm345, %v8877, 0.0
        %8950 = vadd.xlane.f32.xlu0 %v8949
        %v8951 = vpop.xlane.xlu0 %8950
        %v8952 = vsel %vm345, %v8878, 0.0
        %8953 = vadd.xlane.f32.xlu0 %v8952
        %v8954 = vpop.xlane.xlu0 %8953
        %v8955 = vsel %vm345, %v8879, 0.0
        %8956 = vadd.xlane.f32.xlu0 %v8955
        %v8957 = vpop.xlane.xlu0 %8956
        %v8958 = vsel %vm345, %v8880, 0.0
        %8959 = vadd.xlane.f32.xlu0 %v8958
        %v8960 = vpop.xlane.xlu0 %8959
        %v8961 = vsel %vm345, %v8881, 0.0
        %8962 = vadd.xlane.f32.xlu0 %v8961
        %v8963 = vpop.xlane.xlu0 %8962
        %v8964 = vsel %vm345, %v8882, 0.0
        %8965 = vadd.xlane.f32.xlu0 %v8964
        %v8966 = vpop.xlane.xlu0 %8965
        %v8967 = vsel %vm345, %v8883, 0.0
        %8968 = vadd.xlane.f32.xlu0 %v8967
        %v8969 = vpop.xlane.xlu0 %8968
        %v8970 = vsel %vm345, %v8884, 0.0
        %8971 = vadd.xlane.f32.xlu0 %v8970
        %v8972 = vpop.xlane.xlu0 %8971
        %v8973 = vsel %vm345, %v8885, 0.0
        %8974 = vadd.xlane.f32.xlu0 %v8973
        %v8975 = vpop.xlane.xlu0 %8974
        %v8976 = vsel %vm345, %v8886, 0.0
        %8977 = vadd.xlane.f32.xlu0 %v8976
        %v8978 = vpop.xlane.xlu0 %8977
        %v8979 = vsel %vm345, %v8887, 0.0
        %8980 = vadd.xlane.f32.xlu0 %v8979
        %v8981 = vpop.xlane.xlu0 %8980
        %v8982 = vsel %vm345, %v8888, 0.0
        %8983 = vadd.xlane.f32.xlu0 %v8982
        %v8984 = vpop.xlane.xlu0 %8983
        %v8985 = vmul.f32 %v8891, %v442
        %v8986 = vmul.f32 %v8894, %v442
        %v8987 = vmul.f32 %v8897, %v442
        %v8988 = vmul.f32 %v8900, %v442
        %v8989 = vmul.f32 %v8903, %v442
        %v8990 = vmul.f32 %v8906, %v442
        %v8991 = vmul.f32 %v8909, %v442
        %v8992 = vmul.f32 %v8912, %v442
        %v8993 = vmul.f32 %v8915, %v442
        %v8994 = vmul.f32 %v8918, %v442
        %v8995 = vmul.f32 %v8921, %v442
        %v8996 = vmul.f32 %v8924, %v442
        %v8997 = vmul.f32 %v8927, %v442
        %v8998 = vmul.f32 %v8930, %v442
        %v8999 = vmul.f32 %v8933, %v442
        %v9000 = vmul.f32 %v8936, %v442
        %v9001 = vmul.f32 %v8939, %v442
        %v9002 = vmul.f32 %v8942, %v442
        %v9003 = vmul.f32 %v8945, %v442
        %v9004 = vmul.f32 %v8948, %v442
        %v9005 = vmul.f32 %v8951, %v442
        %v9006 = vmul.f32 %v8954, %v442
        %v9007 = vmul.f32 %v8957, %v442
        %v9008 = vmul.f32 %v8960, %v442
        %v9009 = vmul.f32 %v8963, %v442
        %v9010 = vmul.f32 %v8966, %v442
        %v9011 = vmul.f32 %v8969, %v442
        %v9012 = vmul.f32 %v8972, %v442
        %v9013 = vmul.f32 %v8975, %v442
        %v9014 = vmul.f32 %v8978, %v442
        %v9015 = vmul.f32 %v8981, %v442
        %v9016 = vmul.f32 %v8984, %v442
        %v9017 = vadd.f32 %v8985, 1e-05
        %v9018 = vadd.f32 %v8986, 1e-05
        %v9019 = vadd.f32 %v8987, 1e-05
        %v9020 = vadd.f32 %v8988, 1e-05
        %v9021 = vadd.f32 %v8989, 1e-05
        %v9022 = vadd.f32 %v8990, 1e-05
        %v9023 = vadd.f32 %v8991, 1e-05
        %v9024 = vadd.f32 %v8992, 1e-05
        %v9025 = vadd.f32 %v8993, 1e-05
        %v9026 = vadd.f32 %v8994, 1e-05
        %v9027 = vadd.f32 %v8995, 1e-05
        %v9028 = vadd.f32 %v8996, 1e-05
        %v9029 = vadd.f32 %v8997, 1e-05
        %v9030 = vadd.f32 %v8998, 1e-05
        %v9031 = vadd.f32 %v8999, 1e-05
        %v9032 = vadd.f32 %v9000, 1e-05
        %v9033 = vadd.f32 %v9001, 1e-05
        %v9034 = vadd.f32 %v9002, 1e-05
        %v9035 = vadd.f32 %v9003, 1e-05
        %v9036 = vadd.f32 %v9004, 1e-05
        %v9037 = vadd.f32 %v9005, 1e-05
        %v9038 = vadd.f32 %v9006, 1e-05
        %v9039 = vadd.f32 %v9007, 1e-05
        %v9040 = vadd.f32 %v9008, 1e-05
        %v9041 = vadd.f32 %v9009, 1e-05
        %v9042 = vadd.f32 %v9010, 1e-05
        %v9043 = vadd.f32 %v9011, 1e-05
        %v9044 = vadd.f32 %v9012, 1e-05
        %v9045 = vadd.f32 %v9013, 1e-05
        %v9046 = vadd.f32 %v9014, 1e-05
        %v9047 = vadd.f32 %v9015, 1e-05
        %v9048 = vadd.f32 %v9016, 1e-05
        %v9049 = vrsqrt.pop %v9017
        %v9050 = vrsqrt.pop %v9018
        %v9051 = vrsqrt.pop %v9019
        %v9052 = vrsqrt.pop %v9020
        %v9053 = vrsqrt.pop %v9021
        %v9054 = vrsqrt.pop %v9022
        %v9055 = vrsqrt.pop %v9023
        %v9056 = vrsqrt.pop %v9024
        %v9057 = vrsqrt.pop %v9025
        %v9058 = vrsqrt.pop %v9026
        %v9059 = vrsqrt.pop %v9027
        %v9060 = vrsqrt.pop %v9028
        %v9061 = vrsqrt.pop %v9029
        %v9062 = vrsqrt.pop %v9030
        %v9063 = vrsqrt.pop %v9031
        %v9064 = vrsqrt.pop %v9032
        %v9065 = vrsqrt.pop %v9033
        %v9066 = vrsqrt.pop %v9034
        %v9067 = vrsqrt.pop %v9035
        %v9068 = vrsqrt.pop %v9036
        %v9069 = vrsqrt.pop %v9037
        %v9070 = vrsqrt.pop %v9038
        %v9071 = vrsqrt.pop %v9039
        %v9072 = vrsqrt.pop %v9040
        %v9073 = vrsqrt.pop %v9041
        %v9074 = vrsqrt.pop %v9042
        %v9075 = vrsqrt.pop %v9043
        %v9076 = vrsqrt.pop %v9044
        %v9077 = vrsqrt.pop %v9045
        %v9078 = vrsqrt.pop %v9046
        %v9079 = vrsqrt.pop %v9047
        %v9080 = vrsqrt.pop %v9048
        %v9081 = vmul.f32 %v8825, %v9049
        %v9082 = vmul.f32 %v8826, %v9050
        %v9083 = vmul.f32 %v8827, %v9051
        %v9084 = vmul.f32 %v8828, %v9052
        %v9085 = vmul.f32 %v8829, %v9053
        %v9086 = vmul.f32 %v8830, %v9054
        %v9087 = vmul.f32 %v8831, %v9055
        %v9088 = vmul.f32 %v8832, %v9056
        %v9089 = vmul.f32 %v8833, %v9057
        %v9090 = vmul.f32 %v8834, %v9058
        %v9091 = vmul.f32 %v8835, %v9059
        %v9092 = vmul.f32 %v8836, %v9060
        %v9093 = vmul.f32 %v8837, %v9061
        %v9094 = vmul.f32 %v8838, %v9062
        %v9095 = vmul.f32 %v8839, %v9063
        %v9096 = vmul.f32 %v8840, %v9064
        %v9097 = vmul.f32 %v8841, %v9065
        %v9098 = vmul.f32 %v8842, %v9066
        %v9099 = vmul.f32 %v8843, %v9067
        %v9100 = vmul.f32 %v8844, %v9068
        %v9101 = vmul.f32 %v8845, %v9069
        %v9102 = vmul.f32 %v8846, %v9070
        %v9103 = vmul.f32 %v8847, %v9071
        %v9104 = vmul.f32 %v8848, %v9072
        %v9105 = vmul.f32 %v8849, %v9073
        %v9106 = vmul.f32 %v8850, %v9074
        %v9107 = vmul.f32 %v8851, %v9075
        %v9108 = vmul.f32 %v8852, %v9076
        %v9109 = vmul.f32 %v8853, %v9077
        %v9110 = vmul.f32 %v8854, %v9078
        %v9111 = vmul.f32 %v8855, %v9079
        %v9112 = vmul.f32 %v8856, %v9080
        %v9113 = vlaneseq
        %v9114 = vshrl.u32 %v9113, 7
        %v9115 = vsub.s32 4, %v9114
        %v9116 = vrot.slane %v312, %v9115
        %v9117 = vmul.f32 %v9081, %v9116
        %v9118 = vmul.f32 %v9082, %v9116
        %v9119 = vmul.f32 %v9083, %v9116
        %v9120 = vmul.f32 %v9084, %v9116
        %v9121 = vmul.f32 %v9085, %v9116
        %v9122 = vmul.f32 %v9086, %v9116
        %v9123 = vmul.f32 %v9087, %v9116
        %v9124 = vmul.f32 %v9088, %v9116
        %v9125 = vmul.f32 %v9089, %v9116
        %v9126 = vmul.f32 %v9090, %v9116
        %v9127 = vmul.f32 %v9091, %v9116
        %v9128 = vmul.f32 %v9092, %v9116
        %v9129 = vmul.f32 %v9093, %v9116
        %v9130 = vmul.f32 %v9094, %v9116
        %v9131 = vmul.f32 %v9095, %v9116
        %v9132 = vmul.f32 %v9096, %v9116
        %v9133 = vmul.f32 %v9097, %v9116
        %v9134 = vmul.f32 %v9098, %v9116
        %v9135 = vmul.f32 %v9099, %v9116
        %v9136 = vmul.f32 %v9100, %v9116
        %v9137 = vmul.f32 %v9101, %v9116
        %v9138 = vmul.f32 %v9102, %v9116
        %v9139 = vmul.f32 %v9103, %v9116
        %v9140 = vmul.f32 %v9104, %v9116
        %v9141 = vmul.f32 %v9105, %v9116
        %v9142 = vmul.f32 %v9106, %v9116
        %v9143 = vmul.f32 %v9107, %v9116
        %v9144 = vmul.f32 %v9108, %v9116
        %v9145 = vmul.f32 %v9109, %v9116
        %v9146 = vmul.f32 %v9110, %v9116
        %v9147 = vmul.f32 %v9111, %v9116
        %v9148 = vmul.f32 %v9112, %v9116
        %v9149 = vlaneseq
        %v9150 = vshrl.u32 %v9149, 7
        %v9151 = vsub.s32 5, %v9150
        %v9152 = vrot.slane %v312, %v9151
        %v9153 = vadd.f32 %v9117, %v9152
        %v9154 = vadd.f32 %v9118, %v9152
        %v9155 = vadd.f32 %v9119, %v9152
        %v9156 = vadd.f32 %v9120, %v9152
        %v9157 = vadd.f32 %v9121, %v9152
        %v9158 = vadd.f32 %v9122, %v9152
        %v9159 = vadd.f32 %v9123, %v9152
        %v9160 = vadd.f32 %v9124, %v9152
        %v9161 = vadd.f32 %v9125, %v9152
        %v9162 = vadd.f32 %v9126, %v9152
        %v9163 = vadd.f32 %v9127, %v9152
        %v9164 = vadd.f32 %v9128, %v9152
        %v9165 = vadd.f32 %v9129, %v9152
        %v9166 = vadd.f32 %v9130, %v9152
        %v9167 = vadd.f32 %v9131, %v9152
        %v9168 = vadd.f32 %v9132, %v9152
        %v9169 = vadd.f32 %v9133, %v9152
        %v9170 = vadd.f32 %v9134, %v9152
        %v9171 = vadd.f32 %v9135, %v9152
        %v9172 = vadd.f32 %v9136, %v9152
        %v9173 = vadd.f32 %v9137, %v9152
        %v9174 = vadd.f32 %v9138, %v9152
        %v9175 = vadd.f32 %v9139, %v9152
        %v9176 = vadd.f32 %v9140, %v9152
        %v9177 = vadd.f32 %v9141, %v9152
        %v9178 = vadd.f32 %v9142, %v9152
        %v9179 = vadd.f32 %v9143, %v9152
        %v9180 = vadd.f32 %v9144, %v9152
        %v9181 = vadd.f32 %v9145, %v9152
        %v9182 = vadd.f32 %v9146, %v9152
        %v9183 = vadd.f32 %v9147, %v9152
        %v9184 = vadd.f32 %v9148, %v9152
        %v9185 = vld [vmem:[%s5] sm:$0xff]
        %v9186 = vld [vmem:[%s5 + $0x8] sm:$0xff]
        %v9187 = vld [vmem:[%s5 + $0x10] sm:$0xff]
        %v9188 = vld [vmem:[%s5 + $0x18] sm:$0xff]
        %v9189 = vlaneseq
        %v9190 = vshrl.u32 %v9189, 7
        %v9191 = vsub.s32 6, %v9190
        %v9192 = vrot.slane %v312, %v9191
        %v9194 = vsel %vm345, %v9153, 0
        %v9197 = vsel %vm345, %v9154, 0
        %v9200 = vsel %vm345, %v9155, 0
        %v9203 = vsel %vm345, %v9156, 0
        %v9206 = vsel %vm345, %v9157, 0
        %v9209 = vsel %vm345, %v9158, 0
        %v9212 = vsel %vm345, %v9159, 0
        %v9215 = vsel %vm345, %v9160, 0
        %v9218 = vsel %vm345, %v9161, 0
        %v9221 = vsel %vm345, %v9162, 0
        %v9224 = vsel %vm345, %v9163, 0
        %v9227 = vsel %vm345, %v9164, 0
        %v9230 = vsel %vm345, %v9165, 0
        %v9233 = vsel %vm345, %v9166, 0
        %v9236 = vsel %vm345, %v9167, 0
        %v9239 = vsel %vm345, %v9168, 0
        %v9242 = vsel %vm345, %v9169, 0
        %v9245 = vsel %vm345, %v9170, 0
        %v9248 = vsel %vm345, %v9171, 0
        %v9251 = vsel %vm345, %v9172, 0
        %v9254 = vsel %vm345, %v9173, 0
        %v9257 = vsel %vm345, %v9174, 0
        %v9260 = vsel %vm345, %v9175, 0
        %v9263 = vsel %vm345, %v9176, 0
        %v9266 = vsel %vm345, %v9177, 0
        %v9269 = vsel %vm345, %v9178, 0
        %v9272 = vsel %vm345, %v9179, 0
        %v9275 = vsel %vm345, %v9180, 0
        %v9278 = vsel %vm345, %v9181, 0
        %v9281 = vsel %vm345, %v9182, 0
        %v9284 = vsel %vm345, %v9183, 0
        %v9287 = vsel %vm345, %v9184, 0
        %9289 = vmatprep.subr.mxu0 0.0
        %9290 = vmatpush1.msra.mxu0 0.0
        %9291 = vmatprep.subr.mxu0 0.0
        %9292 = vmatpush1.msra.mxu0 0.0
        %9293 = vmatprep.subr.mxu0 0.0
        %9294 = vmatpush1.msra.mxu0 0.0
        %9295 = vmatprep.subr.mxu0 0.0
        %9296 = vmatpush1.msra.mxu0 0.0
        %9297 = vmatprep.subr.mxu0 0.0
        %9298 = vmatpush1.msra.mxu0 0.0
        %9299 = vmatprep.subr.mxu0 0.0
        %9300 = vmatpush1.msra.mxu0 0.0
        %9301 = vmatprep.subr.mxu0 0.0
        %9302 = vmatpush1.msra.mxu0 0.0
        %9303 = vmatprep.subr.mxu0 0.0
        %9304 = vmatpush1.msra.mxu0 0.0
        %9305 = vmatprep.subr.mxu0 0.0
        %9306 = vmatpush1.msra.mxu0 0.0
        %9307 = vmatprep.subr.mxu0 0.0
        %9308 = vmatpush1.msra.mxu0 0.0
        %9309 = vmatprep.subr.mxu0 0.0
        %9310 = vmatpush1.msra.mxu0 0.0
        %9311 = vmatprep.subr.mxu0 0.0
        %9312 = vmatpush1.msra.mxu0 0.0
        %9313 = vmatprep.subr.mxu0 0.0
        %9314 = vmatpush1.msra.mxu0 %v9188
        %9315 = vmatprep.subr.mxu0 0.0
        %9316 = vmatpush1.msra.mxu0 %v9187
        %9317 = vmatprep.subr.mxu0 0.0
        %9318 = vmatpush1.msra.mxu0 %v9186
        %9319 = vmatprep.subr.mxu0 0.0
        %9320 = vmatpush1.msra.mxu0 %v9185
        %9321 = vmatprep.subr.mxu0 0.0
        %9322 = vmatpush2.msra.mxu0 0.0
        %9323 = vmatprep.subr.mxu0 0.0
        %9324 = vmatpush2.msra.mxu0 0.0
        %9325 = vmatprep.subr.mxu0 0.0
        %9326 = vmatpush2.msra.mxu0 0.0
        %9327 = vmatprep.subr.mxu0 0.0
        %9328 = vmatpush2.msra.mxu0 0.0
        %9329 = vmatprep.subr.mxu0 0.0
        %9330 = vmatpush2.msra.mxu0 0.0
        %9331 = vmatprep.subr.mxu0 0.0
        %9332 = vmatpush2.msra.mxu0 0.0
        %9333 = vmatprep.subr.mxu0 0.0
        %9334 = vmatpush2.msra.mxu0 0.0
        %9335 = vmatprep.subr.mxu0 0.0
        %9336 = vmatpush2.msra.mxu0 0.0
        %9337 = vmatprep.subr.mxu0 0.0
        %9338 = vmatpush2.msra.mxu0 0.0
        %9339 = vmatprep.subr.mxu0 0.0
        %9340 = vmatpush2.msra.mxu0 0.0
        %9341 = vmatprep.subr.mxu0 0.0
        %9342 = vmatpush2.msra.mxu0 0.0
        %9343 = vmatprep.subr.mxu0 0.0
        %9344 = vmatpush2.msra.mxu0 0.0
        %9345 = vmatprep.subr.mxu0 0.0
        %9346 = vmatpush2.msra.mxu0 0.0
        %9347 = vmatprep.subr.mxu0 0.0
        %9348 = vmatpush2.msra.mxu0 0.0
        %9349 = vmatprep.subr.mxu0 0.0
        %9350 = vmatpush2.msra.mxu0 0.0
        %9351 = vmatprep.subr.mxu0 0.0
        %9352 = vmatpush2.msra.mxu0 0.0
        %9353 = vmatprep.mubr.f32.mxu0 0.0
        %9354 = vmatmul.mubr.f32.gmra.mxu0 %v9194
        %v9355 = vpop.f32.mrf.mxu0
        %v9356 = vadd.f32 %v9192, %v9355
        %v9357 = vpop.f32.mrf.mxu0
        %9358 = vmatprep.mubr.f32.mxu0 0.0
        %9359 = vmatmul.mubr.f32.gmra.mxu0 %v9197
        %v9360 = vpop.f32.mrf.mxu0
        %v9361 = vadd.f32 %v9192, %v9360
        %v9362 = vpop.f32.mrf.mxu0
        %9363 = vmatprep.mubr.f32.mxu0 0.0
        %9364 = vmatmul.mubr.f32.gmra.mxu0 %v9200
        %v9365 = vpop.f32.mrf.mxu0
        %v9366 = vadd.f32 %v9192, %v9365
        %v9367 = vpop.f32.mrf.mxu0
        %9368 = vmatprep.mubr.f32.mxu0 0.0
        %9369 = vmatmul.mubr.f32.gmra.mxu0 %v9203
        %v9370 = vpop.f32.mrf.mxu0
        %v9371 = vadd.f32 %v9192, %v9370
        %v9372 = vpop.f32.mrf.mxu0
        %9373 = vmatprep.mubr.f32.mxu0 0.0
        %9374 = vmatmul.mubr.f32.gmra.mxu0 %v9206
        %v9375 = vpop.f32.mrf.mxu0
        %v9376 = vadd.f32 %v9192, %v9375
        %v9377 = vpop.f32.mrf.mxu0
        %9378 = vmatprep.mubr.f32.mxu0 0.0
        %9379 = vmatmul.mubr.f32.gmra.mxu0 %v9209
        %v9380 = vpop.f32.mrf.mxu0
        %v9381 = vadd.f32 %v9192, %v9380
        %v9382 = vpop.f32.mrf.mxu0
        %9383 = vmatprep.mubr.f32.mxu0 0.0
        %9384 = vmatmul.mubr.f32.gmra.mxu0 %v9212
        %v9385 = vpop.f32.mrf.mxu0
        %v9386 = vadd.f32 %v9192, %v9385
        %v9387 = vpop.f32.mrf.mxu0
        %9388 = vmatprep.mubr.f32.mxu0 0.0
        %9389 = vmatmul.mubr.f32.gmra.mxu0 %v9215
        %v9390 = vpop.f32.mrf.mxu0
        %v9391 = vadd.f32 %v9192, %v9390
        %v9392 = vpop.f32.mrf.mxu0
        %9393 = vmatprep.mubr.f32.mxu0 0.0
        %9394 = vmatmul.mubr.f32.gmra.mxu0 %v9218
        %v9395 = vpop.f32.mrf.mxu0
        %v9396 = vadd.f32 %v9192, %v9395
        %v9397 = vpop.f32.mrf.mxu0
        %9398 = vmatprep.mubr.f32.mxu0 0.0
        %9399 = vmatmul.mubr.f32.gmra.mxu0 %v9221
        %v9400 = vpop.f32.mrf.mxu0
        %v9401 = vadd.f32 %v9192, %v9400
        %v9402 = vpop.f32.mrf.mxu0
        %9403 = vmatprep.mubr.f32.mxu0 0.0
        %9404 = vmatmul.mubr.f32.gmra.mxu0 %v9224
        %v9405 = vpop.f32.mrf.mxu0
        %v9406 = vadd.f32 %v9192, %v9405
        %v9407 = vpop.f32.mrf.mxu0
        %9408 = vmatprep.mubr.f32.mxu0 0.0
        %9409 = vmatmul.mubr.f32.gmra.mxu0 %v9227
        %v9410 = vpop.f32.mrf.mxu0
        %v9411 = vadd.f32 %v9192, %v9410
        %v9412 = vpop.f32.mrf.mxu0
        %9413 = vmatprep.mubr.f32.mxu0 0.0
        %9414 = vmatmul.mubr.f32.gmra.mxu0 %v9230
        %v9415 = vpop.f32.mrf.mxu0
        %v9416 = vadd.f32 %v9192, %v9415
        %v9417 = vpop.f32.mrf.mxu0
        %9418 = vmatprep.mubr.f32.mxu0 0.0
        %9419 = vmatmul.mubr.f32.gmra.mxu0 %v9233
        %v9420 = vpop.f32.mrf.mxu0
        %v9421 = vadd.f32 %v9192, %v9420
        %v9422 = vpop.f32.mrf.mxu0
        %9423 = vmatprep.mubr.f32.mxu0 0.0
        %9424 = vmatmul.mubr.f32.gmra.mxu0 %v9236
        %v9425 = vpop.f32.mrf.mxu0
        %v9426 = vadd.f32 %v9192, %v9425
        %v9427 = vpop.f32.mrf.mxu0
        %9428 = vmatprep.mubr.f32.mxu0 0.0
        %9429 = vmatmul.mubr.f32.gmra.mxu0 %v9239
        %v9430 = vpop.f32.mrf.mxu0
        %v9431 = vadd.f32 %v9192, %v9430
        %v9432 = vpop.f32.mrf.mxu0
        %9433 = vmatprep.mubr.f32.mxu0 0.0
        %9434 = vmatmul.mubr.f32.gmra.mxu0 %v9242
        %v9435 = vpop.f32.mrf.mxu0
        %v9436 = vadd.f32 %v9192, %v9435
        %v9437 = vpop.f32.mrf.mxu0
        %9438 = vmatprep.mubr.f32.mxu0 0.0
        %9439 = vmatmul.mubr.f32.gmra.mxu0 %v9245
        %v9440 = vpop.f32.mrf.mxu0
        %v9441 = vadd.f32 %v9192, %v9440
        %v9442 = vpop.f32.mrf.mxu0
        %9443 = vmatprep.mubr.f32.mxu0 0.0
        %9444 = vmatmul.mubr.f32.gmra.mxu0 %v9248
        %v9445 = vpop.f32.mrf.mxu0
        %v9446 = vadd.f32 %v9192, %v9445
        %v9447 = vpop.f32.mrf.mxu0
        %9448 = vmatprep.mubr.f32.mxu0 0.0
        %9449 = vmatmul.mubr.f32.gmra.mxu0 %v9251
        %v9450 = vpop.f32.mrf.mxu0
        %v9451 = vadd.f32 %v9192, %v9450
        %v9452 = vpop.f32.mrf.mxu0
        %9453 = vmatprep.mubr.f32.mxu0 0.0
        %9454 = vmatmul.mubr.f32.gmra.mxu0 %v9254
        %v9455 = vpop.f32.mrf.mxu0
        %v9456 = vadd.f32 %v9192, %v9455
        %v9457 = vpop.f32.mrf.mxu0
        %9458 = vmatprep.mubr.f32.mxu0 0.0
        %9459 = vmatmul.mubr.f32.gmra.mxu0 %v9257
        %v9460 = vpop.f32.mrf.mxu0
        %v9461 = vadd.f32 %v9192, %v9460
        %v9462 = vpop.f32.mrf.mxu0
        %9463 = vmatprep.mubr.f32.mxu0 0.0
        %9464 = vmatmul.mubr.f32.gmra.mxu0 %v9260
        %v9465 = vpop.f32.mrf.mxu0
        %v9466 = vadd.f32 %v9192, %v9465
        %v9467 = vpop.f32.mrf.mxu0
        %9468 = vmatprep.mubr.f32.mxu0 0.0
        %9469 = vmatmul.mubr.f32.gmra.mxu0 %v9263
        %v9470 = vpop.f32.mrf.mxu0
        %v9471 = vadd.f32 %v9192, %v9470
        %v9472 = vpop.f32.mrf.mxu0
        %9473 = vmatprep.mubr.f32.mxu0 0.0
        %9474 = vmatmul.mubr.f32.gmra.mxu0 %v9266
        %v9475 = vpop.f32.mrf.mxu0
        %v9476 = vadd.f32 %v9192, %v9475
        %v9477 = vpop.f32.mrf.mxu0
        %9478 = vmatprep.mubr.f32.mxu0 0.0
        %9479 = vmatmul.mubr.f32.gmra.mxu0 %v9269
        %v9480 = vpop.f32.mrf.mxu0
        %v9481 = vadd.f32 %v9192, %v9480
        %v9482 = vpop.f32.mrf.mxu0
        %9483 = vmatprep.mubr.f32.mxu0 0.0
        %9484 = vmatmul.mubr.f32.gmra.mxu0 %v9272
        %v9485 = vpop.f32.mrf.mxu0
        %v9486 = vadd.f32 %v9192, %v9485
        %v9487 = vpop.f32.mrf.mxu0
        %9488 = vmatprep.mubr.f32.mxu0 0.0
        %9489 = vmatmul.mubr.f32.gmra.mxu0 %v9275
        %v9490 = vpop.f32.mrf.mxu0
        %v9491 = vadd.f32 %v9192, %v9490
        %v9492 = vpop.f32.mrf.mxu0
        %9493 = vmatprep.mubr.f32.mxu0 0.0
        %9494 = vmatmul.mubr.f32.gmra.mxu0 %v9278
        %v9495 = vpop.f32.mrf.mxu0
        %v9496 = vadd.f32 %v9192, %v9495
        %v9497 = vpop.f32.mrf.mxu0
        %9498 = vmatprep.mubr.f32.mxu0 0.0
        %9499 = vmatmul.mubr.f32.gmra.mxu0 %v9281
        %v9500 = vpop.f32.mrf.mxu0
        %v9501 = vadd.f32 %v9192, %v9500
        %v9502 = vpop.f32.mrf.mxu0
        %9503 = vmatprep.mubr.f32.mxu0 0.0
        %9504 = vmatmul.mubr.f32.gmra.mxu0 %v9284
        %v9505 = vpop.f32.mrf.mxu0
        %v9506 = vadd.f32 %v9192, %v9505
        %v9507 = vpop.f32.mrf.mxu0
        %9508 = vmatprep.mubr.f32.mxu0 0.0
        %9509 = vmatmul.mubr.f32.gmra.mxu0 %v9287
        %v9510 = vpop.f32.mrf.mxu0
        %v9511 = vadd.f32 %v9192, %v9510
        %v9512 = vpop.f32.mrf.mxu0
        %9513 = vdwg.mxu0
        %v9514 = vmul.f32 %v9356, 0.5
        %v9515 = vmul.f32 %v9361, 0.5
        %v9516 = vmul.f32 %v9366, 0.5
        %v9517 = vmul.f32 %v9371, 0.5
        %v9518 = vmul.f32 %v9376, 0.5
        %v9519 = vmul.f32 %v9381, 0.5
        %v9520 = vmul.f32 %v9386, 0.5
        %v9521 = vmul.f32 %v9391, 0.5
        %v9522 = vmul.f32 %v9396, 0.5
        %v9523 = vmul.f32 %v9401, 0.5
        %v9524 = vmul.f32 %v9406, 0.5
        %v9525 = vmul.f32 %v9411, 0.5
        %v9526 = vmul.f32 %v9416, 0.5
        %v9527 = vmul.f32 %v9421, 0.5
        %v9528 = vmul.f32 %v9426, 0.5
        %v9529 = vmul.f32 %v9431, 0.5
        %v9530 = vmul.f32 %v9436, 0.5
        %v9531 = vmul.f32 %v9441, 0.5
        %v9532 = vmul.f32 %v9446, 0.5
        %v9533 = vmul.f32 %v9451, 0.5
        %v9534 = vmul.f32 %v9456, 0.5
        %v9535 = vmul.f32 %v9461, 0.5
        %v9536 = vmul.f32 %v9466, 0.5
        %v9537 = vmul.f32 %v9471, 0.5
        %v9538 = vmul.f32 %v9476, 0.5
        %v9539 = vmul.f32 %v9481, 0.5
        %v9540 = vmul.f32 %v9486, 0.5
        %v9541 = vmul.f32 %v9491, 0.5
        %v9542 = vmul.f32 %v9496, 0.5
        %v9543 = vmul.f32 %v9501, 0.5
        %v9544 = vmul.f32 %v9506, 0.5
        %v9545 = vmul.f32 %v9511, 0.5
        %v9546 = vmul.f32 %v9356, 0.70710677
        %v9547 = vmul.f32 %v9361, 0.70710677
        %v9548 = vmul.f32 %v9366, 0.70710677
        %v9549 = vmul.f32 %v9371, 0.70710677
        %v9550 = vmul.f32 %v9376, 0.70710677
        %v9551 = vmul.f32 %v9381, 0.70710677
        %v9552 = vmul.f32 %v9386, 0.70710677
        %v9553 = vmul.f32 %v9391, 0.70710677
        %v9554 = vmul.f32 %v9396, 0.70710677
        %v9555 = vmul.f32 %v9401, 0.70710677
        %v9556 = vmul.f32 %v9406, 0.70710677
        %v9557 = vmul.f32 %v9411, 0.70710677
        %v9558 = vmul.f32 %v9416, 0.70710677
        %v9559 = vmul.f32 %v9421, 0.70710677
        %v9560 = vmul.f32 %v9426, 0.70710677
        %v9561 = vmul.f32 %v9431, 0.70710677
        %v9562 = vmul.f32 %v9436, 0.70710677
        %v9563 = vmul.f32 %v9441, 0.70710677
        %v9564 = vmul.f32 %v9446, 0.70710677
        %v9565 = vmul.f32 %v9451, 0.70710677
        %v9566 = vmul.f32 %v9456, 0.70710677
        %v9567 = vmul.f32 %v9461, 0.70710677
        %v9568 = vmul.f32 %v9466, 0.70710677
        %v9569 = vmul.f32 %v9471, 0.70710677
        %v9570 = vmul.f32 %v9476, 0.70710677
        %v9571 = vmul.f32 %v9481, 0.70710677
        %v9572 = vmul.f32 %v9486, 0.70710677
        %v9573 = vmul.f32 %v9491, 0.70710677
        %v9574 = vmul.f32 %v9496, 0.70710677
        %v9575 = vmul.f32 %v9501, 0.70710677
        %v9576 = vmul.f32 %v9506, 0.70710677
        %v9577 = vmul.f32 %v9511, 0.70710677
        %v9578 = verf.f32.pop %v9546
        %v9579 = verf.f32.pop %v9547
        %v9580 = verf.f32.pop %v9548
        %v9581 = verf.f32.pop %v9549
        %v9582 = verf.f32.pop %v9550
        %v9583 = verf.f32.pop %v9551
        %v9584 = verf.f32.pop %v9552
        %v9585 = verf.f32.pop %v9553
        %v9586 = verf.f32.pop %v9554
        %v9587 = verf.f32.pop %v9555
        %v9588 = verf.f32.pop %v9556
        %v9589 = verf.f32.pop %v9557
        %v9590 = verf.f32.pop %v9558
        %v9591 = verf.f32.pop %v9559
        %v9592 = verf.f32.pop %v9560
        %v9593 = verf.f32.pop %v9561
        %v9594 = verf.f32.pop %v9562
        %v9595 = verf.f32.pop %v9563
        %v9596 = verf.f32.pop %v9564
        %v9597 = verf.f32.pop %v9565
        %v9598 = verf.f32.pop %v9566
        %v9599 = verf.f32.pop %v9567
        %v9600 = verf.f32.pop %v9568
        %v9601 = verf.f32.pop %v9569
        %v9602 = verf.f32.pop %v9570
        %v9603 = verf.f32.pop %v9571
        %v9604 = verf.f32.pop %v9572
        %v9605 = verf.f32.pop %v9573
        %v9606 = verf.f32.pop %v9574
        %v9607 = verf.f32.pop %v9575
        %v9608 = verf.f32.pop %v9576
        %v9609 = verf.f32.pop %v9577
        %v9610 = vadd.f32 %v9578, 1.0
        %v9611 = vadd.f32 %v9579, 1.0
        %v9612 = vadd.f32 %v9580, 1.0
        %v9613 = vadd.f32 %v9581, 1.0
        %v9614 = vadd.f32 %v9582, 1.0
        %v9615 = vadd.f32 %v9583, 1.0
        %v9616 = vadd.f32 %v9584, 1.0
        %v9617 = vadd.f32 %v9585, 1.0
        %v9618 = vadd.f32 %v9586, 1.0
        %v9619 = vadd.f32 %v9587, 1.0
        %v9620 = vadd.f32 %v9588, 1.0
        %v9621 = vadd.f32 %v9589, 1.0
        %v9622 = vadd.f32 %v9590, 1.0
        %v9623 = vadd.f32 %v9591, 1.0
        %v9624 = vadd.f32 %v9592, 1.0
        %v9625 = vadd.f32 %v9593, 1.0
        %v9626 = vadd.f32 %v9594, 1.0
        %v9627 = vadd.f32 %v9595, 1.0
        %v9628 = vadd.f32 %v9596, 1.0
        %v9629 = vadd.f32 %v9597, 1.0
        %v9630 = vadd.f32 %v9598, 1.0
        %v9631 = vadd.f32 %v9599, 1.0
        %v9632 = vadd.f32 %v9600, 1.0
        %v9633 = vadd.f32 %v9601, 1.0
        %v9634 = vadd.f32 %v9602, 1.0
        %v9635 = vadd.f32 %v9603, 1.0
        %v9636 = vadd.f32 %v9604, 1.0
        %v9637 = vadd.f32 %v9605, 1.0
        %v9638 = vadd.f32 %v9606, 1.0
        %v9639 = vadd.f32 %v9607, 1.0
        %v9640 = vadd.f32 %v9608, 1.0
        %v9641 = vadd.f32 %v9609, 1.0
        %v9642 = vmul.f32 %v9514, %v9610
        %v9643 = vmul.f32 %v9515, %v9611
        %v9644 = vmul.f32 %v9516, %v9612
        %v9645 = vmul.f32 %v9517, %v9613
        %v9646 = vmul.f32 %v9518, %v9614
        %v9647 = vmul.f32 %v9519, %v9615
        %v9648 = vmul.f32 %v9520, %v9616
        %v9649 = vmul.f32 %v9521, %v9617
        %v9650 = vmul.f32 %v9522, %v9618
        %v9651 = vmul.f32 %v9523, %v9619
        %v9652 = vmul.f32 %v9524, %v9620
        %v9653 = vmul.f32 %v9525, %v9621
        %v9654 = vmul.f32 %v9526, %v9622
        %v9655 = vmul.f32 %v9527, %v9623
        %v9656 = vmul.f32 %v9528, %v9624
        %v9657 = vmul.f32 %v9529, %v9625
        %v9658 = vmul.f32 %v9530, %v9626
        %v9659 = vmul.f32 %v9531, %v9627
        %v9660 = vmul.f32 %v9532, %v9628
        %v9661 = vmul.f32 %v9533, %v9629
        %v9662 = vmul.f32 %v9534, %v9630
        %v9663 = vmul.f32 %v9535, %v9631
        %v9664 = vmul.f32 %v9536, %v9632
        %v9665 = vmul.f32 %v9537, %v9633
        %v9666 = vmul.f32 %v9538, %v9634
        %v9667 = vmul.f32 %v9539, %v9635
        %v9668 = vmul.f32 %v9540, %v9636
        %v9669 = vmul.f32 %v9541, %v9637
        %v9670 = vmul.f32 %v9542, %v9638
        %v9671 = vmul.f32 %v9543, %v9639
        %v9672 = vmul.f32 %v9544, %v9640
        %v9673 = vmul.f32 %v9545, %v9641
        %v9674 = vld [vmem:[%s6] sm:$0xff]
        %v9675 = vld [vmem:[%s6 + $0x8] sm:$0xff]
        %v9676 = vld [vmem:[%s6 + $0x10] sm:$0xff]
        %v9677 = vld [vmem:[%s6 + $0x18] sm:$0xff]
        %v9678 = vld [vmem:[%s6 + $0x20] sm:$0xff]
        %v9679 = vld [vmem:[%s6 + $0x28] sm:$0xff]
        %v9680 = vld [vmem:[%s6 + $0x30] sm:$0xff]
        %v9681 = vld [vmem:[%s6 + $0x38] sm:$0xff]
        %v9682 = vld [vmem:[%s6 + $0x40] sm:$0xff]
        %v9683 = vld [vmem:[%s6 + $0x48] sm:$0xff]
        %v9684 = vld [vmem:[%s6 + $0x50] sm:$0xff]
        %v9685 = vld [vmem:[%s6 + $0x58] sm:$0xff]
        %v9686 = vld [vmem:[%s6 + $0x60] sm:$0xff]
        %v9687 = vld [vmem:[%s6 + $0x68] sm:$0xff]
        %v9688 = vld [vmem:[%s6 + $0x70] sm:$0xff]
        %v9689 = vld [vmem:[%s6 + $0x78] sm:$0xff]
        %9690 = vmatprep.subr.mxu0 0.0
        %9691 = vmatpush1.msra.mxu0 %v9689
        %9692 = vmatprep.subr.mxu0 0.0
        %9693 = vmatpush1.msra.mxu0 %v9688
        %9694 = vmatprep.subr.mxu0 0.0
        %9695 = vmatpush1.msra.mxu0 %v9687
        %9696 = vmatprep.subr.mxu0 0.0
        %9697 = vmatpush1.msra.mxu0 %v9686
        %9698 = vmatprep.subr.mxu0 0.0
        %9699 = vmatpush1.msra.mxu0 %v9685
        %9700 = vmatprep.subr.mxu0 0.0
        %9701 = vmatpush1.msra.mxu0 %v9684
        %9702 = vmatprep.subr.mxu0 0.0
        %9703 = vmatpush1.msra.mxu0 %v9683
        %9704 = vmatprep.subr.mxu0 0.0
        %9705 = vmatpush1.msra.mxu0 %v9682
        %9706 = vmatprep.subr.mxu0 0.0
        %9707 = vmatpush1.msra.mxu0 %v9681
        %9708 = vmatprep.subr.mxu0 0.0
        %9709 = vmatpush1.msra.mxu0 %v9680
        %9710 = vmatprep.subr.mxu0 0.0
        %9711 = vmatpush1.msra.mxu0 %v9679
        %9712 = vmatprep.subr.mxu0 0.0
        %9713 = vmatpush1.msra.mxu0 %v9678
        %9714 = vmatprep.subr.mxu0 0.0
        %9715 = vmatpush1.msra.mxu0 %v9677
        %9716 = vmatprep.subr.mxu0 0.0
        %9717 = vmatpush1.msra.mxu0 %v9676
        %9718 = vmatprep.subr.mxu0 0.0
        %9719 = vmatpush1.msra.mxu0 %v9675
        %9720 = vmatprep.subr.mxu0 0.0
        %9721 = vmatpush1.msra.mxu0 %v9674
        %9722 = vmatprep.subr.mxu0 0.0
        %9723 = vmatpush2.msra.mxu0 0.0
        %9724 = vmatprep.subr.mxu0 0.0
        %9725 = vmatpush2.msra.mxu0 0.0
        %9726 = vmatprep.subr.mxu0 0.0
        %9727 = vmatpush2.msra.mxu0 0.0
        %9728 = vmatprep.subr.mxu0 0.0
        %9729 = vmatpush2.msra.mxu0 0.0
        %9730 = vmatprep.subr.mxu0 0.0
        %9731 = vmatpush2.msra.mxu0 0.0
        %9732 = vmatprep.subr.mxu0 0.0
        %9733 = vmatpush2.msra.mxu0 0.0
        %9734 = vmatprep.subr.mxu0 0.0
        %9735 = vmatpush2.msra.mxu0 0.0
        %9736 = vmatprep.subr.mxu0 0.0
        %9737 = vmatpush2.msra.mxu0 0.0
        %9738 = vmatprep.subr.mxu0 0.0
        %9739 = vmatpush2.msra.mxu0 0.0
        %9740 = vmatprep.subr.mxu0 0.0
        %9741 = vmatpush2.msra.mxu0 0.0
        %9742 = vmatprep.subr.mxu0 0.0
        %9743 = vmatpush2.msra.mxu0 0.0
        %9744 = vmatprep.subr.mxu0 0.0
        %9745 = vmatpush2.msra.mxu0 0.0
        %9746 = vmatprep.subr.mxu0 0.0
        %9747 = vmatpush2.msra.mxu0 0.0
        %9748 = vmatprep.subr.mxu0 0.0
        %9749 = vmatpush2.msra.mxu0 0.0
        %9750 = vmatprep.subr.mxu0 0.0
        %9751 = vmatpush2.msra.mxu0 0.0
        %9752 = vmatprep.subr.mxu0 0.0
        %9753 = vmatpush2.msra.mxu0 0.0
        %9754 = vmatprep.mubr.f32.mxu0 0.0
        %9755 = vmatmul.mubr.f32.gmra.mxu0 %v9642
        %v9756 = vpop.f32.mrf.mxu0
        %v9757 = vadd.f32 0.0, %v9756
        %v9758 = vpop.f32.mrf.mxu0
        %9759 = vmatprep.mubr.f32.mxu0 0.0
        %9760 = vmatmul.mubr.f32.gmra.mxu0 %v9643
        %v9761 = vpop.f32.mrf.mxu0
        %v9762 = vadd.f32 0.0, %v9761
        %v9763 = vpop.f32.mrf.mxu0
        %9764 = vmatprep.mubr.f32.mxu0 0.0
        %9765 = vmatmul.mubr.f32.gmra.mxu0 %v9644
        %v9766 = vpop.f32.mrf.mxu0
        %v9767 = vadd.f32 0.0, %v9766
        %v9768 = vpop.f32.mrf.mxu0
        %9769 = vmatprep.mubr.f32.mxu0 0.0
        %9770 = vmatmul.mubr.f32.gmra.mxu0 %v9645
        %v9771 = vpop.f32.mrf.mxu0
        %v9772 = vadd.f32 0.0, %v9771
        %v9773 = vpop.f32.mrf.mxu0
        %9774 = vmatprep.mubr.f32.mxu0 0.0
        %9775 = vmatmul.mubr.f32.gmra.mxu0 %v9646
        %v9776 = vpop.f32.mrf.mxu0
        %v9777 = vadd.f32 0.0, %v9776
        %v9778 = vpop.f32.mrf.mxu0
        %9779 = vmatprep.mubr.f32.mxu0 0.0
        %9780 = vmatmul.mubr.f32.gmra.mxu0 %v9647
        %v9781 = vpop.f32.mrf.mxu0
        %v9782 = vadd.f32 0.0, %v9781
        %v9783 = vpop.f32.mrf.mxu0
        %9784 = vmatprep.mubr.f32.mxu0 0.0
        %9785 = vmatmul.mubr.f32.gmra.mxu0 %v9648
        %v9786 = vpop.f32.mrf.mxu0
        %v9787 = vadd.f32 0.0, %v9786
        %v9788 = vpop.f32.mrf.mxu0
        %9789 = vmatprep.mubr.f32.mxu0 0.0
        %9790 = vmatmul.mubr.f32.gmra.mxu0 %v9649
        %v9791 = vpop.f32.mrf.mxu0
        %v9792 = vadd.f32 0.0, %v9791
        %v9793 = vpop.f32.mrf.mxu0
        %9794 = vmatprep.mubr.f32.mxu0 0.0
        %9795 = vmatmul.mubr.f32.gmra.mxu0 %v9650
        %v9796 = vpop.f32.mrf.mxu0
        %v9797 = vadd.f32 0.0, %v9796
        %v9798 = vpop.f32.mrf.mxu0
        %9799 = vmatprep.mubr.f32.mxu0 0.0
        %9800 = vmatmul.mubr.f32.gmra.mxu0 %v9651
        %v9801 = vpop.f32.mrf.mxu0
        %v9802 = vadd.f32 0.0, %v9801
        %v9803 = vpop.f32.mrf.mxu0
        %9804 = vmatprep.mubr.f32.mxu0 0.0
        %9805 = vmatmul.mubr.f32.gmra.mxu0 %v9652
        %v9806 = vpop.f32.mrf.mxu0
        %v9807 = vadd.f32 0.0, %v9806
        %v9808 = vpop.f32.mrf.mxu0
        %9809 = vmatprep.mubr.f32.mxu0 0.0
        %9810 = vmatmul.mubr.f32.gmra.mxu0 %v9653
        %v9811 = vpop.f32.mrf.mxu0
        %v9812 = vadd.f32 0.0, %v9811
        %v9813 = vpop.f32.mrf.mxu0
        %9814 = vmatprep.mubr.f32.mxu0 0.0
        %9815 = vmatmul.mubr.f32.gmra.mxu0 %v9654
        %v9816 = vpop.f32.mrf.mxu0
        %v9817 = vadd.f32 0.0, %v9816
        %v9818 = vpop.f32.mrf.mxu0
        %9819 = vmatprep.mubr.f32.mxu0 0.0
        %9820 = vmatmul.mubr.f32.gmra.mxu0 %v9655
        %v9821 = vpop.f32.mrf.mxu0
        %v9822 = vadd.f32 0.0, %v9821
        %v9823 = vpop.f32.mrf.mxu0
        %9824 = vmatprep.mubr.f32.mxu0 0.0
        %9825 = vmatmul.mubr.f32.gmra.mxu0 %v9656
        %v9826 = vpop.f32.mrf.mxu0
        %v9827 = vadd.f32 0.0, %v9826
        %v9828 = vpop.f32.mrf.mxu0
        %9829 = vmatprep.mubr.f32.mxu0 0.0
        %9830 = vmatmul.mubr.f32.gmra.mxu0 %v9657
        %v9831 = vpop.f32.mrf.mxu0
        %v9832 = vadd.f32 0.0, %v9831
        %v9833 = vpop.f32.mrf.mxu0
        %9834 = vmatprep.mubr.f32.mxu0 0.0
        %9835 = vmatmul.mubr.f32.gmra.mxu0 %v9658
        %v9836 = vpop.f32.mrf.mxu0
        %v9837 = vadd.f32 0.0, %v9836
        %v9838 = vpop.f32.mrf.mxu0
        %9839 = vmatprep.mubr.f32.mxu0 0.0
        %9840 = vmatmul.mubr.f32.gmra.mxu0 %v9659
        %v9841 = vpop.f32.mrf.mxu0
        %v9842 = vadd.f32 0.0, %v9841
        %v9843 = vpop.f32.mrf.mxu0
        %9844 = vmatprep.mubr.f32.mxu0 0.0
        %9845 = vmatmul.mubr.f32.gmra.mxu0 %v9660
        %v9846 = vpop.f32.mrf.mxu0
        %v9847 = vadd.f32 0.0, %v9846
        %v9848 = vpop.f32.mrf.mxu0
        %9849 = vmatprep.mubr.f32.mxu0 0.0
        %9850 = vmatmul.mubr.f32.gmra.mxu0 %v9661
        %v9851 = vpop.f32.mrf.mxu0
        %v9852 = vadd.f32 0.0, %v9851
        %v9853 = vpop.f32.mrf.mxu0
        %9854 = vmatprep.mubr.f32.mxu0 0.0
        %9855 = vmatmul.mubr.f32.gmra.mxu0 %v9662
        %v9856 = vpop.f32.mrf.mxu0
        %v9857 = vadd.f32 0.0, %v9856
        %v9858 = vpop.f32.mrf.mxu0
        %9859 = vmatprep.mubr.f32.mxu0 0.0
        %9860 = vmatmul.mubr.f32.gmra.mxu0 %v9663
        %v9861 = vpop.f32.mrf.mxu0
        %v9862 = vadd.f32 0.0, %v9861
        %v9863 = vpop.f32.mrf.mxu0
        %9864 = vmatprep.mubr.f32.mxu0 0.0
        %9865 = vmatmul.mubr.f32.gmra.mxu0 %v9664
        %v9866 = vpop.f32.mrf.mxu0
        %v9867 = vadd.f32 0.0, %v9866
        %v9868 = vpop.f32.mrf.mxu0
        %9869 = vmatprep.mubr.f32.mxu0 0.0
        %9870 = vmatmul.mubr.f32.gmra.mxu0 %v9665
        %v9871 = vpop.f32.mrf.mxu0
        %v9872 = vadd.f32 0.0, %v9871
        %v9873 = vpop.f32.mrf.mxu0
        %9874 = vmatprep.mubr.f32.mxu0 0.0
        %9875 = vmatmul.mubr.f32.gmra.mxu0 %v9666
        %v9876 = vpop.f32.mrf.mxu0
        %v9877 = vadd.f32 0.0, %v9876
        %v9878 = vpop.f32.mrf.mxu0
        %9879 = vmatprep.mubr.f32.mxu0 0.0
        %9880 = vmatmul.mubr.f32.gmra.mxu0 %v9667
        %v9881 = vpop.f32.mrf.mxu0
        %v9882 = vadd.f32 0.0, %v9881
        %v9883 = vpop.f32.mrf.mxu0
        %9884 = vmatprep.mubr.f32.mxu0 0.0
        %9885 = vmatmul.mubr.f32.gmra.mxu0 %v9668
        %v9886 = vpop.f32.mrf.mxu0
        %v9887 = vadd.f32 0.0, %v9886
        %v9888 = vpop.f32.mrf.mxu0
        %9889 = vmatprep.mubr.f32.mxu0 0.0
        %9890 = vmatmul.mubr.f32.gmra.mxu0 %v9669
        %v9891 = vpop.f32.mrf.mxu0
        %v9892 = vadd.f32 0.0, %v9891
        %v9893 = vpop.f32.mrf.mxu0
        %9894 = vmatprep.mubr.f32.mxu0 0.0
        %9895 = vmatmul.mubr.f32.gmra.mxu0 %v9670
        %v9896 = vpop.f32.mrf.mxu0
        %v9897 = vadd.f32 0.0, %v9896
        %v9898 = vpop.f32.mrf.mxu0
        %9899 = vmatprep.mubr.f32.mxu0 0.0
        %9900 = vmatmul.mubr.f32.gmra.mxu0 %v9671
        %v9901 = vpop.f32.mrf.mxu0
        %v9902 = vadd.f32 0.0, %v9901
        %v9903 = vpop.f32.mrf.mxu0
        %9904 = vmatprep.mubr.f32.mxu0 0.0
        %9905 = vmatmul.mubr.f32.gmra.mxu0 %v9672
        %v9906 = vpop.f32.mrf.mxu0
        %v9907 = vadd.f32 0.0, %v9906
        %v9908 = vpop.f32.mrf.mxu0
        %9909 = vmatprep.mubr.f32.mxu0 0.0
        %9910 = vmatmul.mubr.f32.gmra.mxu0 %v9673
        %v9911 = vpop.f32.mrf.mxu0
        %v9912 = vadd.f32 0.0, %v9911
        %v9913 = vpop.f32.mrf.mxu0
        %9914 = vdwg.mxu0
        %v9915 = vadd.f32 %v8665, %v9757
        %v9916 = vadd.f32 %v8666, %v9762
        %v9917 = vadd.f32 %v8667, %v9767
        %v9918 = vadd.f32 %v8668, %v9772
        %v9919 = vadd.f32 %v8669, %v9777
        %v9920 = vadd.f32 %v8670, %v9782
        %v9921 = vadd.f32 %v8671, %v9787
        %v9922 = vadd.f32 %v8672, %v9792
        %v9923 = vadd.f32 %v8673, %v9797
        %v9924 = vadd.f32 %v8674, %v9802
        %v9925 = vadd.f32 %v8675, %v9807
        %v9926 = vadd.f32 %v8676, %v9812
        %v9927 = vadd.f32 %v8677, %v9817
        %v9928 = vadd.f32 %v8678, %v9822
        %v9929 = vadd.f32 %v8679, %v9827
        %v9930 = vadd.f32 %v8680, %v9832
        %v9931 = vadd.f32 %v8681, %v9837
        %v9932 = vadd.f32 %v8682, %v9842
        %v9933 = vadd.f32 %v8683, %v9847
        %v9934 = vadd.f32 %v8684, %v9852
        %v9935 = vadd.f32 %v8685, %v9857
        %v9936 = vadd.f32 %v8686, %v9862
        %v9937 = vadd.f32 %v8687, %v9867
        %v9938 = vadd.f32 %v8688, %v9872
        %v9939 = vadd.f32 %v8689, %v9877
        %v9940 = vadd.f32 %v8690, %v9882
        %v9941 = vadd.f32 %v8691, %v9887
        %v9942 = vadd.f32 %v8692, %v9892
        %v9943 = vadd.f32 %v8693, %v9897
        %v9944 = vadd.f32 %v8694, %v9902
        %v9945 = vadd.f32 %v8695, %v9907
        %v9946 = vadd.f32 %v8696, %v9912
        %v9947 = vlaneseq
        %v9948 = vshrl.u32 %v9947, 7
        %v9949 = vsub.s32 7, %v9948
        %v9950 = vrot.slane %v312, %v9949
        %v9951 = vadd.f32 %v9915, %v9950
        %v9952 = vadd.f32 %v9916, %v9950
        %v9953 = vadd.f32 %v9917, %v9950
        %v9954 = vadd.f32 %v9918, %v9950
        %v9955 = vadd.f32 %v9919, %v9950
        %v9956 = vadd.f32 %v9920, %v9950
        %v9957 = vadd.f32 %v9921, %v9950
        %v9958 = vadd.f32 %v9922, %v9950
        %v9959 = vadd.f32 %v9923, %v9950
        %v9960 = vadd.f32 %v9924, %v9950
        %v9961 = vadd.f32 %v9925, %v9950
        %v9962 = vadd.f32 %v9926, %v9950
        %v9963 = vadd.f32 %v9927, %v9950
        %v9964 = vadd.f32 %v9928, %v9950
        %v9965 = vadd.f32 %v9929, %v9950
        %v9966 = vadd.f32 %v9930, %v9950
        %v9967 = vadd.f32 %v9931, %v9950
        %v9968 = vadd.f32 %v9932, %v9950
        %v9969 = vadd.f32 %v9933, %v9950
        %v9970 = vadd.f32 %v9934, %v9950
        %v9971 = vadd.f32 %v9935, %v9950
        %v9972 = vadd.f32 %v9936, %v9950
        %v9973 = vadd.f32 %v9937, %v9950
        %v9974 = vadd.f32 %v9938, %v9950
        %v9975 = vadd.f32 %v9939, %v9950
        %v9976 = vadd.f32 %v9940, %v9950
        %v9977 = vadd.f32 %v9941, %v9950
        %v9978 = vadd.f32 %v9942, %v9950
        %v9979 = vadd.f32 %v9943, %v9950
        %v9980 = vadd.f32 %v9944, %v9950
        %v9981 = vadd.f32 %v9945, %v9950
        %v9982 = vadd.f32 %v9946, %v9950
        %v10015 = vrot.slane %v9952, 7
        %vm10016 = vcmask 1041409
        %v10017 = vsel %vm10016, %v10015, %v9951
        %v10018 = vrot.slane %v9953, 6
        %vm10019 = vcmask 1042434
        %v10020 = vsel %vm10019, %v10018, %v10017
        %v10021 = vrot.slane %v9954, 5
        %vm10022 = vcmask 1043459
        %v10023 = vsel %vm10022, %v10021, %v10020
        %v10024 = vrot.slane %v9955, 4
        %vm10025 = vcmask 1044484
        %v10026 = vsel %vm10025, %v10024, %v10023
        %v10027 = vrot.slane %v9956, 3
        %vm10028 = vcmask 1045509
        %v10029 = vsel %vm10028, %v10027, %v10026
        %v10030 = vrot.slane %v9957, 2
        %vm10031 = vcmask 1046534
        %v10032 = vsel %vm10031, %v10030, %v10029
        %v10033 = vrot.slane %v9958, 1
        %vm10034 = vcmask 1047559
        %v10035 = vsel %vm10034, %v10033, %v10032
        %v10036 = vrot.slane %v9960, 7
        %v10037 = vsel %vm10016, %v10036, %v9959
        %v10038 = vrot.slane %v9961, 6
        %v10039 = vsel %vm10019, %v10038, %v10037
        %v10040 = vrot.slane %v9962, 5
        %v10041 = vsel %vm10022, %v10040, %v10039
        %v10042 = vrot.slane %v9963, 4
        %v10043 = vsel %vm10025, %v10042, %v10041
        %v10044 = vrot.slane %v9964, 3
        %v10045 = vsel %vm10028, %v10044, %v10043
        %v10046 = vrot.slane %v9965, 2
        %v10047 = vsel %vm10031, %v10046, %v10045
        %v10048 = vrot.slane %v9966, 1
        %v10049 = vsel %vm10034, %v10048, %v10047
        %v10050 = vrot.slane %v9968, 7
        %v10051 = vsel %vm10016, %v10050, %v9967
        %v10052 = vrot.slane %v9969, 6
        %v10053 = vsel %vm10019, %v10052, %v10051
        %v10054 = vrot.slane %v9970, 5
        %v10055 = vsel %vm10022, %v10054, %v10053
        %v10056 = vrot.slane %v9971, 4
        %v10057 = vsel %vm10025, %v10056, %v10055
        %v10058 = vrot.slane %v9972, 3
        %v10059 = vsel %vm10028, %v10058, %v10057
        %v10060 = vrot.slane %v9973, 2
        %v10061 = vsel %vm10031, %v10060, %v10059
        %v10062 = vrot.slane %v9974, 1
        %v10063 = vsel %vm10034, %v10062, %v10061
        %v10064 = vrot.slane %v9976, 7
        %v10065 = vsel %vm10016, %v10064, %v9975
        %v10066 = vrot.slane %v9977, 6
        %v10067 = vsel %vm10019, %v10066, %v10065
        %v10068 = vrot.slane %v9978, 5
        %v10069 = vsel %vm10022, %v10068, %v10067
        %v10070 = vrot.slane %v9979, 4
        %v10071 = vsel %vm10025, %v10070, %v10069
        %v10072 = vrot.slane %v9980, 3
        %v10073 = vsel %vm10028, %v10072, %v10071
        %v10074 = vrot.slane %v9981, 2
        %v10075 = vsel %vm10031, %v10074, %v10073
        %v10076 = vrot.slane %v9982, 1
        %v10077 = vsel %vm10034, %v10076, %v10075
        %v10082 = vrot.slane %v9951, 1
        %v10083 = vsel %vm10016, %v9952, %v10082
        %v10084 = vrot.slane %v9953, 7
        %v10085 = vsel %vm10019, %v10084, %v10083
        %v10086 = vrot.slane %v9954, 6
        %v10087 = vsel %vm10022, %v10086, %v10085
        %v10088 = vrot.slane %v9955, 5
        %v10089 = vsel %vm10025, %v10088, %v10087
        %v10090 = vrot.slane %v9956, 4
        %v10091 = vsel %vm10028, %v10090, %v10089
        %v10092 = vrot.slane %v9957, 3
        %v10093 = vsel %vm10031, %v10092, %v10091
        %v10094 = vrot.slane %v9958, 2
        %v10095 = vsel %vm10034, %v10094, %v10093
        %v10096 = vrot.slane %v9959, 1
        %v10097 = vsel %vm10016, %v9960, %v10096
        %v10098 = vrot.slane %v9961, 7
        %v10099 = vsel %vm10019, %v10098, %v10097
        %v10100 = vrot.slane %v9962, 6
        %v10101 = vsel %vm10022, %v10100, %v10099
        %v10102 = vrot.slane %v9963, 5
        %v10103 = vsel %vm10025, %v10102, %v10101
        %v10104 = vrot.slane %v9964, 4
        %v10105 = vsel %vm10028, %v10104, %v10103
        %v10106 = vrot.slane %v9965, 3
        %v10107 = vsel %vm10031, %v10106, %v10105
        %v10108 = vrot.slane %v9966, 2
        %v10109 = vsel %vm10034, %v10108, %v10107
        %v10110 = vrot.slane %v9967, 1
        %v10111 = vsel %vm10016, %v9968, %v10110
        %v10112 = vrot.slane %v9969, 7
        %v10113 = vsel %vm10019, %v10112, %v10111
        %v10114 = vrot.slane %v9970, 6
        %v10115 = vsel %vm10022, %v10114, %v10113
        %v10116 = vrot.slane %v9971, 5
        %v10117 = vsel %vm10025, %v10116, %v10115
        %v10118 = vrot.slane %v9972, 4
        %v10119 = vsel %vm10028, %v10118, %v10117
        %v10120 = vrot.slane %v9973, 3
        %v10121 = vsel %vm10031, %v10120, %v10119
        %v10122 = vrot.slane %v9974, 2
        %v10123 = vsel %vm10034, %v10122, %v10121
        %v10124 = vrot.slane %v9975, 1
        %v10125 = vsel %vm10016, %v9976, %v10124
        %v10126 = vrot.slane %v9977, 7
        %v10127 = vsel %vm10019, %v10126, %v10125
        %v10128 = vrot.slane %v9978, 6
        %v10129 = vsel %vm10022, %v10128, %v10127
        %v10130 = vrot.slane %v9979, 5
        %v10131 = vsel %vm10025, %v10130, %v10129
        %v10132 = vrot.slane %v9980, 4
        %v10133 = vsel %vm10028, %v10132, %v10131
        %v10134 = vrot.slane %v9981, 3
        %v10135 = vsel %vm10031, %v10134, %v10133
        %v10136 = vrot.slane %v9982, 2
        %v10137 = vsel %vm10034, %v10136, %v10135
        %10138 = vrot.lane.b32.xlu0 %v10095, 32
        %v10139 = vpop.permute.xlu0 %10138
        %10140 = vrot.lane.b32.xlu0 %v10109, 32
        %v10141 = vpop.permute.xlu0 %10140
        %10142 = vrot.lane.b32.xlu0 %v10123, 32
        %v10143 = vpop.permute.xlu0 %10142
        %10144 = vrot.lane.b32.xlu0 %v10137, 32
        %v10145 = vpop.permute.xlu0 %10144
        %v10150 = vrot.slane %v9951, 2
        %v10151 = vrot.slane %v9952, 1
        %v10152 = vsel %vm10016, %v10151, %v10150
        %v10153 = vsel %vm10019, %v9953, %v10152
        %v10154 = vrot.slane %v9954, 7
        %v10155 = vsel %vm10022, %v10154, %v10153
        %v10156 = vrot.slane %v9955, 6
        %v10157 = vsel %vm10025, %v10156, %v10155
        %v10158 = vrot.slane %v9956, 5
        %v10159 = vsel %vm10028, %v10158, %v10157
        %v10160 = vrot.slane %v9957, 4
        %v10161 = vsel %vm10031, %v10160, %v10159
        %v10162 = vrot.slane %v9958, 3
        %v10163 = vsel %vm10034, %v10162, %v10161
        %v10164 = vrot.slane %v9959, 2
        %v10165 = vrot.slane %v9960, 1
        %v10166 = vsel %vm10016, %v10165, %v10164
        %v10167 = vsel %vm10019, %v9961, %v10166
        %v10168 = vrot.slane %v9962, 7
        %v10169 = vsel %vm10022, %v10168, %v10167
        %v10170 = vrot.slane %v9963, 6
        %v10171 = vsel %vm10025, %v10170, %v10169
        %v10172 = vrot.slane %v9964, 5
        %v10173 = vsel %vm10028, %v10172, %v10171
        %v10174 = vrot.slane %v9965, 4
        %v10175 = vsel %vm10031, %v10174, %v10173
        %v10176 = vrot.slane %v9966, 3
        %v10177 = vsel %vm10034, %v10176, %v10175
        %v10178 = vrot.slane %v9967, 2
        %v10179 = vrot.slane %v9968, 1
        %v10180 = vsel %vm10016, %v10179, %v10178
        %v10181 = vsel %vm10019, %v9969, %v10180
        %v10182 = vrot.slane %v9970, 7
        %v10183 = vsel %vm10022, %v10182, %v10181
        %v10184 = vrot.slane %v9971, 6
        %v10185 = vsel %vm10025, %v10184, %v10183
        %v10186 = vrot.slane %v9972, 5
        %v10187 = vsel %vm10028, %v10186, %v10185
        %v10188 = vrot.slane %v9973, 4
        %v10189 = vsel %vm10031, %v10188, %v10187
        %v10190 = vrot.slane %v9974, 3
        %v10191 = vsel %vm10034, %v10190, %v10189
        %v10192 = vrot.slane %v9975, 2
        %v10193 = vrot.slane %v9976, 1
        %v10194 = vsel %vm10016, %v10193, %v10192
        %v10195 = vsel %vm10019, %v9977, %v10194
        %v10196 = vrot.slane %v9978, 7
        %v10197 = vsel %vm10022, %v10196, %v10195
        %v10198 = vrot.slane %v9979, 6
        %v10199 = vsel %vm10025, %v10198, %v10197
        %v10200 = vrot.slane %v9980, 5
        %v10201 = vsel %vm10028, %v10200, %v10199
        %v10202 = vrot.slane %v9981, 4
        %v10203 = vsel %vm10031, %v10202, %v10201
        %v10204 = vrot.slane %v9982, 3
        %v10205 = vsel %vm10034, %v10204, %v10203
        %10206 = vrot.lane.b32.xlu0 %v10163, 64
        %v10207 = vpop.permute.xlu0 %10206
        %10208 = vrot.lane.b32.xlu0 %v10177, 64
        %v10209 = vpop.permute.xlu0 %10208
        %10210 = vrot.lane.b32.xlu0 %v10191, 64
        %v10211 = vpop.permute.xlu0 %10210
        %10212 = vrot.lane.b32.xlu0 %v10205, 64
        %v10213 = vpop.permute.xlu0 %10212
        %v10218 = vrot.slane %v9951, 3
        %v10219 = vrot.slane %v9952, 2
        %v10220 = vsel %vm10016, %v10219, %v10218
        %v10221 = vrot.slane %v9953, 1
        %v10222 = vsel %vm10019, %v10221, %v10220
        %v10223 = vsel %vm10022, %v9954, %v10222
        %v10224 = vrot.slane %v9955, 7
        %v10225 = vsel %vm10025, %v10224, %v10223
        %v10226 = vrot.slane %v9956, 6
        %v10227 = vsel %vm10028, %v10226, %v10225
        %v10228 = vrot.slane %v9957, 5
        %v10229 = vsel %vm10031, %v10228, %v10227
        %v10230 = vrot.slane %v9958, 4
        %v10231 = vsel %vm10034, %v10230, %v10229
        %v10232 = vrot.slane %v9959, 3
        %v10233 = vrot.slane %v9960, 2
        %v10234 = vsel %vm10016, %v10233, %v10232
        %v10235 = vrot.slane %v9961, 1
        %v10236 = vsel %vm10019, %v10235, %v10234
        %v10237 = vsel %vm10022, %v9962, %v10236
        %v10238 = vrot.slane %v9963, 7
        %v10239 = vsel %vm10025, %v10238, %v10237
        %v10240 = vrot.slane %v9964, 6
        %v10241 = vsel %vm10028, %v10240, %v10239
        %v10242 = vrot.slane %v9965, 5
        %v10243 = vsel %vm10031, %v10242, %v10241
        %v10244 = vrot.slane %v9966, 4
        %v10245 = vsel %vm10034, %v10244, %v10243
        %v10246 = vrot.slane %v9967, 3
        %v10247 = vrot.slane %v9968, 2
        %v10248 = vsel %vm10016, %v10247, %v10246
        %v10249 = vrot.slane %v9969, 1
        %v10250 = vsel %vm10019, %v10249, %v10248
        %v10251 = vsel %vm10022, %v9970, %v10250
        %v10252 = vrot.slane %v9971, 7
        %v10253 = vsel %vm10025, %v10252, %v10251
        %v10254 = vrot.slane %v9972, 6
        %v10255 = vsel %vm10028, %v10254, %v10253
        %v10256 = vrot.slane %v9973, 5
        %v10257 = vsel %vm10031, %v10256, %v10255
        %v10258 = vrot.slane %v9974, 4
        %v10259 = vsel %vm10034, %v10258, %v10257
        %v10260 = vrot.slane %v9975, 3
        %v10261 = vrot.slane %v9976, 2
        %v10262 = vsel %vm10016, %v10261, %v10260
        %v10263 = vrot.slane %v9977, 1
        %v10264 = vsel %vm10019, %v10263, %v10262
        %v10265 = vsel %vm10022, %v9978, %v10264
        %v10266 = vrot.slane %v9979, 7
        %v10267 = vsel %vm10025, %v10266, %v10265
        %v10268 = vrot.slane %v9980, 6
        %v10269 = vsel %vm10028, %v10268, %v10267
        %v10270 = vrot.slane %v9981, 5
        %v10271 = vsel %vm10031, %v10270, %v10269
        %v10272 = vrot.slane %v9982, 4
        %v10273 = vsel %vm10034, %v10272, %v10271
        %10274 = vrot.lane.b32.xlu0 %v10231, 96
        %v10275 = vpop.permute.xlu0 %10274
        %10276 = vrot.lane.b32.xlu0 %v10245, 96
        %v10277 = vpop.permute.xlu0 %10276
        %10278 = vrot.lane.b32.xlu0 %v10259, 96
        %v10279 = vpop.permute.xlu0 %10278
        %10280 = vrot.lane.b32.xlu0 %v10273, 96
        %v10281 = vpop.permute.xlu0 %10280
        %v10286 = vrot.slane %v9951, 4
        %v10287 = vrot.slane %v9952, 3
        %v10288 = vsel %vm10016, %v10287, %v10286
        %v10289 = vrot.slane %v9953, 2
        %v10290 = vsel %vm10019, %v10289, %v10288
        %v10291 = vrot.slane %v9954, 1
        %v10292 = vsel %vm10022, %v10291, %v10290
        %v10293 = vsel %vm10025, %v9955, %v10292
        %v10294 = vrot.slane %v9956, 7
        %v10295 = vsel %vm10028, %v10294, %v10293
        %v10296 = vrot.slane %v9957, 6
        %v10297 = vsel %vm10031, %v10296, %v10295
        %v10298 = vrot.slane %v9958, 5
        %v10299 = vsel %vm10034, %v10298, %v10297
        %v10300 = vrot.slane %v9959, 4
        %v10301 = vrot.slane %v9960, 3
        %v10302 = vsel %vm10016, %v10301, %v10300
        %v10303 = vrot.slane %v9961, 2
        %v10304 = vsel %vm10019, %v10303, %v10302
        %v10305 = vrot.slane %v9962, 1
        %v10306 = vsel %vm10022, %v10305, %v10304
        %v10307 = vsel %vm10025, %v9963, %v10306
        %v10308 = vrot.slane %v9964, 7
        %v10309 = vsel %vm10028, %v10308, %v10307
        %v10310 = vrot.slane %v9965, 6
        %v10311 = vsel %vm10031, %v10310, %v10309
        %v10312 = vrot.slane %v9966, 5
        %v10313 = vsel %vm10034, %v10312, %v10311
        %v10314 = vrot.slane %v9967, 4
        %v10315 = vrot.slane %v9968, 3
        %v10316 = vsel %vm10016, %v10315, %v10314
        %v10317 = vrot.slane %v9969, 2
        %v10318 = vsel %vm10019, %v10317, %v10316
        %v10319 = vrot.slane %v9970, 1
        %v10320 = vsel %vm10022, %v10319, %v10318
        %v10321 = vsel %vm10025, %v9971, %v10320
        %v10322 = vrot.slane %v9972, 7
        %v10323 = vsel %vm10028, %v10322, %v10321
        %v10324 = vrot.slane %v9973, 6
        %v10325 = vsel %vm10031, %v10324, %v10323
        %v10326 = vrot.slane %v9974, 5
        %v10327 = vsel %vm10034, %v10326, %v10325
        %v10328 = vrot.slane %v9975, 4
        %v10329 = vrot.slane %v9976, 3
        %v10330 = vsel %vm10016, %v10329, %v10328
        %v10331 = vrot.slane %v9977, 2
        %v10332 = vsel %vm10019, %v10331, %v10330
        %v10333 = vrot.slane %v9978, 1
        %v10334 = vsel %vm10022, %v10333, %v10332
        %v10335 = vsel %vm10025, %v9979, %v10334
        %v10336 = vrot.slane %v9980, 7
        %v10337 = vsel %vm10028, %v10336, %v10335
        %v10338 = vrot.slane %v9981, 6
        %v10339 = vsel %vm10031, %v10338, %v10337
        %v10340 = vrot.slane %v9982, 5
        %v10341 = vsel %vm10034, %v10340, %v10339
        %v10346 = vrot.slane %v9951, 5
        %v10347 = vrot.slane %v9952, 4
        %v10348 = vsel %vm10016, %v10347, %v10346
        %v10349 = vrot.slane %v9953, 3
        %v10350 = vsel %vm10019, %v10349, %v10348
        %v10351 = vrot.slane %v9954, 2
        %v10352 = vsel %vm10022, %v10351, %v10350
        %v10353 = vrot.slane %v9955, 1
        %v10354 = vsel %vm10025, %v10353, %v10352
        %v10355 = vsel %vm10028, %v9956, %v10354
        %v10356 = vrot.slane %v9957, 7
        %v10357 = vsel %vm10031, %v10356, %v10355
        %v10358 = vrot.slane %v9958, 6
        %v10359 = vsel %vm10034, %v10358, %v10357
        %v10360 = vrot.slane %v9959, 5
        %v10361 = vrot.slane %v9960, 4
        %v10362 = vsel %vm10016, %v10361, %v10360
        %v10363 = vrot.slane %v9961, 3
        %v10364 = vsel %vm10019, %v10363, %v10362
        %v10365 = vrot.slane %v9962, 2
        %v10366 = vsel %vm10022, %v10365, %v10364
        %v10367 = vrot.slane %v9963, 1
        %v10368 = vsel %vm10025, %v10367, %v10366
        %v10369 = vsel %vm10028, %v9964, %v10368
        %v10370 = vrot.slane %v9965, 7
        %v10371 = vsel %vm10031, %v10370, %v10369
        %v10372 = vrot.slane %v9966, 6
        %v10373 = vsel %vm10034, %v10372, %v10371
        %v10374 = vrot.slane %v9967, 5
        %v10375 = vrot.slane %v9968, 4
        %v10376 = vsel %vm10016, %v10375, %v10374
        %v10377 = vrot.slane %v9969, 3
        %v10378 = vsel %vm10019, %v10377, %v10376
        %v10379 = vrot.slane %v9970, 2
        %v10380 = vsel %vm10022, %v10379, %v10378
        %v10381 = vrot.slane %v9971, 1
        %v10382 = vsel %vm10025, %v10381, %v10380
        %v10383 = vsel %vm10028, %v9972, %v10382
        %v10384 = vrot.slane %v9973, 7
        %v10385 = vsel %vm10031, %v10384, %v10383
        %v10386 = vrot.slane %v9974, 6
        %v10387 = vsel %vm10034, %v10386, %v10385
        %v10388 = vrot.slane %v9975, 5
        %v10389 = vrot.slane %v9976, 4
        %v10390 = vsel %vm10016, %v10389, %v10388
        %v10391 = vrot.slane %v9977, 3
        %v10392 = vsel %vm10019, %v10391, %v10390
        %v10393 = vrot.slane %v9978, 2
        %v10394 = vsel %vm10022, %v10393, %v10392
        %v10395 = vrot.slane %v9979, 1
        %v10396 = vsel %vm10025, %v10395, %v10394
        %v10397 = vsel %vm10028, %v9980, %v10396
        %v10398 = vrot.slane %v9981, 7
        %v10399 = vsel %vm10031, %v10398, %v10397
        %v10400 = vrot.slane %v9982, 6
        %v10401 = vsel %vm10034, %v10400, %v10399
        %10402 = vrot.lane.b32.xlu0 %v10359, 32
        %v10403 = vpop.permute.xlu0 %10402
        %10404 = vrot.lane.b32.xlu0 %v10373, 32
        %v10405 = vpop.permute.xlu0 %10404
        %10406 = vrot.lane.b32.xlu0 %v10387, 32
        %v10407 = vpop.permute.xlu0 %10406
        %10408 = vrot.lane.b32.xlu0 %v10401, 32
        %v10409 = vpop.permute.xlu0 %10408
        %v10414 = vrot.slane %v9951, 6
        %v10415 = vrot.slane %v9952, 5
        %v10416 = vsel %vm10016, %v10415, %v10414
        %v10417 = vrot.slane %v9953, 4
        %v10418 = vsel %vm10019, %v10417, %v10416
        %v10419 = vrot.slane %v9954, 3
        %v10420 = vsel %vm10022, %v10419, %v10418
        %v10421 = vrot.slane %v9955, 2
        %v10422 = vsel %vm10025, %v10421, %v10420
        %v10423 = vrot.slane %v9956, 1
        %v10424 = vsel %vm10028, %v10423, %v10422
        %v10425 = vsel %vm10031, %v9957, %v10424
        %v10426 = vrot.slane %v9958, 7
        %v10427 = vsel %vm10034, %v10426, %v10425
        %v10428 = vrot.slane %v9959, 6
        %v10429 = vrot.slane %v9960, 5
        %v10430 = vsel %vm10016, %v10429, %v10428
        %v10431 = vrot.slane %v9961, 4
        %v10432 = vsel %vm10019, %v10431, %v10430
        %v10433 = vrot.slane %v9962, 3
        %v10434 = vsel %vm10022, %v10433, %v10432
        %v10435 = vrot.slane %v9963, 2
        %v10436 = vsel %vm10025, %v10435, %v10434
        %v10437 = vrot.slane %v9964, 1
        %v10438 = vsel %vm10028, %v10437, %v10436
        %v10439 = vsel %vm10031, %v9965, %v10438
        %v10440 = vrot.slane %v9966, 7
        %v10441 = vsel %vm10034, %v10440, %v10439
        %v10442 = vrot.slane %v9967, 6
        %v10443 = vrot.slane %v9968, 5
        %v10444 = vsel %vm10016, %v10443, %v10442
        %v10445 = vrot.slane %v9969, 4
        %v10446 = vsel %vm10019, %v10445, %v10444
        %v10447 = vrot.slane %v9970, 3
        %v10448 = vsel %vm10022, %v10447, %v10446
        %v10449 = vrot.slane %v9971, 2
        %v10450 = vsel %vm10025, %v10449, %v10448
        %v10451 = vrot.slane %v9972, 1
        %v10452 = vsel %vm10028, %v10451, %v10450
        %v10453 = vsel %vm10031, %v9973, %v10452
        %v10454 = vrot.slane %v9974, 7
        %v10455 = vsel %vm10034, %v10454, %v10453
        %v10456 = vrot.slane %v9975, 6
        %v10457 = vrot.slane %v9976, 5
        %v10458 = vsel %vm10016, %v10457, %v10456
        %v10459 = vrot.slane %v9977, 4
        %v10460 = vsel %vm10019, %v10459, %v10458
        %v10461 = vrot.slane %v9978, 3
        %v10462 = vsel %vm10022, %v10461, %v10460
        %v10463 = vrot.slane %v9979, 2
        %v10464 = vsel %vm10025, %v10463, %v10462
        %v10465 = vrot.slane %v9980, 1
        %v10466 = vsel %vm10028, %v10465, %v10464
        %v10467 = vsel %vm10031, %v9981, %v10466
        %v10468 = vrot.slane %v9982, 7
        %v10469 = vsel %vm10034, %v10468, %v10467
        %10470 = vrot.lane.b32.xlu0 %v10427, 64
        %v10471 = vpop.permute.xlu0 %10470
        %10472 = vrot.lane.b32.xlu0 %v10441, 64
        %v10473 = vpop.permute.xlu0 %10472
        %10474 = vrot.lane.b32.xlu0 %v10455, 64
        %v10475 = vpop.permute.xlu0 %10474
        %10476 = vrot.lane.b32.xlu0 %v10469, 64
        %v10477 = vpop.permute.xlu0 %10476
        %v10482 = vrot.slane %v9951, 7
        %v10483 = vrot.slane %v9952, 6
        %v10484 = vsel %vm10016, %v10483, %v10482
        %v10485 = vrot.slane %v9953, 5
        %v10486 = vsel %vm10019, %v10485, %v10484
        %v10487 = vrot.slane %v9954, 4
        %v10488 = vsel %vm10022, %v10487, %v10486
        %v10489 = vrot.slane %v9955, 3
        %v10490 = vsel %vm10025, %v10489, %v10488
        %v10491 = vrot.slane %v9956, 2
        %v10492 = vsel %vm10028, %v10491, %v10490
        %v10493 = vrot.slane %v9957, 1
        %v10494 = vsel %vm10031, %v10493, %v10492
        %v10495 = vsel %vm10034, %v9958, %v10494
        %v10496 = vrot.slane %v9959, 7
        %v10497 = vrot.slane %v9960, 6
        %v10498 = vsel %vm10016, %v10497, %v10496
        %v10499 = vrot.slane %v9961, 5
        %v10500 = vsel %vm10019, %v10499, %v10498
        %v10501 = vrot.slane %v9962, 4
        %v10502 = vsel %vm10022, %v10501, %v10500
        %v10503 = vrot.slane %v9963, 3
        %v10504 = vsel %vm10025, %v10503, %v10502
        %v10505 = vrot.slane %v9964, 2
        %v10506 = vsel %vm10028, %v10505, %v10504
        %v10507 = vrot.slane %v9965, 1
        %v10508 = vsel %vm10031, %v10507, %v10506
        %v10509 = vsel %vm10034, %v9966, %v10508
        %v10510 = vrot.slane %v9967, 7
        %v10511 = vrot.slane %v9968, 6
        %v10512 = vsel %vm10016, %v10511, %v10510
        %v10513 = vrot.slane %v9969, 5
        %v10514 = vsel %vm10019, %v10513, %v10512
        %v10515 = vrot.slane %v9970, 4
        %v10516 = vsel %vm10022, %v10515, %v10514
        %v10517 = vrot.slane %v9971, 3
        %v10518 = vsel %vm10025, %v10517, %v10516
        %v10519 = vrot.slane %v9972, 2
        %v10520 = vsel %vm10028, %v10519, %v10518
        %v10521 = vrot.slane %v9973, 1
        %v10522 = vsel %vm10031, %v10521, %v10520
        %v10523 = vsel %vm10034, %v9974, %v10522
        %v10524 = vrot.slane %v9975, 7
        %v10525 = vrot.slane %v9976, 6
        %v10526 = vsel %vm10016, %v10525, %v10524
        %v10527 = vrot.slane %v9977, 5
        %v10528 = vsel %vm10019, %v10527, %v10526
        %v10529 = vrot.slane %v9978, 4
        %v10530 = vsel %vm10022, %v10529, %v10528
        %v10531 = vrot.slane %v9979, 3
        %v10532 = vsel %vm10025, %v10531, %v10530
        %v10533 = vrot.slane %v9980, 2
        %v10534 = vsel %vm10028, %v10533, %v10532
        %v10535 = vrot.slane %v9981, 1
        %v10536 = vsel %vm10031, %v10535, %v10534
        %v10537 = vsel %vm10034, %v9982, %v10536
        %10538 = vrot.lane.b32.xlu0 %v10495, 96
        %v10539 = vpop.permute.xlu0 %10538
        %10540 = vrot.lane.b32.xlu0 %v10509, 96
        %v10541 = vpop.permute.xlu0 %10540
        %10542 = vrot.lane.b32.xlu0 %v10523, 96
        %v10543 = vpop.permute.xlu0 %10542
        %10544 = vrot.lane.b32.xlu0 %v10537, 96
        %v10545 = vpop.permute.xlu0 %10544
        %v10550 = vsel %vm345, %v10035, %v10139
        %v10551 = vsel %vm345, %v10049, %v10141
        %v10552 = vsel %vm345, %v10063, %v10143
        %v10553 = vsel %vm345, %v10077, %v10145
        %v10554 = vsel %vm3997, %v10550, %v10207
        %v10555 = vsel %vm3997, %v10551, %v10209
        %v10556 = vsel %vm3997, %v10552, %v10211
        %v10557 = vsel %vm3997, %v10553, %v10213
        %vm10558 = vcmask 785408
        %v10559 = vsel %vm10558, %v10554, %v10275
        %v10560 = vsel %vm10558, %v10555, %v10277
        %v10561 = vsel %vm10558, %v10556, %v10279
        %v10562 = vsel %vm10558, %v10557, %v10281
        %v10563 = vsel %vm345, %v10299, %v10403
        %v10564 = vsel %vm345, %v10313, %v10405
        %v10565 = vsel %vm345, %v10327, %v10407
        %v10566 = vsel %vm345, %v10341, %v10409
        %v10567 = vsel %vm3997, %v10563, %v10471
        %v10568 = vsel %vm3997, %v10564, %v10473
        %v10569 = vsel %vm3997, %v10565, %v10475
        %v10570 = vsel %vm3997, %v10566, %v10477
        %v10571 = vsel %vm10558, %v10567, %v10539
        %v10572 = vsel %vm10558, %v10568, %v10541
        %v10573 = vsel %vm10558, %v10569, %v10543
        %v10574 = vsel %vm10558, %v10570, %v10545
        %10575 = vst [vmem:[%s311] sm:$0xff] %v10559
        %10576 = vst [vmem:[%s311 + $0x8] sm:$0xff] %v10571
        %10577 = vst [vmem:[%s311 + $0x10] sm:$0xff] %v10560
        %10578 = vst [vmem:[%s311 + $0x18] sm:$0xff] %v10572
        %10579 = vst [vmem:[%s311 + $0x20] sm:$0xff] %v10561
        %10580 = vst [vmem:[%s311 + $0x28] sm:$0xff] %v10573
        %10581 = vst [vmem:[%s311 + $0x30] sm:$0xff] %v10562
        %10582 = vst [vmem:[%s311 + $0x38] sm:$0xff] %v10574
        %s10583 = sand.u32 %s185, 1
        %s10584 = scalar_lea.sflag [#allocation4], %s10583
        %s10585 = sand.u32 %s185, 1
        %s10586 = smul.addr %s10585, 64
        %s10587 = scalar_lea.vmem [#allocation7], %s10586
        // Predicated region
        $region57: #{tpu_custom_call.1} parent=47 // pred_check
          %p10588 = pneg %p195
        $region58: #{tpu_custom_call.1} parent=47 // pred_check_branch
          %10590 = sbr.rel (%p10588) target = $region60
        $region59: #{tpu_custom_call.1} parent=47 // pred_region
          %s10592 = ssub.s32 1024, 1024
          %10593 = vsyncadd %s10584, %s10592
          %s10594 = smul.addr %s25, 8
          %s10595 = smul.addr %s10594, 128
          %s10596 = scalar_lea.hbm %s7, %s10595
          %s10597 = sshll.u32 %s10587, 4
          %s10598 = int_to_ptr.vmem [resolvable:$true] %s10597
          %10603 = dma.vmem_to_hbm [thread:$0]  %s10598, 1024, %s10596, %s10584, 512, 512, 32
        $region60: #{tpu_custom_call.1} parent=47 // pred_fallthru
          _
      $region48: #{tpu_custom_call.1} parent=5 // pred_fallthru
        _
      %p10604 = scmp.le.s32.totalorder 2, %s20
      // Predicated region
      $region61: #{tpu_custom_call.1} parent=5 // pred_check
        %p10605 = pneg %p10604
      $region62: #{tpu_custom_call.1} parent=5 // pred_check_branch
        %10607 = sbr.rel (%p10605) target = $region64
      $region63: #{tpu_custom_call.1} parent=5 // pred_region
        %s10608 = ssub.s32 %s20, 2
        // Predicated region
        $region65: #{tpu_custom_call.1} parent=63 // pred_check
          %p10609 = pneg %p201
        $region66: #{tpu_custom_call.1} parent=63 // pred_check_branch
          %10611 = sbr.rel (%p10609) target = $region68
        $region67: #{tpu_custom_call.1} parent=63 // pred_region
          %s10612 = sand.u32 %s186, 1
          %s10613 = scalar_lea.sflag [#allocation4], %s10612
          %s10614 = sand.u32 %s186, 1
          %s10615 = smul.addr %s10614, 64
          %s10616 = scalar_lea.vmem [#allocation7], %s10615
          %10617 = dma.done %s10613, 1024
        $region68: #{tpu_custom_call.1} parent=63 // pred_fallthru
          _
      $region64: #{tpu_custom_call.1} parent=5 // pred_fallthru
        _
    $region6: #{tpu_custom_call.1} parent=1 // loop_footer
      %s24 = sadd.s32 1, %s20
    $region7: #{tpu_custom_call.1} parent=1 // loop_footer_branch
      %19 = sbr.rel target = $region3
    $region8: #{tpu_custom_call.1} parent=1 // loop_exit
      _
    %10618 = vsyncpa [#allocation3], 1
    %s10619 = scalar_lea.sflag [#allocation3], 1
    %10620 = vsyncpa %s10619, 1
    %10621 = vsyncpa [#allocation6], 1
    %10622 = vsyncpa [#allocation4], 1
    %s10623 = scalar_lea.sflag [#allocation4], 1
    %10624 = vsyncpa %s10623, 1

</llo_original>
